<compile_context>
chip_gen: v5e
topology: v5e:2x2
jax: 0.10.0
libtpu: 0.0.40
codegen_flags: <defaults>
</compile_context>

<pallas_src>
import jax
import jax.numpy as jnp
import numpy as np
from jax.experimental import pallas as pl
from jax.experimental.pallas import tpu as pltpu

C_FEAT = 28                      # real encoder output channels
C_PAD = 32                       # feat channels padded to 32 lanes
D_IN = C_FEAT + 4                # [feat(28) | rel_coord(2) | rel_cell(2)] == C_PAD
H_CLS = 32
H_LIGHT = 32
H_HEAVY = 64
H_PACK = H_CLS + H_LIGHT + H_HEAVY   # 128: packed first-layer width (full MXU lanes)


# ---------------- encoder: 3x3 conv, in-kernel im2col (9 shifted matmuls) ----

def _make_encoder_kernel(th, w):
    def kernel(x_ref, w_ref, b_ref, o_ref):
        # x_ref: (1, 1, th+2, w+2, 3) f32 zero-padded row tile (1-px halo)
        # w_ref: (9, 3, 32) bf16 (k = dy*3+dx, cin, cout); b_ref: (1, 32) f32
        xt = x_ref[0, 0]                                            # (th+2, w+2, 3)
        acc = None
        k = 0
        for dy in range(3):
            for dx in range(3):
                patch = xt[dy:dy + th, dx:dx + w, :]                # (th, w, 3)
                patch = patch.reshape(th * w, 3).astype(jnp.bfloat16)
                part = jnp.dot(patch, w_ref[k],
                               preferred_element_type=jnp.float32)  # (th*w, 32)
                acc = part if acc is None else acc + part
                k += 1
        o_ref[0] = acc + b_ref[...]
    return kernel


def _choose_row_tile(h, w):
    # ~2 MiB f32 output block budget -> double-buffered fits every generation.
    budget = max(8, (2 * 1024 * 1024) // (w * C_PAD * 4))
    th = min(h, budget)
    while th > 1 and not (h % th == 0 and (th * w) % 8 == 0):
        th -= 1
    assert h % th == 0 and (th * w) % 8 == 0, "need a row tile with th | h and 8 | th*w"
    return th


def encoder_conv(lr_nchw, w_conv_bf16, b_conv_f32):
    """3x3 conv (pad=1), 3 -> C_PAD channels (last C_PAD-C_FEAT columns are zero)."""
    B, Cin, h, w = lr_nchw.shape
    assert Cin == 3
    x = jnp.transpose(lr_nchw, (0, 2, 3, 1))                        # NHWC
    xp = jnp.pad(x, ((0, 0), (1, 1), (1, 1), (0, 0)))               # zero-pad halo
    th = _choose_row_tile(h, w)
    nt = h // th
    if nt == 1:
        x_tiles = xp[:, None]                                       # (B,1,h+2,w+2,3)
    else:
        # duplicate only the 2 halo rows per tile (vs 9x duplication of HBM im2col)
        x_tiles = jnp.stack([xp[:, i * th:i * th + th + 2] for i in range(nt)],
                            axis=1)                                 # (B,nt,th+2,w+2,3)

    out = pl.pallas_call(
        _make_encoder_kernel(th, w),
        out_shape=jax.ShapeDtypeStruct((B, h * w, C_PAD), jnp.float32),
        grid_spec=pltpu.PrefetchScalarGridSpec(
            num_scalar_prefetch=0,
            grid=(B, nt),
            in_specs=[pl.BlockSpec((1, 1, th + 2, w + 2, 3),
                                   lambda b, i: (b, i, 0, 0, 0)),
                      pl.BlockSpec((9, 3, C_PAD), lambda b, i: (0, 0, 0)),
                      pl.BlockSpec((1, C_PAD), lambda b, i: (0, 0))],
            out_specs=pl.BlockSpec((1, th * w, C_PAD), lambda b, i: (b, i, 0))),
        compiler_params=pltpu.CompilerParams(
            dimension_semantics=("parallel", "parallel")),
    )(x_tiles, w_conv_bf16, b_conv_f32)
    return out.reshape(B, h, w, C_PAD)


# -------- fused classifier + light/heavy samplers + blend + residual ---------

def _fused_kernel(x_ref, res_ref, w1, b1, wh2, bh2, w2, w3, bhd,
                  pred_ref, prob_ref):
    f32 = jnp.float32
    bf16 = jnp.bfloat16
    x = x_ref[0]                                                    # (tq, 32) bf16

    # packed first layer: h = relu(x @ [wc1|wl1|wh1] + [bc1|bl1|bh1])   (tq, 128)
    h = jnp.maximum(jnp.dot(x, w1[...], preferred_element_type=f32) + b1[...], 0.0)

    # heavy sampler second hidden layer on the hh slice
    hh = jnp.maximum(
        jnp.dot(h[:, H_CLS + H_LIGHT:].astype(bf16), wh2[...],
                preferred_element_type=f32) + bh2[...], 0.0)        # (tq, 64)

    # packed heads: columns = [logits(2) | p_light(3) | p_heavy(3)]
    heads = (jnp.dot(h[:, :H_CLS + H_LIGHT].astype(bf16), w2[...],
                     preferred_element_type=f32)
             + jnp.dot(hh.astype(bf16), w3[...], preferred_element_type=f32)
             + bhd[...])                                            # (tq, 8)

    logits = heads[:, 0:2]
    m = jnp.max(logits, axis=-1, keepdims=True)
    e = jnp.exp(logits - m)
    prob = e * pl.reciprocal(jnp.sum(e, axis=-1, keepdims=True), approx=True)

    pred = (prob[:, 0:1] * heads[:, 2:5] + prob[:, 1:2] * heads[:, 5:8]
            + res_ref[0])
    pred_ref[0] = pred
    prob_ref[0] = prob


def _choose_query_tile(Q, max_t=2048):
    t = min(Q, max_t)
    while t > 0 and not (Q % t == 0 and t % 16 == 0):
        t -= 1
    assert t > 0, "Q must have a divisor that is a multiple of 16"
    return t


def fused_sampler(x_q_bf16, res, kp, tq=None):
    B, Q, d_in = x_q_bf16.shape
    assert d_in == D_IN
    if tq is None:
        tq = _choose_query_tile(Q)
    weights = [kp['W1'], kp['B1'], kp['Wh2'], kp['Bh2'], kp['W2'], kp['W3'], kp['Bh']]

    def rep(a):
        return pl.BlockSpec(a.shape, lambda b, q: (0, 0))

    pred, prob = pl.pallas_call(
        _fused_kernel,
        out_shape=(jax.ShapeDtypeStruct((B, Q, 3), jnp.float32),
                   jax.ShapeDtypeStruct((B, Q, 2), jnp.float32)),
        grid_spec=pltpu.PrefetchScalarGridSpec(
            num_scalar_prefetch=0,
            grid=(B, Q // tq),
            in_specs=[pl.BlockSpec((1, tq, D_IN), lambda b, q: (b, q, 0)),
                      pl.BlockSpec((1, tq, 3), lambda b, q: (b, q, 0))]
                     + [rep(a) for a in weights],
            out_specs=[pl.BlockSpec((1, tq, 3), lambda b, q: (b, q, 0)),
                       pl.BlockSpec((1, tq, 2), lambda b, q: (b, q, 0))]),
        compiler_params=pltpu.CompilerParams(
            dimension_semantics=("parallel", "parallel")),
    )(x_q_bf16, res, *weights)
    return pred, prob


# ------------------------------- JAX glue ------------------------------------

def make_coord(shape):
    seqs = [(-1.0 + (2.0 * jnp.arange(n, dtype=jnp.float32) + 1.0) / n)
            for n in shape]
    yy, xx = jnp.meshgrid(seqs[0], seqs[1], indexing='ij')
    return jnp.stack([yy, xx], axis=-1).reshape(-1, 2)


def build_query_inputs(feat, coord, cell):
    """LIIF-style nearest-feature query; feat is (B,h,w,32) with last 4 ch zero."""
    B, h, w, _ = feat.shape
    cy, cx = coord[..., 0], coord[..., 1]
    iy = jnp.clip(jnp.floor((cy + 1) / 2 * h), 0, h - 1).astype(jnp.int32)
    ix = jnp.clip(jnp.floor((cx + 1) / 2 * w), 0, w - 1).astype(jnp.int32)
    b_idx = jnp.arange(B)[:, None]
    q_feat = feat[b_idx, iy, ix]                                    # (B,Q,32)
    fy = -1.0 + (2.0 * iy.astype(jnp.float32) + 1.0) / h
    fx = -1.0 + (2.0 * ix.astype(jnp.float32) + 1.0) / w
    rel = jnp.stack([(cy - fy) * h, (cx - fx) * w], axis=-1)
    rel_cell = cell * jnp.array([h, w], jnp.float32)
    extra = jnp.concatenate([rel, rel_cell], axis=-1)               # (B,Q,4)
    return q_feat.at[..., C_FEAT:].set(extra)                       # (B,Q,32)


def bilinear_border_sample(lr_nchw, coord):
    """Matches F.grid_sample(lr, coord.flip(-1)[:,None], 'bilinear',
    padding_mode='border', align_corners=False)[:, :, 0, :].permute(0,2,1)."""
    B, C, h, w = lr_nchw.shape
    img = jnp.transpose(lr_nchw, (0, 2, 3, 1))                      # NHWC
    fy = jnp.clip((coord[..., 0] + 1) / 2 * h - 0.5, 0.0, h - 1.0)
    fx = jnp.clip((coord[..., 1] + 1) / 2 * w - 0.5, 0.0, w - 1.0)
    y0 = jnp.floor(fy)
    x0 = jnp.floor(fx)
    wy = (fy - y0)[..., None]
    wx = (fx - x0)[..., None]
    y0i = jnp.clip(y0, 0, h - 1).astype(jnp.int32)
    y1i = jnp.clip(y0 + 1, 0, h - 1).astype(jnp.int32)
    x0i = jnp.clip(x0, 0, w - 1).astype(jnp.int32)
    x1i = jnp.clip(x0 + 1, 0, w - 1).astype(jnp.int32)
    b_idx = jnp.arange(B)[:, None]
    v00 = img[b_idx, y0i, x0i]
    v01 = img[b_idx, y0i, x1i]
    v10 = img[b_idx, y1i, x0i]
    v11 = img[b_idx, y1i, x1i]
    return ((1 - wy) * ((1 - wx) * v00 + wx * v01)
            + wy * ((1 - wx) * v10 + wx * v11))                     # (B,Q,3)


def init_params(key):
    def dense(k, fan_in, fan_out):
        k1, k2 = jax.random.split(k)
        w = jax.random.normal(k1, (fan_in, fan_out), jnp.float32) / np.sqrt(fan_in)
        b = 0.01 * jax.random.normal(k2, (1, fan_out), jnp.float32)
        return w, b

    keys = jax.random.split(key, 8)
    p = {}
    p['w_conv'] = jax.random.normal(keys[0], (3, 3, 3, C_FEAT), jnp.float32) / np.sqrt(27.0)
    p['b_conv'] = jnp.zeros((C_FEAT,), jnp.float32)
    p['wc1'], p['bc1'] = dense(keys[1], D_IN, H_CLS)
    p['wc2'], p['bc2'] = dense(keys[2], H_CLS, 2)
    p['wl1'], p['bl1'] = dense(keys[3], D_IN, H_LIGHT)
    p['wl2'], p['bl2'] = dense(keys[4], H_LIGHT, 3)
    p['wh1'], p['bh1'] = dense(keys[5], D_IN, H_HEAVY)
    p['wh2'], p['bh2'] = dense(keys[6], H_HEAVY, H_HEAVY)
    p['wh3'], p['bh3'] = dense(keys[7], H_HEAVY, 3)
    return p


def pack_params(p):
    """Pack / pad / bf16-cast parameters for the TPU kernels."""
    bf16 = jnp.bfloat16
    w_conv = p['w_conv'].reshape(27, C_FEAT)
    w_conv = jnp.pad(w_conv, ((0, 0), (0, C_PAD - C_FEAT)))
    w_conv = w_conv.reshape(9, 3, C_PAD).astype(bf16)                       # (9,3,32)
    b_conv = jnp.pad(p['b_conv'], (0, C_PAD - C_FEAT)).reshape(1, C_PAD)    # (1,32) f32

    W1 = jnp.concatenate([p['wc1'], p['wl1'], p['wh1']], axis=1).astype(bf16)  # (32,128)
    B1 = jnp.concatenate([p['bc1'], p['bl1'], p['bh1']], axis=1)               # (1,128)

    Wh2 = p['wh2'].astype(bf16)                                                # (64,64)
    Bh2 = p['bh2']                                                             # (1,64)

    # heads, block-diagonal packing: cols = [logits(2) | p_light(3) | p_heavy(3)]
    W2 = jnp.zeros((H_CLS + H_LIGHT, 8), jnp.float32)
    W2 = W2.at[0:H_CLS, 0:2].set(p['wc2'])
    W2 = W2.at[H_CLS:H_CLS + H_LIGHT, 2:5].set(p['wl2']).astype(bf16)          # (64,8)
    W3 = jnp.zeros((H_HEAVY, 8), jnp.float32).at[:, 5:8].set(p['wh3']).astype(bf16)
    Bh = jnp.concatenate([p['bc2'], p['bl2'], p['bh3']], axis=1)               # (1,8)
    return dict(w_conv=w_conv, b_conv=b_conv, W1=W1, B1=B1,
                Wh2=Wh2, Bh2=Bh2, W2=W2, W3=W3, Bh=Bh)


def pcsr_forward_train(lr, coord, cell, params):
    kp = pack_params(params)
    feat = encoder_conv(lr, kp['w_conv'], kp['b_conv'])             # (B,h,w,32) f32
    # TODO(synk): fuse this gather into the sampler kernel (scalar-prefetched
    # indices + in-kernel gather) to avoid the x_q HBM round trip.
    x_q = build_query_inputs(feat, coord, cell)                     # (B,Q,32) f32
    res = bilinear_border_sample(lr, coord)                         # (B,Q,3)  f32
    return fused_sampler(x_q.astype(jnp.bfloat16), res, kp)         # pred, prob


# ----------------------- pure-JAX reference (no Pallas) ----------------------

def _bdot(a, b):
    """bf16-operand matmul with f32 accumulation (mirrors the kernels' MXU use)."""
    return jax.lax.dot_general(
        a.astype(jnp.bfloat16), b.astype(jnp.bfloat16),
        dimension_numbers=(((a.ndim - 1,), (0,)), ((), ())),
        preferred_element_type=jnp.float32)


def reference_forward(lr, coord, cell, params):
    B, Cin, h, w = lr.shape
    x = jnp.transpose(lr, (0, 2, 3, 1))
    xp = jnp.pad(x, ((0, 0), (1, 1), (1, 1), (0, 0)))
    cols = [xp[:, dy:dy + h, dx:dx + w, :] for dy in range(3) for dx in range(3)]
    patches = jnp.concatenate(cols, axis=-1).reshape(B, h * w, 9 * Cin)
    feat = _bdot(patches, params['w_conv'].reshape(9 * Cin, C_FEAT)) + params['b_conv']
    feat = jnp.pad(feat, ((0, 0), (0, 0), (0, C_PAD - C_FEAT))).reshape(B, h, w, C_PAD)
    x_q = build_query_inputs(feat, coord, cell)
    res = bilinear_border_sample(lr, coord)
    relu = jax.nn.relu
    hc = relu(_bdot(x_q, params['wc1']) + params['bc1'])
    prob = jax.nn.softmax(_bdot(hc, params['wc2']) + params['bc2'], axis=-1)
    hl = relu(_bdot(x_q, params['wl1']) + params['bl1'])
    p_light = _bdot(hl, params['wl2']) + params['bl2']
    hh = relu(_bdot(x_q, params['wh1']) + params['bh1'])
    hh = relu(_bdot(hh, params['wh2']) + params['bh2'])
    p_heavy = _bdot(hh, params['wh3']) + params['bh3']
    pred = prob[..., 0:1] * p_light + prob[..., 1:2] * p_heavy + res
    return pred, prob


if __name__ == "__main__":
    key = jax.random.PRNGKey(0)
    kp_, kl = jax.random.split(key)
    params = init_params(kp_)

    B, h, w = 2, 16, 16
    scale = 2
    H, W = h * scale, w * scale
    Q = H * W                                                       # 1024
    lr = jax.random.normal(kl, (B, 3, h, w), jnp.float32)
    coord = jnp.broadcast_to(make_coord((H, W))[None], (B, Q, 2))
    cell = jnp.ones((B, Q, 2), jnp.float32) * jnp.array([2.0 / H, 2.0 / W],
                                                        jnp.float32)

    fwd = jax.jit(pcsr_forward_train)
    pred, prob = fwd(lr, coord, cell, params)
    jax.block_until_ready((pred, prob))

    pred_ref, prob_ref = reference_forward(lr, coord, cell, params)
    # tolerances account for bf16 MXU operands + approximate reciprocal in softmax
    np.testing.assert_allclose(np.asarray(pred), np.asarray(pred_ref),
                               rtol=2e-2, atol=2e-2)
    np.testing.assert_allclose(np.asarray(prob), np.asarray(prob_ref),
                               rtol=2e-2, atol=2e-2)
    assert pred.shape == (B, Q, 3) and prob.shape == (B, Q, 2)
    print("KERNEL_OK")
</pallas_src>

<mosaic_0001>
module attributes {stable_mosaic.version = 11 : i64} {
  func.func @kernel(%arg0: i32, %arg1: i32, %arg2: memref<1x1x18x18x3xf32, #tpu.memory_space<vmem>>, %arg3: memref<9x3x32xbf16, #tpu.memory_space<vmem>>, %arg4: memref<1x32xf32, #tpu.memory_space<vmem>>, %arg5: memref<1x256x32xf32, #tpu.memory_space<vmem>>) attributes {dimension_semantics = [#tpu.dimension_semantics<parallel>, #tpu.dimension_semantics<parallel>], iteration_bounds = array<i64: 2, 1>, scalar_prefetch = 0 : i64, scratch_operands = 0 : i64, tpu.core_type = #tpu.core_type<tc>, window_params = [{transform_indices = @transform_0, window_bounds = array<i64: 1, 1, 18, 18, 3>}, {pipeline_mode = #tpu.pipeline_mode<synchronous>, transform_indices = @transform_1, window_bounds = array<i64: 9, 3, 32>}, {pipeline_mode = #tpu.pipeline_mode<synchronous>, transform_indices = @transform_2, window_bounds = array<i64: 1, 32>}, {transform_indices = @transform_3, window_bounds = array<i64: 1, 256, 32>}]} {
    %c0 = arith.constant 0 : index
    %c0_0 = arith.constant 0 : index
    %c0_1 = arith.constant 0 : index
    %c0_2 = arith.constant 0 : index
    %c0_3 = arith.constant 0 : index
    %0 = vector.load %arg2[%c0, %c0_0, %c0_1, %c0_2, %c0_3] : memref<1x1x18x18x3xf32, #tpu.memory_space<vmem>>, vector<1x1x18x18x3xf32>
    %1 = vector.shape_cast %0 : vector<1x1x18x18x3xf32> to vector<18x18x3xf32>
    %2 = vector.extract_strided_slice %1 {offsets = [0, 0, 0], sizes = [16, 16, 3], strides = [1, 1, 1]} : vector<18x18x3xf32> to vector<16x16x3xf32>
    %3 = vector.shape_cast %2 : vector<16x16x3xf32> to vector<256x3xf32>
    %4 = arith.truncf %3 : vector<256x3xf32> to vector<256x3xbf16>
    %c0_4 = arith.constant 0 : index
    %c0_5 = arith.constant 0 : index
    %c0_6 = arith.constant 0 : index
    %5 = vector.load %arg3[%c0_4, %c0_5, %c0_6] : memref<9x3x32xbf16, #tpu.memory_space<vmem>>, vector<1x3x32xbf16>
    %6 = vector.shape_cast %5 : vector<1x3x32xbf16> to vector<3x32xbf16>
    %cst = arith.constant dense<0.000000e+00> : vector<256x32xf32>
    %7 = tpu.matmul %4, %6, %cst {dimension_numbers = #tpu.dot_dimension_numbers<[1], [0], [0], [1], [0, 0, 1, 1], [], []>} : vector<256x3xbf16>, vector<3x32xbf16>, vector<256x32xf32> -> vector<256x32xf32>
    %8 = vector.extract_strided_slice %1 {offsets = [0, 1, 0], sizes = [16, 16, 3], strides = [1, 1, 1]} : vector<18x18x3xf32> to vector<16x16x3xf32>
    %9 = vector.shape_cast %8 : vector<16x16x3xf32> to vector<256x3xf32>
    %10 = arith.truncf %9 : vector<256x3xf32> to vector<256x3xbf16>
    %c1 = arith.constant 1 : index
    %c0_7 = arith.constant 0 : index
    %c0_8 = arith.constant 0 : index
    %11 = vector.load %arg3[%c1, %c0_7, %c0_8] : memref<9x3x32xbf16, #tpu.memory_space<vmem>>, vector<1x3x32xbf16>
    %12 = vector.shape_cast %11 : vector<1x3x32xbf16> to vector<3x32xbf16>
    %cst_9 = arith.constant dense<0.000000e+00> : vector<256x32xf32>
    %13 = tpu.matmul %10, %12, %cst_9 {dimension_numbers = #tpu.dot_dimension_numbers<[1], [0], [0], [1], [0, 0, 1, 1], [], []>} : vector<256x3xbf16>, vector<3x32xbf16>, vector<256x32xf32> -> vector<256x32xf32>
    %14 = arith.addf %7, %13 : vector<256x32xf32>
    %15 = vector.extract_strided_slice %1 {offsets = [0, 2, 0], sizes = [16, 16, 3], strides = [1, 1, 1]} : vector<18x18x3xf32> to vector<16x16x3xf32>
    %16 = vector.shape_cast %15 : vector<16x16x3xf32> to vector<256x3xf32>
    %17 = arith.truncf %16 : vector<256x3xf32> to vector<256x3xbf16>
    %c2 = arith.constant 2 : index
    %c0_10 = arith.constant 0 : index
    %c0_11 = arith.constant 0 : index
    %18 = vector.load %arg3[%c2, %c0_10, %c0_11] : memref<9x3x32xbf16, #tpu.memory_space<vmem>>, vector<1x3x32xbf16>
    %19 = vector.shape_cast %18 : vector<1x3x32xbf16> to vector<3x32xbf16>
    %cst_12 = arith.constant dense<0.000000e+00> : vector<256x32xf32>
    %20 = tpu.matmul %17, %19, %cst_12 {dimension_numbers = #tpu.dot_dimension_numbers<[1], [0], [0], [1], [0, 0, 1, 1], [], []>} : vector<256x3xbf16>, vector<3x32xbf16>, vector<256x32xf32> -> vector<256x32xf32>
    %21 = arith.addf %14, %20 : vector<256x32xf32>
    %22 = vector.extract_strided_slice %1 {offsets = [1, 0, 0], sizes = [16, 16, 3], strides = [1, 1, 1]} : vector<18x18x3xf32> to vector<16x16x3xf32>
    %23 = vector.shape_cast %22 : vector<16x16x3xf32> to vector<256x3xf32>
    %24 = arith.truncf %23 : vector<256x3xf32> to vector<256x3xbf16>
    %c3 = arith.constant 3 : index
    %c0_13 = arith.constant 0 : index
    %c0_14 = arith.constant 0 : index
    %25 = vector.load %arg3[%c3, %c0_13, %c0_14] : memref<9x3x32xbf16, #tpu.memory_space<vmem>>, vector<1x3x32xbf16>
    %26 = vector.shape_cast %25 : vector<1x3x32xbf16> to vector<3x32xbf16>
    %cst_15 = arith.constant dense<0.000000e+00> : vector<256x32xf32>
    %27 = tpu.matmul %24, %26, %cst_15 {dimension_numbers = #tpu.dot_dimension_numbers<[1], [0], [0], [1], [0, 0, 1, 1], [], []>} : vector<256x3xbf16>, vector<3x32xbf16>, vector<256x32xf32> -> vector<256x32xf32>
    %28 = arith.addf %21, %27 : vector<256x32xf32>
    %29 = vector.extract_strided_slice %1 {offsets = [1, 1, 0], sizes = [16, 16, 3], strides = [1, 1, 1]} : vector<18x18x3xf32> to vector<16x16x3xf32>
    %30 = vector.shape_cast %29 : vector<16x16x3xf32> to vector<256x3xf32>
    %31 = arith.truncf %30 : vector<256x3xf32> to vector<256x3xbf16>
    %c4 = arith.constant 4 : index
    %c0_16 = arith.constant 0 : index
    %c0_17 = arith.constant 0 : index
    %32 = vector.load %arg3[%c4, %c0_16, %c0_17] : memref<9x3x32xbf16, #tpu.memory_space<vmem>>, vector<1x3x32xbf16>
    %33 = vector.shape_cast %32 : vector<1x3x32xbf16> to vector<3x32xbf16>
    %cst_18 = arith.constant dense<0.000000e+00> : vector<256x32xf32>
    %34 = tpu.matmul %31, %33, %cst_18 {dimension_numbers = #tpu.dot_dimension_numbers<[1], [0], [0], [1], [0, 0, 1, 1], [], []>} : vector<256x3xbf16>, vector<3x32xbf16>, vector<256x32xf32> -> vector<256x32xf32>
    %35 = arith.addf %28, %34 : vector<256x32xf32>
    %36 = vector.extract_strided_slice %1 {offsets = [1, 2, 0], sizes = [16, 16, 3], strides = [1, 1, 1]} : vector<18x18x3xf32> to vector<16x16x3xf32>
    %37 = vector.shape_cast %36 : vector<16x16x3xf32> to vector<256x3xf32>
    %38 = arith.truncf %37 : vector<256x3xf32> to vector<256x3xbf16>
    %c5 = arith.constant 5 : index
    %c0_19 = arith.constant 0 : index
    %c0_20 = arith.constant 0 : index
    %39 = vector.load %arg3[%c5, %c0_19, %c0_20] : memref<9x3x32xbf16, #tpu.memory_space<vmem>>, vector<1x3x32xbf16>
    %40 = vector.shape_cast %39 : vector<1x3x32xbf16> to vector<3x32xbf16>
    %cst_21 = arith.constant dense<0.000000e+00> : vector<256x32xf32>
    %41 = tpu.matmul %38, %40, %cst_21 {dimension_numbers = #tpu.dot_dimension_numbers<[1], [0], [0], [1], [0, 0, 1, 1], [], []>} : vector<256x3xbf16>, vector<3x32xbf16>, vector<256x32xf32> -> vector<256x32xf32>
    %42 = arith.addf %35, %41 : vector<256x32xf32>
    %43 = vector.extract_strided_slice %1 {offsets = [2, 0, 0], sizes = [16, 16, 3], strides = [1, 1, 1]} : vector<18x18x3xf32> to vector<16x16x3xf32>
    %44 = vector.shape_cast %43 : vector<16x16x3xf32> to vector<256x3xf32>
    %45 = arith.truncf %44 : vector<256x3xf32> to vector<256x3xbf16>
    %c6 = arith.constant 6 : index
    %c0_22 = arith.constant 0 : index
    %c0_23 = arith.constant 0 : index
    %46 = vector.load %arg3[%c6, %c0_22, %c0_23] : memref<9x3x32xbf16, #tpu.memory_space<vmem>>, vector<1x3x32xbf16>
    %47 = vector.shape_cast %46 : vector<1x3x32xbf16> to vector<3x32xbf16>
    %cst_24 = arith.constant dense<0.000000e+00> : vector<256x32xf32>
    %48 = tpu.matmul %45, %47, %cst_24 {dimension_numbers = #tpu.dot_dimension_numbers<[1], [0], [0], [1], [0, 0, 1, 1], [], []>} : vector<256x3xbf16>, vector<3x32xbf16>, vector<256x32xf32> -> vector<256x32xf32>
    %49 = arith.addf %42, %48 : vector<256x32xf32>
    %50 = vector.extract_strided_slice %1 {offsets = [2, 1, 0], sizes = [16, 16, 3], strides = [1, 1, 1]} : vector<18x18x3xf32> to vector<16x16x3xf32>
    %51 = vector.shape_cast %50 : vector<16x16x3xf32> to vector<256x3xf32>
    %52 = arith.truncf %51 : vector<256x3xf32> to vector<256x3xbf16>
    %c7 = arith.constant 7 : index
    %c0_25 = arith.constant 0 : index
    %c0_26 = arith.constant 0 : index
    %53 = vector.load %arg3[%c7, %c0_25, %c0_26] : memref<9x3x32xbf16, #tpu.memory_space<vmem>>, vector<1x3x32xbf16>
    %54 = vector.shape_cast %53 : vector<1x3x32xbf16> to vector<3x32xbf16>
    %cst_27 = arith.constant dense<0.000000e+00> : vector<256x32xf32>
    %55 = tpu.matmul %52, %54, %cst_27 {dimension_numbers = #tpu.dot_dimension_numbers<[1], [0], [0], [1], [0, 0, 1, 1], [], []>} : vector<256x3xbf16>, vector<3x32xbf16>, vector<256x32xf32> -> vector<256x32xf32>
    %56 = arith.addf %49, %55 : vector<256x32xf32>
    %57 = vector.extract_strided_slice %1 {offsets = [2, 2, 0], sizes = [16, 16, 3], strides = [1, 1, 1]} : vector<18x18x3xf32> to vector<16x16x3xf32>
    %58 = vector.shape_cast %57 : vector<16x16x3xf32> to vector<256x3xf32>
    %59 = arith.truncf %58 : vector<256x3xf32> to vector<256x3xbf16>
    %c8 = arith.constant 8 : index
    %c0_28 = arith.constant 0 : index
    %c0_29 = arith.constant 0 : index
    %60 = vector.load %arg3[%c8, %c0_28, %c0_29] : memref<9x3x32xbf16, #tpu.memory_space<vmem>>, vector<1x3x32xbf16>
    %61 = vector.shape_cast %60 : vector<1x3x32xbf16> to vector<3x32xbf16>
    %cst_30 = arith.constant dense<0.000000e+00> : vector<256x32xf32>
    %62 = tpu.matmul %59, %61, %cst_30 {dimension_numbers = #tpu.dot_dimension_numbers<[1], [0], [0], [1], [0, 0, 1, 1], [], []>} : vector<256x3xbf16>, vector<3x32xbf16>, vector<256x32xf32> -> vector<256x32xf32>
    %63 = arith.addf %56, %62 : vector<256x32xf32>
    %c0_31 = arith.constant 0 : index
    %c0_32 = arith.constant 0 : index
    %64 = vector.load %arg4[%c0_31, %c0_32] : memref<1x32xf32, #tpu.memory_space<vmem>>, vector<1x32xf32>
    %65 = vector.broadcast %64 : vector<1x32xf32> to vector<256x32xf32>
    %66 = arith.addf %63, %65 : vector<256x32xf32>
    %c0_33 = arith.constant 0 : index
    %c0_34 = arith.constant 0 : index
    %c0_35 = arith.constant 0 : index
    %67 = vector.load %arg5[%c0_33, %c0_34, %c0_35] : memref<1x256x32xf32, #tpu.memory_space<vmem>>, vector<1x256x32xf32>
    %68 = vector.shape_cast %67 : vector<1x256x32xf32> to vector<256x32xf32>
    %69 = vector.shape_cast %66 : vector<256x32xf32> to vector<1x256x32xf32>
    tpu.vector_store %arg5[%c0_33, %c0_34, %c0_35], %69 {strides = array<i32>} : memref<1x256x32xf32, #tpu.memory_space<vmem>>, vector<1x256x32xf32>,
    return
  }
  func.func @transform_0(%arg0: i32, %arg1: i32) -> (i32, i32, i32, i32, i32) {
    %c0_i32 = arith.constant 0 : i32
    %c0_i32_0 = arith.constant 0 : i32
    %c0_i32_1 = arith.constant 0 : i32
    %c0_i32_2 = arith.constant 0 : i32
    return %arg0, %arg1, %c0_i32, %c0_i32_0, %c0_i32_1 : i32, i32, i32, i32, i32
  }
  func.func @transform_1(%arg0: i32, %arg1: i32) -> (i32, i32, i32) {
    %c0_i32 = arith.constant 0 : i32
    %c0_i32_0 = arith.constant 0 : i32
    %c0_i32_1 = arith.constant 0 : i32
    %c0_i32_2 = arith.constant 0 : i32
    return %c0_i32, %c0_i32_0, %c0_i32_1 : i32, i32, i32
  }
  func.func @transform_2(%arg0: i32, %arg1: i32) -> (i32, i32) {
    %c0_i32 = arith.constant 0 : i32
    %c0_i32_0 = arith.constant 0 : i32
    %c0_i32_1 = arith.constant 0 : i32
    return %c0_i32, %c0_i32_0 : i32, i32
  }
  func.func @transform_3(%arg0: i32, %arg1: i32) -> (i32, i32, i32) {
    %c0_i32 = arith.constant 0 : i32
    %c0_i32_0 = arith.constant 0 : i32
    return %arg0, %arg1, %c0_i32 : i32, i32, i32
  }
}

module attributes {stable_mosaic.version = 11 : i64} {
  func.func @_fused_kernel(%arg0: i32, %arg1: i32, %arg2: memref<1x1024x32xbf16, #tpu.memory_space<vmem>>, %arg3: memref<1x1024x3xf32, #tpu.memory_space<vmem>>, %arg4: memref<32x128xbf16, #tpu.memory_space<vmem>>, %arg5: memref<1x128xf32, #tpu.memory_space<vmem>>, %arg6: memref<64x64xbf16, #tpu.memory_space<vmem>>, %arg7: memref<1x64xf32, #tpu.memory_space<vmem>>, %arg8: memref<64x8xbf16, #tpu.memory_space<vmem>>, %arg9: memref<64x8xbf16, #tpu.memory_space<vmem>>, %arg10: memref<1x8xf32, #tpu.memory_space<vmem>>, %arg11: memref<1x1024x3xf32, #tpu.memory_space<vmem>>, %arg12: memref<1x1024x2xf32, #tpu.memory_space<vmem>>) attributes {dimension_semantics = [#tpu.dimension_semantics<parallel>, #tpu.dimension_semantics<parallel>], iteration_bounds = array<i64: 2, 1>, scalar_prefetch = 0 : i64, scratch_operands = 0 : i64, tpu.core_type = #tpu.core_type<tc>, window_params = [{transform_indices = @transform_0, window_bounds = array<i64: 1, 1024, 32>}, {transform_indices = @transform_1, window_bounds = array<i64: 1, 1024, 3>}, {pipeline_mode = #tpu.pipeline_mode<synchronous>, transform_indices = @transform_2, window_bounds = array<i64: 32, 128>}, {pipeline_mode = #tpu.pipeline_mode<synchronous>, transform_indices = @transform_3, window_bounds = array<i64: 1, 128>}, {pipeline_mode = #tpu.pipeline_mode<synchronous>, transform_indices = @transform_4, window_bounds = array<i64: 64, 64>}, {pipeline_mode = #tpu.pipeline_mode<synchronous>, transform_indices = @transform_5, window_bounds = array<i64: 1, 64>}, {pipeline_mode = #tpu.pipeline_mode<synchronous>, transform_indices = @transform_6, window_bounds = array<i64: 64, 8>}, {pipeline_mode = #tpu.pipeline_mode<synchronous>, transform_indices = @transform_7, window_bounds = array<i64: 64, 8>}, {pipeline_mode = #tpu.pipeline_mode<synchronous>, transform_indices = @transform_8, window_bounds = array<i64: 1, 8>}, {transform_indices = @transform_9, window_bounds = array<i64: 1, 1024, 3>}, {transform_indices = @transform_10, window_bounds = array<i64: 1, 1024, 2>}]} {
    %c0 = arith.constant 0 : index
    %c0_0 = arith.constant 0 : index
    %c0_1 = arith.constant 0 : index
    %0 = vector.load %arg2[%c0, %c0_0, %c0_1] : memref<1x1024x32xbf16, #tpu.memory_space<vmem>>, vector<1x1024x32xbf16>
    %1 = vector.shape_cast %0 : vector<1x1024x32xbf16> to vector<1024x32xbf16>
    %c0_2 = arith.constant 0 : index
    %c0_3 = arith.constant 0 : index
    %2 = vector.load %arg4[%c0_2, %c0_3] : memref<32x128xbf16, #tpu.memory_space<vmem>>, vector<32x128xbf16>
    %cst = arith.constant dense<0.000000e+00> : vector<1024x128xf32>
    %3 = tpu.matmul %1, %2, %cst {dimension_numbers = #tpu.dot_dimension_numbers<[1], [0], [0], [1], [0, 0, 1, 1], [], []>} : vector<1024x32xbf16>, vector<32x128xbf16>, vector<1024x128xf32> -> vector<1024x128xf32>
    %c0_4 = arith.constant 0 : index
    %c0_5 = arith.constant 0 : index
    %4 = vector.load %arg5[%c0_4, %c0_5] : memref<1x128xf32, #tpu.memory_space<vmem>>, vector<1x128xf32>
    %5 = vector.broadcast %4 : vector<1x128xf32> to vector<1024x128xf32>
    %6 = arith.addf %3, %5 : vector<1024x128xf32>
    %cst_6 = arith.constant 0.000000e+00 : f32
    %7 = vector.broadcast %cst_6 : f32 to vector<1024x128xf32>
    %8 = arith.maximumf %6, %7 : vector<1024x128xf32>
    %9 = vector.extract_strided_slice %8 {offsets = [0, 64], sizes = [1024, 64], strides = [1, 1]} : vector<1024x128xf32> to vector<1024x64xf32>
    %10 = arith.truncf %9 : vector<1024x64xf32> to vector<1024x64xbf16>
    %c0_7 = arith.constant 0 : index
    %c0_8 = arith.constant 0 : index
    %11 = vector.load %arg6[%c0_7, %c0_8] : memref<64x64xbf16, #tpu.memory_space<vmem>>, vector<64x64xbf16>
    %cst_9 = arith.constant dense<0.000000e+00> : vector<1024x64xf32>
    %12 = tpu.matmul %10, %11, %cst_9 {dimension_numbers = #tpu.dot_dimension_numbers<[1], [0], [0], [1], [0, 0, 1, 1], [], []>} : vector<1024x64xbf16>, vector<64x64xbf16>, vector<1024x64xf32> -> vector<1024x64xf32>
    %c0_10 = arith.constant 0 : index
    %c0_11 = arith.constant 0 : index
    %13 = vector.load %arg7[%c0_10, %c0_11] : memref<1x64xf32, #tpu.memory_space<vmem>>, vector<1x64xf32>
    %14 = vector.broadcast %13 : vector<1x64xf32> to vector<1024x64xf32>
    %15 = arith.addf %12, %14 : vector<1024x64xf32>
    %cst_12 = arith.constant 0.000000e+00 : f32
    %16 = vector.broadcast %cst_12 : f32 to vector<1024x64xf32>
    %17 = arith.maximumf %15, %16 : vector<1024x64xf32>
    %18 = vector.extract_strided_slice %8 {offsets = [0, 0], sizes = [1024, 64], strides = [1, 1]} : vector<1024x128xf32> to vector<1024x64xf32>
    %19 = arith.truncf %18 : vector<1024x64xf32> to vector<1024x64xbf16>
    %c0_13 = arith.constant 0 : index
    %c0_14 = arith.constant 0 : index
    %20 = vector.load %arg8[%c0_13, %c0_14] : memref<64x8xbf16, #tpu.memory_space<vmem>>, vector<64x8xbf16>
    %cst_15 = arith.constant dense<0.000000e+00> : vector<1024x8xf32>
    %21 = tpu.matmul %19, %20, %cst_15 {dimension_numbers = #tpu.dot_dimension_numbers<[1], [0], [0], [1], [0, 0, 1, 1], [], []>} : vector<1024x64xbf16>, vector<64x8xbf16>, vector<1024x8xf32> -> vector<1024x8xf32>
    %22 = arith.truncf %17 : vector<1024x64xf32> to vector<1024x64xbf16>
    %c0_16 = arith.constant 0 : index
    %c0_17 = arith.constant 0 : index
    %23 = vector.load %arg9[%c0_16, %c0_17] : memref<64x8xbf16, #tpu.memory_space<vmem>>, vector<64x8xbf16>
    %cst_18 = arith.constant dense<0.000000e+00> : vector<1024x8xf32>
    %24 = tpu.matmul %22, %23, %cst_18 {dimension_numbers = #tpu.dot_dimension_numbers<[1], [0], [0], [1], [0, 0, 1, 1], [], []>} : vector<1024x64xbf16>, vector<64x8xbf16>, vector<1024x8xf32> -> vector<1024x8xf32>
    %25 = arith.addf %21, %24 : vector<1024x8xf32>
    %c0_19 = arith.constant 0 : index
    %c0_20 = arith.constant 0 : index
    %26 = vector.load %arg10[%c0_19, %c0_20] : memref<1x8xf32, #tpu.memory_space<vmem>>, vector<1x8xf32>
    %27 = vector.broadcast %26 : vector<1x8xf32> to vector<1024x8xf32>
    %28 = arith.addf %25, %27 : vector<1024x8xf32>
    %29 = vector.extract_strided_slice %28 {offsets = [0, 0], sizes = [1024, 2], strides = [1, 1]} : vector<1024x8xf32> to vector<1024x2xf32>
    %cst_21 = arith.constant dense<0xFF800000> : vector<1024xf32>
    %30 = vector.multi_reduction <maximumf>, %29, %cst_21 [1] : vector<1024x2xf32> to vector<1024xf32>
    %31 = vector.shape_cast %30 : vector<1024xf32> to vector<1024x1xf32>
    %32 = vector.broadcast %31 : vector<1024x1xf32> to vector<1024x2xf32>
    %33 = arith.subf %29, %32 : vector<1024x2xf32>
    %34 = math.exp %33 : vector<1024x2xf32>
    %cst_22 = arith.constant dense<0.000000e+00> : vector<1024xf32>
    %35 = vector.multi_reduction <add>, %34, %cst_22 [1] : vector<1024x2xf32> to vector<1024xf32>
    %36 = vector.shape_cast %35 : vector<1024xf32> to vector<1024x1xf32>
    %37 = tpu.reciprocal %36 {approx = true} : vector<1024x1xf32> -> vector<1024x1xf32>
    %38 = vector.broadcast %37 : vector<1024x1xf32> to vector<1024x2xf32>
    %39 = arith.mulf %34, %38 : vector<1024x2xf32>
    %40 = vector.extract_strided_slice %39 {offsets = [0, 0], sizes = [1024, 1], strides = [1, 1]} : vector<1024x2xf32> to vector<1024x1xf32>
    %41 = vector.extract_strided_slice %28 {offsets = [0, 2], sizes = [1024, 3], strides = [1, 1]} : vector<1024x8xf32> to vector<1024x3xf32>
    %42 = vector.broadcast %40 : vector<1024x1xf32> to vector<1024x3xf32>
    %43 = arith.mulf %42, %41 : vector<1024x3xf32>
    %44 = vector.extract_strided_slice %39 {offsets = [0, 1], sizes = [1024, 1], strides = [1, 1]} : vector<1024x2xf32> to vector<1024x1xf32>
    %45 = vector.extract_strided_slice %28 {offsets = [0, 5], sizes = [1024, 3], strides = [1, 1]} : vector<1024x8xf32> to vector<1024x3xf32>
    %46 = vector.broadcast %44 : vector<1024x1xf32> to vector<1024x3xf32>
    %47 = arith.mulf %46, %45 : vector<1024x3xf32>
    %48 = arith.addf %43, %47 : vector<1024x3xf32>
    %c0_23 = arith.constant 0 : index
    %c0_24 = arith.constant 0 : index
    %c0_25 = arith.constant 0 : index
    %49 = vector.load %arg3[%c0_23, %c0_24, %c0_25] : memref<1x1024x3xf32, #tpu.memory_space<vmem>>, vector<1x1024x3xf32>
    %50 = vector.shape_cast %49 : vector<1x1024x3xf32> to vector<1024x3xf32>
    %51 = arith.addf %48, %50 : vector<1024x3xf32>
    %c0_26 = arith.constant 0 : index
    %c0_27 = arith.constant 0 : index
    %c0_28 = arith.constant 0 : index
    %52 = vector.load %arg11[%c0_26, %c0_27, %c0_28] : memref<1x1024x3xf32, #tpu.memory_space<vmem>>, vector<1x1024x3xf32>
    %53 = vector.shape_cast %52 : vector<1x1024x3xf32> to vector<1024x3xf32>
    %54 = vector.shape_cast %51 : vector<1024x3xf32> to vector<1x1024x3xf32>
    tpu.vector_store %arg11[%c0_26, %c0_27, %c0_28], %54 {strides = array<i32>} : memref<1x1024x3xf32, #tpu.memory_space<vmem>>, vector<1x1024x3xf32>,
    %c0_29 = arith.constant 0 : index
    %c0_30 = arith.constant 0 : index
    %c0_31 = arith.constant 0 : index
    %55 = vector.load %arg12[%c0_29, %c0_30, %c0_31] : memref<1x1024x2xf32, #tpu.memory_space<vmem>>, vector<1x1024x2xf32>
    %56 = vector.shape_cast %55 : vector<1x1024x2xf32> to vector<1024x2xf32>
    %57 = vector.shape_cast %39 : vector<1024x2xf32> to vector<1x1024x2xf32>
    tpu.vector_store %arg12[%c0_29, %c0_30, %c0_31], %57 {strides = array<i32>} : memref<1x1024x2xf32, #tpu.memory_space<vmem>>, vector<1x1024x2xf32>,
    return
  }
  func.func @transform_0(%arg0: i32, %arg1: i32) -> (i32, i32, i32) {
    %c0_i32 = arith.constant 0 : i32
    %c0_i32_0 = arith.constant 0 : i32
    return %arg0, %arg1, %c0_i32 : i32, i32, i32
  }
  func.func @transform_1(%arg0: i32, %arg1: i32) -> (i32, i32, i32) {
    %c0_i32 = arith.constant 0 : i32
    %c0_i32_0 = arith.constant 0 : i32
    return %arg0, %arg1, %c0_i32 : i32, i32, i32
  }
  func.func @transform_2(%arg0: i32, %arg1: i32) -> (i32, i32) {
    %c0_i32 = arith.constant 0 : i32
    %c0_i32_0 = arith.constant 0 : i32
    %c0_i32_1 = arith.constant 0 : i32
    return %c0_i32, %c0_i32_0 : i32, i32
  }
  func.func @transform_3(%arg0: i32, %arg1: i32) -> (i32, i32) {
    %c0_i32 = arith.constant 0 : i32
    %c0_i32_0 = arith.constant 0 : i32
    %c0_i32_1 = arith.constant 0 : i32
    return %c0_i32, %c0_i32_0 : i32, i32
  }
  func.func @transform_4(%arg0: i32, %arg1: i32) -> (i32, i32) {
    %c0_i32 = arith.constant 0 : i32
    %c0_i32_0 = arith.constant 0 : i32
    %c0_i32_1 = arith.constant 0 : i32
    return %c0_i32, %c0_i32_0 : i32, i32
  }
  func.func @transform_5(%arg0: i32, %arg1: i32) -> (i32, i32) {
    %c0_i32 = arith.constant 0 : i32
    %c0_i32_0 = arith.constant 0 : i32
    %c0_i32_1 = arith.constant 0 : i32
    return %c0_i32, %c0_i32_0 : i32, i32
  }
  func.func @transform_6(%arg0: i32, %arg1: i32) -> (i32, i32) {
    %c0_i32 = arith.constant 0 : i32
    %c0_i32_0 = arith.constant 0 : i32
    %c0_i32_1 = arith.constant 0 : i32
    return %c0_i32, %c0_i32_0 : i32, i32
  }
  func.func @transform_7(%arg0: i32, %arg1: i32) -> (i32, i32) {
    %c0_i32 = arith.constant 0 : i32
    %c0_i32_0 = arith.constant 0 : i32
    %c0_i32_1 = arith.constant 0 : i32
    return %c0_i32, %c0_i32_0 : i32, i32
  }
  func.func @transform_8(%arg0: i32, %arg1: i32) -> (i32, i32) {
    %c0_i32 = arith.constant 0 : i32
    %c0_i32_0 = arith.constant 0 : i32
    %c0_i32_1 = arith.constant 0 : i32
    return %c0_i32, %c0_i32_0 : i32, i32
  }
  func.func @transform_9(%arg0: i32, %arg1: i32) -> (i32, i32, i32) {
    %c0_i32 = arith.constant 0 : i32
    %c0_i32_0 = arith.constant 0 : i32
    return %arg0, %arg1, %c0_i32 : i32, i32, i32
  }
  func.func @transform_10(%arg0: i32, %arg1: i32) -> (i32, i32, i32) {
    %c0_i32 = arith.constant 0 : i32
    %c0_i32_0 = arith.constant 0 : i32
    return %arg0, %arg1, %c0_i32 : i32, i32, i32
  }
}

</mosaic_0001>

<llo_original>
// kernel: pcsr_forward_train.2
$region0: #{pcsr_forward_train.2}
  #allocation0 [shape = 'u32[]', space=smem, size = 0x4, offset = 0x4, fixed_abs, tag = 'smem constant byte address 0x4 - core index']
  #allocation1 [shape = 'u32[72,128]{1,0:T(1,128)}', space=vmem, size = 0x9000, scoped, tag = 'internal scratch']
  %s0 = inlined_call_operand.vmem [shape: f32[2,1,18,18,3], index: 0, kind: input, shape index: {}]
  %s1 = inlined_call_operand.vmem [shape: bf16[9,3,32], index: 1, kind: input, shape index: {}]
  %s2 = inlined_call_operand.vmem [shape: f32[1,32], index: 2, kind: input, shape index: {}]
  %s3 = inlined_call_operand.vmem [shape: f32[2,256,32], index: 3, kind: output, shape index: {}]
  %s4 = sld [smem:[#allocation0]]
  $region45: #{pcsr_forward_train.2} parent=0
    _
  %s6 = ssub.s32 1, %s4
  %s7 = scalar_select 0, %s6, %s4
  loop: start=0, step=1, limit=4
  $region2: #{pcsr_forward_train.2} parent=0 // loop_pre_header
    _
  $region3: #{pcsr_forward_train.2} parent=0 // loop_header
    %s9 = sphi 0, %s13
    %p10 = scmp.ge.s32.totalorder %s9, 4
    %s16 = sphi 0, %s28
    %s17 = sphi 0, %s24
    %s18 = sphi 0, %s16
    %s19 = sphi 0, %s17
    %s20 = sphi 0, %s18
    %s21 = sphi 0, %s19
    %s33 = sphi 0, %s35
    %s36 = sphi 0, %s33
    %s37 = sphi 0, %s36
    %s53 = sphi 0, %s37
    %s57 = sphi 0, %s57
    %s59 = sphi 0, %s57
    %s60 = sphi 0, %s59
    %s74 = sphi 0, %s60
    %s78 = sphi 0, %s78
    %s80 = sphi 0, %s78
    %s81 = sphi 0, %s80
    %s95 = sphi 0, %s81
    %s103 = sphi 0, %s105
    %s106 = sphi 0, %s103
    %s107 = sphi 0, %s106
    %s123 = sphi 0, %s107
  $region4: #{pcsr_forward_train.2} parent=0 // loop_header_branch
    %12 = sbr.rel (%p10) target = $region8
  $region5: #{pcsr_forward_train.2} parent=0 // loop_body
    %s14 = ssub.s32 %s9, 1
    %s15 = ssub.s32 %s9, 2
    %s22 = sadd.s32 1, %s17
    %p23 = scmp.ge.s32.totalorder %s22, 1
    %s24 = scalar_select %p23, 0, %s22
    %s25 = sadd.s32 1, %s16
    %s26 = scalar_select %p23, %s25, %s16
    %p27 = scmp.ge.s32.totalorder %s26, 2
    %s28 = scalar_select %p27, 0, %s26
    %s29 = ssub.s32 %s16, %s28
    %s30 = ssub.s32 %s17, %s24
    %s31 = sor.u32 %s29, %s30
    %p32 = scmp.eq.s32.totalorder %s31, 0
    %s34 = sadd.s32 %s33, 1
    %s35 = scalar_select %p32, %s33, %s34
    %p38 = pneg %p32
    %p39 = scmp.eq.s32.totalorder %s9, 1
    %p40 = por %p38, %p39
    %p41 = scmp.ne.s32.totalorder %s33, %s36
    %p42 = scmp.eq.s32.totalorder %s9, 0
    %p43 = por %p41, %p42
    %p44 = scmp.ne.s32.totalorder %s33, %s36
    %p45 = scmp.eq.s32.totalorder %s14, 1
    %p46 = por %p44, %p45
    %p47 = scmp.ne.s32.totalorder %s36, %s37
    %p48 = scmp.eq.s32.totalorder %s14, 0
    %p49 = por %p47, %p48
    %p50 = scmp.ne.s32.totalorder %s36, %s37
    %p51 = scmp.eq.s32.totalorder %s15, 1
    %p52 = por %p50, %p51
    %p54 = scmp.ne.s32.totalorder %s37, %s53
    %p55 = scmp.eq.s32.totalorder %s15, 0
    %p56 = por %p54, %p55
    %s58 = sadd.s32 %s57, 1
    %p61 = scmp.eq.s32.totalorder %s9, 1
    %p62 = scmp.ne.s32.totalorder %s57, %s59
    %p63 = scmp.eq.s32.totalorder %s9, 0
    %p64 = por %p62, %p63
    %p65 = scmp.ne.s32.totalorder %s57, %s59
    %p66 = scmp.eq.s32.totalorder %s14, 1
    %p67 = por %p65, %p66
    %p68 = scmp.ne.s32.totalorder %s59, %s60
    %p69 = scmp.eq.s32.totalorder %s14, 0
    %p70 = por %p68, %p69
    %p71 = scmp.ne.s32.totalorder %s59, %s60
    %p72 = scmp.eq.s32.totalorder %s15, 1
    %p73 = por %p71, %p72
    %p75 = scmp.ne.s32.totalorder %s60, %s74
    %p76 = scmp.eq.s32.totalorder %s15, 0
    %p77 = por %p75, %p76
    %s79 = sadd.s32 %s78, 1
    %p82 = scmp.eq.s32.totalorder %s9, 1
    %p83 = scmp.ne.s32.totalorder %s78, %s80
    %p84 = scmp.eq.s32.totalorder %s9, 0
    %p85 = por %p83, %p84
    %p86 = scmp.ne.s32.totalorder %s78, %s80
    %p87 = scmp.eq.s32.totalorder %s14, 1
    %p88 = por %p86, %p87
    %p89 = scmp.ne.s32.totalorder %s80, %s81
    %p90 = scmp.eq.s32.totalorder %s14, 0
    %p91 = por %p89, %p90
    %p92 = scmp.ne.s32.totalorder %s80, %s81
    %p93 = scmp.eq.s32.totalorder %s15, 1
    %p94 = por %p92, %p93
    %p96 = scmp.ne.s32.totalorder %s81, %s95
    %p97 = scmp.eq.s32.totalorder %s15, 0
    %p98 = por %p96, %p97
    %s99 = ssub.s32 %s16, %s28
    %s100 = ssub.s32 %s17, %s24
    %s101 = sor.u32 %s99, %s100
    %p102 = scmp.eq.s32.totalorder %s101, 0
    %s104 = sadd.s32 %s103, 1
    %s105 = scalar_select %p102, %s103, %s104
    %p108 = pneg %p102
    %p109 = scmp.eq.s32.totalorder %s9, 1
    %p110 = por %p108, %p109
    %p111 = scmp.ne.s32.totalorder %s103, %s106
    %p112 = scmp.eq.s32.totalorder %s9, 0
    %p113 = por %p111, %p112
    %p114 = scmp.ne.s32.totalorder %s103, %s106
    %p115 = scmp.eq.s32.totalorder %s14, 1
    %p116 = por %p114, %p115
    %p117 = scmp.ne.s32.totalorder %s106, %s107
    %p118 = scmp.eq.s32.totalorder %s14, 0
    %p119 = por %p117, %p118
    %p120 = scmp.ne.s32.totalorder %s106, %s107
    %p121 = scmp.eq.s32.totalorder %s15, 1
    %p122 = por %p120, %p121
    %p124 = scmp.ne.s32.totalorder %s107, %s123
    %p125 = scmp.eq.s32.totalorder %s15, 0
    %p126 = por %p124, %p125
    %p127 = scmp.le.s32.totalorder 1, %s9
    %p128 = scmp.lt.s32.totalorder %s9, 3
    %p129 = pnand %p127, %p128
    %p130 = pneg %p129
    // Predicated region
    $region9: #{pcsr_forward_train.2} parent=5 // pred_check
      _
    $region10: #{pcsr_forward_train.2} parent=5 // pred_check_branch
      %132 = sbr.rel (%p129) target = $region12
    $region11: #{pcsr_forward_train.2} parent=5 // pred_region
      %s133 = ssub.s32 %s9, 1
      // Predicated region
      $region13: #{pcsr_forward_train.2} parent=11 // pred_check
        %p134 = pneg %p70
      $region14: #{pcsr_forward_train.2} parent=11 // pred_check_branch
        %136 = sbr.rel (%p134) target = $region16
      $region15: #{pcsr_forward_train.2} parent=11 // pred_region
        _
      $region16: #{pcsr_forward_train.2} parent=11 // pred_fallthru
        _
      // Predicated region
      $region17: #{pcsr_forward_train.2} parent=11 // pred_check
        %p137 = pneg %p91
      $region18: #{pcsr_forward_train.2} parent=11 // pred_check_branch
        %139 = sbr.rel (%p137) target = $region20
      $region19: #{pcsr_forward_train.2} parent=11 // pred_region
        _
      $region20: #{pcsr_forward_train.2} parent=11 // pred_fallthru
        _
    $region12: #{pcsr_forward_train.2} parent=5 // pred_fallthru
      _
    %p140 = scmp.lt.s32.totalorder %s9, 2
    // Predicated region
    $region21: #{pcsr_forward_train.2} parent=5 // pred_check
      %p141 = pneg %p140
    $region22: #{pcsr_forward_train.2} parent=5 // pred_check_branch
      %143 = sbr.rel (%p141) target = $region24
    $region23: #{pcsr_forward_train.2} parent=5 // pred_region
      // Predicated region
      $region25: #{pcsr_forward_train.2} parent=23 // pred_check
        %p144 = pneg %p43
      $region26: #{pcsr_forward_train.2} parent=23 // pred_check_branch
        %146 = sbr.rel (%p144) target = $region28
      $region27: #{pcsr_forward_train.2} parent=23 // pred_region
        %p147 = scmp.lt.s32.totalorder %s16, 1
        %s148 = scalar_select %p147, %s16, 1
        %p149 = scmp.lt.s32.totalorder %s17, 0
        %s150 = scalar_select %p149, %s17, 0
        %s151 = smul.addr %s150, 54
        %s152 = smul.addr %s148, 54
        %s153 = sadd.s32 %s151, %s152
        %s154 = smul.addr %s153, 8
        %s155 = scalar_lea.vmem %s0, %s154
      $region28: #{pcsr_forward_train.2} parent=23 // pred_fallthru
        _
    $region24: #{pcsr_forward_train.2} parent=5 // pred_fallthru
      _
    %p156 = scmp.le.s32.totalorder 1, %s9
    %p157 = scmp.lt.s32.totalorder %s9, 3
    %p158 = pnand %p156, %p157
    %p159 = pneg %p158
    // Predicated region
    $region29: #{pcsr_forward_train.2} parent=5 // pred_check
      _
    $region30: #{pcsr_forward_train.2} parent=5 // pred_check_branch
      %161 = sbr.rel (%p158) target = $region32
    $region31: #{pcsr_forward_train.2} parent=5 // pred_region
      %s162 = ssub.s32 %s9, 1
      %p163 = scmp.lt.s32.totalorder %s18, 1
      %s164 = scalar_select %p163, %s18, 1
      %p165 = scmp.lt.s32.totalorder %s19, 0
      %s166 = scalar_select %p165, %s19, 0
      %s167 = smul.addr %s166, 54
      %s168 = smul.addr %s164, 54
      %s169 = sadd.s32 %s167, %s168
      %s170 = smul.addr %s169, 8
      %s171 = scalar_lea.vmem %s0, %s170
      %p172 = pneg %p49
      %p173 = pneg %p46
      %p174 = pneg %p70
      %p175 = pneg %p67
      %p176 = pneg %p91
      %p177 = pneg %p88
      %p178 = pneg %p119
      %p179 = pneg %p116
      %s180 = smul.u32 32, %s19
      %p181 = scmp.lt.s32.totalorder %s18, 1
      %s182 = scalar_select %p181, %s18, 1
      %p183 = scmp.lt.s32.totalorder %s180, 31
      %s184 = scalar_select %p183, %s180, 31
      %s185 = smul.addr %s182, 32
      %s186 = sadd.s32 %s184, %s185
      %s187 = smul.addr %s186, 8
      %s188 = scalar_lea.vmem %s3, %s187
      %p189 = scmp.lt.s32.totalorder %s18, 1
      %s190 = scalar_select %p189, %s18, 1
      %p191 = scmp.lt.s32.totalorder %s19, 0
      %s192 = scalar_select %p191, %s19, 0
      %s193 = smul.addr %s192, 54
      %s194 = smul.addr %s190, 54
      %s195 = sadd.s32 %s193, %s194
      %s196 = smul.addr %s195, 8
      %s197 = scalar_lea.vmem %s0, %s196
      %s198 = smul.u32 32, %s19
      %p199 = scmp.lt.s32.totalorder %s18, 1
      %s200 = scalar_select %p199, %s18, 1
      %p201 = scmp.lt.s32.totalorder %s198, 31
      %s202 = scalar_select %p201, %s198, 31
      %s203 = smul.addr %s200, 32
      %s204 = sadd.s32 %s202, %s203
      %s205 = smul.addr %s204, 8
      %s206 = scalar_lea.vmem %s3, %s205
      %s207 = smul.u32 32, %s19
      %v209 = vld [vmem:[%s197] sm:$0xff]
      %v210 = vld [vmem:[%s197 + $0x8] sm:$0xff]
      %v211 = vld [vmem:[%s197 + $0x10] sm:$0x3]
      %v212 = vld [vmem:[%s197 + $0x18] sm:$0xff]
      %v213 = vld [vmem:[%s197 + $0x20] sm:$0xff]
      %v214 = vld [vmem:[%s197 + $0x28] sm:$0x3]
      %v215 = vld [vmem:[%s197 + $0x30] sm:$0xff]
      %v216 = vld [vmem:[%s197 + $0x38] sm:$0xff]
      %v217 = vld [vmem:[%s197 + $0x40] sm:$0x3]
      %v218 = vld [vmem:[%s197 + $0x48] sm:$0xff]
      %v219 = vld [vmem:[%s197 + $0x50] sm:$0xff]
      %v220 = vld [vmem:[%s197 + $0x58] sm:$0x3]
      %v221 = vld [vmem:[%s197 + $0x60] sm:$0xff]
      %v222 = vld [vmem:[%s197 + $0x68] sm:$0xff]
      %v223 = vld [vmem:[%s197 + $0x70] sm:$0x3]
      %v224 = vld [vmem:[%s197 + $0x78] sm:$0xff]
      %v225 = vld [vmem:[%s197 + $0x80] sm:$0xff]
      %v226 = vld [vmem:[%s197 + $0x88] sm:$0x3]
      %v227 = vld [vmem:[%s197 + $0x90] sm:$0xff]
      %v228 = vld [vmem:[%s197 + $0x98] sm:$0xff]
      %v229 = vld [vmem:[%s197 + $0xa0] sm:$0x3]
      %v230 = vld [vmem:[%s197 + $0xa8] sm:$0xff]
      %v231 = vld [vmem:[%s197 + $0xb0] sm:$0xff]
      %v232 = vld [vmem:[%s197 + $0xb8] sm:$0x3]
      %v233 = vld [vmem:[%s197 + $0xc0] sm:$0xff]
      %v234 = vld [vmem:[%s197 + $0xc8] sm:$0xff]
      %v235 = vld [vmem:[%s197 + $0xd0] sm:$0x3]
      %v236 = vld [vmem:[%s197 + $0xd8] sm:$0xff]
      %v237 = vld [vmem:[%s197 + $0xe0] sm:$0xff]
      %v238 = vld [vmem:[%s197 + $0xe8] sm:$0x3]
      %v239 = vld [vmem:[%s197 + $0xf0] sm:$0xff]
      %v240 = vld [vmem:[%s197 + $0xf8] sm:$0xff]
      %v241 = vld [vmem:[%s197 + $0x100] sm:$0x3]
      %v242 = vld [vmem:[%s197 + $0x108] sm:$0xff]
      %v243 = vld [vmem:[%s197 + $0x110] sm:$0xff]
      %v244 = vld [vmem:[%s197 + $0x118] sm:$0x3]
      %v245 = vld [vmem:[%s197 + $0x120] sm:$0xff]
      %v246 = vld [vmem:[%s197 + $0x128] sm:$0xff]
      %v247 = vld [vmem:[%s197 + $0x130] sm:$0x3]
      %v248 = vld [vmem:[%s197 + $0x138] sm:$0xff]
      %v249 = vld [vmem:[%s197 + $0x140] sm:$0xff]
      %v250 = vld [vmem:[%s197 + $0x148] sm:$0x3]
      %v251 = vld [vmem:[%s197 + $0x150] sm:$0xff]
      %v252 = vld [vmem:[%s197 + $0x158] sm:$0xff]
      %v253 = vld [vmem:[%s197 + $0x160] sm:$0x3]
      %v254 = vld [vmem:[%s197 + $0x168] sm:$0xff]
      %v255 = vld [vmem:[%s197 + $0x170] sm:$0xff]
      %v256 = vld [vmem:[%s197 + $0x178] sm:$0x3]
      %v257 = vld [vmem:[%s197 + $0x180] sm:$0xff]
      %v258 = vld [vmem:[%s197 + $0x188] sm:$0xff]
      %v259 = vld [vmem:[%s197 + $0x190] sm:$0x3]
      %v260 = vld [vmem:[%s197 + $0x198] sm:$0xff]
      %v261 = vld [vmem:[%s197 + $0x1a0] sm:$0xff]
      %v262 = vld [vmem:[%s197 + $0x1a8] sm:$0x3]
      %v263 = vpack.c.bf16 %v210, %v209
      %v264 = vpack.c.bf16 %v213, %v212
      %v265 = vpack.c.bf16 %v216, %v215
      %v266 = vpack.c.bf16 %v219, %v218
      %v267 = vpack.c.bf16 %v222, %v221
      %v268 = vpack.c.bf16 %v225, %v224
      %v269 = vpack.c.bf16 %v228, %v227
      %v270 = vpack.c.bf16 %v231, %v230
      %v271 = vpack.c.bf16 %v234, %v233
      %v272 = vpack.c.bf16 %v237, %v236
      %v273 = vpack.c.bf16 %v240, %v239
      %v274 = vpack.c.bf16 %v243, %v242
      %v275 = vpack.c.bf16 %v246, %v245
      %v276 = vpack.c.bf16 %v249, %v248
      %v277 = vpack.c.bf16 %v252, %v251
      %v278 = vpack.c.bf16 %v255, %v254
      %v279 = vld [vmem:[%s1] sm:$0x3]
      %vm328 = vcmask 1046528
      %v329 = vrot.slane %v209, 1
      %v330 = vrot.slane %v210, 1
      %v331 = vsel %vm328, %v329, %v330
      %v332 = vrot.slane %v211, 1
      %v333 = vsel %vm328, %v330, %v332
      %v334 = vrot.slane %v212, 1
      %v335 = vrot.slane %v213, 1
      %v336 = vsel %vm328, %v334, %v335
      %v337 = vrot.slane %v214, 1
      %v338 = vsel %vm328, %v335, %v337
      %v339 = vrot.slane %v215, 1
      %v340 = vrot.slane %v216, 1
      %v341 = vsel %vm328, %v339, %v340
      %v342 = vrot.slane %v217, 1
      %v343 = vsel %vm328, %v340, %v342
      %v344 = vrot.slane %v218, 1
      %v345 = vrot.slane %v219, 1
      %v346 = vsel %vm328, %v344, %v345
      %v347 = vrot.slane %v220, 1
      %v348 = vsel %vm328, %v345, %v347
      %v349 = vrot.slane %v221, 1
      %v350 = vrot.slane %v222, 1
      %v351 = vsel %vm328, %v349, %v350
      %v352 = vrot.slane %v223, 1
      %v353 = vsel %vm328, %v350, %v352
      %v354 = vrot.slane %v224, 1
      %v355 = vrot.slane %v225, 1
      %v356 = vsel %vm328, %v354, %v355
      %v357 = vrot.slane %v226, 1
      %v358 = vsel %vm328, %v355, %v357
      %v359 = vrot.slane %v227, 1
      %v360 = vrot.slane %v228, 1
      %v361 = vsel %vm328, %v359, %v360
      %v362 = vrot.slane %v229, 1
      %v363 = vsel %vm328, %v360, %v362
      %v364 = vrot.slane %v230, 1
      %v365 = vrot.slane %v231, 1
      %v366 = vsel %vm328, %v364, %v365
      %v367 = vrot.slane %v232, 1
      %v368 = vsel %vm328, %v365, %v367
      %v369 = vrot.slane %v233, 1
      %v370 = vrot.slane %v234, 1
      %v371 = vsel %vm328, %v369, %v370
      %v372 = vrot.slane %v235, 1
      %v373 = vsel %vm328, %v370, %v372
      %v374 = vrot.slane %v236, 1
      %v375 = vrot.slane %v237, 1
      %v376 = vsel %vm328, %v374, %v375
      %v377 = vrot.slane %v238, 1
      %v378 = vsel %vm328, %v375, %v377
      %v379 = vrot.slane %v239, 1
      %v380 = vrot.slane %v240, 1
      %v381 = vsel %vm328, %v379, %v380
      %v382 = vrot.slane %v241, 1
      %v383 = vsel %vm328, %v380, %v382
      %v384 = vrot.slane %v242, 1
      %v385 = vrot.slane %v243, 1
      %v386 = vsel %vm328, %v384, %v385
      %v387 = vrot.slane %v244, 1
      %v388 = vsel %vm328, %v385, %v387
      %v389 = vrot.slane %v245, 1
      %v390 = vrot.slane %v246, 1
      %v391 = vsel %vm328, %v389, %v390
      %v392 = vrot.slane %v247, 1
      %v393 = vsel %vm328, %v390, %v392
      %v394 = vrot.slane %v248, 1
      %v395 = vrot.slane %v249, 1
      %v396 = vsel %vm328, %v394, %v395
      %v397 = vrot.slane %v250, 1
      %v398 = vsel %vm328, %v395, %v397
      %v399 = vrot.slane %v251, 1
      %v400 = vrot.slane %v252, 1
      %v401 = vsel %vm328, %v399, %v400
      %v402 = vrot.slane %v253, 1
      %v403 = vsel %vm328, %v400, %v402
      %v404 = vrot.slane %v254, 1
      %v405 = vrot.slane %v255, 1
      %v406 = vsel %vm328, %v404, %v405
      %v407 = vrot.slane %v256, 1
      %v408 = vsel %vm328, %v405, %v407
      %v441 = vpack.c.bf16 %v333, %v331
      %v442 = vpack.c.bf16 %v338, %v336
      %v443 = vpack.c.bf16 %v343, %v341
      %v444 = vpack.c.bf16 %v348, %v346
      %v445 = vpack.c.bf16 %v353, %v351
      %v446 = vpack.c.bf16 %v358, %v356
      %v447 = vpack.c.bf16 %v363, %v361
      %v448 = vpack.c.bf16 %v368, %v366
      %v449 = vpack.c.bf16 %v373, %v371
      %v450 = vpack.c.bf16 %v378, %v376
      %v451 = vpack.c.bf16 %v383, %v381
      %v452 = vpack.c.bf16 %v388, %v386
      %v453 = vpack.c.bf16 %v393, %v391
      %v454 = vpack.c.bf16 %v398, %v396
      %v455 = vpack.c.bf16 %v403, %v401
      %v456 = vpack.c.bf16 %v408, %v406
      %s457 = scalar_lea.vmem %s1, 2
      %v458 = vld [vmem:[%s457] sm:$0x3]
      %vm459 = vcmask 23552
      %v461 = vsel %vm459, %v441, 0
      %v464 = vsel %vm459, %v442, 0
      %v467 = vsel %vm459, %v443, 0
      %v470 = vsel %vm459, %v444, 0
      %v473 = vsel %vm459, %v445, 0
      %v476 = vsel %vm459, %v446, 0
      %v479 = vsel %vm459, %v447, 0
      %v482 = vsel %vm459, %v448, 0
      %v485 = vsel %vm459, %v449, 0
      %v488 = vsel %vm459, %v450, 0
      %v491 = vsel %vm459, %v451, 0
      %v494 = vsel %vm459, %v452, 0
      %v497 = vsel %vm459, %v453, 0
      %v500 = vsel %vm459, %v454, 0
      %v503 = vsel %vm459, %v455, 0
      %v506 = vsel %vm459, %v456, 0
      %vm508 = vcmask 1040384
      %vm509 = vcmask 1041408
      %v510 = vsel %vm508, 4294967295, 65535
      %v511 = vsel %vm509, %v510, 0
      %v513 = vand.u32 %v458, %v511
      %515 = vmatpush.bf16.msra.mxu0 0
      %516 = vmatpush.bf16.msra.mxu0 0
      %517 = vmatpush.bf16.msra.mxu0 0
      %518 = vmatpush.bf16.msra.mxu0 0
      %519 = vmatpush.bf16.msra.mxu0 0
      %520 = vmatpush.bf16.msra.mxu0 0
      %521 = vmatpush.bf16.msra.mxu0 0
      %522 = vmatpush.bf16.msra.mxu0 %v513
      %523 = vmatmul.bf16.gmra.mxu0 %v461
      %v524 = vpop.f32.mrf.mxu0
      %v525 = vadd.f32 0.0, %v524
      %v526 = vpop.f32.mrf.mxu0
      %v527 = vadd.f32 0.0, %v526
      %528 = vmatmul.bf16.gmra.mxu0 %v464
      %v529 = vpop.f32.mrf.mxu0
      %v530 = vadd.f32 0.0, %v529
      %v531 = vpop.f32.mrf.mxu0
      %v532 = vadd.f32 0.0, %v531
      %533 = vmatmul.bf16.gmra.mxu0 %v467
      %v534 = vpop.f32.mrf.mxu0
      %v535 = vadd.f32 0.0, %v534
      %v536 = vpop.f32.mrf.mxu0
      %v537 = vadd.f32 0.0, %v536
      %538 = vmatmul.bf16.gmra.mxu0 %v470
      %v539 = vpop.f32.mrf.mxu0
      %v540 = vadd.f32 0.0, %v539
      %v541 = vpop.f32.mrf.mxu0
      %v542 = vadd.f32 0.0, %v541
      %543 = vmatmul.bf16.gmra.mxu0 %v473
      %v544 = vpop.f32.mrf.mxu0
      %v545 = vadd.f32 0.0, %v544
      %v546 = vpop.f32.mrf.mxu0
      %v547 = vadd.f32 0.0, %v546
      %548 = vmatmul.bf16.gmra.mxu0 %v476
      %v549 = vpop.f32.mrf.mxu0
      %v550 = vadd.f32 0.0, %v549
      %v551 = vpop.f32.mrf.mxu0
      %v552 = vadd.f32 0.0, %v551
      %553 = vmatmul.bf16.gmra.mxu0 %v479
      %v554 = vpop.f32.mrf.mxu0
      %v555 = vadd.f32 0.0, %v554
      %v556 = vpop.f32.mrf.mxu0
      %v557 = vadd.f32 0.0, %v556
      %558 = vmatmul.bf16.gmra.mxu0 %v482
      %v559 = vpop.f32.mrf.mxu0
      %v560 = vadd.f32 0.0, %v559
      %v561 = vpop.f32.mrf.mxu0
      %v562 = vadd.f32 0.0, %v561
      %563 = vmatmul.bf16.gmra.mxu0 %v485
      %v564 = vpop.f32.mrf.mxu0
      %v565 = vadd.f32 0.0, %v564
      %v566 = vpop.f32.mrf.mxu0
      %v567 = vadd.f32 0.0, %v566
      %568 = vmatmul.bf16.gmra.mxu0 %v488
      %v569 = vpop.f32.mrf.mxu0
      %v570 = vadd.f32 0.0, %v569
      %v571 = vpop.f32.mrf.mxu0
      %v572 = vadd.f32 0.0, %v571
      %573 = vmatmul.bf16.gmra.mxu0 %v491
      %v574 = vpop.f32.mrf.mxu0
      %v575 = vadd.f32 0.0, %v574
      %v576 = vpop.f32.mrf.mxu0
      %v577 = vadd.f32 0.0, %v576
      %578 = vmatmul.bf16.gmra.mxu0 %v494
      %v579 = vpop.f32.mrf.mxu0
      %v580 = vadd.f32 0.0, %v579
      %v581 = vpop.f32.mrf.mxu0
      %v582 = vadd.f32 0.0, %v581
      %583 = vmatmul.bf16.gmra.mxu0 %v497
      %v584 = vpop.f32.mrf.mxu0
      %v585 = vadd.f32 0.0, %v584
      %v586 = vpop.f32.mrf.mxu0
      %v587 = vadd.f32 0.0, %v586
      %588 = vmatmul.bf16.gmra.mxu0 %v500
      %v589 = vpop.f32.mrf.mxu0
      %v590 = vadd.f32 0.0, %v589
      %v591 = vpop.f32.mrf.mxu0
      %v592 = vadd.f32 0.0, %v591
      %593 = vmatmul.bf16.gmra.mxu0 %v503
      %v594 = vpop.f32.mrf.mxu0
      %v595 = vadd.f32 0.0, %v594
      %v596 = vpop.f32.mrf.mxu0
      %v597 = vadd.f32 0.0, %v596
      %598 = vmatmul.bf16.gmra.mxu0 %v506
      %v599 = vpop.f32.mrf.mxu0
      %v600 = vadd.f32 0.0, %v599
      %v601 = vpop.f32.mrf.mxu0
      %v602 = vadd.f32 0.0, %v601
      %603 = vdwg.mxu0
      %v605 = vsel %vm459, %v263, 0
      %v608 = vsel %vm459, %v264, 0
      %v611 = vsel %vm459, %v265, 0
      %v614 = vsel %vm459, %v266, 0
      %v617 = vsel %vm459, %v267, 0
      %v620 = vsel %vm459, %v268, 0
      %v623 = vsel %vm459, %v269, 0
      %v626 = vsel %vm459, %v270, 0
      %v629 = vsel %vm459, %v271, 0
      %v632 = vsel %vm459, %v272, 0
      %v635 = vsel %vm459, %v273, 0
      %v638 = vsel %vm459, %v274, 0
      %v641 = vsel %vm459, %v275, 0
      %v644 = vsel %vm459, %v276, 0
      %v647 = vsel %vm459, %v277, 0
      %v650 = vsel %vm459, %v278, 0
      %v653 = vand.u32 %v279, %v511
      %655 = vmatpush.bf16.msra.mxu0 0
      %656 = vmatpush.bf16.msra.mxu0 0
      %657 = vmatpush.bf16.msra.mxu0 0
      %658 = vmatpush.bf16.msra.mxu0 0
      %659 = vmatpush.bf16.msra.mxu0 0
      %660 = vmatpush.bf16.msra.mxu0 0
      %661 = vmatpush.bf16.msra.mxu0 0
      %662 = vmatpush.bf16.msra.mxu0 %v653
      %663 = vmatmul.bf16.gmra.mxu0 %v605
      %v664 = vpop.f32.mrf.mxu0
      %v665 = vadd.f32 %v525, %v664
      %v666 = vpop.f32.mrf.mxu0
      %v667 = vadd.f32 %v527, %v666
      %668 = vmatmul.bf16.gmra.mxu0 %v608
      %v669 = vpop.f32.mrf.mxu0
      %v670 = vadd.f32 %v530, %v669
      %v671 = vpop.f32.mrf.mxu0
      %v672 = vadd.f32 %v532, %v671
      %673 = vmatmul.bf16.gmra.mxu0 %v611
      %v674 = vpop.f32.mrf.mxu0
      %v675 = vadd.f32 %v535, %v674
      %v676 = vpop.f32.mrf.mxu0
      %v677 = vadd.f32 %v537, %v676
      %678 = vmatmul.bf16.gmra.mxu0 %v614
      %v679 = vpop.f32.mrf.mxu0
      %v680 = vadd.f32 %v540, %v679
      %v681 = vpop.f32.mrf.mxu0
      %v682 = vadd.f32 %v542, %v681
      %683 = vmatmul.bf16.gmra.mxu0 %v617
      %v684 = vpop.f32.mrf.mxu0
      %v685 = vadd.f32 %v545, %v684
      %v686 = vpop.f32.mrf.mxu0
      %v687 = vadd.f32 %v547, %v686
      %688 = vmatmul.bf16.gmra.mxu0 %v620
      %v689 = vpop.f32.mrf.mxu0
      %v690 = vadd.f32 %v550, %v689
      %v691 = vpop.f32.mrf.mxu0
      %v692 = vadd.f32 %v552, %v691
      %693 = vmatmul.bf16.gmra.mxu0 %v623
      %v694 = vpop.f32.mrf.mxu0
      %v695 = vadd.f32 %v555, %v694
      %v696 = vpop.f32.mrf.mxu0
      %v697 = vadd.f32 %v557, %v696
      %698 = vmatmul.bf16.gmra.mxu0 %v626
      %v699 = vpop.f32.mrf.mxu0
      %v700 = vadd.f32 %v560, %v699
      %v701 = vpop.f32.mrf.mxu0
      %v702 = vadd.f32 %v562, %v701
      %703 = vmatmul.bf16.gmra.mxu0 %v629
      %v704 = vpop.f32.mrf.mxu0
      %v705 = vadd.f32 %v565, %v704
      %v706 = vpop.f32.mrf.mxu0
      %v707 = vadd.f32 %v567, %v706
      %708 = vmatmul.bf16.gmra.mxu0 %v632
      %v709 = vpop.f32.mrf.mxu0
      %v710 = vadd.f32 %v570, %v709
      %v711 = vpop.f32.mrf.mxu0
      %v712 = vadd.f32 %v572, %v711
      %713 = vmatmul.bf16.gmra.mxu0 %v635
      %v714 = vpop.f32.mrf.mxu0
      %v715 = vadd.f32 %v575, %v714
      %v716 = vpop.f32.mrf.mxu0
      %v717 = vadd.f32 %v577, %v716
      %718 = vmatmul.bf16.gmra.mxu0 %v638
      %v719 = vpop.f32.mrf.mxu0
      %v720 = vadd.f32 %v580, %v719
      %v721 = vpop.f32.mrf.mxu0
      %v722 = vadd.f32 %v582, %v721
      %723 = vmatmul.bf16.gmra.mxu0 %v641
      %v724 = vpop.f32.mrf.mxu0
      %v725 = vadd.f32 %v585, %v724
      %v726 = vpop.f32.mrf.mxu0
      %v727 = vadd.f32 %v587, %v726
      %728 = vmatmul.bf16.gmra.mxu0 %v644
      %v729 = vpop.f32.mrf.mxu0
      %v730 = vadd.f32 %v590, %v729
      %v731 = vpop.f32.mrf.mxu0
      %v732 = vadd.f32 %v592, %v731
      %733 = vmatmul.bf16.gmra.mxu0 %v647
      %v734 = vpop.f32.mrf.mxu0
      %v735 = vadd.f32 %v595, %v734
      %v736 = vpop.f32.mrf.mxu0
      %v737 = vadd.f32 %v597, %v736
      %738 = vmatmul.bf16.gmra.mxu0 %v650
      %v739 = vpop.f32.mrf.mxu0
      %v740 = vadd.f32 %v600, %v739
      %v741 = vpop.f32.mrf.mxu0
      %v742 = vadd.f32 %v602, %v741
      %743 = vdwg.mxu0
      %vm744 = vcmask 1045504
      %v745 = vrot.slane %v209, 2
      %v746 = vrot.slane %v210, 2
      %v747 = vsel %vm744, %v745, %v746
      %v748 = vrot.slane %v211, 2
      %v749 = vsel %vm744, %v746, %v748
      %v750 = vrot.slane %v212, 2
      %v751 = vrot.slane %v213, 2
      %v752 = vsel %vm744, %v750, %v751
      %v753 = vrot.slane %v214, 2
      %v754 = vsel %vm744, %v751, %v753
      %v755 = vrot.slane %v215, 2
      %v756 = vrot.slane %v216, 2
      %v757 = vsel %vm744, %v755, %v756
      %v758 = vrot.slane %v217, 2
      %v759 = vsel %vm744, %v756, %v758
      %v760 = vrot.slane %v218, 2
      %v761 = vrot.slane %v219, 2
      %v762 = vsel %vm744, %v760, %v761
      %v763 = vrot.slane %v220, 2
      %v764 = vsel %vm744, %v761, %v763
      %v765 = vrot.slane %v221, 2
      %v766 = vrot.slane %v222, 2
      %v767 = vsel %vm744, %v765, %v766
      %v768 = vrot.slane %v223, 2
      %v769 = vsel %vm744, %v766, %v768
      %v770 = vrot.slane %v224, 2
      %v771 = vrot.slane %v225, 2
      %v772 = vsel %vm744, %v770, %v771
      %v773 = vrot.slane %v226, 2
      %v774 = vsel %vm744, %v771, %v773
      %v775 = vrot.slane %v227, 2
      %v776 = vrot.slane %v228, 2
      %v777 = vsel %vm744, %v775, %v776
      %v778 = vrot.slane %v229, 2
      %v779 = vsel %vm744, %v776, %v778
      %v780 = vrot.slane %v230, 2
      %v781 = vrot.slane %v231, 2
      %v782 = vsel %vm744, %v780, %v781
      %v783 = vrot.slane %v232, 2
      %v784 = vsel %vm744, %v781, %v783
      %v785 = vrot.slane %v233, 2
      %v786 = vrot.slane %v234, 2
      %v787 = vsel %vm744, %v785, %v786
      %v788 = vrot.slane %v235, 2
      %v789 = vsel %vm744, %v786, %v788
      %v790 = vrot.slane %v236, 2
      %v791 = vrot.slane %v237, 2
      %v792 = vsel %vm744, %v790, %v791
      %v793 = vrot.slane %v238, 2
      %v794 = vsel %vm744, %v791, %v793
      %v795 = vrot.slane %v239, 2
      %v796 = vrot.slane %v240, 2
      %v797 = vsel %vm744, %v795, %v796
      %v798 = vrot.slane %v241, 2
      %v799 = vsel %vm744, %v796, %v798
      %v800 = vrot.slane %v242, 2
      %v801 = vrot.slane %v243, 2
      %v802 = vsel %vm744, %v800, %v801
      %v803 = vrot.slane %v244, 2
      %v804 = vsel %vm744, %v801, %v803
      %v805 = vrot.slane %v245, 2
      %v806 = vrot.slane %v246, 2
      %v807 = vsel %vm744, %v805, %v806
      %v808 = vrot.slane %v247, 2
      %v809 = vsel %vm744, %v806, %v808
      %v810 = vrot.slane %v248, 2
      %v811 = vrot.slane %v249, 2
      %v812 = vsel %vm744, %v810, %v811
      %v813 = vrot.slane %v250, 2
      %v814 = vsel %vm744, %v811, %v813
      %v815 = vrot.slane %v251, 2
      %v816 = vrot.slane %v252, 2
      %v817 = vsel %vm744, %v815, %v816
      %v818 = vrot.slane %v253, 2
      %v819 = vsel %vm744, %v816, %v818
      %v820 = vrot.slane %v254, 2
      %v821 = vrot.slane %v255, 2
      %v822 = vsel %vm744, %v820, %v821
      %v823 = vrot.slane %v256, 2
      %v824 = vsel %vm744, %v821, %v823
      %v857 = vpack.c.bf16 %v749, %v747
      %v858 = vpack.c.bf16 %v754, %v752
      %v859 = vpack.c.bf16 %v759, %v757
      %v860 = vpack.c.bf16 %v764, %v762
      %v861 = vpack.c.bf16 %v769, %v767
      %v862 = vpack.c.bf16 %v774, %v772
      %v863 = vpack.c.bf16 %v779, %v777
      %v864 = vpack.c.bf16 %v784, %v782
      %v865 = vpack.c.bf16 %v789, %v787
      %v866 = vpack.c.bf16 %v794, %v792
      %v867 = vpack.c.bf16 %v799, %v797
      %v868 = vpack.c.bf16 %v804, %v802
      %v869 = vpack.c.bf16 %v809, %v807
      %v870 = vpack.c.bf16 %v814, %v812
      %v871 = vpack.c.bf16 %v819, %v817
      %v872 = vpack.c.bf16 %v824, %v822
      %s873 = scalar_lea.vmem %s1, 4
      %v874 = vld [vmem:[%s873] sm:$0x3]
      %v876 = vsel %vm459, %v857, 0
      %v879 = vsel %vm459, %v858, 0
      %v882 = vsel %vm459, %v859, 0
      %v885 = vsel %vm459, %v860, 0
      %v888 = vsel %vm459, %v861, 0
      %v891 = vsel %vm459, %v862, 0
      %v894 = vsel %vm459, %v863, 0
      %v897 = vsel %vm459, %v864, 0
      %v900 = vsel %vm459, %v865, 0
      %v903 = vsel %vm459, %v866, 0
      %v906 = vsel %vm459, %v867, 0
      %v909 = vsel %vm459, %v868, 0
      %v912 = vsel %vm459, %v869, 0
      %v915 = vsel %vm459, %v870, 0
      %v918 = vsel %vm459, %v871, 0
      %v921 = vsel %vm459, %v872, 0
      %v924 = vand.u32 %v874, %v511
      %926 = vmatpush.bf16.msra.mxu0 0
      %927 = vmatpush.bf16.msra.mxu0 0
      %928 = vmatpush.bf16.msra.mxu0 0
      %929 = vmatpush.bf16.msra.mxu0 0
      %930 = vmatpush.bf16.msra.mxu0 0
      %931 = vmatpush.bf16.msra.mxu0 0
      %932 = vmatpush.bf16.msra.mxu0 0
      %933 = vmatpush.bf16.msra.mxu0 %v924
      %934 = vmatmul.bf16.gmra.mxu0 %v876
      %v935 = vpop.f32.mrf.mxu0
      %v936 = vadd.f32 0.0, %v935
      %v937 = vpop.f32.mrf.mxu0
      %v938 = vadd.f32 0.0, %v937
      %939 = vmatmul.bf16.gmra.mxu0 %v879
      %v940 = vpop.f32.mrf.mxu0
      %v941 = vadd.f32 0.0, %v940
      %v942 = vpop.f32.mrf.mxu0
      %v943 = vadd.f32 0.0, %v942
      %944 = vmatmul.bf16.gmra.mxu0 %v882
      %v945 = vpop.f32.mrf.mxu0
      %v946 = vadd.f32 0.0, %v945
      %v947 = vpop.f32.mrf.mxu0
      %v948 = vadd.f32 0.0, %v947
      %949 = vmatmul.bf16.gmra.mxu0 %v885
      %v950 = vpop.f32.mrf.mxu0
      %v951 = vadd.f32 0.0, %v950
      %v952 = vpop.f32.mrf.mxu0
      %v953 = vadd.f32 0.0, %v952
      %954 = vmatmul.bf16.gmra.mxu0 %v888
      %v955 = vpop.f32.mrf.mxu0
      %v956 = vadd.f32 0.0, %v955
      %v957 = vpop.f32.mrf.mxu0
      %v958 = vadd.f32 0.0, %v957
      %959 = vmatmul.bf16.gmra.mxu0 %v891
      %v960 = vpop.f32.mrf.mxu0
      %v961 = vadd.f32 0.0, %v960
      %v962 = vpop.f32.mrf.mxu0
      %v963 = vadd.f32 0.0, %v962
      %964 = vmatmul.bf16.gmra.mxu0 %v894
      %v965 = vpop.f32.mrf.mxu0
      %v966 = vadd.f32 0.0, %v965
      %v967 = vpop.f32.mrf.mxu0
      %v968 = vadd.f32 0.0, %v967
      %969 = vmatmul.bf16.gmra.mxu0 %v897
      %v970 = vpop.f32.mrf.mxu0
      %v971 = vadd.f32 0.0, %v970
      %v972 = vpop.f32.mrf.mxu0
      %v973 = vadd.f32 0.0, %v972
      %974 = vmatmul.bf16.gmra.mxu0 %v900
      %v975 = vpop.f32.mrf.mxu0
      %v976 = vadd.f32 0.0, %v975
      %v977 = vpop.f32.mrf.mxu0
      %v978 = vadd.f32 0.0, %v977
      %979 = vmatmul.bf16.gmra.mxu0 %v903
      %v980 = vpop.f32.mrf.mxu0
      %v981 = vadd.f32 0.0, %v980
      %v982 = vpop.f32.mrf.mxu0
      %v983 = vadd.f32 0.0, %v982
      %984 = vmatmul.bf16.gmra.mxu0 %v906
      %v985 = vpop.f32.mrf.mxu0
      %v986 = vadd.f32 0.0, %v985
      %v987 = vpop.f32.mrf.mxu0
      %v988 = vadd.f32 0.0, %v987
      %989 = vmatmul.bf16.gmra.mxu0 %v909
      %v990 = vpop.f32.mrf.mxu0
      %v991 = vadd.f32 0.0, %v990
      %v992 = vpop.f32.mrf.mxu0
      %v993 = vadd.f32 0.0, %v992
      %994 = vmatmul.bf16.gmra.mxu0 %v912
      %v995 = vpop.f32.mrf.mxu0
      %v996 = vadd.f32 0.0, %v995
      %v997 = vpop.f32.mrf.mxu0
      %v998 = vadd.f32 0.0, %v997
      %999 = vmatmul.bf16.gmra.mxu0 %v915
      %v1000 = vpop.f32.mrf.mxu0
      %v1001 = vadd.f32 0.0, %v1000
      %v1002 = vpop.f32.mrf.mxu0
      %v1003 = vadd.f32 0.0, %v1002
      %1004 = vmatmul.bf16.gmra.mxu0 %v918
      %v1005 = vpop.f32.mrf.mxu0
      %v1006 = vadd.f32 0.0, %v1005
      %v1007 = vpop.f32.mrf.mxu0
      %v1008 = vadd.f32 0.0, %v1007
      %1009 = vmatmul.bf16.gmra.mxu0 %v921
      %v1010 = vpop.f32.mrf.mxu0
      %v1011 = vadd.f32 0.0, %v1010
      %v1012 = vpop.f32.mrf.mxu0
      %v1013 = vadd.f32 0.0, %v1012
      %1014 = vdwg.mxu0
      %v1015 = vadd.f32 %v665, %v936
      %v1016 = vadd.f32 %v667, %v938
      %v1017 = vadd.f32 %v670, %v941
      %v1018 = vadd.f32 %v672, %v943
      %v1019 = vadd.f32 %v675, %v946
      %v1020 = vadd.f32 %v677, %v948
      %v1021 = vadd.f32 %v680, %v951
      %v1022 = vadd.f32 %v682, %v953
      %v1023 = vadd.f32 %v685, %v956
      %v1024 = vadd.f32 %v687, %v958
      %v1025 = vadd.f32 %v690, %v961
      %v1026 = vadd.f32 %v692, %v963
      %v1027 = vadd.f32 %v695, %v966
      %v1028 = vadd.f32 %v697, %v968
      %v1029 = vadd.f32 %v700, %v971
      %v1030 = vadd.f32 %v702, %v973
      %v1031 = vadd.f32 %v705, %v976
      %v1032 = vadd.f32 %v707, %v978
      %v1033 = vadd.f32 %v710, %v981
      %v1034 = vadd.f32 %v712, %v983
      %v1035 = vadd.f32 %v715, %v986
      %v1036 = vadd.f32 %v717, %v988
      %v1037 = vadd.f32 %v720, %v991
      %v1038 = vadd.f32 %v722, %v993
      %v1039 = vadd.f32 %v725, %v996
      %v1040 = vadd.f32 %v727, %v998
      %v1041 = vadd.f32 %v730, %v1001
      %v1042 = vadd.f32 %v732, %v1003
      %v1043 = vadd.f32 %v735, %v1006
      %v1044 = vadd.f32 %v737, %v1008
      %v1045 = vadd.f32 %v740, %v1011
      %v1046 = vadd.f32 %v742, %v1013
      %v1047 = vpack.c.bf16 %v258, %v257
      %s1048 = scalar_lea.vmem %s1, 6
      %v1049 = vld [vmem:[%s1048] sm:$0x3]
      %v1051 = vsel %vm459, %v1047, 0
      %v1054 = vand.u32 %v1049, %v511
      %1056 = vmatpush.bf16.msra.mxu0 0
      %1057 = vmatpush.bf16.msra.mxu0 0
      %1058 = vmatpush.bf16.msra.mxu0 0
      %1059 = vmatpush.bf16.msra.mxu0 0
      %1060 = vmatpush.bf16.msra.mxu0 0
      %1061 = vmatpush.bf16.msra.mxu0 0
      %1062 = vmatpush.bf16.msra.mxu0 0
      %1063 = vmatpush.bf16.msra.mxu0 %v1054
      %1064 = vmatmul.bf16.gmra.mxu0 %v608
      %v1065 = vpop.f32.mrf.mxu0
      %v1066 = vadd.f32 0.0, %v1065
      %v1067 = vpop.f32.mrf.mxu0
      %v1068 = vadd.f32 0.0, %v1067
      %1069 = vmatmul.bf16.gmra.mxu0 %v611
      %v1070 = vpop.f32.mrf.mxu0
      %v1071 = vadd.f32 0.0, %v1070
      %v1072 = vpop.f32.mrf.mxu0
      %v1073 = vadd.f32 0.0, %v1072
      %1074 = vmatmul.bf16.gmra.mxu0 %v614
      %v1075 = vpop.f32.mrf.mxu0
      %v1076 = vadd.f32 0.0, %v1075
      %v1077 = vpop.f32.mrf.mxu0
      %v1078 = vadd.f32 0.0, %v1077
      %1079 = vmatmul.bf16.gmra.mxu0 %v617
      %v1080 = vpop.f32.mrf.mxu0
      %v1081 = vadd.f32 0.0, %v1080
      %v1082 = vpop.f32.mrf.mxu0
      %v1083 = vadd.f32 0.0, %v1082
      %1084 = vmatmul.bf16.gmra.mxu0 %v620
      %v1085 = vpop.f32.mrf.mxu0
      %v1086 = vadd.f32 0.0, %v1085
      %v1087 = vpop.f32.mrf.mxu0
      %v1088 = vadd.f32 0.0, %v1087
      %1089 = vmatmul.bf16.gmra.mxu0 %v623
      %v1090 = vpop.f32.mrf.mxu0
      %v1091 = vadd.f32 0.0, %v1090
      %v1092 = vpop.f32.mrf.mxu0
      %v1093 = vadd.f32 0.0, %v1092
      %1094 = vmatmul.bf16.gmra.mxu0 %v626
      %v1095 = vpop.f32.mrf.mxu0
      %v1096 = vadd.f32 0.0, %v1095
      %v1097 = vpop.f32.mrf.mxu0
      %v1098 = vadd.f32 0.0, %v1097
      %1099 = vmatmul.bf16.gmra.mxu0 %v629
      %v1100 = vpop.f32.mrf.mxu0
      %v1101 = vadd.f32 0.0, %v1100
      %v1102 = vpop.f32.mrf.mxu0
      %v1103 = vadd.f32 0.0, %v1102
      %1104 = vmatmul.bf16.gmra.mxu0 %v632
      %v1105 = vpop.f32.mrf.mxu0
      %v1106 = vadd.f32 0.0, %v1105
      %v1107 = vpop.f32.mrf.mxu0
      %v1108 = vadd.f32 0.0, %v1107
      %1109 = vmatmul.bf16.gmra.mxu0 %v635
      %v1110 = vpop.f32.mrf.mxu0
      %v1111 = vadd.f32 0.0, %v1110
      %v1112 = vpop.f32.mrf.mxu0
      %v1113 = vadd.f32 0.0, %v1112
      %1114 = vmatmul.bf16.gmra.mxu0 %v638
      %v1115 = vpop.f32.mrf.mxu0
      %v1116 = vadd.f32 0.0, %v1115
      %v1117 = vpop.f32.mrf.mxu0
      %v1118 = vadd.f32 0.0, %v1117
      %1119 = vmatmul.bf16.gmra.mxu0 %v641
      %v1120 = vpop.f32.mrf.mxu0
      %v1121 = vadd.f32 0.0, %v1120
      %v1122 = vpop.f32.mrf.mxu0
      %v1123 = vadd.f32 0.0, %v1122
      %1124 = vmatmul.bf16.gmra.mxu0 %v644
      %v1125 = vpop.f32.mrf.mxu0
      %v1126 = vadd.f32 0.0, %v1125
      %v1127 = vpop.f32.mrf.mxu0
      %v1128 = vadd.f32 0.0, %v1127
      %1129 = vmatmul.bf16.gmra.mxu0 %v647
      %v1130 = vpop.f32.mrf.mxu0
      %v1131 = vadd.f32 0.0, %v1130
      %v1132 = vpop.f32.mrf.mxu0
      %v1133 = vadd.f32 0.0, %v1132
      %1134 = vmatmul.bf16.gmra.mxu0 %v650
      %v1135 = vpop.f32.mrf.mxu0
      %v1136 = vadd.f32 0.0, %v1135
      %v1137 = vpop.f32.mrf.mxu0
      %v1138 = vadd.f32 0.0, %v1137
      %1139 = vmatmul.bf16.gmra.mxu0 %v1051
      %v1140 = vpop.f32.mrf.mxu0
      %v1141 = vadd.f32 0.0, %v1140
      %v1142 = vpop.f32.mrf.mxu0
      %v1143 = vadd.f32 0.0, %v1142
      %1144 = vdwg.mxu0
      %v1145 = vadd.f32 %v1015, %v1066
      %v1146 = vadd.f32 %v1016, %v1068
      %v1147 = vadd.f32 %v1017, %v1071
      %v1148 = vadd.f32 %v1018, %v1073
      %v1149 = vadd.f32 %v1019, %v1076
      %v1150 = vadd.f32 %v1020, %v1078
      %v1151 = vadd.f32 %v1021, %v1081
      %v1152 = vadd.f32 %v1022, %v1083
      %v1153 = vadd.f32 %v1023, %v1086
      %v1154 = vadd.f32 %v1024, %v1088
      %v1155 = vadd.f32 %v1025, %v1091
      %v1156 = vadd.f32 %v1026, %v1093
      %v1157 = vadd.f32 %v1027, %v1096
      %v1158 = vadd.f32 %v1028, %v1098
      %v1159 = vadd.f32 %v1029, %v1101
      %v1160 = vadd.f32 %v1030, %v1103
      %v1161 = vadd.f32 %v1031, %v1106
      %v1162 = vadd.f32 %v1032, %v1108
      %v1163 = vadd.f32 %v1033, %v1111
      %v1164 = vadd.f32 %v1034, %v1113
      %v1165 = vadd.f32 %v1035, %v1116
      %v1166 = vadd.f32 %v1036, %v1118
      %v1167 = vadd.f32 %v1037, %v1121
      %v1168 = vadd.f32 %v1038, %v1123
      %v1169 = vadd.f32 %v1039, %v1126
      %v1170 = vadd.f32 %v1040, %v1128
      %v1171 = vadd.f32 %v1041, %v1131
      %v1172 = vadd.f32 %v1042, %v1133
      %v1173 = vadd.f32 %v1043, %v1136
      %v1174 = vadd.f32 %v1044, %v1138
      %v1175 = vadd.f32 %v1045, %v1141
      %v1176 = vadd.f32 %v1046, %v1143
      %v1180 = vrot.slane %v257, 1
      %v1181 = vrot.slane %v258, 1
      %v1182 = vsel %vm328, %v1180, %v1181
      %v1183 = vrot.slane %v259, 1
      %v1184 = vsel %vm328, %v1181, %v1183
      %v1187 = vpack.c.bf16 %v1184, %v1182
      %s1188 = scalar_lea.vmem %s1, 8
      %v1189 = vld [vmem:[%s1188] sm:$0x3]
      %v1191 = vsel %vm459, %v1187, 0
      %v1194 = vand.u32 %v1189, %v511
      %1196 = vmatpush.bf16.msra.mxu0 0
      %1197 = vmatpush.bf16.msra.mxu0 0
      %1198 = vmatpush.bf16.msra.mxu0 0
      %1199 = vmatpush.bf16.msra.mxu0 0
      %1200 = vmatpush.bf16.msra.mxu0 0
      %1201 = vmatpush.bf16.msra.mxu0 0
      %1202 = vmatpush.bf16.msra.mxu0 0
      %1203 = vmatpush.bf16.msra.mxu0 %v1194
      %1204 = vmatmul.bf16.gmra.mxu0 %v464
      %v1205 = vpop.f32.mrf.mxu0
      %v1206 = vadd.f32 0.0, %v1205
      %v1207 = vpop.f32.mrf.mxu0
      %v1208 = vadd.f32 0.0, %v1207
      %1209 = vmatmul.bf16.gmra.mxu0 %v467
      %v1210 = vpop.f32.mrf.mxu0
      %v1211 = vadd.f32 0.0, %v1210
      %v1212 = vpop.f32.mrf.mxu0
      %v1213 = vadd.f32 0.0, %v1212
      %1214 = vmatmul.bf16.gmra.mxu0 %v470
      %v1215 = vpop.f32.mrf.mxu0
      %v1216 = vadd.f32 0.0, %v1215
      %v1217 = vpop.f32.mrf.mxu0
      %v1218 = vadd.f32 0.0, %v1217
      %1219 = vmatmul.bf16.gmra.mxu0 %v473
      %v1220 = vpop.f32.mrf.mxu0
      %v1221 = vadd.f32 0.0, %v1220
      %v1222 = vpop.f32.mrf.mxu0
      %v1223 = vadd.f32 0.0, %v1222
      %1224 = vmatmul.bf16.gmra.mxu0 %v476
      %v1225 = vpop.f32.mrf.mxu0
      %v1226 = vadd.f32 0.0, %v1225
      %v1227 = vpop.f32.mrf.mxu0
      %v1228 = vadd.f32 0.0, %v1227
      %1229 = vmatmul.bf16.gmra.mxu0 %v479
      %v1230 = vpop.f32.mrf.mxu0
      %v1231 = vadd.f32 0.0, %v1230
      %v1232 = vpop.f32.mrf.mxu0
      %v1233 = vadd.f32 0.0, %v1232
      %1234 = vmatmul.bf16.gmra.mxu0 %v482
      %v1235 = vpop.f32.mrf.mxu0
      %v1236 = vadd.f32 0.0, %v1235
      %v1237 = vpop.f32.mrf.mxu0
      %v1238 = vadd.f32 0.0, %v1237
      %1239 = vmatmul.bf16.gmra.mxu0 %v485
      %v1240 = vpop.f32.mrf.mxu0
      %v1241 = vadd.f32 0.0, %v1240
      %v1242 = vpop.f32.mrf.mxu0
      %v1243 = vadd.f32 0.0, %v1242
      %1244 = vmatmul.bf16.gmra.mxu0 %v488
      %v1245 = vpop.f32.mrf.mxu0
      %v1246 = vadd.f32 0.0, %v1245
      %v1247 = vpop.f32.mrf.mxu0
      %v1248 = vadd.f32 0.0, %v1247
      %1249 = vmatmul.bf16.gmra.mxu0 %v491
      %v1250 = vpop.f32.mrf.mxu0
      %v1251 = vadd.f32 0.0, %v1250
      %v1252 = vpop.f32.mrf.mxu0
      %v1253 = vadd.f32 0.0, %v1252
      %1254 = vmatmul.bf16.gmra.mxu0 %v494
      %v1255 = vpop.f32.mrf.mxu0
      %v1256 = vadd.f32 0.0, %v1255
      %v1257 = vpop.f32.mrf.mxu0
      %v1258 = vadd.f32 0.0, %v1257
      %1259 = vmatmul.bf16.gmra.mxu0 %v497
      %v1260 = vpop.f32.mrf.mxu0
      %v1261 = vadd.f32 0.0, %v1260
      %v1262 = vpop.f32.mrf.mxu0
      %v1263 = vadd.f32 0.0, %v1262
      %1264 = vmatmul.bf16.gmra.mxu0 %v500
      %v1265 = vpop.f32.mrf.mxu0
      %v1266 = vadd.f32 0.0, %v1265
      %v1267 = vpop.f32.mrf.mxu0
      %v1268 = vadd.f32 0.0, %v1267
      %1269 = vmatmul.bf16.gmra.mxu0 %v503
      %v1270 = vpop.f32.mrf.mxu0
      %v1271 = vadd.f32 0.0, %v1270
      %v1272 = vpop.f32.mrf.mxu0
      %v1273 = vadd.f32 0.0, %v1272
      %1274 = vmatmul.bf16.gmra.mxu0 %v506
      %v1275 = vpop.f32.mrf.mxu0
      %v1276 = vadd.f32 0.0, %v1275
      %v1277 = vpop.f32.mrf.mxu0
      %v1278 = vadd.f32 0.0, %v1277
      %1279 = vmatmul.bf16.gmra.mxu0 %v1191
      %v1280 = vpop.f32.mrf.mxu0
      %v1281 = vadd.f32 0.0, %v1280
      %v1282 = vpop.f32.mrf.mxu0
      %v1283 = vadd.f32 0.0, %v1282
      %1284 = vdwg.mxu0
      %v1285 = vadd.f32 %v1145, %v1206
      %v1286 = vadd.f32 %v1146, %v1208
      %v1287 = vadd.f32 %v1147, %v1211
      %v1288 = vadd.f32 %v1148, %v1213
      %v1289 = vadd.f32 %v1149, %v1216
      %v1290 = vadd.f32 %v1150, %v1218
      %v1291 = vadd.f32 %v1151, %v1221
      %v1292 = vadd.f32 %v1152, %v1223
      %v1293 = vadd.f32 %v1153, %v1226
      %v1294 = vadd.f32 %v1154, %v1228
      %v1295 = vadd.f32 %v1155, %v1231
      %v1296 = vadd.f32 %v1156, %v1233
      %v1297 = vadd.f32 %v1157, %v1236
      %v1298 = vadd.f32 %v1158, %v1238
      %v1299 = vadd.f32 %v1159, %v1241
      %v1300 = vadd.f32 %v1160, %v1243
      %v1301 = vadd.f32 %v1161, %v1246
      %v1302 = vadd.f32 %v1162, %v1248
      %v1303 = vadd.f32 %v1163, %v1251
      %v1304 = vadd.f32 %v1164, %v1253
      %v1305 = vadd.f32 %v1165, %v1256
      %v1306 = vadd.f32 %v1166, %v1258
      %v1307 = vadd.f32 %v1167, %v1261
      %v1308 = vadd.f32 %v1168, %v1263
      %v1309 = vadd.f32 %v1169, %v1266
      %v1310 = vadd.f32 %v1170, %v1268
      %v1311 = vadd.f32 %v1171, %v1271
      %v1312 = vadd.f32 %v1172, %v1273
      %v1313 = vadd.f32 %v1173, %v1276
      %v1314 = vadd.f32 %v1174, %v1278
      %v1315 = vadd.f32 %v1175, %v1281
      %v1316 = vadd.f32 %v1176, %v1283
      %v1317 = vrot.slane %v257, 2
      %v1318 = vrot.slane %v258, 2
      %v1319 = vsel %vm744, %v1317, %v1318
      %v1320 = vrot.slane %v259, 2
      %v1321 = vsel %vm744, %v1318, %v1320
      %v1324 = vpack.c.bf16 %v1321, %v1319
      %s1325 = scalar_lea.vmem %s1, 10
      %v1326 = vld [vmem:[%s1325] sm:$0x3]
      %v1328 = vsel %vm459, %v1324, 0
      %v1331 = vand.u32 %v1326, %v511
      %1333 = vmatpush.bf16.msra.mxu0 0
      %1334 = vmatpush.bf16.msra.mxu0 0
      %1335 = vmatpush.bf16.msra.mxu0 0
      %1336 = vmatpush.bf16.msra.mxu0 0
      %1337 = vmatpush.bf16.msra.mxu0 0
      %1338 = vmatpush.bf16.msra.mxu0 0
      %1339 = vmatpush.bf16.msra.mxu0 0
      %1340 = vmatpush.bf16.msra.mxu0 %v1331
      %1341 = vmatmul.bf16.gmra.mxu0 %v879
      %v1342 = vpop.f32.mrf.mxu0
      %v1343 = vadd.f32 0.0, %v1342
      %v1344 = vpop.f32.mrf.mxu0
      %v1345 = vadd.f32 0.0, %v1344
      %1346 = vmatmul.bf16.gmra.mxu0 %v882
      %v1347 = vpop.f32.mrf.mxu0
      %v1348 = vadd.f32 0.0, %v1347
      %v1349 = vpop.f32.mrf.mxu0
      %v1350 = vadd.f32 0.0, %v1349
      %1351 = vmatmul.bf16.gmra.mxu0 %v885
      %v1352 = vpop.f32.mrf.mxu0
      %v1353 = vadd.f32 0.0, %v1352
      %v1354 = vpop.f32.mrf.mxu0
      %v1355 = vadd.f32 0.0, %v1354
      %1356 = vmatmul.bf16.gmra.mxu0 %v888
      %v1357 = vpop.f32.mrf.mxu0
      %v1358 = vadd.f32 0.0, %v1357
      %v1359 = vpop.f32.mrf.mxu0
      %v1360 = vadd.f32 0.0, %v1359
      %1361 = vmatmul.bf16.gmra.mxu0 %v891
      %v1362 = vpop.f32.mrf.mxu0
      %v1363 = vadd.f32 0.0, %v1362
      %v1364 = vpop.f32.mrf.mxu0
      %v1365 = vadd.f32 0.0, %v1364
      %1366 = vmatmul.bf16.gmra.mxu0 %v894
      %v1367 = vpop.f32.mrf.mxu0
      %v1368 = vadd.f32 0.0, %v1367
      %v1369 = vpop.f32.mrf.mxu0
      %v1370 = vadd.f32 0.0, %v1369
      %1371 = vmatmul.bf16.gmra.mxu0 %v897
      %v1372 = vpop.f32.mrf.mxu0
      %v1373 = vadd.f32 0.0, %v1372
      %v1374 = vpop.f32.mrf.mxu0
      %v1375 = vadd.f32 0.0, %v1374
      %1376 = vmatmul.bf16.gmra.mxu0 %v900
      %v1377 = vpop.f32.mrf.mxu0
      %v1378 = vadd.f32 0.0, %v1377
      %v1379 = vpop.f32.mrf.mxu0
      %v1380 = vadd.f32 0.0, %v1379
      %1381 = vmatmul.bf16.gmra.mxu0 %v903
      %v1382 = vpop.f32.mrf.mxu0
      %v1383 = vadd.f32 0.0, %v1382
      %v1384 = vpop.f32.mrf.mxu0
      %v1385 = vadd.f32 0.0, %v1384
      %1386 = vmatmul.bf16.gmra.mxu0 %v906
      %v1387 = vpop.f32.mrf.mxu0
      %v1388 = vadd.f32 0.0, %v1387
      %v1389 = vpop.f32.mrf.mxu0
      %v1390 = vadd.f32 0.0, %v1389
      %1391 = vmatmul.bf16.gmra.mxu0 %v909
      %v1392 = vpop.f32.mrf.mxu0
      %v1393 = vadd.f32 0.0, %v1392
      %v1394 = vpop.f32.mrf.mxu0
      %v1395 = vadd.f32 0.0, %v1394
      %1396 = vmatmul.bf16.gmra.mxu0 %v912
      %v1397 = vpop.f32.mrf.mxu0
      %v1398 = vadd.f32 0.0, %v1397
      %v1399 = vpop.f32.mrf.mxu0
      %v1400 = vadd.f32 0.0, %v1399
      %1401 = vmatmul.bf16.gmra.mxu0 %v915
      %v1402 = vpop.f32.mrf.mxu0
      %v1403 = vadd.f32 0.0, %v1402
      %v1404 = vpop.f32.mrf.mxu0
      %v1405 = vadd.f32 0.0, %v1404
      %1406 = vmatmul.bf16.gmra.mxu0 %v918
      %v1407 = vpop.f32.mrf.mxu0
      %v1408 = vadd.f32 0.0, %v1407
      %v1409 = vpop.f32.mrf.mxu0
      %v1410 = vadd.f32 0.0, %v1409
      %1411 = vmatmul.bf16.gmra.mxu0 %v921
      %v1412 = vpop.f32.mrf.mxu0
      %v1413 = vadd.f32 0.0, %v1412
      %v1414 = vpop.f32.mrf.mxu0
      %v1415 = vadd.f32 0.0, %v1414
      %1416 = vmatmul.bf16.gmra.mxu0 %v1328
      %v1417 = vpop.f32.mrf.mxu0
      %v1418 = vadd.f32 0.0, %v1417
      %v1419 = vpop.f32.mrf.mxu0
      %v1420 = vadd.f32 0.0, %v1419
      %1421 = vdwg.mxu0
      %v1422 = vadd.f32 %v1285, %v1343
      %v1423 = vadd.f32 %v1286, %v1345
      %v1424 = vadd.f32 %v1287, %v1348
      %v1425 = vadd.f32 %v1288, %v1350
      %v1426 = vadd.f32 %v1289, %v1353
      %v1427 = vadd.f32 %v1290, %v1355
      %v1428 = vadd.f32 %v1291, %v1358
      %v1429 = vadd.f32 %v1292, %v1360
      %v1430 = vadd.f32 %v1293, %v1363
      %v1431 = vadd.f32 %v1294, %v1365
      %v1432 = vadd.f32 %v1295, %v1368
      %v1433 = vadd.f32 %v1296, %v1370
      %v1434 = vadd.f32 %v1297, %v1373
      %v1435 = vadd.f32 %v1298, %v1375
      %v1436 = vadd.f32 %v1299, %v1378
      %v1437 = vadd.f32 %v1300, %v1380
      %v1438 = vadd.f32 %v1301, %v1383
      %v1439 = vadd.f32 %v1302, %v1385
      %v1440 = vadd.f32 %v1303, %v1388
      %v1441 = vadd.f32 %v1304, %v1390
      %v1442 = vadd.f32 %v1305, %v1393
      %v1443 = vadd.f32 %v1306, %v1395
      %v1444 = vadd.f32 %v1307, %v1398
      %v1445 = vadd.f32 %v1308, %v1400
      %v1446 = vadd.f32 %v1309, %v1403
      %v1447 = vadd.f32 %v1310, %v1405
      %v1448 = vadd.f32 %v1311, %v1408
      %v1449 = vadd.f32 %v1312, %v1410
      %v1450 = vadd.f32 %v1313, %v1413
      %v1451 = vadd.f32 %v1314, %v1415
      %v1452 = vadd.f32 %v1315, %v1418
      %v1453 = vadd.f32 %v1316, %v1420
      %v1454 = vpack.c.bf16 %v261, %v260
      %s1455 = scalar_lea.vmem %s1, 12
      %v1456 = vld [vmem:[%s1455] sm:$0x3]
      %v1458 = vsel %vm459, %v1454, 0
      %v1461 = vand.u32 %v1456, %v511
      %1463 = vmatpush.bf16.msra.mxu0 0
      %1464 = vmatpush.bf16.msra.mxu0 0
      %1465 = vmatpush.bf16.msra.mxu0 0
      %1466 = vmatpush.bf16.msra.mxu0 0
      %1467 = vmatpush.bf16.msra.mxu0 0
      %1468 = vmatpush.bf16.msra.mxu0 0
      %1469 = vmatpush.bf16.msra.mxu0 0
      %1470 = vmatpush.bf16.msra.mxu0 %v1461
      %1471 = vmatmul.bf16.gmra.mxu0 %v611
      %v1472 = vpop.f32.mrf.mxu0
      %v1473 = vadd.f32 0.0, %v1472
      %v1474 = vpop.f32.mrf.mxu0
      %v1475 = vadd.f32 0.0, %v1474
      %1476 = vmatmul.bf16.gmra.mxu0 %v614
      %v1477 = vpop.f32.mrf.mxu0
      %v1478 = vadd.f32 0.0, %v1477
      %v1479 = vpop.f32.mrf.mxu0
      %v1480 = vadd.f32 0.0, %v1479
      %1481 = vmatmul.bf16.gmra.mxu0 %v617
      %v1482 = vpop.f32.mrf.mxu0
      %v1483 = vadd.f32 0.0, %v1482
      %v1484 = vpop.f32.mrf.mxu0
      %v1485 = vadd.f32 0.0, %v1484
      %1486 = vmatmul.bf16.gmra.mxu0 %v620
      %v1487 = vpop.f32.mrf.mxu0
      %v1488 = vadd.f32 0.0, %v1487
      %v1489 = vpop.f32.mrf.mxu0
      %v1490 = vadd.f32 0.0, %v1489
      %1491 = vmatmul.bf16.gmra.mxu0 %v623
      %v1492 = vpop.f32.mrf.mxu0
      %v1493 = vadd.f32 0.0, %v1492
      %v1494 = vpop.f32.mrf.mxu0
      %v1495 = vadd.f32 0.0, %v1494
      %1496 = vmatmul.bf16.gmra.mxu0 %v626
      %v1497 = vpop.f32.mrf.mxu0
      %v1498 = vadd.f32 0.0, %v1497
      %v1499 = vpop.f32.mrf.mxu0
      %v1500 = vadd.f32 0.0, %v1499
      %1501 = vmatmul.bf16.gmra.mxu0 %v629
      %v1502 = vpop.f32.mrf.mxu0
      %v1503 = vadd.f32 0.0, %v1502
      %v1504 = vpop.f32.mrf.mxu0
      %v1505 = vadd.f32 0.0, %v1504
      %1506 = vmatmul.bf16.gmra.mxu0 %v632
      %v1507 = vpop.f32.mrf.mxu0
      %v1508 = vadd.f32 0.0, %v1507
      %v1509 = vpop.f32.mrf.mxu0
      %v1510 = vadd.f32 0.0, %v1509
      %1511 = vmatmul.bf16.gmra.mxu0 %v635
      %v1512 = vpop.f32.mrf.mxu0
      %v1513 = vadd.f32 0.0, %v1512
      %v1514 = vpop.f32.mrf.mxu0
      %v1515 = vadd.f32 0.0, %v1514
      %1516 = vmatmul.bf16.gmra.mxu0 %v638
      %v1517 = vpop.f32.mrf.mxu0
      %v1518 = vadd.f32 0.0, %v1517
      %v1519 = vpop.f32.mrf.mxu0
      %v1520 = vadd.f32 0.0, %v1519
      %1521 = vmatmul.bf16.gmra.mxu0 %v641
      %v1522 = vpop.f32.mrf.mxu0
      %v1523 = vadd.f32 0.0, %v1522
      %v1524 = vpop.f32.mrf.mxu0
      %v1525 = vadd.f32 0.0, %v1524
      %1526 = vmatmul.bf16.gmra.mxu0 %v644
      %v1527 = vpop.f32.mrf.mxu0
      %v1528 = vadd.f32 0.0, %v1527
      %v1529 = vpop.f32.mrf.mxu0
      %v1530 = vadd.f32 0.0, %v1529
      %1531 = vmatmul.bf16.gmra.mxu0 %v647
      %v1532 = vpop.f32.mrf.mxu0
      %v1533 = vadd.f32 0.0, %v1532
      %v1534 = vpop.f32.mrf.mxu0
      %v1535 = vadd.f32 0.0, %v1534
      %1536 = vmatmul.bf16.gmra.mxu0 %v650
      %v1537 = vpop.f32.mrf.mxu0
      %v1538 = vadd.f32 0.0, %v1537
      %v1539 = vpop.f32.mrf.mxu0
      %v1540 = vadd.f32 0.0, %v1539
      %1541 = vmatmul.bf16.gmra.mxu0 %v1051
      %v1542 = vpop.f32.mrf.mxu0
      %v1543 = vadd.f32 0.0, %v1542
      %v1544 = vpop.f32.mrf.mxu0
      %v1545 = vadd.f32 0.0, %v1544
      %1546 = vmatmul.bf16.gmra.mxu0 %v1458
      %v1547 = vpop.f32.mrf.mxu0
      %v1548 = vadd.f32 0.0, %v1547
      %v1549 = vpop.f32.mrf.mxu0
      %v1550 = vadd.f32 0.0, %v1549
      %1551 = vdwg.mxu0
      %v1552 = vadd.f32 %v1422, %v1473
      %v1553 = vadd.f32 %v1423, %v1475
      %v1554 = vadd.f32 %v1424, %v1478
      %v1555 = vadd.f32 %v1425, %v1480
      %v1556 = vadd.f32 %v1426, %v1483
      %v1557 = vadd.f32 %v1427, %v1485
      %v1558 = vadd.f32 %v1428, %v1488
      %v1559 = vadd.f32 %v1429, %v1490
      %v1560 = vadd.f32 %v1430, %v1493
      %v1561 = vadd.f32 %v1431, %v1495
      %v1562 = vadd.f32 %v1432, %v1498
      %v1563 = vadd.f32 %v1433, %v1500
      %v1564 = vadd.f32 %v1434, %v1503
      %v1565 = vadd.f32 %v1435, %v1505
      %v1566 = vadd.f32 %v1436, %v1508
      %v1567 = vadd.f32 %v1437, %v1510
      %v1568 = vadd.f32 %v1438, %v1513
      %v1569 = vadd.f32 %v1439, %v1515
      %v1570 = vadd.f32 %v1440, %v1518
      %v1571 = vadd.f32 %v1441, %v1520
      %v1572 = vadd.f32 %v1442, %v1523
      %v1573 = vadd.f32 %v1443, %v1525
      %v1574 = vadd.f32 %v1444, %v1528
      %v1575 = vadd.f32 %v1445, %v1530
      %v1576 = vadd.f32 %v1446, %v1533
      %v1577 = vadd.f32 %v1447, %v1535
      %v1578 = vadd.f32 %v1448, %v1538
      %v1579 = vadd.f32 %v1449, %v1540
      %v1580 = vadd.f32 %v1450, %v1543
      %v1581 = vadd.f32 %v1451, %v1545
      %v1582 = vadd.f32 %v1452, %v1548
      %v1583 = vadd.f32 %v1453, %v1550
      %v1587 = vrot.slane %v260, 1
      %v1588 = vrot.slane %v261, 1
      %v1589 = vsel %vm328, %v1587, %v1588
      %v1590 = vrot.slane %v262, 1
      %v1591 = vsel %vm328, %v1588, %v1590
      %v1594 = vpack.c.bf16 %v1591, %v1589
      %s1595 = scalar_lea.vmem %s1, 14
      %v1596 = vld [vmem:[%s1595] sm:$0x3]
      %v1598 = vsel %vm459, %v1594, 0
      %v1601 = vand.u32 %v1596, %v511
      %1603 = vmatpush.bf16.msra.mxu0 0
      %1604 = vmatpush.bf16.msra.mxu0 0
      %1605 = vmatpush.bf16.msra.mxu0 0
      %1606 = vmatpush.bf16.msra.mxu0 0
      %1607 = vmatpush.bf16.msra.mxu0 0
      %1608 = vmatpush.bf16.msra.mxu0 0
      %1609 = vmatpush.bf16.msra.mxu0 0
      %1610 = vmatpush.bf16.msra.mxu0 %v1601
      %1611 = vmatmul.bf16.gmra.mxu0 %v467
      %v1612 = vpop.f32.mrf.mxu0
      %v1613 = vadd.f32 0.0, %v1612
      %v1614 = vpop.f32.mrf.mxu0
      %v1615 = vadd.f32 0.0, %v1614
      %1616 = vmatmul.bf16.gmra.mxu0 %v470
      %v1617 = vpop.f32.mrf.mxu0
      %v1618 = vadd.f32 0.0, %v1617
      %v1619 = vpop.f32.mrf.mxu0
      %v1620 = vadd.f32 0.0, %v1619
      %1621 = vmatmul.bf16.gmra.mxu0 %v473
      %v1622 = vpop.f32.mrf.mxu0
      %v1623 = vadd.f32 0.0, %v1622
      %v1624 = vpop.f32.mrf.mxu0
      %v1625 = vadd.f32 0.0, %v1624
      %1626 = vmatmul.bf16.gmra.mxu0 %v476
      %v1627 = vpop.f32.mrf.mxu0
      %v1628 = vadd.f32 0.0, %v1627
      %v1629 = vpop.f32.mrf.mxu0
      %v1630 = vadd.f32 0.0, %v1629
      %1631 = vmatmul.bf16.gmra.mxu0 %v479
      %v1632 = vpop.f32.mrf.mxu0
      %v1633 = vadd.f32 0.0, %v1632
      %v1634 = vpop.f32.mrf.mxu0
      %v1635 = vadd.f32 0.0, %v1634
      %1636 = vmatmul.bf16.gmra.mxu0 %v482
      %v1637 = vpop.f32.mrf.mxu0
      %v1638 = vadd.f32 0.0, %v1637
      %v1639 = vpop.f32.mrf.mxu0
      %v1640 = vadd.f32 0.0, %v1639
      %1641 = vmatmul.bf16.gmra.mxu0 %v485
      %v1642 = vpop.f32.mrf.mxu0
      %v1643 = vadd.f32 0.0, %v1642
      %v1644 = vpop.f32.mrf.mxu0
      %v1645 = vadd.f32 0.0, %v1644
      %1646 = vmatmul.bf16.gmra.mxu0 %v488
      %v1647 = vpop.f32.mrf.mxu0
      %v1648 = vadd.f32 0.0, %v1647
      %v1649 = vpop.f32.mrf.mxu0
      %v1650 = vadd.f32 0.0, %v1649
      %1651 = vmatmul.bf16.gmra.mxu0 %v491
      %v1652 = vpop.f32.mrf.mxu0
      %v1653 = vadd.f32 0.0, %v1652
      %v1654 = vpop.f32.mrf.mxu0
      %v1655 = vadd.f32 0.0, %v1654
      %1656 = vmatmul.bf16.gmra.mxu0 %v494
      %v1657 = vpop.f32.mrf.mxu0
      %v1658 = vadd.f32 0.0, %v1657
      %v1659 = vpop.f32.mrf.mxu0
      %v1660 = vadd.f32 0.0, %v1659
      %1661 = vmatmul.bf16.gmra.mxu0 %v497
      %v1662 = vpop.f32.mrf.mxu0
      %v1663 = vadd.f32 0.0, %v1662
      %v1664 = vpop.f32.mrf.mxu0
      %v1665 = vadd.f32 0.0, %v1664
      %1666 = vmatmul.bf16.gmra.mxu0 %v500
      %v1667 = vpop.f32.mrf.mxu0
      %v1668 = vadd.f32 0.0, %v1667
      %v1669 = vpop.f32.mrf.mxu0
      %v1670 = vadd.f32 0.0, %v1669
      %1671 = vmatmul.bf16.gmra.mxu0 %v503
      %v1672 = vpop.f32.mrf.mxu0
      %v1673 = vadd.f32 0.0, %v1672
      %v1674 = vpop.f32.mrf.mxu0
      %v1675 = vadd.f32 0.0, %v1674
      %1676 = vmatmul.bf16.gmra.mxu0 %v506
      %v1677 = vpop.f32.mrf.mxu0
      %v1678 = vadd.f32 0.0, %v1677
      %v1679 = vpop.f32.mrf.mxu0
      %v1680 = vadd.f32 0.0, %v1679
      %1681 = vmatmul.bf16.gmra.mxu0 %v1191
      %v1682 = vpop.f32.mrf.mxu0
      %v1683 = vadd.f32 0.0, %v1682
      %v1684 = vpop.f32.mrf.mxu0
      %v1685 = vadd.f32 0.0, %v1684
      %1686 = vmatmul.bf16.gmra.mxu0 %v1598
      %v1687 = vpop.f32.mrf.mxu0
      %v1688 = vadd.f32 0.0, %v1687
      %v1689 = vpop.f32.mrf.mxu0
      %v1690 = vadd.f32 0.0, %v1689
      %1691 = vdwg.mxu0
      %v1692 = vadd.f32 %v1552, %v1613
      %v1693 = vadd.f32 %v1553, %v1615
      %v1694 = vadd.f32 %v1554, %v1618
      %v1695 = vadd.f32 %v1555, %v1620
      %v1696 = vadd.f32 %v1556, %v1623
      %v1697 = vadd.f32 %v1557, %v1625
      %v1698 = vadd.f32 %v1558, %v1628
      %v1699 = vadd.f32 %v1559, %v1630
      %v1700 = vadd.f32 %v1560, %v1633
      %v1701 = vadd.f32 %v1561, %v1635
      %v1702 = vadd.f32 %v1562, %v1638
      %v1703 = vadd.f32 %v1563, %v1640
      %v1704 = vadd.f32 %v1564, %v1643
      %v1705 = vadd.f32 %v1565, %v1645
      %v1706 = vadd.f32 %v1566, %v1648
      %v1707 = vadd.f32 %v1567, %v1650
      %v1708 = vadd.f32 %v1568, %v1653
      %v1709 = vadd.f32 %v1569, %v1655
      %v1710 = vadd.f32 %v1570, %v1658
      %v1711 = vadd.f32 %v1571, %v1660
      %v1712 = vadd.f32 %v1572, %v1663
      %v1713 = vadd.f32 %v1573, %v1665
      %v1714 = vadd.f32 %v1574, %v1668
      %v1715 = vadd.f32 %v1575, %v1670
      %v1716 = vadd.f32 %v1576, %v1673
      %v1717 = vadd.f32 %v1577, %v1675
      %v1718 = vadd.f32 %v1578, %v1678
      %v1719 = vadd.f32 %v1579, %v1680
      %v1720 = vadd.f32 %v1580, %v1683
      %v1721 = vadd.f32 %v1581, %v1685
      %v1722 = vadd.f32 %v1582, %v1688
      %v1723 = vadd.f32 %v1583, %v1690
      %v1724 = vrot.slane %v260, 2
      %v1725 = vrot.slane %v261, 2
      %v1726 = vsel %vm744, %v1724, %v1725
      %v1727 = vrot.slane %v262, 2
      %v1728 = vsel %vm744, %v1725, %v1727
      %v1731 = vpack.c.bf16 %v1728, %v1726
      %s1732 = scalar_lea.vmem %s1, 16
      %v1733 = vld [vmem:[%s1732] sm:$0x3]
      %v1735 = vsel %vm459, %v1731, 0
      %v1738 = vand.u32 %v1733, %v511
      %1740 = vmatpush.bf16.msra.mxu0 0
      %1741 = vmatpush.bf16.msra.mxu0 0
      %1742 = vmatpush.bf16.msra.mxu0 0
      %1743 = vmatpush.bf16.msra.mxu0 0
      %1744 = vmatpush.bf16.msra.mxu0 0
      %1745 = vmatpush.bf16.msra.mxu0 0
      %1746 = vmatpush.bf16.msra.mxu0 0
      %1747 = vmatpush.bf16.msra.mxu0 %v1738
      %1748 = vmatmul.bf16.gmra.mxu0 %v882
      %v1749 = vpop.f32.mrf.mxu0
      %v1750 = vadd.f32 0.0, %v1749
      %v1751 = vpop.f32.mrf.mxu0
      %v1752 = vadd.f32 0.0, %v1751
      %1753 = vmatmul.bf16.gmra.mxu0 %v885
      %v1754 = vpop.f32.mrf.mxu0
      %v1755 = vadd.f32 0.0, %v1754
      %v1756 = vpop.f32.mrf.mxu0
      %v1757 = vadd.f32 0.0, %v1756
      %1758 = vmatmul.bf16.gmra.mxu0 %v888
      %v1759 = vpop.f32.mrf.mxu0
      %v1760 = vadd.f32 0.0, %v1759
      %v1761 = vpop.f32.mrf.mxu0
      %v1762 = vadd.f32 0.0, %v1761
      %1763 = vmatmul.bf16.gmra.mxu0 %v891
      %v1764 = vpop.f32.mrf.mxu0
      %v1765 = vadd.f32 0.0, %v1764
      %v1766 = vpop.f32.mrf.mxu0
      %v1767 = vadd.f32 0.0, %v1766
      %1768 = vmatmul.bf16.gmra.mxu0 %v894
      %v1769 = vpop.f32.mrf.mxu0
      %v1770 = vadd.f32 0.0, %v1769
      %v1771 = vpop.f32.mrf.mxu0
      %v1772 = vadd.f32 0.0, %v1771
      %1773 = vmatmul.bf16.gmra.mxu0 %v897
      %v1774 = vpop.f32.mrf.mxu0
      %v1775 = vadd.f32 0.0, %v1774
      %v1776 = vpop.f32.mrf.mxu0
      %v1777 = vadd.f32 0.0, %v1776
      %1778 = vmatmul.bf16.gmra.mxu0 %v900
      %v1779 = vpop.f32.mrf.mxu0
      %v1780 = vadd.f32 0.0, %v1779
      %v1781 = vpop.f32.mrf.mxu0
      %v1782 = vadd.f32 0.0, %v1781
      %1783 = vmatmul.bf16.gmra.mxu0 %v903
      %v1784 = vpop.f32.mrf.mxu0
      %v1785 = vadd.f32 0.0, %v1784
      %v1786 = vpop.f32.mrf.mxu0
      %v1787 = vadd.f32 0.0, %v1786
      %1788 = vmatmul.bf16.gmra.mxu0 %v906
      %v1789 = vpop.f32.mrf.mxu0
      %v1790 = vadd.f32 0.0, %v1789
      %v1791 = vpop.f32.mrf.mxu0
      %v1792 = vadd.f32 0.0, %v1791
      %1793 = vmatmul.bf16.gmra.mxu0 %v909
      %v1794 = vpop.f32.mrf.mxu0
      %v1795 = vadd.f32 0.0, %v1794
      %v1796 = vpop.f32.mrf.mxu0
      %v1797 = vadd.f32 0.0, %v1796
      %1798 = vmatmul.bf16.gmra.mxu0 %v912
      %v1799 = vpop.f32.mrf.mxu0
      %v1800 = vadd.f32 0.0, %v1799
      %v1801 = vpop.f32.mrf.mxu0
      %v1802 = vadd.f32 0.0, %v1801
      %1803 = vmatmul.bf16.gmra.mxu0 %v915
      %v1804 = vpop.f32.mrf.mxu0
      %v1805 = vadd.f32 0.0, %v1804
      %v1806 = vpop.f32.mrf.mxu0
      %v1807 = vadd.f32 0.0, %v1806
      %1808 = vmatmul.bf16.gmra.mxu0 %v918
      %v1809 = vpop.f32.mrf.mxu0
      %v1810 = vadd.f32 0.0, %v1809
      %v1811 = vpop.f32.mrf.mxu0
      %v1812 = vadd.f32 0.0, %v1811
      %1813 = vmatmul.bf16.gmra.mxu0 %v921
      %v1814 = vpop.f32.mrf.mxu0
      %v1815 = vadd.f32 0.0, %v1814
      %v1816 = vpop.f32.mrf.mxu0
      %v1817 = vadd.f32 0.0, %v1816
      %1818 = vmatmul.bf16.gmra.mxu0 %v1328
      %v1819 = vpop.f32.mrf.mxu0
      %v1820 = vadd.f32 0.0, %v1819
      %v1821 = vpop.f32.mrf.mxu0
      %v1822 = vadd.f32 0.0, %v1821
      %1823 = vmatmul.bf16.gmra.mxu0 %v1735
      %v1824 = vpop.f32.mrf.mxu0
      %v1825 = vadd.f32 0.0, %v1824
      %v1826 = vpop.f32.mrf.mxu0
      %v1827 = vadd.f32 0.0, %v1826
      %1828 = vdwg.mxu0
      %v1829 = vadd.f32 %v1692, %v1750
      %v1830 = vadd.f32 %v1693, %v1752
      %v1831 = vadd.f32 %v1694, %v1755
      %v1832 = vadd.f32 %v1695, %v1757
      %v1833 = vadd.f32 %v1696, %v1760
      %v1834 = vadd.f32 %v1697, %v1762
      %v1835 = vadd.f32 %v1698, %v1765
      %v1836 = vadd.f32 %v1699, %v1767
      %v1837 = vadd.f32 %v1700, %v1770
      %v1838 = vadd.f32 %v1701, %v1772
      %v1839 = vadd.f32 %v1702, %v1775
      %v1840 = vadd.f32 %v1703, %v1777
      %v1841 = vadd.f32 %v1704, %v1780
      %v1842 = vadd.f32 %v1705, %v1782
      %v1843 = vadd.f32 %v1706, %v1785
      %v1844 = vadd.f32 %v1707, %v1787
      %v1845 = vadd.f32 %v1708, %v1790
      %v1846 = vadd.f32 %v1709, %v1792
      %v1847 = vadd.f32 %v1710, %v1795
      %v1848 = vadd.f32 %v1711, %v1797
      %v1849 = vadd.f32 %v1712, %v1800
      %v1850 = vadd.f32 %v1713, %v1802
      %v1851 = vadd.f32 %v1714, %v1805
      %v1852 = vadd.f32 %v1715, %v1807
      %v1853 = vadd.f32 %v1716, %v1810
      %v1854 = vadd.f32 %v1717, %v1812
      %v1855 = vadd.f32 %v1718, %v1815
      %v1856 = vadd.f32 %v1719, %v1817
      %v1857 = vadd.f32 %v1720, %v1820
      %v1858 = vadd.f32 %v1721, %v1822
      %v1859 = vadd.f32 %v1722, %v1825
      %v1860 = vadd.f32 %v1723, %v1827
      %v1861 = vld [vmem:[%s2] sm:$0x1]
      %v1863 = vperm.slane %v1861, 0
      %v1865 = vadd.f32 %v1829, %v1863
      %v1866 = vadd.f32 %v1830, %v1863
      %v1867 = vadd.f32 %v1831, %v1863
      %v1868 = vadd.f32 %v1832, %v1863
      %v1869 = vadd.f32 %v1833, %v1863
      %v1870 = vadd.f32 %v1834, %v1863
      %v1871 = vadd.f32 %v1835, %v1863
      %v1872 = vadd.f32 %v1836, %v1863
      %v1873 = vadd.f32 %v1837, %v1863
      %v1874 = vadd.f32 %v1838, %v1863
      %v1875 = vadd.f32 %v1839, %v1863
      %v1876 = vadd.f32 %v1840, %v1863
      %v1877 = vadd.f32 %v1841, %v1863
      %v1878 = vadd.f32 %v1842, %v1863
      %v1879 = vadd.f32 %v1843, %v1863
      %v1880 = vadd.f32 %v1844, %v1863
      %v1881 = vadd.f32 %v1845, %v1863
      %v1882 = vadd.f32 %v1846, %v1863
      %v1883 = vadd.f32 %v1847, %v1863
      %v1884 = vadd.f32 %v1848, %v1863
      %v1885 = vadd.f32 %v1849, %v1863
      %v1886 = vadd.f32 %v1850, %v1863
      %v1887 = vadd.f32 %v1851, %v1863
      %v1888 = vadd.f32 %v1852, %v1863
      %v1889 = vadd.f32 %v1853, %v1863
      %v1890 = vadd.f32 %v1854, %v1863
      %v1891 = vadd.f32 %v1855, %v1863
      %v1892 = vadd.f32 %v1856, %v1863
      %v1893 = vadd.f32 %v1857, %v1863
      %v1894 = vadd.f32 %v1858, %v1863
      %v1895 = vadd.f32 %v1859, %v1863
      %v1896 = vadd.f32 %v1860, %v1863
      %vm1897 = vcmask 261120
      %1898 = vst.msk [vmem:[%s206] sm:$0xff] %vm1897, %v1865
      %1899 = vst.msk [vmem:[%s206 + $0x8] sm:$0xff] %vm1897, %v1866
      %1900 = vst.msk [vmem:[%s206 + $0x10] sm:$0xff] %vm1897, %v1867
      %1901 = vst.msk [vmem:[%s206 + $0x18] sm:$0xff] %vm1897, %v1868
      %1902 = vst.msk [vmem:[%s206 + $0x20] sm:$0xff] %vm1897, %v1869
      %1903 = vst.msk [vmem:[%s206 + $0x28] sm:$0xff] %vm1897, %v1870
      %1904 = vst.msk [vmem:[%s206 + $0x30] sm:$0xff] %vm1897, %v1871
      %1905 = vst.msk [vmem:[%s206 + $0x38] sm:$0xff] %vm1897, %v1872
      %1906 = vst.msk [vmem:[%s206 + $0x40] sm:$0xff] %vm1897, %v1873
      %1907 = vst.msk [vmem:[%s206 + $0x48] sm:$0xff] %vm1897, %v1874
      %1908 = vst.msk [vmem:[%s206 + $0x50] sm:$0xff] %vm1897, %v1875
      %1909 = vst.msk [vmem:[%s206 + $0x58] sm:$0xff] %vm1897, %v1876
      %1910 = vst.msk [vmem:[%s206 + $0x60] sm:$0xff] %vm1897, %v1877
      %1911 = vst.msk [vmem:[%s206 + $0x68] sm:$0xff] %vm1897, %v1878
      %1912 = vst.msk [vmem:[%s206 + $0x70] sm:$0xff] %vm1897, %v1879
      %1913 = vst.msk [vmem:[%s206 + $0x78] sm:$0xff] %vm1897, %v1880
      %1914 = vst.msk [vmem:[%s206 + $0x80] sm:$0xff] %vm1897, %v1881
      %1915 = vst.msk [vmem:[%s206 + $0x88] sm:$0xff] %vm1897, %v1882
      %1916 = vst.msk [vmem:[%s206 + $0x90] sm:$0xff] %vm1897, %v1883
      %1917 = vst.msk [vmem:[%s206 + $0x98] sm:$0xff] %vm1897, %v1884
      %1918 = vst.msk [vmem:[%s206 + $0xa0] sm:$0xff] %vm1897, %v1885
      %1919 = vst.msk [vmem:[%s206 + $0xa8] sm:$0xff] %vm1897, %v1886
      %1920 = vst.msk [vmem:[%s206 + $0xb0] sm:$0xff] %vm1897, %v1887
      %1921 = vst.msk [vmem:[%s206 + $0xb8] sm:$0xff] %vm1897, %v1888
      %1922 = vst.msk [vmem:[%s206 + $0xc0] sm:$0xff] %vm1897, %v1889
      %1923 = vst.msk [vmem:[%s206 + $0xc8] sm:$0xff] %vm1897, %v1890
      %1924 = vst.msk [vmem:[%s206 + $0xd0] sm:$0xff] %vm1897, %v1891
      %1925 = vst.msk [vmem:[%s206 + $0xd8] sm:$0xff] %vm1897, %v1892
      %1926 = vst.msk [vmem:[%s206 + $0xe0] sm:$0xff] %vm1897, %v1893
      %1927 = vst.msk [vmem:[%s206 + $0xe8] sm:$0xff] %vm1897, %v1894
      %1928 = vst.msk [vmem:[%s206 + $0xf0] sm:$0xff] %vm1897, %v1895
      %1929 = vst.msk [vmem:[%s206 + $0xf8] sm:$0xff] %vm1897, %v1896
      %s1930 = smul.u32 32, %s19
      %p1931 = scmp.lt.s32.totalorder %s18, 1
      %s1932 = scalar_select %p1931, %s18, 1
      %p1933 = scmp.lt.s32.totalorder %s1930, 31
      %s1934 = scalar_select %p1933, %s1930, 31
      %s1935 = smul.addr %s1932, 32
      %s1936 = sadd.s32 %s1934, %s1935
      %s1937 = smul.addr %s1936, 8
      %s1938 = scalar_lea.vmem %s3, %s1937
      // Predicated region
      $region33: #{pcsr_forward_train.2} parent=31 // pred_check
        %p1939 = pneg %p116
      $region34: #{pcsr_forward_train.2} parent=31 // pred_check_branch
        %1941 = sbr.rel (%p1939) target = $region36
      $region35: #{pcsr_forward_train.2} parent=31 // pred_region
        %s1942 = smul.u32 32, %s19
      $region36: #{pcsr_forward_train.2} parent=31 // pred_fallthru
        _
    $region32: #{pcsr_forward_train.2} parent=5 // pred_fallthru
      _
    %p1943 = scmp.le.s32.totalorder 2, %s9
    // Predicated region
    $region37: #{pcsr_forward_train.2} parent=5 // pred_check
      %p1944 = pneg %p1943
    $region38: #{pcsr_forward_train.2} parent=5 // pred_check_branch
      %1946 = sbr.rel (%p1944) target = $region40
    $region39: #{pcsr_forward_train.2} parent=5 // pred_region
      %s1947 = ssub.s32 %s9, 2
      // Predicated region
      $region41: #{pcsr_forward_train.2} parent=39 // pred_check
        %p1948 = pneg %p122
      $region42: #{pcsr_forward_train.2} parent=39 // pred_check_branch
        %1950 = sbr.rel (%p1948) target = $region44
      $region43: #{pcsr_forward_train.2} parent=39 // pred_region
        %s1951 = smul.u32 32, %s21
        %p1952 = scmp.lt.s32.totalorder %s20, 1
        %s1953 = scalar_select %p1952, %s20, 1
        %p1954 = scmp.lt.s32.totalorder %s1951, 31
        %s1955 = scalar_select %p1954, %s1951, 31
        %s1956 = smul.addr %s1953, 32
        %s1957 = sadd.s32 %s1955, %s1956
        %s1958 = smul.addr %s1957, 8
        %s1959 = scalar_lea.vmem %s3, %s1958
      $region44: #{pcsr_forward_train.2} parent=39 // pred_fallthru
        _
    $region40: #{pcsr_forward_train.2} parent=5 // pred_fallthru
      _
  $region6: #{pcsr_forward_train.2} parent=0 // loop_footer
    %s13 = sadd.s32 1, %s9
  $region7: #{pcsr_forward_train.2} parent=0 // loop_footer_branch
    %8 = sbr.rel target = $region3
  $region8: #{pcsr_forward_train.2} parent=0 // loop_exit
    _

// kernel: pcsr_forward_train.3
$region0: #{pcsr_forward_train.3}
  #allocation0 [shape = 'u32[]', space=smem, size = 0x4, offset = 0x4, fixed_abs, tag = 'smem constant byte address 0x4 - core index']
  #allocation1 [shape = 'u32[72,128]{1,0:T(1,128)}', space=vmem, size = 0x9000, scoped, tag = 'internal scratch']
  %s0 = inlined_call_operand.vmem [shape: bf16[2,1024,32], index: 0, kind: input, shape index: {}]
  %s1 = inlined_call_operand.vmem [shape: f32[2,1024,3], index: 1, kind: input, shape index: {}]
  %s2 = inlined_call_operand.vmem [shape: bf16[32,128], index: 2, kind: input, shape index: {}]
  %s3 = inlined_call_operand.vmem [shape: f32[1,128], index: 3, kind: input, shape index: {}]
  %s4 = inlined_call_operand.vmem [shape: bf16[64,64], index: 4, kind: input, shape index: {}]
  %s5 = inlined_call_operand.vmem [shape: f32[1,64], index: 5, kind: input, shape index: {}]
  %s6 = inlined_call_operand.vmem [shape: bf16[64,8], index: 6, kind: input, shape index: {}]
  %s7 = inlined_call_operand.vmem [shape: bf16[64,8], index: 7, kind: input, shape index: {}]
  %s8 = inlined_call_operand.vmem [shape: f32[1,8], index: 8, kind: input, shape index: {}]
  %s9 = inlined_call_operand.vmem [shape: f32[2,1024,3], index: 9, kind: output, shape index: {0}]
  %s10 = inlined_call_operand.vmem [shape: f32[2,1024,2], index: 10, kind: output, shape index: {1}]
  %11 = xla_tuple %s9, %s10
  %s12 = sld [smem:[#allocation0]]
  $region77: #{pcsr_forward_train.3} parent=0
    _
  %s14 = ssub.s32 1, %s12
  %s15 = scalar_select 0, %s14, %s12
  loop: start=0, step=1, limit=4
  $region2: #{pcsr_forward_train.3} parent=0 // loop_pre_header
    _
  $region3: #{pcsr_forward_train.3} parent=0 // loop_header
    %s17 = sphi 0, %s21
    %p18 = scmp.ge.s32.totalorder %s17, 4
    %s24 = sphi 0, %s36
    %s25 = sphi 0, %s32
    %s26 = sphi 0, %s24
    %s27 = sphi 0, %s25
    %s28 = sphi 0, %s26
    %s29 = sphi 0, %s27
    %s41 = sphi 0, %s43
    %s44 = sphi 0, %s41
    %s45 = sphi 0, %s44
    %s61 = sphi 0, %s45
    %s69 = sphi 0, %s71
    %s72 = sphi 0, %s69
    %s73 = sphi 0, %s72
    %s89 = sphi 0, %s73
    %s93 = sphi 0, %s93
    %s95 = sphi 0, %s93
    %s96 = sphi 0, %s95
    %s110 = sphi 0, %s96
    %s114 = sphi 0, %s114
    %s116 = sphi 0, %s114
    %s117 = sphi 0, %s116
    %s131 = sphi 0, %s117
    %s135 = sphi 0, %s135
    %s137 = sphi 0, %s135
    %s138 = sphi 0, %s137
    %s152 = sphi 0, %s138
    %s156 = sphi 0, %s156
    %s158 = sphi 0, %s156
    %s159 = sphi 0, %s158
    %s173 = sphi 0, %s159
    %s177 = sphi 0, %s177
    %s179 = sphi 0, %s177
    %s180 = sphi 0, %s179
    %s194 = sphi 0, %s180
    %s198 = sphi 0, %s198
    %s200 = sphi 0, %s198
    %s201 = sphi 0, %s200
    %s215 = sphi 0, %s201
    %s219 = sphi 0, %s219
    %s221 = sphi 0, %s219
    %s222 = sphi 0, %s221
    %s236 = sphi 0, %s222
    %s244 = sphi 0, %s246
    %s247 = sphi 0, %s244
    %s248 = sphi 0, %s247
    %s264 = sphi 0, %s248
    %s272 = sphi 0, %s274
    %s275 = sphi 0, %s272
    %s276 = sphi 0, %s275
    %s292 = sphi 0, %s276
  $region4: #{pcsr_forward_train.3} parent=0 // loop_header_branch
    %20 = sbr.rel (%p18) target = $region8
  $region5: #{pcsr_forward_train.3} parent=0 // loop_body
    %s22 = ssub.s32 %s17, 1
    %s23 = ssub.s32 %s17, 2
    %s30 = sadd.s32 1, %s25
    %p31 = scmp.ge.s32.totalorder %s30, 1
    %s32 = scalar_select %p31, 0, %s30
    %s33 = sadd.s32 1, %s24
    %s34 = scalar_select %p31, %s33, %s24
    %p35 = scmp.ge.s32.totalorder %s34, 2
    %s36 = scalar_select %p35, 0, %s34
    %s37 = ssub.s32 %s24, %s36
    %s38 = ssub.s32 %s25, %s32
    %s39 = sor.u32 %s37, %s38
    %p40 = scmp.eq.s32.totalorder %s39, 0
    %s42 = sadd.s32 %s41, 1
    %s43 = scalar_select %p40, %s41, %s42
    %p46 = pneg %p40
    %p47 = scmp.eq.s32.totalorder %s17, 1
    %p48 = por %p46, %p47
    %p49 = scmp.ne.s32.totalorder %s41, %s44
    %p50 = scmp.eq.s32.totalorder %s17, 0
    %p51 = por %p49, %p50
    %p52 = scmp.ne.s32.totalorder %s41, %s44
    %p53 = scmp.eq.s32.totalorder %s22, 1
    %p54 = por %p52, %p53
    %p55 = scmp.ne.s32.totalorder %s44, %s45
    %p56 = scmp.eq.s32.totalorder %s22, 0
    %p57 = por %p55, %p56
    %p58 = scmp.ne.s32.totalorder %s44, %s45
    %p59 = scmp.eq.s32.totalorder %s23, 1
    %p60 = por %p58, %p59
    %p62 = scmp.ne.s32.totalorder %s45, %s61
    %p63 = scmp.eq.s32.totalorder %s23, 0
    %p64 = por %p62, %p63
    %s65 = ssub.s32 %s24, %s36
    %s66 = ssub.s32 %s25, %s32
    %s67 = sor.u32 %s65, %s66
    %p68 = scmp.eq.s32.totalorder %s67, 0
    %s70 = sadd.s32 %s69, 1
    %s71 = scalar_select %p68, %s69, %s70
    %p74 = pneg %p68
    %p75 = scmp.eq.s32.totalorder %s17, 1
    %p76 = por %p74, %p75
    %p77 = scmp.ne.s32.totalorder %s69, %s72
    %p78 = scmp.eq.s32.totalorder %s17, 0
    %p79 = por %p77, %p78
    %p80 = scmp.ne.s32.totalorder %s69, %s72
    %p81 = scmp.eq.s32.totalorder %s22, 1
    %p82 = por %p80, %p81
    %p83 = scmp.ne.s32.totalorder %s72, %s73
    %p84 = scmp.eq.s32.totalorder %s22, 0
    %p85 = por %p83, %p84
    %p86 = scmp.ne.s32.totalorder %s72, %s73
    %p87 = scmp.eq.s32.totalorder %s23, 1
    %p88 = por %p86, %p87
    %p90 = scmp.ne.s32.totalorder %s73, %s89
    %p91 = scmp.eq.s32.totalorder %s23, 0
    %p92 = por %p90, %p91
    %s94 = sadd.s32 %s93, 1
    %p97 = scmp.eq.s32.totalorder %s17, 1
    %p98 = scmp.ne.s32.totalorder %s93, %s95
    %p99 = scmp.eq.s32.totalorder %s17, 0
    %p100 = por %p98, %p99
    %p101 = scmp.ne.s32.totalorder %s93, %s95
    %p102 = scmp.eq.s32.totalorder %s22, 1
    %p103 = por %p101, %p102
    %p104 = scmp.ne.s32.totalorder %s95, %s96
    %p105 = scmp.eq.s32.totalorder %s22, 0
    %p106 = por %p104, %p105
    %p107 = scmp.ne.s32.totalorder %s95, %s96
    %p108 = scmp.eq.s32.totalorder %s23, 1
    %p109 = por %p107, %p108
    %p111 = scmp.ne.s32.totalorder %s96, %s110
    %p112 = scmp.eq.s32.totalorder %s23, 0
    %p113 = por %p111, %p112
    %s115 = sadd.s32 %s114, 1
    %p118 = scmp.eq.s32.totalorder %s17, 1
    %p119 = scmp.ne.s32.totalorder %s114, %s116
    %p120 = scmp.eq.s32.totalorder %s17, 0
    %p121 = por %p119, %p120
    %p122 = scmp.ne.s32.totalorder %s114, %s116
    %p123 = scmp.eq.s32.totalorder %s22, 1
    %p124 = por %p122, %p123
    %p125 = scmp.ne.s32.totalorder %s116, %s117
    %p126 = scmp.eq.s32.totalorder %s22, 0
    %p127 = por %p125, %p126
    %p128 = scmp.ne.s32.totalorder %s116, %s117
    %p129 = scmp.eq.s32.totalorder %s23, 1
    %p130 = por %p128, %p129
    %p132 = scmp.ne.s32.totalorder %s117, %s131
    %p133 = scmp.eq.s32.totalorder %s23, 0
    %p134 = por %p132, %p133
    %s136 = sadd.s32 %s135, 1
    %p139 = scmp.eq.s32.totalorder %s17, 1
    %p140 = scmp.ne.s32.totalorder %s135, %s137
    %p141 = scmp.eq.s32.totalorder %s17, 0
    %p142 = por %p140, %p141
    %p143 = scmp.ne.s32.totalorder %s135, %s137
    %p144 = scmp.eq.s32.totalorder %s22, 1
    %p145 = por %p143, %p144
    %p146 = scmp.ne.s32.totalorder %s137, %s138
    %p147 = scmp.eq.s32.totalorder %s22, 0
    %p148 = por %p146, %p147
    %p149 = scmp.ne.s32.totalorder %s137, %s138
    %p150 = scmp.eq.s32.totalorder %s23, 1
    %p151 = por %p149, %p150
    %p153 = scmp.ne.s32.totalorder %s138, %s152
    %p154 = scmp.eq.s32.totalorder %s23, 0
    %p155 = por %p153, %p154
    %s157 = sadd.s32 %s156, 1
    %p160 = scmp.eq.s32.totalorder %s17, 1
    %p161 = scmp.ne.s32.totalorder %s156, %s158
    %p162 = scmp.eq.s32.totalorder %s17, 0
    %p163 = por %p161, %p162
    %p164 = scmp.ne.s32.totalorder %s156, %s158
    %p165 = scmp.eq.s32.totalorder %s22, 1
    %p166 = por %p164, %p165
    %p167 = scmp.ne.s32.totalorder %s158, %s159
    %p168 = scmp.eq.s32.totalorder %s22, 0
    %p169 = por %p167, %p168
    %p170 = scmp.ne.s32.totalorder %s158, %s159
    %p171 = scmp.eq.s32.totalorder %s23, 1
    %p172 = por %p170, %p171
    %p174 = scmp.ne.s32.totalorder %s159, %s173
    %p175 = scmp.eq.s32.totalorder %s23, 0
    %p176 = por %p174, %p175
    %s178 = sadd.s32 %s177, 1
    %p181 = scmp.eq.s32.totalorder %s17, 1
    %p182 = scmp.ne.s32.totalorder %s177, %s179
    %p183 = scmp.eq.s32.totalorder %s17, 0
    %p184 = por %p182, %p183
    %p185 = scmp.ne.s32.totalorder %s177, %s179
    %p186 = scmp.eq.s32.totalorder %s22, 1
    %p187 = por %p185, %p186
    %p188 = scmp.ne.s32.totalorder %s179, %s180
    %p189 = scmp.eq.s32.totalorder %s22, 0
    %p190 = por %p188, %p189
    %p191 = scmp.ne.s32.totalorder %s179, %s180
    %p192 = scmp.eq.s32.totalorder %s23, 1
    %p193 = por %p191, %p192
    %p195 = scmp.ne.s32.totalorder %s180, %s194
    %p196 = scmp.eq.s32.totalorder %s23, 0
    %p197 = por %p195, %p196
    %s199 = sadd.s32 %s198, 1
    %p202 = scmp.eq.s32.totalorder %s17, 1
    %p203 = scmp.ne.s32.totalorder %s198, %s200
    %p204 = scmp.eq.s32.totalorder %s17, 0
    %p205 = por %p203, %p204
    %p206 = scmp.ne.s32.totalorder %s198, %s200
    %p207 = scmp.eq.s32.totalorder %s22, 1
    %p208 = por %p206, %p207
    %p209 = scmp.ne.s32.totalorder %s200, %s201
    %p210 = scmp.eq.s32.totalorder %s22, 0
    %p211 = por %p209, %p210
    %p212 = scmp.ne.s32.totalorder %s200, %s201
    %p213 = scmp.eq.s32.totalorder %s23, 1
    %p214 = por %p212, %p213
    %p216 = scmp.ne.s32.totalorder %s201, %s215
    %p217 = scmp.eq.s32.totalorder %s23, 0
    %p218 = por %p216, %p217
    %s220 = sadd.s32 %s219, 1
    %p223 = scmp.eq.s32.totalorder %s17, 1
    %p224 = scmp.ne.s32.totalorder %s219, %s221
    %p225 = scmp.eq.s32.totalorder %s17, 0
    %p226 = por %p224, %p225
    %p227 = scmp.ne.s32.totalorder %s219, %s221
    %p228 = scmp.eq.s32.totalorder %s22, 1
    %p229 = por %p227, %p228
    %p230 = scmp.ne.s32.totalorder %s221, %s222
    %p231 = scmp.eq.s32.totalorder %s22, 0
    %p232 = por %p230, %p231
    %p233 = scmp.ne.s32.totalorder %s221, %s222
    %p234 = scmp.eq.s32.totalorder %s23, 1
    %p235 = por %p233, %p234
    %p237 = scmp.ne.s32.totalorder %s222, %s236
    %p238 = scmp.eq.s32.totalorder %s23, 0
    %p239 = por %p237, %p238
    %s240 = ssub.s32 %s24, %s36
    %s241 = ssub.s32 %s25, %s32
    %s242 = sor.u32 %s240, %s241
    %p243 = scmp.eq.s32.totalorder %s242, 0
    %s245 = sadd.s32 %s244, 1
    %s246 = scalar_select %p243, %s244, %s245
    %p249 = pneg %p243
    %p250 = scmp.eq.s32.totalorder %s17, 1
    %p251 = por %p249, %p250
    %p252 = scmp.ne.s32.totalorder %s244, %s247
    %p253 = scmp.eq.s32.totalorder %s17, 0
    %p254 = por %p252, %p253
    %p255 = scmp.ne.s32.totalorder %s244, %s247
    %p256 = scmp.eq.s32.totalorder %s22, 1
    %p257 = por %p255, %p256
    %p258 = scmp.ne.s32.totalorder %s247, %s248
    %p259 = scmp.eq.s32.totalorder %s22, 0
    %p260 = por %p258, %p259
    %p261 = scmp.ne.s32.totalorder %s247, %s248
    %p262 = scmp.eq.s32.totalorder %s23, 1
    %p263 = por %p261, %p262
    %p265 = scmp.ne.s32.totalorder %s248, %s264
    %p266 = scmp.eq.s32.totalorder %s23, 0
    %p267 = por %p265, %p266
    %s268 = ssub.s32 %s24, %s36
    %s269 = ssub.s32 %s25, %s32
    %s270 = sor.u32 %s268, %s269
    %p271 = scmp.eq.s32.totalorder %s270, 0
    %s273 = sadd.s32 %s272, 1
    %s274 = scalar_select %p271, %s272, %s273
    %p277 = pneg %p271
    %p278 = scmp.eq.s32.totalorder %s17, 1
    %p279 = por %p277, %p278
    %p280 = scmp.ne.s32.totalorder %s272, %s275
    %p281 = scmp.eq.s32.totalorder %s17, 0
    %p282 = por %p280, %p281
    %p283 = scmp.ne.s32.totalorder %s272, %s275
    %p284 = scmp.eq.s32.totalorder %s22, 1
    %p285 = por %p283, %p284
    %p286 = scmp.ne.s32.totalorder %s275, %s276
    %p287 = scmp.eq.s32.totalorder %s22, 0
    %p288 = por %p286, %p287
    %p289 = scmp.ne.s32.totalorder %s275, %s276
    %p290 = scmp.eq.s32.totalorder %s23, 1
    %p291 = por %p289, %p290
    %p293 = scmp.ne.s32.totalorder %s276, %s292
    %p294 = scmp.eq.s32.totalorder %s23, 0
    %p295 = por %p293, %p294
    %p296 = scmp.le.s32.totalorder 1, %s17
    %p297 = scmp.lt.s32.totalorder %s17, 3
    %p298 = pnand %p296, %p297
    %p299 = pneg %p298
    // Predicated region
    $region9: #{pcsr_forward_train.3} parent=5 // pred_check
      _
    $region10: #{pcsr_forward_train.3} parent=5 // pred_check_branch
      %301 = sbr.rel (%p298) target = $region12
    $region11: #{pcsr_forward_train.3} parent=5 // pred_region
      %s302 = ssub.s32 %s17, 1
      // Predicated region
      $region13: #{pcsr_forward_train.3} parent=11 // pred_check
        %p303 = pneg %p106
      $region14: #{pcsr_forward_train.3} parent=11 // pred_check_branch
        %305 = sbr.rel (%p303) target = $region16
      $region15: #{pcsr_forward_train.3} parent=11 // pred_region
        _
      $region16: #{pcsr_forward_train.3} parent=11 // pred_fallthru
        _
      // Predicated region
      $region17: #{pcsr_forward_train.3} parent=11 // pred_check
        %p306 = pneg %p127
      $region18: #{pcsr_forward_train.3} parent=11 // pred_check_branch
        %308 = sbr.rel (%p306) target = $region20
      $region19: #{pcsr_forward_train.3} parent=11 // pred_region
        _
      $region20: #{pcsr_forward_train.3} parent=11 // pred_fallthru
        _
      // Predicated region
      $region21: #{pcsr_forward_train.3} parent=11 // pred_check
        %p309 = pneg %p148
      $region22: #{pcsr_forward_train.3} parent=11 // pred_check_branch
        %311 = sbr.rel (%p309) target = $region24
      $region23: #{pcsr_forward_train.3} parent=11 // pred_region
        _
      $region24: #{pcsr_forward_train.3} parent=11 // pred_fallthru
        _
      // Predicated region
      $region25: #{pcsr_forward_train.3} parent=11 // pred_check
        %p312 = pneg %p169
      $region26: #{pcsr_forward_train.3} parent=11 // pred_check_branch
        %314 = sbr.rel (%p312) target = $region28
      $region27: #{pcsr_forward_train.3} parent=11 // pred_region
        _
      $region28: #{pcsr_forward_train.3} parent=11 // pred_fallthru
        _
      // Predicated region
      $region29: #{pcsr_forward_train.3} parent=11 // pred_check
        %p315 = pneg %p190
      $region30: #{pcsr_forward_train.3} parent=11 // pred_check_branch
        %317 = sbr.rel (%p315) target = $region32
      $region31: #{pcsr_forward_train.3} parent=11 // pred_region
        _
      $region32: #{pcsr_forward_train.3} parent=11 // pred_fallthru
        _
      // Predicated region
      $region33: #{pcsr_forward_train.3} parent=11 // pred_check
        %p318 = pneg %p211
      $region34: #{pcsr_forward_train.3} parent=11 // pred_check_branch
        %320 = sbr.rel (%p318) target = $region36
      $region35: #{pcsr_forward_train.3} parent=11 // pred_region
        _
      $region36: #{pcsr_forward_train.3} parent=11 // pred_fallthru
        _
      // Predicated region
      $region37: #{pcsr_forward_train.3} parent=11 // pred_check
        %p321 = pneg %p232
      $region38: #{pcsr_forward_train.3} parent=11 // pred_check_branch
        %323 = sbr.rel (%p321) target = $region40
      $region39: #{pcsr_forward_train.3} parent=11 // pred_region
        _
      $region40: #{pcsr_forward_train.3} parent=11 // pred_fallthru
        _
    $region12: #{pcsr_forward_train.3} parent=5 // pred_fallthru
      _
    %p324 = scmp.lt.s32.totalorder %s17, 2
    // Predicated region
    $region41: #{pcsr_forward_train.3} parent=5 // pred_check
      %p325 = pneg %p324
    $region42: #{pcsr_forward_train.3} parent=5 // pred_check_branch
      %327 = sbr.rel (%p325) target = $region44
    $region43: #{pcsr_forward_train.3} parent=5 // pred_region
      // Predicated region
      $region45: #{pcsr_forward_train.3} parent=43 // pred_check
        %p328 = pneg %p51
      $region46: #{pcsr_forward_train.3} parent=43 // pred_check_branch
        %330 = sbr.rel (%p328) target = $region48
      $region47: #{pcsr_forward_train.3} parent=43 // pred_region
        %s331 = smul.u32 128, %s25
        %p332 = scmp.lt.s32.totalorder %s24, 1
        %s333 = scalar_select %p332, %s24, 1
        %p334 = scmp.lt.s32.totalorder %s331, 127
        %s335 = scalar_select %p334, %s331, 127
        %s336 = smul.addr %s333, 128
        %s337 = sadd.s32 %s335, %s336
        %s338 = smul.addr %s337, 4
        %s339 = scalar_lea.vmem %s0, %s338
        %s340 = smul.u32 128, %s25
      $region48: #{pcsr_forward_train.3} parent=43 // pred_fallthru
        _
      // Predicated region
      $region49: #{pcsr_forward_train.3} parent=43 // pred_check
        %p341 = pneg %p79
      $region50: #{pcsr_forward_train.3} parent=43 // pred_check_branch
        %343 = sbr.rel (%p341) target = $region52
      $region51: #{pcsr_forward_train.3} parent=43 // pred_region
        %s344 = smul.u32 128, %s25
        %p345 = scmp.lt.s32.totalorder %s24, 1
        %s346 = scalar_select %p345, %s24, 1
        %p347 = scmp.lt.s32.totalorder %s344, 127
        %s348 = scalar_select %p347, %s344, 127
        %s349 = smul.addr %s346, 128
        %s350 = sadd.s32 %s348, %s349
        %s351 = smul.addr %s350, 8
        %s352 = scalar_lea.vmem %s1, %s351
        %s353 = smul.u32 128, %s25
      $region52: #{pcsr_forward_train.3} parent=43 // pred_fallthru
        _
    $region44: #{pcsr_forward_train.3} parent=5 // pred_fallthru
      _
    %p354 = scmp.le.s32.totalorder 1, %s17
    %p355 = scmp.lt.s32.totalorder %s17, 3
    %p356 = pnand %p354, %p355
    %p357 = pneg %p356
    // Predicated region
    $region53: #{pcsr_forward_train.3} parent=5 // pred_check
      _
    $region54: #{pcsr_forward_train.3} parent=5 // pred_check_branch
      %359 = sbr.rel (%p356) target = $region56
    $region55: #{pcsr_forward_train.3} parent=5 // pred_region
      %s360 = ssub.s32 %s17, 1
      %s361 = smul.u32 128, %s27
      %p362 = scmp.lt.s32.totalorder %s26, 1
      %s363 = scalar_select %p362, %s26, 1
      %p364 = scmp.lt.s32.totalorder %s361, 127
      %s365 = scalar_select %p364, %s361, 127
      %s366 = smul.addr %s363, 128
      %s367 = sadd.s32 %s365, %s366
      %s368 = smul.addr %s367, 4
      %s369 = scalar_lea.vmem %s0, %s368
      %p370 = pneg %p57
      %p371 = pneg %p54
      %s372 = smul.u32 128, %s27
      %p373 = scmp.lt.s32.totalorder %s26, 1
      %s374 = scalar_select %p373, %s26, 1
      %p375 = scmp.lt.s32.totalorder %s372, 127
      %s376 = scalar_select %p375, %s372, 127
      %s377 = smul.addr %s374, 128
      %s378 = sadd.s32 %s376, %s377
      %s379 = smul.addr %s378, 8
      %s380 = scalar_lea.vmem %s1, %s379
      %p381 = pneg %p85
      %p382 = pneg %p82
      %p383 = pneg %p106
      %p384 = pneg %p103
      %p385 = pneg %p127
      %p386 = pneg %p124
      %p387 = pneg %p148
      %p388 = pneg %p145
      %p389 = pneg %p169
      %p390 = pneg %p166
      %p391 = pneg %p190
      %p392 = pneg %p187
      %p393 = pneg %p211
      %p394 = pneg %p208
      %p395 = pneg %p232
      %p396 = pneg %p229
      %p397 = pneg %p260
      %p398 = pneg %p257
      %s399 = smul.u32 128, %s27
      %p400 = scmp.lt.s32.totalorder %s26, 1
      %s401 = scalar_select %p400, %s26, 1
      %p402 = scmp.lt.s32.totalorder %s399, 127
      %s403 = scalar_select %p402, %s399, 127
      %s404 = smul.addr %s401, 128
      %s405 = sadd.s32 %s403, %s404
      %s406 = smul.addr %s405, 8
      %s407 = scalar_lea.vmem %s9, %s406
      %p408 = pneg %p288
      %p409 = pneg %p285
      %s410 = smul.u32 128, %s27
      %p411 = scmp.lt.s32.totalorder %s26, 1
      %s412 = scalar_select %p411, %s26, 1
      %p413 = scmp.lt.s32.totalorder %s410, 127
      %s414 = scalar_select %p413, %s410, 127
      %s415 = smul.addr %s412, 128
      %s416 = sadd.s32 %s414, %s415
      %s417 = smul.addr %s416, 8
      %s418 = scalar_lea.vmem %s10, %s417
      %s419 = smul.u32 128, %s27
      %p420 = scmp.lt.s32.totalorder %s26, 1
      %s421 = scalar_select %p420, %s26, 1
      %p422 = scmp.lt.s32.totalorder %s419, 127
      %s423 = scalar_select %p422, %s419, 127
      %s424 = smul.addr %s421, 128
      %s425 = sadd.s32 %s423, %s424
      %s426 = smul.addr %s425, 4
      %s427 = scalar_lea.vmem %s0, %s426
      %s428 = smul.u32 128, %s27
      %s429 = smul.u32 128, %s27
      %p430 = scmp.lt.s32.totalorder %s26, 1
      %s431 = scalar_select %p430, %s26, 1
      %p432 = scmp.lt.s32.totalorder %s429, 127
      %s433 = scalar_select %p432, %s429, 127
      %s434 = smul.addr %s431, 128
      %s435 = sadd.s32 %s433, %s434
      %s436 = smul.addr %s435, 8
      %s437 = scalar_lea.vmem %s1, %s436
      %s438 = smul.u32 128, %s27
      %s439 = smul.u32 128, %s27
      %p440 = scmp.lt.s32.totalorder %s26, 1
      %s441 = scalar_select %p440, %s26, 1
      %p442 = scmp.lt.s32.totalorder %s439, 127
      %s443 = scalar_select %p442, %s439, 127
      %s444 = smul.addr %s441, 128
      %s445 = sadd.s32 %s443, %s444
      %s446 = smul.addr %s445, 8
      %s447 = scalar_lea.vmem %s9, %s446
      %s448 = smul.u32 128, %s27
      %s449 = smul.u32 128, %s27
      %p450 = scmp.lt.s32.totalorder %s26, 1
      %s451 = scalar_select %p450, %s26, 1
      %p452 = scmp.lt.s32.totalorder %s449, 127
      %s453 = scalar_select %p452, %s449, 127
      %s454 = smul.addr %s451, 128
      %s455 = sadd.s32 %s453, %s454
      %s456 = smul.addr %s455, 8
      %s457 = scalar_lea.vmem %s10, %s456
      %s458 = smul.u32 128, %s27
      %v460 = vld [vmem:[%s427] sm:$0xf]
      %v461 = vld [vmem:[%s427 + $0x4] sm:$0xf]
      %v462 = vld [vmem:[%s427 + $0x8] sm:$0xf]
      %v463 = vld [vmem:[%s427 + $0xc] sm:$0xf]
      %v464 = vld [vmem:[%s427 + $0x10] sm:$0xf]
      %v465 = vld [vmem:[%s427 + $0x14] sm:$0xf]
      %v466 = vld [vmem:[%s427 + $0x18] sm:$0xf]
      %v467 = vld [vmem:[%s427 + $0x1c] sm:$0xf]
      %v468 = vld [vmem:[%s427 + $0x20] sm:$0xf]
      %v469 = vld [vmem:[%s427 + $0x24] sm:$0xf]
      %v470 = vld [vmem:[%s427 + $0x28] sm:$0xf]
      %v471 = vld [vmem:[%s427 + $0x2c] sm:$0xf]
      %v472 = vld [vmem:[%s427 + $0x30] sm:$0xf]
      %v473 = vld [vmem:[%s427 + $0x34] sm:$0xf]
      %v474 = vld [vmem:[%s427 + $0x38] sm:$0xf]
      %v475 = vld [vmem:[%s427 + $0x3c] sm:$0xf]
      %v476 = vld [vmem:[%s427 + $0x40] sm:$0xf]
      %v477 = vld [vmem:[%s427 + $0x44] sm:$0xf]
      %v478 = vld [vmem:[%s427 + $0x48] sm:$0xf]
      %v479 = vld [vmem:[%s427 + $0x4c] sm:$0xf]
      %v480 = vld [vmem:[%s427 + $0x50] sm:$0xf]
      %v481 = vld [vmem:[%s427 + $0x54] sm:$0xf]
      %v482 = vld [vmem:[%s427 + $0x58] sm:$0xf]
      %v483 = vld [vmem:[%s427 + $0x5c] sm:$0xf]
      %v484 = vld [vmem:[%s427 + $0x60] sm:$0xf]
      %v485 = vld [vmem:[%s427 + $0x64] sm:$0xf]
      %v486 = vld [vmem:[%s427 + $0x68] sm:$0xf]
      %v487 = vld [vmem:[%s427 + $0x6c] sm:$0xf]
      %v488 = vld [vmem:[%s427 + $0x70] sm:$0xf]
      %v489 = vld [vmem:[%s427 + $0x74] sm:$0xf]
      %v490 = vld [vmem:[%s427 + $0x78] sm:$0xf]
      %v491 = vld [vmem:[%s427 + $0x7c] sm:$0xf]
      %v492 = vld [vmem:[%s427 + $0x80] sm:$0xf]
      %v493 = vld [vmem:[%s427 + $0x84] sm:$0xf]
      %v494 = vld [vmem:[%s427 + $0x88] sm:$0xf]
      %v495 = vld [vmem:[%s427 + $0x8c] sm:$0xf]
      %v496 = vld [vmem:[%s427 + $0x90] sm:$0xf]
      %v497 = vld [vmem:[%s427 + $0x94] sm:$0xf]
      %v498 = vld [vmem:[%s427 + $0x98] sm:$0xf]
      %v499 = vld [vmem:[%s427 + $0x9c] sm:$0xf]
      %v500 = vld [vmem:[%s427 + $0xa0] sm:$0xf]
      %v501 = vld [vmem:[%s427 + $0xa4] sm:$0xf]
      %v502 = vld [vmem:[%s427 + $0xa8] sm:$0xf]
      %v503 = vld [vmem:[%s427 + $0xac] sm:$0xf]
      %v504 = vld [vmem:[%s427 + $0xb0] sm:$0xf]
      %v505 = vld [vmem:[%s427 + $0xb4] sm:$0xf]
      %v506 = vld [vmem:[%s427 + $0xb8] sm:$0xf]
      %v507 = vld [vmem:[%s427 + $0xbc] sm:$0xf]
      %v508 = vld [vmem:[%s427 + $0xc0] sm:$0xf]
      %v509 = vld [vmem:[%s427 + $0xc4] sm:$0xf]
      %v510 = vld [vmem:[%s427 + $0xc8] sm:$0xf]
      %v511 = vld [vmem:[%s427 + $0xcc] sm:$0xf]
      %v512 = vld [vmem:[%s427 + $0xd0] sm:$0xf]
      %v513 = vld [vmem:[%s427 + $0xd4] sm:$0xf]
      %v514 = vld [vmem:[%s427 + $0xd8] sm:$0xf]
      %v515 = vld [vmem:[%s427 + $0xdc] sm:$0xf]
      %v516 = vld [vmem:[%s427 + $0xe0] sm:$0xf]
      %v517 = vld [vmem:[%s427 + $0xe4] sm:$0xf]
      %v518 = vld [vmem:[%s427 + $0xe8] sm:$0xf]
      %v519 = vld [vmem:[%s427 + $0xec] sm:$0xf]
      %v520 = vld [vmem:[%s427 + $0xf0] sm:$0xf]
      %v521 = vld [vmem:[%s427 + $0xf4] sm:$0xf]
      %v522 = vld [vmem:[%s427 + $0xf8] sm:$0xf]
      %v523 = vld [vmem:[%s427 + $0xfc] sm:$0xf]
      %v524 = vld [vmem:[%s427 + $0x100] sm:$0xf]
      %v525 = vld [vmem:[%s427 + $0x104] sm:$0xf]
      %v526 = vld [vmem:[%s427 + $0x108] sm:$0xf]
      %v527 = vld [vmem:[%s427 + $0x10c] sm:$0xf]
      %v528 = vld [vmem:[%s427 + $0x110] sm:$0xf]
      %v529 = vld [vmem:[%s427 + $0x114] sm:$0xf]
      %v530 = vld [vmem:[%s427 + $0x118] sm:$0xf]
      %v531 = vld [vmem:[%s427 + $0x11c] sm:$0xf]
      %v532 = vld [vmem:[%s427 + $0x120] sm:$0xf]
      %v533 = vld [vmem:[%s427 + $0x124] sm:$0xf]
      %v534 = vld [vmem:[%s427 + $0x128] sm:$0xf]
      %v535 = vld [vmem:[%s427 + $0x12c] sm:$0xf]
      %v536 = vld [vmem:[%s427 + $0x130] sm:$0xf]
      %v537 = vld [vmem:[%s427 + $0x134] sm:$0xf]
      %v538 = vld [vmem:[%s427 + $0x138] sm:$0xf]
      %v539 = vld [vmem:[%s427 + $0x13c] sm:$0xf]
      %v540 = vld [vmem:[%s427 + $0x140] sm:$0xf]
      %v541 = vld [vmem:[%s427 + $0x144] sm:$0xf]
      %v542 = vld [vmem:[%s427 + $0x148] sm:$0xf]
      %v543 = vld [vmem:[%s427 + $0x14c] sm:$0xf]
      %v544 = vld [vmem:[%s427 + $0x150] sm:$0xf]
      %v545 = vld [vmem:[%s427 + $0x154] sm:$0xf]
      %v546 = vld [vmem:[%s427 + $0x158] sm:$0xf]
      %v547 = vld [vmem:[%s427 + $0x15c] sm:$0xf]
      %v548 = vld [vmem:[%s427 + $0x160] sm:$0xf]
      %v549 = vld [vmem:[%s427 + $0x164] sm:$0xf]
      %v550 = vld [vmem:[%s427 + $0x168] sm:$0xf]
      %v551 = vld [vmem:[%s427 + $0x16c] sm:$0xf]
      %v552 = vld [vmem:[%s427 + $0x170] sm:$0xf]
      %v553 = vld [vmem:[%s427 + $0x174] sm:$0xf]
      %v554 = vld [vmem:[%s427 + $0x178] sm:$0xf]
      %v555 = vld [vmem:[%s427 + $0x17c] sm:$0xf]
      %v556 = vld [vmem:[%s427 + $0x180] sm:$0xf]
      %v557 = vld [vmem:[%s427 + $0x184] sm:$0xf]
      %v558 = vld [vmem:[%s427 + $0x188] sm:$0xf]
      %v559 = vld [vmem:[%s427 + $0x18c] sm:$0xf]
      %v560 = vld [vmem:[%s427 + $0x190] sm:$0xf]
      %v561 = vld [vmem:[%s427 + $0x194] sm:$0xf]
      %v562 = vld [vmem:[%s427 + $0x198] sm:$0xf]
      %v563 = vld [vmem:[%s427 + $0x19c] sm:$0xf]
      %v564 = vld [vmem:[%s427 + $0x1a0] sm:$0xf]
      %v565 = vld [vmem:[%s427 + $0x1a4] sm:$0xf]
      %v566 = vld [vmem:[%s427 + $0x1a8] sm:$0xf]
      %v567 = vld [vmem:[%s427 + $0x1ac] sm:$0xf]
      %v568 = vld [vmem:[%s427 + $0x1b0] sm:$0xf]
      %v569 = vld [vmem:[%s427 + $0x1b4] sm:$0xf]
      %v570 = vld [vmem:[%s427 + $0x1b8] sm:$0xf]
      %v571 = vld [vmem:[%s427 + $0x1bc] sm:$0xf]
      %v572 = vld [vmem:[%s427 + $0x1c0] sm:$0xf]
      %v573 = vld [vmem:[%s427 + $0x1c4] sm:$0xf]
      %v574 = vld [vmem:[%s427 + $0x1c8] sm:$0xf]
      %v575 = vld [vmem:[%s427 + $0x1cc] sm:$0xf]
      %v576 = vld [vmem:[%s427 + $0x1d0] sm:$0xf]
      %v577 = vld [vmem:[%s427 + $0x1d4] sm:$0xf]
      %v578 = vld [vmem:[%s427 + $0x1d8] sm:$0xf]
      %v579 = vld [vmem:[%s427 + $0x1dc] sm:$0xf]
      %v580 = vld [vmem:[%s427 + $0x1e0] sm:$0xf]
      %v581 = vld [vmem:[%s427 + $0x1e4] sm:$0xf]
      %v582 = vld [vmem:[%s427 + $0x1e8] sm:$0xf]
      %v583 = vld [vmem:[%s427 + $0x1ec] sm:$0xf]
      %v584 = vld [vmem:[%s427 + $0x1f0] sm:$0xf]
      %v585 = vld [vmem:[%s427 + $0x1f4] sm:$0xf]
      %v586 = vld [vmem:[%s427 + $0x1f8] sm:$0xf]
      %v587 = vld [vmem:[%s427 + $0x1fc] sm:$0xf]
      %v588 = vld [vmem:[%s2] sm:$0xf]
      %v589 = vld [vmem:[%s2 + $0x4] sm:$0xf]
      %v590 = vld [vmem:[%s2 + $0x8] sm:$0xf]
      %v591 = vld [vmem:[%s2 + $0xc] sm:$0xf]
      %v592 = vld [vmem:[%s3] sm:$0x1]
      %v594 = vperm.slane %v592, 0
      %v724 = vunpack.c.l.b16 %v460
      %v725 = vunpack.c.l.b16 %v461
      %v726 = vunpack.c.l.b16 %v462
      %v727 = vunpack.c.l.b16 %v463
      %v728 = vunpack.c.l.b16 %v464
      %v729 = vunpack.c.l.b16 %v465
      %v730 = vunpack.c.l.b16 %v466
      %v731 = vunpack.c.l.b16 %v467
      %v732 = vunpack.c.l.b16 %v468
      %v733 = vunpack.c.l.b16 %v469
      %v734 = vunpack.c.l.b16 %v470
      %v735 = vunpack.c.l.b16 %v471
      %v736 = vunpack.c.l.b16 %v472
      %v737 = vunpack.c.l.b16 %v473
      %v738 = vunpack.c.l.b16 %v474
      %v739 = vunpack.c.l.b16 %v475
      %v740 = vunpack.c.l.b16 %v476
      %v741 = vunpack.c.l.b16 %v477
      %v742 = vunpack.c.l.b16 %v478
      %v743 = vunpack.c.l.b16 %v479
      %v744 = vunpack.c.l.b16 %v480
      %v745 = vunpack.c.l.b16 %v481
      %v746 = vunpack.c.l.b16 %v482
      %v747 = vunpack.c.l.b16 %v483
      %v748 = vunpack.c.l.b16 %v484
      %v749 = vunpack.c.l.b16 %v485
      %v750 = vunpack.c.l.b16 %v486
      %v751 = vunpack.c.l.b16 %v487
      %v752 = vunpack.c.l.b16 %v488
      %v753 = vunpack.c.l.b16 %v489
      %v754 = vunpack.c.l.b16 %v490
      %v755 = vunpack.c.l.b16 %v491
      %v756 = vunpack.c.l.b16 %v492
      %v757 = vunpack.c.l.b16 %v493
      %v758 = vunpack.c.l.b16 %v494
      %v759 = vunpack.c.l.b16 %v495
      %v760 = vunpack.c.l.b16 %v496
      %v761 = vunpack.c.l.b16 %v497
      %v762 = vunpack.c.l.b16 %v498
      %v763 = vunpack.c.l.b16 %v499
      %v764 = vunpack.c.l.b16 %v500
      %v765 = vunpack.c.l.b16 %v501
      %v766 = vunpack.c.l.b16 %v502
      %v767 = vunpack.c.l.b16 %v503
      %v768 = vunpack.c.l.b16 %v504
      %v769 = vunpack.c.l.b16 %v505
      %v770 = vunpack.c.l.b16 %v506
      %v771 = vunpack.c.l.b16 %v507
      %v772 = vunpack.c.l.b16 %v508
      %v773 = vunpack.c.l.b16 %v509
      %v774 = vunpack.c.l.b16 %v510
      %v775 = vunpack.c.l.b16 %v511
      %v776 = vunpack.c.l.b16 %v512
      %v777 = vunpack.c.l.b16 %v513
      %v778 = vunpack.c.l.b16 %v514
      %v779 = vunpack.c.l.b16 %v515
      %v780 = vunpack.c.l.b16 %v516
      %v781 = vunpack.c.l.b16 %v517
      %v782 = vunpack.c.l.b16 %v518
      %v783 = vunpack.c.l.b16 %v519
      %v784 = vunpack.c.l.b16 %v520
      %v785 = vunpack.c.l.b16 %v521
      %v786 = vunpack.c.l.b16 %v522
      %v787 = vunpack.c.l.b16 %v523
      %v788 = vunpack.c.l.b16 %v524
      %v789 = vunpack.c.l.b16 %v525
      %v790 = vunpack.c.l.b16 %v526
      %v791 = vunpack.c.l.b16 %v527
      %v792 = vunpack.c.l.b16 %v528
      %v793 = vunpack.c.l.b16 %v529
      %v794 = vunpack.c.l.b16 %v530
      %v795 = vunpack.c.l.b16 %v531
      %v796 = vunpack.c.l.b16 %v532
      %v797 = vunpack.c.l.b16 %v533
      %v798 = vunpack.c.l.b16 %v534
      %v799 = vunpack.c.l.b16 %v535
      %v800 = vunpack.c.l.b16 %v536
      %v801 = vunpack.c.l.b16 %v537
      %v802 = vunpack.c.l.b16 %v538
      %v803 = vunpack.c.l.b16 %v539
      %v804 = vunpack.c.l.b16 %v540
      %v805 = vunpack.c.l.b16 %v541
      %v806 = vunpack.c.l.b16 %v542
      %v807 = vunpack.c.l.b16 %v543
      %v808 = vunpack.c.l.b16 %v544
      %v809 = vunpack.c.l.b16 %v545
      %v810 = vunpack.c.l.b16 %v546
      %v811 = vunpack.c.l.b16 %v547
      %v812 = vunpack.c.l.b16 %v548
      %v813 = vunpack.c.l.b16 %v549
      %v814 = vunpack.c.l.b16 %v550
      %v815 = vunpack.c.l.b16 %v551
      %v816 = vunpack.c.l.b16 %v552
      %v817 = vunpack.c.l.b16 %v553
      %v818 = vunpack.c.l.b16 %v554
      %v819 = vunpack.c.l.b16 %v555
      %v820 = vunpack.c.l.b16 %v556
      %v821 = vunpack.c.l.b16 %v557
      %v822 = vunpack.c.l.b16 %v558
      %v823 = vunpack.c.l.b16 %v559
      %v824 = vunpack.c.l.b16 %v560
      %v825 = vunpack.c.l.b16 %v561
      %v826 = vunpack.c.l.b16 %v562
      %v827 = vunpack.c.l.b16 %v563
      %v828 = vunpack.c.l.b16 %v564
      %v829 = vunpack.c.l.b16 %v565
      %v830 = vunpack.c.l.b16 %v566
      %v831 = vunpack.c.l.b16 %v567
      %v832 = vunpack.c.l.b16 %v568
      %v833 = vunpack.c.l.b16 %v569
      %v834 = vunpack.c.l.b16 %v570
      %v835 = vunpack.c.l.b16 %v571
      %v836 = vunpack.c.l.b16 %v572
      %v837 = vunpack.c.l.b16 %v573
      %v838 = vunpack.c.l.b16 %v574
      %v839 = vunpack.c.l.b16 %v575
      %v840 = vunpack.c.l.b16 %v576
      %v841 = vunpack.c.l.b16 %v577
      %v842 = vunpack.c.l.b16 %v578
      %v843 = vunpack.c.l.b16 %v579
      %v844 = vunpack.c.l.b16 %v580
      %v845 = vunpack.c.l.b16 %v581
      %v846 = vunpack.c.l.b16 %v582
      %v847 = vunpack.c.l.b16 %v583
      %v848 = vunpack.c.l.b16 %v584
      %v849 = vunpack.c.l.b16 %v585
      %v850 = vunpack.c.l.b16 %v586
      %v851 = vunpack.c.l.b16 %v587
      %v852 = vpack.c.b16 %v725, %v724
      %v853 = vpack.c.b16 %v727, %v726
      %v854 = vpack.c.b16 %v729, %v728
      %v855 = vpack.c.b16 %v731, %v730
      %v856 = vpack.c.b16 %v733, %v732
      %v857 = vpack.c.b16 %v735, %v734
      %v858 = vpack.c.b16 %v737, %v736
      %v859 = vpack.c.b16 %v739, %v738
      %v860 = vpack.c.b16 %v741, %v740
      %v861 = vpack.c.b16 %v743, %v742
      %v862 = vpack.c.b16 %v745, %v744
      %v863 = vpack.c.b16 %v747, %v746
      %v864 = vpack.c.b16 %v749, %v748
      %v865 = vpack.c.b16 %v751, %v750
      %v866 = vpack.c.b16 %v753, %v752
      %v867 = vpack.c.b16 %v755, %v754
      %v868 = vpack.c.b16 %v757, %v756
      %v869 = vpack.c.b16 %v759, %v758
      %v870 = vpack.c.b16 %v761, %v760
      %v871 = vpack.c.b16 %v763, %v762
      %v872 = vpack.c.b16 %v765, %v764
      %v873 = vpack.c.b16 %v767, %v766
      %v874 = vpack.c.b16 %v769, %v768
      %v875 = vpack.c.b16 %v771, %v770
      %v876 = vpack.c.b16 %v773, %v772
      %v877 = vpack.c.b16 %v775, %v774
      %v878 = vpack.c.b16 %v777, %v776
      %v879 = vpack.c.b16 %v779, %v778
      %v880 = vpack.c.b16 %v781, %v780
      %v881 = vpack.c.b16 %v783, %v782
      %v882 = vpack.c.b16 %v785, %v784
      %v883 = vpack.c.b16 %v787, %v786
      %v884 = vpack.c.b16 %v789, %v788
      %v885 = vpack.c.b16 %v791, %v790
      %v886 = vpack.c.b16 %v793, %v792
      %v887 = vpack.c.b16 %v795, %v794
      %v888 = vpack.c.b16 %v797, %v796
      %v889 = vpack.c.b16 %v799, %v798
      %v890 = vpack.c.b16 %v801, %v800
      %v891 = vpack.c.b16 %v803, %v802
      %v892 = vpack.c.b16 %v805, %v804
      %v893 = vpack.c.b16 %v807, %v806
      %v894 = vpack.c.b16 %v809, %v808
      %v895 = vpack.c.b16 %v811, %v810
      %v896 = vpack.c.b16 %v813, %v812
      %v897 = vpack.c.b16 %v815, %v814
      %v898 = vpack.c.b16 %v817, %v816
      %v899 = vpack.c.b16 %v819, %v818
      %v900 = vpack.c.b16 %v821, %v820
      %v901 = vpack.c.b16 %v823, %v822
      %v902 = vpack.c.b16 %v825, %v824
      %v903 = vpack.c.b16 %v827, %v826
      %v904 = vpack.c.b16 %v829, %v828
      %v905 = vpack.c.b16 %v831, %v830
      %v906 = vpack.c.b16 %v833, %v832
      %v907 = vpack.c.b16 %v835, %v834
      %v908 = vpack.c.b16 %v837, %v836
      %v909 = vpack.c.b16 %v839, %v838
      %v910 = vpack.c.b16 %v841, %v840
      %v911 = vpack.c.b16 %v843, %v842
      %v912 = vpack.c.b16 %v845, %v844
      %v913 = vpack.c.b16 %v847, %v846
      %v914 = vpack.c.b16 %v849, %v848
      %v915 = vpack.c.b16 %v851, %v850
      %v920 = vunpack.c.l.b16 %v588
      %v921 = vunpack.c.l.b16 %v589
      %v922 = vunpack.c.l.b16 %v590
      %v923 = vunpack.c.l.b16 %v591
      %v924 = vpack.c.b16 %v921, %v920
      %v925 = vpack.c.b16 %v923, %v922
      %vm928 = vcmask 261120
      %v930 = vsel %vm928, %v852, 0
      %v933 = vsel %vm928, %v853, 0
      %v936 = vsel %vm928, %v854, 0
      %v939 = vsel %vm928, %v855, 0
      %v942 = vsel %vm928, %v856, 0
      %v945 = vsel %vm928, %v857, 0
      %v948 = vsel %vm928, %v858, 0
      %v951 = vsel %vm928, %v859, 0
      %v954 = vsel %vm928, %v860, 0
      %v957 = vsel %vm928, %v861, 0
      %v960 = vsel %vm928, %v862, 0
      %v963 = vsel %vm928, %v863, 0
      %v966 = vsel %vm928, %v864, 0
      %v969 = vsel %vm928, %v865, 0
      %v972 = vsel %vm928, %v866, 0
      %v975 = vsel %vm928, %v867, 0
      %v978 = vsel %vm928, %v868, 0
      %v981 = vsel %vm928, %v869, 0
      %v984 = vsel %vm928, %v870, 0
      %v987 = vsel %vm928, %v871, 0
      %v990 = vsel %vm928, %v872, 0
      %v993 = vsel %vm928, %v873, 0
      %v996 = vsel %vm928, %v874, 0
      %v999 = vsel %vm928, %v875, 0
      %v1002 = vsel %vm928, %v876, 0
      %v1005 = vsel %vm928, %v877, 0
      %v1008 = vsel %vm928, %v878, 0
      %v1011 = vsel %vm928, %v879, 0
      %v1014 = vsel %vm928, %v880, 0
      %v1017 = vsel %vm928, %v881, 0
      %v1020 = vsel %vm928, %v882, 0
      %v1023 = vsel %vm928, %v883, 0
      %v1026 = vsel %vm928, %v884, 0
      %v1029 = vsel %vm928, %v885, 0
      %v1032 = vsel %vm928, %v886, 0
      %v1035 = vsel %vm928, %v887, 0
      %v1038 = vsel %vm928, %v888, 0
      %v1041 = vsel %vm928, %v889, 0
      %v1044 = vsel %vm928, %v890, 0
      %v1047 = vsel %vm928, %v891, 0
      %v1050 = vsel %vm928, %v892, 0
      %v1053 = vsel %vm928, %v893, 0
      %v1056 = vsel %vm928, %v894, 0
      %v1059 = vsel %vm928, %v895, 0
      %v1062 = vsel %vm928, %v896, 0
      %v1065 = vsel %vm928, %v897, 0
      %v1068 = vsel %vm928, %v898, 0
      %v1071 = vsel %vm928, %v899, 0
      %v1074 = vsel %vm928, %v900, 0
      %v1077 = vsel %vm928, %v901, 0
      %v1080 = vsel %vm928, %v902, 0
      %v1083 = vsel %vm928, %v903, 0
      %v1086 = vsel %vm928, %v904, 0
      %v1089 = vsel %vm928, %v905, 0
      %v1092 = vsel %vm928, %v906, 0
      %v1095 = vsel %vm928, %v907, 0
      %v1098 = vsel %vm928, %v908, 0
      %v1101 = vsel %vm928, %v909, 0
      %v1104 = vsel %vm928, %v910, 0
      %v1107 = vsel %vm928, %v911, 0
      %v1110 = vsel %vm928, %v912, 0
      %v1113 = vsel %vm928, %v913, 0
      %v1116 = vsel %vm928, %v914, 0
      %v1119 = vsel %vm928, %v915, 0
      %1121 = vmatpush.bf16.msra.mxu0 0
      %1122 = vmatpush.bf16.msra.mxu0 0
      %1123 = vmatpush.bf16.msra.mxu0 0
      %1124 = vmatpush.bf16.msra.mxu0 0
      %1125 = vmatpush.bf16.msra.mxu0 0
      %1126 = vmatpush.bf16.msra.mxu0 0
      %1127 = vmatpush.bf16.msra.mxu0 %v925
      %1128 = vmatpush.bf16.msra.mxu0 %v924
      %1129 = vmatmul.bf16.gmra.mxu0 %v930
      %v1130 = vpop.f32.mrf.mxu0
      %v1131 = vadd.f32 %v594, %v1130
      %v1132 = vpop.f32.mrf.mxu0
      %v1133 = vadd.f32 %v594, %v1132
      %1134 = vmatmul.bf16.gmra.mxu0 %v933
      %v1135 = vpop.f32.mrf.mxu0
      %v1136 = vadd.f32 %v594, %v1135
      %v1137 = vpop.f32.mrf.mxu0
      %v1138 = vadd.f32 %v594, %v1137
      %1139 = vmatmul.bf16.gmra.mxu0 %v936
      %v1140 = vpop.f32.mrf.mxu0
      %v1141 = vadd.f32 %v594, %v1140
      %v1142 = vpop.f32.mrf.mxu0
      %v1143 = vadd.f32 %v594, %v1142
      %1144 = vmatmul.bf16.gmra.mxu0 %v939
      %v1145 = vpop.f32.mrf.mxu0
      %v1146 = vadd.f32 %v594, %v1145
      %v1147 = vpop.f32.mrf.mxu0
      %v1148 = vadd.f32 %v594, %v1147
      %1149 = vmatmul.bf16.gmra.mxu0 %v942
      %v1150 = vpop.f32.mrf.mxu0
      %v1151 = vadd.f32 %v594, %v1150
      %v1152 = vpop.f32.mrf.mxu0
      %v1153 = vadd.f32 %v594, %v1152
      %1154 = vmatmul.bf16.gmra.mxu0 %v945
      %v1155 = vpop.f32.mrf.mxu0
      %v1156 = vadd.f32 %v594, %v1155
      %v1157 = vpop.f32.mrf.mxu0
      %v1158 = vadd.f32 %v594, %v1157
      %1159 = vmatmul.bf16.gmra.mxu0 %v948
      %v1160 = vpop.f32.mrf.mxu0
      %v1161 = vadd.f32 %v594, %v1160
      %v1162 = vpop.f32.mrf.mxu0
      %v1163 = vadd.f32 %v594, %v1162
      %1164 = vmatmul.bf16.gmra.mxu0 %v951
      %v1165 = vpop.f32.mrf.mxu0
      %v1166 = vadd.f32 %v594, %v1165
      %v1167 = vpop.f32.mrf.mxu0
      %v1168 = vadd.f32 %v594, %v1167
      %1169 = vmatmul.bf16.gmra.mxu0 %v954
      %v1170 = vpop.f32.mrf.mxu0
      %v1171 = vadd.f32 %v594, %v1170
      %v1172 = vpop.f32.mrf.mxu0
      %v1173 = vadd.f32 %v594, %v1172
      %1174 = vmatmul.bf16.gmra.mxu0 %v957
      %v1175 = vpop.f32.mrf.mxu0
      %v1176 = vadd.f32 %v594, %v1175
      %v1177 = vpop.f32.mrf.mxu0
      %v1178 = vadd.f32 %v594, %v1177
      %1179 = vmatmul.bf16.gmra.mxu0 %v960
      %v1180 = vpop.f32.mrf.mxu0
      %v1181 = vadd.f32 %v594, %v1180
      %v1182 = vpop.f32.mrf.mxu0
      %v1183 = vadd.f32 %v594, %v1182
      %1184 = vmatmul.bf16.gmra.mxu0 %v963
      %v1185 = vpop.f32.mrf.mxu0
      %v1186 = vadd.f32 %v594, %v1185
      %v1187 = vpop.f32.mrf.mxu0
      %v1188 = vadd.f32 %v594, %v1187
      %1189 = vmatmul.bf16.gmra.mxu0 %v966
      %v1190 = vpop.f32.mrf.mxu0
      %v1191 = vadd.f32 %v594, %v1190
      %v1192 = vpop.f32.mrf.mxu0
      %v1193 = vadd.f32 %v594, %v1192
      %1194 = vmatmul.bf16.gmra.mxu0 %v969
      %v1195 = vpop.f32.mrf.mxu0
      %v1196 = vadd.f32 %v594, %v1195
      %v1197 = vpop.f32.mrf.mxu0
      %v1198 = vadd.f32 %v594, %v1197
      %1199 = vmatmul.bf16.gmra.mxu0 %v972
      %v1200 = vpop.f32.mrf.mxu0
      %v1201 = vadd.f32 %v594, %v1200
      %v1202 = vpop.f32.mrf.mxu0
      %v1203 = vadd.f32 %v594, %v1202
      %1204 = vmatmul.bf16.gmra.mxu0 %v975
      %v1205 = vpop.f32.mrf.mxu0
      %v1206 = vadd.f32 %v594, %v1205
      %v1207 = vpop.f32.mrf.mxu0
      %v1208 = vadd.f32 %v594, %v1207
      %1209 = vmatmul.bf16.gmra.mxu0 %v978
      %v1210 = vpop.f32.mrf.mxu0
      %v1211 = vadd.f32 %v594, %v1210
      %v1212 = vpop.f32.mrf.mxu0
      %v1213 = vadd.f32 %v594, %v1212
      %1214 = vmatmul.bf16.gmra.mxu0 %v981
      %v1215 = vpop.f32.mrf.mxu0
      %v1216 = vadd.f32 %v594, %v1215
      %v1217 = vpop.f32.mrf.mxu0
      %v1218 = vadd.f32 %v594, %v1217
      %1219 = vmatmul.bf16.gmra.mxu0 %v984
      %v1220 = vpop.f32.mrf.mxu0
      %v1221 = vadd.f32 %v594, %v1220
      %v1222 = vpop.f32.mrf.mxu0
      %v1223 = vadd.f32 %v594, %v1222
      %1224 = vmatmul.bf16.gmra.mxu0 %v987
      %v1225 = vpop.f32.mrf.mxu0
      %v1226 = vadd.f32 %v594, %v1225
      %v1227 = vpop.f32.mrf.mxu0
      %v1228 = vadd.f32 %v594, %v1227
      %1229 = vmatmul.bf16.gmra.mxu0 %v990
      %v1230 = vpop.f32.mrf.mxu0
      %v1231 = vadd.f32 %v594, %v1230
      %v1232 = vpop.f32.mrf.mxu0
      %v1233 = vadd.f32 %v594, %v1232
      %1234 = vmatmul.bf16.gmra.mxu0 %v993
      %v1235 = vpop.f32.mrf.mxu0
      %v1236 = vadd.f32 %v594, %v1235
      %v1237 = vpop.f32.mrf.mxu0
      %v1238 = vadd.f32 %v594, %v1237
      %1239 = vmatmul.bf16.gmra.mxu0 %v996
      %v1240 = vpop.f32.mrf.mxu0
      %v1241 = vadd.f32 %v594, %v1240
      %v1242 = vpop.f32.mrf.mxu0
      %v1243 = vadd.f32 %v594, %v1242
      %1244 = vmatmul.bf16.gmra.mxu0 %v999
      %v1245 = vpop.f32.mrf.mxu0
      %v1246 = vadd.f32 %v594, %v1245
      %v1247 = vpop.f32.mrf.mxu0
      %v1248 = vadd.f32 %v594, %v1247
      %1249 = vmatmul.bf16.gmra.mxu0 %v1002
      %v1250 = vpop.f32.mrf.mxu0
      %v1251 = vadd.f32 %v594, %v1250
      %v1252 = vpop.f32.mrf.mxu0
      %v1253 = vadd.f32 %v594, %v1252
      %1254 = vmatmul.bf16.gmra.mxu0 %v1005
      %v1255 = vpop.f32.mrf.mxu0
      %v1256 = vadd.f32 %v594, %v1255
      %v1257 = vpop.f32.mrf.mxu0
      %v1258 = vadd.f32 %v594, %v1257
      %1259 = vmatmul.bf16.gmra.mxu0 %v1008
      %v1260 = vpop.f32.mrf.mxu0
      %v1261 = vadd.f32 %v594, %v1260
      %v1262 = vpop.f32.mrf.mxu0
      %v1263 = vadd.f32 %v594, %v1262
      %1264 = vmatmul.bf16.gmra.mxu0 %v1011
      %v1265 = vpop.f32.mrf.mxu0
      %v1266 = vadd.f32 %v594, %v1265
      %v1267 = vpop.f32.mrf.mxu0
      %v1268 = vadd.f32 %v594, %v1267
      %1269 = vmatmul.bf16.gmra.mxu0 %v1014
      %v1270 = vpop.f32.mrf.mxu0
      %v1271 = vadd.f32 %v594, %v1270
      %v1272 = vpop.f32.mrf.mxu0
      %v1273 = vadd.f32 %v594, %v1272
      %1274 = vmatmul.bf16.gmra.mxu0 %v1017
      %v1275 = vpop.f32.mrf.mxu0
      %v1276 = vadd.f32 %v594, %v1275
      %v1277 = vpop.f32.mrf.mxu0
      %v1278 = vadd.f32 %v594, %v1277
      %1279 = vmatmul.bf16.gmra.mxu0 %v1020
      %v1280 = vpop.f32.mrf.mxu0
      %v1281 = vadd.f32 %v594, %v1280
      %v1282 = vpop.f32.mrf.mxu0
      %v1283 = vadd.f32 %v594, %v1282
      %1284 = vmatmul.bf16.gmra.mxu0 %v1023
      %v1285 = vpop.f32.mrf.mxu0
      %v1286 = vadd.f32 %v594, %v1285
      %v1287 = vpop.f32.mrf.mxu0
      %v1288 = vadd.f32 %v594, %v1287
      %1289 = vmatmul.bf16.gmra.mxu0 %v1026
      %v1290 = vpop.f32.mrf.mxu0
      %v1291 = vadd.f32 %v594, %v1290
      %v1292 = vpop.f32.mrf.mxu0
      %v1293 = vadd.f32 %v594, %v1292
      %1294 = vmatmul.bf16.gmra.mxu0 %v1029
      %v1295 = vpop.f32.mrf.mxu0
      %v1296 = vadd.f32 %v594, %v1295
      %v1297 = vpop.f32.mrf.mxu0
      %v1298 = vadd.f32 %v594, %v1297
      %1299 = vmatmul.bf16.gmra.mxu0 %v1032
      %v1300 = vpop.f32.mrf.mxu0
      %v1301 = vadd.f32 %v594, %v1300
      %v1302 = vpop.f32.mrf.mxu0
      %v1303 = vadd.f32 %v594, %v1302
      %1304 = vmatmul.bf16.gmra.mxu0 %v1035
      %v1305 = vpop.f32.mrf.mxu0
      %v1306 = vadd.f32 %v594, %v1305
      %v1307 = vpop.f32.mrf.mxu0
      %v1308 = vadd.f32 %v594, %v1307
      %1309 = vmatmul.bf16.gmra.mxu0 %v1038
      %v1310 = vpop.f32.mrf.mxu0
      %v1311 = vadd.f32 %v594, %v1310
      %v1312 = vpop.f32.mrf.mxu0
      %v1313 = vadd.f32 %v594, %v1312
      %1314 = vmatmul.bf16.gmra.mxu0 %v1041
      %v1315 = vpop.f32.mrf.mxu0
      %v1316 = vadd.f32 %v594, %v1315
      %v1317 = vpop.f32.mrf.mxu0
      %v1318 = vadd.f32 %v594, %v1317
      %1319 = vmatmul.bf16.gmra.mxu0 %v1044
      %v1320 = vpop.f32.mrf.mxu0
      %v1321 = vadd.f32 %v594, %v1320
      %v1322 = vpop.f32.mrf.mxu0
      %v1323 = vadd.f32 %v594, %v1322
      %1324 = vmatmul.bf16.gmra.mxu0 %v1047
      %v1325 = vpop.f32.mrf.mxu0
      %v1326 = vadd.f32 %v594, %v1325
      %v1327 = vpop.f32.mrf.mxu0
      %v1328 = vadd.f32 %v594, %v1327
      %1329 = vmatmul.bf16.gmra.mxu0 %v1050
      %v1330 = vpop.f32.mrf.mxu0
      %v1331 = vadd.f32 %v594, %v1330
      %v1332 = vpop.f32.mrf.mxu0
      %v1333 = vadd.f32 %v594, %v1332
      %1334 = vmatmul.bf16.gmra.mxu0 %v1053
      %v1335 = vpop.f32.mrf.mxu0
      %v1336 = vadd.f32 %v594, %v1335
      %v1337 = vpop.f32.mrf.mxu0
      %v1338 = vadd.f32 %v594, %v1337
      %1339 = vmatmul.bf16.gmra.mxu0 %v1056
      %v1340 = vpop.f32.mrf.mxu0
      %v1341 = vadd.f32 %v594, %v1340
      %v1342 = vpop.f32.mrf.mxu0
      %v1343 = vadd.f32 %v594, %v1342
      %1344 = vmatmul.bf16.gmra.mxu0 %v1059
      %v1345 = vpop.f32.mrf.mxu0
      %v1346 = vadd.f32 %v594, %v1345
      %v1347 = vpop.f32.mrf.mxu0
      %v1348 = vadd.f32 %v594, %v1347
      %1349 = vmatmul.bf16.gmra.mxu0 %v1062
      %v1350 = vpop.f32.mrf.mxu0
      %v1351 = vadd.f32 %v594, %v1350
      %v1352 = vpop.f32.mrf.mxu0
      %v1353 = vadd.f32 %v594, %v1352
      %1354 = vmatmul.bf16.gmra.mxu0 %v1065
      %v1355 = vpop.f32.mrf.mxu0
      %v1356 = vadd.f32 %v594, %v1355
      %v1357 = vpop.f32.mrf.mxu0
      %v1358 = vadd.f32 %v594, %v1357
      %1359 = vmatmul.bf16.gmra.mxu0 %v1068
      %v1360 = vpop.f32.mrf.mxu0
      %v1361 = vadd.f32 %v594, %v1360
      %v1362 = vpop.f32.mrf.mxu0
      %v1363 = vadd.f32 %v594, %v1362
      %1364 = vmatmul.bf16.gmra.mxu0 %v1071
      %v1365 = vpop.f32.mrf.mxu0
      %v1366 = vadd.f32 %v594, %v1365
      %v1367 = vpop.f32.mrf.mxu0
      %v1368 = vadd.f32 %v594, %v1367
      %1369 = vmatmul.bf16.gmra.mxu0 %v1074
      %v1370 = vpop.f32.mrf.mxu0
      %v1371 = vadd.f32 %v594, %v1370
      %v1372 = vpop.f32.mrf.mxu0
      %v1373 = vadd.f32 %v594, %v1372
      %1374 = vmatmul.bf16.gmra.mxu0 %v1077
      %v1375 = vpop.f32.mrf.mxu0
      %v1376 = vadd.f32 %v594, %v1375
      %v1377 = vpop.f32.mrf.mxu0
      %v1378 = vadd.f32 %v594, %v1377
      %1379 = vmatmul.bf16.gmra.mxu0 %v1080
      %v1380 = vpop.f32.mrf.mxu0
      %v1381 = vadd.f32 %v594, %v1380
      %v1382 = vpop.f32.mrf.mxu0
      %v1383 = vadd.f32 %v594, %v1382
      %1384 = vmatmul.bf16.gmra.mxu0 %v1083
      %v1385 = vpop.f32.mrf.mxu0
      %v1386 = vadd.f32 %v594, %v1385
      %v1387 = vpop.f32.mrf.mxu0
      %v1388 = vadd.f32 %v594, %v1387
      %1389 = vmatmul.bf16.gmra.mxu0 %v1086
      %v1390 = vpop.f32.mrf.mxu0
      %v1391 = vadd.f32 %v594, %v1390
      %v1392 = vpop.f32.mrf.mxu0
      %v1393 = vadd.f32 %v594, %v1392
      %1394 = vmatmul.bf16.gmra.mxu0 %v1089
      %v1395 = vpop.f32.mrf.mxu0
      %v1396 = vadd.f32 %v594, %v1395
      %v1397 = vpop.f32.mrf.mxu0
      %v1398 = vadd.f32 %v594, %v1397
      %1399 = vmatmul.bf16.gmra.mxu0 %v1092
      %v1400 = vpop.f32.mrf.mxu0
      %v1401 = vadd.f32 %v594, %v1400
      %v1402 = vpop.f32.mrf.mxu0
      %v1403 = vadd.f32 %v594, %v1402
      %1404 = vmatmul.bf16.gmra.mxu0 %v1095
      %v1405 = vpop.f32.mrf.mxu0
      %v1406 = vadd.f32 %v594, %v1405
      %v1407 = vpop.f32.mrf.mxu0
      %v1408 = vadd.f32 %v594, %v1407
      %1409 = vmatmul.bf16.gmra.mxu0 %v1098
      %v1410 = vpop.f32.mrf.mxu0
      %v1411 = vadd.f32 %v594, %v1410
      %v1412 = vpop.f32.mrf.mxu0
      %v1413 = vadd.f32 %v594, %v1412
      %1414 = vmatmul.bf16.gmra.mxu0 %v1101
      %v1415 = vpop.f32.mrf.mxu0
      %v1416 = vadd.f32 %v594, %v1415
      %v1417 = vpop.f32.mrf.mxu0
      %v1418 = vadd.f32 %v594, %v1417
      %1419 = vmatmul.bf16.gmra.mxu0 %v1104
      %v1420 = vpop.f32.mrf.mxu0
      %v1421 = vadd.f32 %v594, %v1420
      %v1422 = vpop.f32.mrf.mxu0
      %v1423 = vadd.f32 %v594, %v1422
      %1424 = vmatmul.bf16.gmra.mxu0 %v1107
      %v1425 = vpop.f32.mrf.mxu0
      %v1426 = vadd.f32 %v594, %v1425
      %v1427 = vpop.f32.mrf.mxu0
      %v1428 = vadd.f32 %v594, %v1427
      %1429 = vmatmul.bf16.gmra.mxu0 %v1110
      %v1430 = vpop.f32.mrf.mxu0
      %v1431 = vadd.f32 %v594, %v1430
      %v1432 = vpop.f32.mrf.mxu0
      %v1433 = vadd.f32 %v594, %v1432
      %1434 = vmatmul.bf16.gmra.mxu0 %v1113
      %v1435 = vpop.f32.mrf.mxu0
      %v1436 = vadd.f32 %v594, %v1435
      %v1437 = vpop.f32.mrf.mxu0
      %v1438 = vadd.f32 %v594, %v1437
      %1439 = vmatmul.bf16.gmra.mxu0 %v1116
      %v1440 = vpop.f32.mrf.mxu0
      %v1441 = vadd.f32 %v594, %v1440
      %v1442 = vpop.f32.mrf.mxu0
      %v1443 = vadd.f32 %v594, %v1442
      %1444 = vmatmul.bf16.gmra.mxu0 %v1119
      %v1445 = vpop.f32.mrf.mxu0
      %v1446 = vadd.f32 %v594, %v1445
      %v1447 = vpop.f32.mrf.mxu0
      %v1448 = vadd.f32 %v594, %v1447
      %1449 = vdwg.mxu0
      %v1450 = vmax.f32 %v1131, 0.0
      %v1451 = vmax.f32 %v1133, 0.0
      %v1452 = vmax.f32 %v1136, 0.0
      %v1453 = vmax.f32 %v1138, 0.0
      %v1454 = vmax.f32 %v1141, 0.0
      %v1455 = vmax.f32 %v1143, 0.0
      %v1456 = vmax.f32 %v1146, 0.0
      %v1457 = vmax.f32 %v1148, 0.0
      %v1458 = vmax.f32 %v1151, 0.0
      %v1459 = vmax.f32 %v1153, 0.0
      %v1460 = vmax.f32 %v1156, 0.0
      %v1461 = vmax.f32 %v1158, 0.0
      %v1462 = vmax.f32 %v1161, 0.0
      %v1463 = vmax.f32 %v1163, 0.0
      %v1464 = vmax.f32 %v1166, 0.0
      %v1465 = vmax.f32 %v1168, 0.0
      %v1466 = vmax.f32 %v1171, 0.0
      %v1467 = vmax.f32 %v1173, 0.0
      %v1468 = vmax.f32 %v1176, 0.0
      %v1469 = vmax.f32 %v1178, 0.0
      %v1470 = vmax.f32 %v1181, 0.0
      %v1471 = vmax.f32 %v1183, 0.0
      %v1472 = vmax.f32 %v1186, 0.0
      %v1473 = vmax.f32 %v1188, 0.0
      %v1474 = vmax.f32 %v1191, 0.0
      %v1475 = vmax.f32 %v1193, 0.0
      %v1476 = vmax.f32 %v1196, 0.0
      %v1477 = vmax.f32 %v1198, 0.0
      %v1478 = vmax.f32 %v1201, 0.0
      %v1479 = vmax.f32 %v1203, 0.0
      %v1480 = vmax.f32 %v1206, 0.0
      %v1481 = vmax.f32 %v1208, 0.0
      %v1482 = vmax.f32 %v1211, 0.0
      %v1483 = vmax.f32 %v1213, 0.0
      %v1484 = vmax.f32 %v1216, 0.0
      %v1485 = vmax.f32 %v1218, 0.0
      %v1486 = vmax.f32 %v1221, 0.0
      %v1487 = vmax.f32 %v1223, 0.0
      %v1488 = vmax.f32 %v1226, 0.0
      %v1489 = vmax.f32 %v1228, 0.0
      %v1490 = vmax.f32 %v1231, 0.0
      %v1491 = vmax.f32 %v1233, 0.0
      %v1492 = vmax.f32 %v1236, 0.0
      %v1493 = vmax.f32 %v1238, 0.0
      %v1494 = vmax.f32 %v1241, 0.0
      %v1495 = vmax.f32 %v1243, 0.0
      %v1496 = vmax.f32 %v1246, 0.0
      %v1497 = vmax.f32 %v1248, 0.0
      %v1498 = vmax.f32 %v1251, 0.0
      %v1499 = vmax.f32 %v1253, 0.0
      %v1500 = vmax.f32 %v1256, 0.0
      %v1501 = vmax.f32 %v1258, 0.0
      %v1502 = vmax.f32 %v1261, 0.0
      %v1503 = vmax.f32 %v1263, 0.0
      %v1504 = vmax.f32 %v1266, 0.0
      %v1505 = vmax.f32 %v1268, 0.0
      %v1506 = vmax.f32 %v1271, 0.0
      %v1507 = vmax.f32 %v1273, 0.0
      %v1508 = vmax.f32 %v1276, 0.0
      %v1509 = vmax.f32 %v1278, 0.0
      %v1510 = vmax.f32 %v1281, 0.0
      %v1511 = vmax.f32 %v1283, 0.0
      %v1512 = vmax.f32 %v1286, 0.0
      %v1513 = vmax.f32 %v1288, 0.0
      %v1514 = vmax.f32 %v1291, 0.0
      %v1515 = vmax.f32 %v1293, 0.0
      %v1516 = vmax.f32 %v1296, 0.0
      %v1517 = vmax.f32 %v1298, 0.0
      %v1518 = vmax.f32 %v1301, 0.0
      %v1519 = vmax.f32 %v1303, 0.0
      %v1520 = vmax.f32 %v1306, 0.0
      %v1521 = vmax.f32 %v1308, 0.0
      %v1522 = vmax.f32 %v1311, 0.0
      %v1523 = vmax.f32 %v1313, 0.0
      %v1524 = vmax.f32 %v1316, 0.0
      %v1525 = vmax.f32 %v1318, 0.0
      %v1526 = vmax.f32 %v1321, 0.0
      %v1527 = vmax.f32 %v1323, 0.0
      %v1528 = vmax.f32 %v1326, 0.0
      %v1529 = vmax.f32 %v1328, 0.0
      %v1530 = vmax.f32 %v1331, 0.0
      %v1531 = vmax.f32 %v1333, 0.0
      %v1532 = vmax.f32 %v1336, 0.0
      %v1533 = vmax.f32 %v1338, 0.0
      %v1534 = vmax.f32 %v1341, 0.0
      %v1535 = vmax.f32 %v1343, 0.0
      %v1536 = vmax.f32 %v1346, 0.0
      %v1537 = vmax.f32 %v1348, 0.0
      %v1538 = vmax.f32 %v1351, 0.0
      %v1539 = vmax.f32 %v1353, 0.0
      %v1540 = vmax.f32 %v1356, 0.0
      %v1541 = vmax.f32 %v1358, 0.0
      %v1542 = vmax.f32 %v1361, 0.0
      %v1543 = vmax.f32 %v1363, 0.0
      %v1544 = vmax.f32 %v1366, 0.0
      %v1545 = vmax.f32 %v1368, 0.0
      %v1546 = vmax.f32 %v1371, 0.0
      %v1547 = vmax.f32 %v1373, 0.0
      %v1548 = vmax.f32 %v1376, 0.0
      %v1549 = vmax.f32 %v1378, 0.0
      %v1550 = vmax.f32 %v1381, 0.0
      %v1551 = vmax.f32 %v1383, 0.0
      %v1552 = vmax.f32 %v1386, 0.0
      %v1553 = vmax.f32 %v1388, 0.0
      %v1554 = vmax.f32 %v1391, 0.0
      %v1555 = vmax.f32 %v1393, 0.0
      %v1556 = vmax.f32 %v1396, 0.0
      %v1557 = vmax.f32 %v1398, 0.0
      %v1558 = vmax.f32 %v1401, 0.0
      %v1559 = vmax.f32 %v1403, 0.0
      %v1560 = vmax.f32 %v1406, 0.0
      %v1561 = vmax.f32 %v1408, 0.0
      %v1562 = vmax.f32 %v1411, 0.0
      %v1563 = vmax.f32 %v1413, 0.0
      %v1564 = vmax.f32 %v1416, 0.0
      %v1565 = vmax.f32 %v1418, 0.0
      %v1566 = vmax.f32 %v1421, 0.0
      %v1567 = vmax.f32 %v1423, 0.0
      %v1568 = vmax.f32 %v1426, 0.0
      %v1569 = vmax.f32 %v1428, 0.0
      %v1570 = vmax.f32 %v1431, 0.0
      %v1571 = vmax.f32 %v1433, 0.0
      %v1572 = vmax.f32 %v1436, 0.0
      %v1573 = vmax.f32 %v1438, 0.0
      %v1574 = vmax.f32 %v1441, 0.0
      %v1575 = vmax.f32 %v1443, 0.0
      %v1576 = vmax.f32 %v1446, 0.0
      %v1577 = vmax.f32 %v1448, 0.0
      %v1578 = vpack.c.bf16 %v1451, %v1450
      %v1579 = vpack.c.bf16 %v1453, %v1452
      %v1580 = vpack.c.bf16 %v1455, %v1454
      %v1581 = vpack.c.bf16 %v1457, %v1456
      %v1582 = vpack.c.bf16 %v1459, %v1458
      %v1583 = vpack.c.bf16 %v1461, %v1460
      %v1584 = vpack.c.bf16 %v1463, %v1462
      %v1585 = vpack.c.bf16 %v1465, %v1464
      %v1586 = vpack.c.bf16 %v1467, %v1466
      %v1587 = vpack.c.bf16 %v1469, %v1468
      %v1588 = vpack.c.bf16 %v1471, %v1470
      %v1589 = vpack.c.bf16 %v1473, %v1472
      %v1590 = vpack.c.bf16 %v1475, %v1474
      %v1591 = vpack.c.bf16 %v1477, %v1476
      %v1592 = vpack.c.bf16 %v1479, %v1478
      %v1593 = vpack.c.bf16 %v1481, %v1480
      %v1594 = vpack.c.bf16 %v1483, %v1482
      %v1595 = vpack.c.bf16 %v1485, %v1484
      %v1596 = vpack.c.bf16 %v1487, %v1486
      %v1597 = vpack.c.bf16 %v1489, %v1488
      %v1598 = vpack.c.bf16 %v1491, %v1490
      %v1599 = vpack.c.bf16 %v1493, %v1492
      %v1600 = vpack.c.bf16 %v1495, %v1494
      %v1601 = vpack.c.bf16 %v1497, %v1496
      %v1602 = vpack.c.bf16 %v1499, %v1498
      %v1603 = vpack.c.bf16 %v1501, %v1500
      %v1604 = vpack.c.bf16 %v1503, %v1502
      %v1605 = vpack.c.bf16 %v1505, %v1504
      %v1606 = vpack.c.bf16 %v1507, %v1506
      %v1607 = vpack.c.bf16 %v1509, %v1508
      %v1608 = vpack.c.bf16 %v1511, %v1510
      %v1609 = vpack.c.bf16 %v1513, %v1512
      %v1610 = vpack.c.bf16 %v1515, %v1514
      %v1611 = vpack.c.bf16 %v1517, %v1516
      %v1612 = vpack.c.bf16 %v1519, %v1518
      %v1613 = vpack.c.bf16 %v1521, %v1520
      %v1614 = vpack.c.bf16 %v1523, %v1522
      %v1615 = vpack.c.bf16 %v1525, %v1524
      %v1616 = vpack.c.bf16 %v1527, %v1526
      %v1617 = vpack.c.bf16 %v1529, %v1528
      %v1618 = vpack.c.bf16 %v1531, %v1530
      %v1619 = vpack.c.bf16 %v1533, %v1532
      %v1620 = vpack.c.bf16 %v1535, %v1534
      %v1621 = vpack.c.bf16 %v1537, %v1536
      %v1622 = vpack.c.bf16 %v1539, %v1538
      %v1623 = vpack.c.bf16 %v1541, %v1540
      %v1624 = vpack.c.bf16 %v1543, %v1542
      %v1625 = vpack.c.bf16 %v1545, %v1544
      %v1626 = vpack.c.bf16 %v1547, %v1546
      %v1627 = vpack.c.bf16 %v1549, %v1548
      %v1628 = vpack.c.bf16 %v1551, %v1550
      %v1629 = vpack.c.bf16 %v1553, %v1552
      %v1630 = vpack.c.bf16 %v1555, %v1554
      %v1631 = vpack.c.bf16 %v1557, %v1556
      %v1632 = vpack.c.bf16 %v1559, %v1558
      %v1633 = vpack.c.bf16 %v1561, %v1560
      %v1634 = vpack.c.bf16 %v1563, %v1562
      %v1635 = vpack.c.bf16 %v1565, %v1564
      %v1636 = vpack.c.bf16 %v1567, %v1566
      %v1637 = vpack.c.bf16 %v1569, %v1568
      %v1638 = vpack.c.bf16 %v1571, %v1570
      %v1639 = vpack.c.bf16 %v1573, %v1572
      %v1640 = vpack.c.bf16 %v1575, %v1574
      %v1641 = vpack.c.bf16 %v1577, %v1576
      %v1642 = vld [vmem:[%s4] sm:$0xf]
      %v1643 = vld [vmem:[%s4 + $0x4] sm:$0xf]
      %v1644 = vld [vmem:[%s4 + $0x8] sm:$0xf]
      %v1645 = vld [vmem:[%s4 + $0xc] sm:$0xf]
      %v1646 = vld [vmem:[%s4 + $0x10] sm:$0xf]
      %v1647 = vld [vmem:[%s4 + $0x14] sm:$0xf]
      %v1648 = vld [vmem:[%s4 + $0x18] sm:$0xf]
      %v1649 = vld [vmem:[%s4 + $0x1c] sm:$0xf]
      %v1650 = vld [vmem:[%s5] sm:$0x1]
      %v1652 = vperm.slane %v1650, 0
      %1718 = vrot.lane.b32.xlu0 %v1578, 64
      %v1719 = vpop.permute.xlu0 %1718
      %1720 = vrot.lane.b32.xlu0 %v1579, 64
      %v1721 = vpop.permute.xlu0 %1720
      %1722 = vrot.lane.b32.xlu0 %v1580, 64
      %v1723 = vpop.permute.xlu0 %1722
      %1724 = vrot.lane.b32.xlu0 %v1581, 64
      %v1725 = vpop.permute.xlu0 %1724
      %1726 = vrot.lane.b32.xlu0 %v1582, 64
      %v1727 = vpop.permute.xlu0 %1726
      %1728 = vrot.lane.b32.xlu0 %v1583, 64
      %v1729 = vpop.permute.xlu0 %1728
      %1730 = vrot.lane.b32.xlu0 %v1584, 64
      %v1731 = vpop.permute.xlu0 %1730
      %1732 = vrot.lane.b32.xlu0 %v1585, 64
      %v1733 = vpop.permute.xlu0 %1732
      %1734 = vrot.lane.b32.xlu0 %v1586, 64
      %v1735 = vpop.permute.xlu0 %1734
      %1736 = vrot.lane.b32.xlu0 %v1587, 64
      %v1737 = vpop.permute.xlu0 %1736
      %1738 = vrot.lane.b32.xlu0 %v1588, 64
      %v1739 = vpop.permute.xlu0 %1738
      %1740 = vrot.lane.b32.xlu0 %v1589, 64
      %v1741 = vpop.permute.xlu0 %1740
      %1742 = vrot.lane.b32.xlu0 %v1590, 64
      %v1743 = vpop.permute.xlu0 %1742
      %1744 = vrot.lane.b32.xlu0 %v1591, 64
      %v1745 = vpop.permute.xlu0 %1744
      %1746 = vrot.lane.b32.xlu0 %v1592, 64
      %v1747 = vpop.permute.xlu0 %1746
      %1748 = vrot.lane.b32.xlu0 %v1593, 64
      %v1749 = vpop.permute.xlu0 %1748
      %1750 = vrot.lane.b32.xlu0 %v1594, 64
      %v1751 = vpop.permute.xlu0 %1750
      %1752 = vrot.lane.b32.xlu0 %v1595, 64
      %v1753 = vpop.permute.xlu0 %1752
      %1754 = vrot.lane.b32.xlu0 %v1596, 64
      %v1755 = vpop.permute.xlu0 %1754
      %1756 = vrot.lane.b32.xlu0 %v1597, 64
      %v1757 = vpop.permute.xlu0 %1756
      %1758 = vrot.lane.b32.xlu0 %v1598, 64
      %v1759 = vpop.permute.xlu0 %1758
      %1760 = vrot.lane.b32.xlu0 %v1599, 64
      %v1761 = vpop.permute.xlu0 %1760
      %1762 = vrot.lane.b32.xlu0 %v1600, 64
      %v1763 = vpop.permute.xlu0 %1762
      %1764 = vrot.lane.b32.xlu0 %v1601, 64
      %v1765 = vpop.permute.xlu0 %1764
      %1766 = vrot.lane.b32.xlu0 %v1602, 64
      %v1767 = vpop.permute.xlu0 %1766
      %1768 = vrot.lane.b32.xlu0 %v1603, 64
      %v1769 = vpop.permute.xlu0 %1768
      %1770 = vrot.lane.b32.xlu0 %v1604, 64
      %v1771 = vpop.permute.xlu0 %1770
      %1772 = vrot.lane.b32.xlu0 %v1605, 64
      %v1773 = vpop.permute.xlu0 %1772
      %1774 = vrot.lane.b32.xlu0 %v1606, 64
      %v1775 = vpop.permute.xlu0 %1774
      %1776 = vrot.lane.b32.xlu0 %v1607, 64
      %v1777 = vpop.permute.xlu0 %1776
      %1778 = vrot.lane.b32.xlu0 %v1608, 64
      %v1779 = vpop.permute.xlu0 %1778
      %1780 = vrot.lane.b32.xlu0 %v1609, 64
      %v1781 = vpop.permute.xlu0 %1780
      %1782 = vrot.lane.b32.xlu0 %v1610, 64
      %v1783 = vpop.permute.xlu0 %1782
      %1784 = vrot.lane.b32.xlu0 %v1611, 64
      %v1785 = vpop.permute.xlu0 %1784
      %1786 = vrot.lane.b32.xlu0 %v1612, 64
      %v1787 = vpop.permute.xlu0 %1786
      %1788 = vrot.lane.b32.xlu0 %v1613, 64
      %v1789 = vpop.permute.xlu0 %1788
      %1790 = vrot.lane.b32.xlu0 %v1614, 64
      %v1791 = vpop.permute.xlu0 %1790
      %1792 = vrot.lane.b32.xlu0 %v1615, 64
      %v1793 = vpop.permute.xlu0 %1792
      %1794 = vrot.lane.b32.xlu0 %v1616, 64
      %v1795 = vpop.permute.xlu0 %1794
      %1796 = vrot.lane.b32.xlu0 %v1617, 64
      %v1797 = vpop.permute.xlu0 %1796
      %1798 = vrot.lane.b32.xlu0 %v1618, 64
      %v1799 = vpop.permute.xlu0 %1798
      %1800 = vrot.lane.b32.xlu0 %v1619, 64
      %v1801 = vpop.permute.xlu0 %1800
      %1802 = vrot.lane.b32.xlu0 %v1620, 64
      %v1803 = vpop.permute.xlu0 %1802
      %1804 = vrot.lane.b32.xlu0 %v1621, 64
      %v1805 = vpop.permute.xlu0 %1804
      %1806 = vrot.lane.b32.xlu0 %v1622, 64
      %v1807 = vpop.permute.xlu0 %1806
      %1808 = vrot.lane.b32.xlu0 %v1623, 64
      %v1809 = vpop.permute.xlu0 %1808
      %1810 = vrot.lane.b32.xlu0 %v1624, 64
      %v1811 = vpop.permute.xlu0 %1810
      %1812 = vrot.lane.b32.xlu0 %v1625, 64
      %v1813 = vpop.permute.xlu0 %1812
      %1814 = vrot.lane.b32.xlu0 %v1626, 64
      %v1815 = vpop.permute.xlu0 %1814
      %1816 = vrot.lane.b32.xlu0 %v1627, 64
      %v1817 = vpop.permute.xlu0 %1816
      %1818 = vrot.lane.b32.xlu0 %v1628, 64
      %v1819 = vpop.permute.xlu0 %1818
      %1820 = vrot.lane.b32.xlu0 %v1629, 64
      %v1821 = vpop.permute.xlu0 %1820
      %1822 = vrot.lane.b32.xlu0 %v1630, 64
      %v1823 = vpop.permute.xlu0 %1822
      %1824 = vrot.lane.b32.xlu0 %v1631, 64
      %v1825 = vpop.permute.xlu0 %1824
      %1826 = vrot.lane.b32.xlu0 %v1632, 64
      %v1827 = vpop.permute.xlu0 %1826
      %1828 = vrot.lane.b32.xlu0 %v1633, 64
      %v1829 = vpop.permute.xlu0 %1828
      %1830 = vrot.lane.b32.xlu0 %v1634, 64
      %v1831 = vpop.permute.xlu0 %1830
      %1832 = vrot.lane.b32.xlu0 %v1635, 64
      %v1833 = vpop.permute.xlu0 %1832
      %1834 = vrot.lane.b32.xlu0 %v1636, 64
      %v1835 = vpop.permute.xlu0 %1834
      %1836 = vrot.lane.b32.xlu0 %v1637, 64
      %v1837 = vpop.permute.xlu0 %1836
      %1838 = vrot.lane.b32.xlu0 %v1638, 64
      %v1839 = vpop.permute.xlu0 %1838
      %1840 = vrot.lane.b32.xlu0 %v1639, 64
      %v1841 = vpop.permute.xlu0 %1840
      %1842 = vrot.lane.b32.xlu0 %v1640, 64
      %v1843 = vpop.permute.xlu0 %1842
      %1844 = vrot.lane.b32.xlu0 %v1641, 64
      %v1845 = vpop.permute.xlu0 %1844
      %v1854 = vunpack.c.l.b16 %v1642
      %v1855 = vunpack.c.l.b16 %v1643
      %v1856 = vunpack.c.l.b16 %v1644
      %v1857 = vunpack.c.l.b16 %v1645
      %v1858 = vunpack.c.l.b16 %v1646
      %v1859 = vunpack.c.l.b16 %v1647
      %v1860 = vunpack.c.l.b16 %v1648
      %v1861 = vunpack.c.l.b16 %v1649
      %v1862 = vpack.c.b16 %v1855, %v1854
      %v1863 = vpack.c.b16 %v1857, %v1856
      %v1864 = vpack.c.b16 %v1859, %v1858
      %v1865 = vpack.c.b16 %v1861, %v1860
      %vm1870 = vcmask 523264
      %v1872 = vsel %vm1870, %v1719, 0
      %v1875 = vsel %vm1870, %v1721, 0
      %v1878 = vsel %vm1870, %v1723, 0
      %v1881 = vsel %vm1870, %v1725, 0
      %v1884 = vsel %vm1870, %v1727, 0
      %v1887 = vsel %vm1870, %v1729, 0
      %v1890 = vsel %vm1870, %v1731, 0
      %v1893 = vsel %vm1870, %v1733, 0
      %v1896 = vsel %vm1870, %v1735, 0
      %v1899 = vsel %vm1870, %v1737, 0
      %v1902 = vsel %vm1870, %v1739, 0
      %v1905 = vsel %vm1870, %v1741, 0
      %v1908 = vsel %vm1870, %v1743, 0
      %v1911 = vsel %vm1870, %v1745, 0
      %v1914 = vsel %vm1870, %v1747, 0
      %v1917 = vsel %vm1870, %v1749, 0
      %v1920 = vsel %vm1870, %v1751, 0
      %v1923 = vsel %vm1870, %v1753, 0
      %v1926 = vsel %vm1870, %v1755, 0
      %v1929 = vsel %vm1870, %v1757, 0
      %v1932 = vsel %vm1870, %v1759, 0
      %v1935 = vsel %vm1870, %v1761, 0
      %v1938 = vsel %vm1870, %v1763, 0
      %v1941 = vsel %vm1870, %v1765, 0
      %v1944 = vsel %vm1870, %v1767, 0
      %v1947 = vsel %vm1870, %v1769, 0
      %v1950 = vsel %vm1870, %v1771, 0
      %v1953 = vsel %vm1870, %v1773, 0
      %v1956 = vsel %vm1870, %v1775, 0
      %v1959 = vsel %vm1870, %v1777, 0
      %v1962 = vsel %vm1870, %v1779, 0
      %v1965 = vsel %vm1870, %v1781, 0
      %v1968 = vsel %vm1870, %v1783, 0
      %v1971 = vsel %vm1870, %v1785, 0
      %v1974 = vsel %vm1870, %v1787, 0
      %v1977 = vsel %vm1870, %v1789, 0
      %v1980 = vsel %vm1870, %v1791, 0
      %v1983 = vsel %vm1870, %v1793, 0
      %v1986 = vsel %vm1870, %v1795, 0
      %v1989 = vsel %vm1870, %v1797, 0
      %v1992 = vsel %vm1870, %v1799, 0
      %v1995 = vsel %vm1870, %v1801, 0
      %v1998 = vsel %vm1870, %v1803, 0
      %v2001 = vsel %vm1870, %v1805, 0
      %v2004 = vsel %vm1870, %v1807, 0
      %v2007 = vsel %vm1870, %v1809, 0
      %v2010 = vsel %vm1870, %v1811, 0
      %v2013 = vsel %vm1870, %v1813, 0
      %v2016 = vsel %vm1870, %v1815, 0
      %v2019 = vsel %vm1870, %v1817, 0
      %v2022 = vsel %vm1870, %v1819, 0
      %v2025 = vsel %vm1870, %v1821, 0
      %v2028 = vsel %vm1870, %v1823, 0
      %v2031 = vsel %vm1870, %v1825, 0
      %v2034 = vsel %vm1870, %v1827, 0
      %v2037 = vsel %vm1870, %v1829, 0
      %v2040 = vsel %vm1870, %v1831, 0
      %v2043 = vsel %vm1870, %v1833, 0
      %v2046 = vsel %vm1870, %v1835, 0
      %v2049 = vsel %vm1870, %v1837, 0
      %v2052 = vsel %vm1870, %v1839, 0
      %v2055 = vsel %vm1870, %v1841, 0
      %v2058 = vsel %vm1870, %v1843, 0
      %v2061 = vsel %vm1870, %v1845, 0
      %2063 = vmatpush.bf16.msra.mxu0 0
      %2064 = vmatpush.bf16.msra.mxu0 0
      %2065 = vmatpush.bf16.msra.mxu0 0
      %2066 = vmatpush.bf16.msra.mxu0 0
      %2067 = vmatpush.bf16.msra.mxu0 %v1865
      %2068 = vmatpush.bf16.msra.mxu0 %v1864
      %2069 = vmatpush.bf16.msra.mxu0 %v1863
      %2070 = vmatpush.bf16.msra.mxu0 %v1862
      %2071 = vmatmul.bf16.gmra.mxu0 %v1872
      %v2072 = vpop.f32.mrf.mxu0
      %v2073 = vadd.f32 %v1652, %v2072
      %v2074 = vpop.f32.mrf.mxu0
      %v2075 = vadd.f32 %v1652, %v2074
      %2076 = vmatmul.bf16.gmra.mxu0 %v1875
      %v2077 = vpop.f32.mrf.mxu0
      %v2078 = vadd.f32 %v1652, %v2077
      %v2079 = vpop.f32.mrf.mxu0
      %v2080 = vadd.f32 %v1652, %v2079
      %2081 = vmatmul.bf16.gmra.mxu0 %v1878
      %v2082 = vpop.f32.mrf.mxu0
      %v2083 = vadd.f32 %v1652, %v2082
      %v2084 = vpop.f32.mrf.mxu0
      %v2085 = vadd.f32 %v1652, %v2084
      %2086 = vmatmul.bf16.gmra.mxu0 %v1881
      %v2087 = vpop.f32.mrf.mxu0
      %v2088 = vadd.f32 %v1652, %v2087
      %v2089 = vpop.f32.mrf.mxu0
      %v2090 = vadd.f32 %v1652, %v2089
      %2091 = vmatmul.bf16.gmra.mxu0 %v1884
      %v2092 = vpop.f32.mrf.mxu0
      %v2093 = vadd.f32 %v1652, %v2092
      %v2094 = vpop.f32.mrf.mxu0
      %v2095 = vadd.f32 %v1652, %v2094
      %2096 = vmatmul.bf16.gmra.mxu0 %v1887
      %v2097 = vpop.f32.mrf.mxu0
      %v2098 = vadd.f32 %v1652, %v2097
      %v2099 = vpop.f32.mrf.mxu0
      %v2100 = vadd.f32 %v1652, %v2099
      %2101 = vmatmul.bf16.gmra.mxu0 %v1890
      %v2102 = vpop.f32.mrf.mxu0
      %v2103 = vadd.f32 %v1652, %v2102
      %v2104 = vpop.f32.mrf.mxu0
      %v2105 = vadd.f32 %v1652, %v2104
      %2106 = vmatmul.bf16.gmra.mxu0 %v1893
      %v2107 = vpop.f32.mrf.mxu0
      %v2108 = vadd.f32 %v1652, %v2107
      %v2109 = vpop.f32.mrf.mxu0
      %v2110 = vadd.f32 %v1652, %v2109
      %2111 = vmatmul.bf16.gmra.mxu0 %v1896
      %v2112 = vpop.f32.mrf.mxu0
      %v2113 = vadd.f32 %v1652, %v2112
      %v2114 = vpop.f32.mrf.mxu0
      %v2115 = vadd.f32 %v1652, %v2114
      %2116 = vmatmul.bf16.gmra.mxu0 %v1899
      %v2117 = vpop.f32.mrf.mxu0
      %v2118 = vadd.f32 %v1652, %v2117
      %v2119 = vpop.f32.mrf.mxu0
      %v2120 = vadd.f32 %v1652, %v2119
      %2121 = vmatmul.bf16.gmra.mxu0 %v1902
      %v2122 = vpop.f32.mrf.mxu0
      %v2123 = vadd.f32 %v1652, %v2122
      %v2124 = vpop.f32.mrf.mxu0
      %v2125 = vadd.f32 %v1652, %v2124
      %2126 = vmatmul.bf16.gmra.mxu0 %v1905
      %v2127 = vpop.f32.mrf.mxu0
      %v2128 = vadd.f32 %v1652, %v2127
      %v2129 = vpop.f32.mrf.mxu0
      %v2130 = vadd.f32 %v1652, %v2129
      %2131 = vmatmul.bf16.gmra.mxu0 %v1908
      %v2132 = vpop.f32.mrf.mxu0
      %v2133 = vadd.f32 %v1652, %v2132
      %v2134 = vpop.f32.mrf.mxu0
      %v2135 = vadd.f32 %v1652, %v2134
      %2136 = vmatmul.bf16.gmra.mxu0 %v1911
      %v2137 = vpop.f32.mrf.mxu0
      %v2138 = vadd.f32 %v1652, %v2137
      %v2139 = vpop.f32.mrf.mxu0
      %v2140 = vadd.f32 %v1652, %v2139
      %2141 = vmatmul.bf16.gmra.mxu0 %v1914
      %v2142 = vpop.f32.mrf.mxu0
      %v2143 = vadd.f32 %v1652, %v2142
      %v2144 = vpop.f32.mrf.mxu0
      %v2145 = vadd.f32 %v1652, %v2144
      %2146 = vmatmul.bf16.gmra.mxu0 %v1917
      %v2147 = vpop.f32.mrf.mxu0
      %v2148 = vadd.f32 %v1652, %v2147
      %v2149 = vpop.f32.mrf.mxu0
      %v2150 = vadd.f32 %v1652, %v2149
      %2151 = vmatmul.bf16.gmra.mxu0 %v1920
      %v2152 = vpop.f32.mrf.mxu0
      %v2153 = vadd.f32 %v1652, %v2152
      %v2154 = vpop.f32.mrf.mxu0
      %v2155 = vadd.f32 %v1652, %v2154
      %2156 = vmatmul.bf16.gmra.mxu0 %v1923
      %v2157 = vpop.f32.mrf.mxu0
      %v2158 = vadd.f32 %v1652, %v2157
      %v2159 = vpop.f32.mrf.mxu0
      %v2160 = vadd.f32 %v1652, %v2159
      %2161 = vmatmul.bf16.gmra.mxu0 %v1926
      %v2162 = vpop.f32.mrf.mxu0
      %v2163 = vadd.f32 %v1652, %v2162
      %v2164 = vpop.f32.mrf.mxu0
      %v2165 = vadd.f32 %v1652, %v2164
      %2166 = vmatmul.bf16.gmra.mxu0 %v1929
      %v2167 = vpop.f32.mrf.mxu0
      %v2168 = vadd.f32 %v1652, %v2167
      %v2169 = vpop.f32.mrf.mxu0
      %v2170 = vadd.f32 %v1652, %v2169
      %2171 = vmatmul.bf16.gmra.mxu0 %v1932
      %v2172 = vpop.f32.mrf.mxu0
      %v2173 = vadd.f32 %v1652, %v2172
      %v2174 = vpop.f32.mrf.mxu0
      %v2175 = vadd.f32 %v1652, %v2174
      %2176 = vmatmul.bf16.gmra.mxu0 %v1935
      %v2177 = vpop.f32.mrf.mxu0
      %v2178 = vadd.f32 %v1652, %v2177
      %v2179 = vpop.f32.mrf.mxu0
      %v2180 = vadd.f32 %v1652, %v2179
      %2181 = vmatmul.bf16.gmra.mxu0 %v1938
      %v2182 = vpop.f32.mrf.mxu0
      %v2183 = vadd.f32 %v1652, %v2182
      %v2184 = vpop.f32.mrf.mxu0
      %v2185 = vadd.f32 %v1652, %v2184
      %2186 = vmatmul.bf16.gmra.mxu0 %v1941
      %v2187 = vpop.f32.mrf.mxu0
      %v2188 = vadd.f32 %v1652, %v2187
      %v2189 = vpop.f32.mrf.mxu0
      %v2190 = vadd.f32 %v1652, %v2189
      %2191 = vmatmul.bf16.gmra.mxu0 %v1944
      %v2192 = vpop.f32.mrf.mxu0
      %v2193 = vadd.f32 %v1652, %v2192
      %v2194 = vpop.f32.mrf.mxu0
      %v2195 = vadd.f32 %v1652, %v2194
      %2196 = vmatmul.bf16.gmra.mxu0 %v1947
      %v2197 = vpop.f32.mrf.mxu0
      %v2198 = vadd.f32 %v1652, %v2197
      %v2199 = vpop.f32.mrf.mxu0
      %v2200 = vadd.f32 %v1652, %v2199
      %2201 = vmatmul.bf16.gmra.mxu0 %v1950
      %v2202 = vpop.f32.mrf.mxu0
      %v2203 = vadd.f32 %v1652, %v2202
      %v2204 = vpop.f32.mrf.mxu0
      %v2205 = vadd.f32 %v1652, %v2204
      %2206 = vmatmul.bf16.gmra.mxu0 %v1953
      %v2207 = vpop.f32.mrf.mxu0
      %v2208 = vadd.f32 %v1652, %v2207
      %v2209 = vpop.f32.mrf.mxu0
      %v2210 = vadd.f32 %v1652, %v2209
      %2211 = vmatmul.bf16.gmra.mxu0 %v1956
      %v2212 = vpop.f32.mrf.mxu0
      %v2213 = vadd.f32 %v1652, %v2212
      %v2214 = vpop.f32.mrf.mxu0
      %v2215 = vadd.f32 %v1652, %v2214
      %2216 = vmatmul.bf16.gmra.mxu0 %v1959
      %v2217 = vpop.f32.mrf.mxu0
      %v2218 = vadd.f32 %v1652, %v2217
      %v2219 = vpop.f32.mrf.mxu0
      %v2220 = vadd.f32 %v1652, %v2219
      %2221 = vmatmul.bf16.gmra.mxu0 %v1962
      %v2222 = vpop.f32.mrf.mxu0
      %v2223 = vadd.f32 %v1652, %v2222
      %v2224 = vpop.f32.mrf.mxu0
      %v2225 = vadd.f32 %v1652, %v2224
      %2226 = vmatmul.bf16.gmra.mxu0 %v1965
      %v2227 = vpop.f32.mrf.mxu0
      %v2228 = vadd.f32 %v1652, %v2227
      %v2229 = vpop.f32.mrf.mxu0
      %v2230 = vadd.f32 %v1652, %v2229
      %2231 = vmatmul.bf16.gmra.mxu0 %v1968
      %v2232 = vpop.f32.mrf.mxu0
      %v2233 = vadd.f32 %v1652, %v2232
      %v2234 = vpop.f32.mrf.mxu0
      %v2235 = vadd.f32 %v1652, %v2234
      %2236 = vmatmul.bf16.gmra.mxu0 %v1971
      %v2237 = vpop.f32.mrf.mxu0
      %v2238 = vadd.f32 %v1652, %v2237
      %v2239 = vpop.f32.mrf.mxu0
      %v2240 = vadd.f32 %v1652, %v2239
      %2241 = vmatmul.bf16.gmra.mxu0 %v1974
      %v2242 = vpop.f32.mrf.mxu0
      %v2243 = vadd.f32 %v1652, %v2242
      %v2244 = vpop.f32.mrf.mxu0
      %v2245 = vadd.f32 %v1652, %v2244
      %2246 = vmatmul.bf16.gmra.mxu0 %v1977
      %v2247 = vpop.f32.mrf.mxu0
      %v2248 = vadd.f32 %v1652, %v2247
      %v2249 = vpop.f32.mrf.mxu0
      %v2250 = vadd.f32 %v1652, %v2249
      %2251 = vmatmul.bf16.gmra.mxu0 %v1980
      %v2252 = vpop.f32.mrf.mxu0
      %v2253 = vadd.f32 %v1652, %v2252
      %v2254 = vpop.f32.mrf.mxu0
      %v2255 = vadd.f32 %v1652, %v2254
      %2256 = vmatmul.bf16.gmra.mxu0 %v1983
      %v2257 = vpop.f32.mrf.mxu0
      %v2258 = vadd.f32 %v1652, %v2257
      %v2259 = vpop.f32.mrf.mxu0
      %v2260 = vadd.f32 %v1652, %v2259
      %2261 = vmatmul.bf16.gmra.mxu0 %v1986
      %v2262 = vpop.f32.mrf.mxu0
      %v2263 = vadd.f32 %v1652, %v2262
      %v2264 = vpop.f32.mrf.mxu0
      %v2265 = vadd.f32 %v1652, %v2264
      %2266 = vmatmul.bf16.gmra.mxu0 %v1989
      %v2267 = vpop.f32.mrf.mxu0
      %v2268 = vadd.f32 %v1652, %v2267
      %v2269 = vpop.f32.mrf.mxu0
      %v2270 = vadd.f32 %v1652, %v2269
      %2271 = vmatmul.bf16.gmra.mxu0 %v1992
      %v2272 = vpop.f32.mrf.mxu0
      %v2273 = vadd.f32 %v1652, %v2272
      %v2274 = vpop.f32.mrf.mxu0
      %v2275 = vadd.f32 %v1652, %v2274
      %2276 = vmatmul.bf16.gmra.mxu0 %v1995
      %v2277 = vpop.f32.mrf.mxu0
      %v2278 = vadd.f32 %v1652, %v2277
      %v2279 = vpop.f32.mrf.mxu0
      %v2280 = vadd.f32 %v1652, %v2279
      %2281 = vmatmul.bf16.gmra.mxu0 %v1998
      %v2282 = vpop.f32.mrf.mxu0
      %v2283 = vadd.f32 %v1652, %v2282
      %v2284 = vpop.f32.mrf.mxu0
      %v2285 = vadd.f32 %v1652, %v2284
      %2286 = vmatmul.bf16.gmra.mxu0 %v2001
      %v2287 = vpop.f32.mrf.mxu0
      %v2288 = vadd.f32 %v1652, %v2287
      %v2289 = vpop.f32.mrf.mxu0
      %v2290 = vadd.f32 %v1652, %v2289
      %2291 = vmatmul.bf16.gmra.mxu0 %v2004
      %v2292 = vpop.f32.mrf.mxu0
      %v2293 = vadd.f32 %v1652, %v2292
      %v2294 = vpop.f32.mrf.mxu0
      %v2295 = vadd.f32 %v1652, %v2294
      %2296 = vmatmul.bf16.gmra.mxu0 %v2007
      %v2297 = vpop.f32.mrf.mxu0
      %v2298 = vadd.f32 %v1652, %v2297
      %v2299 = vpop.f32.mrf.mxu0
      %v2300 = vadd.f32 %v1652, %v2299
      %2301 = vmatmul.bf16.gmra.mxu0 %v2010
      %v2302 = vpop.f32.mrf.mxu0
      %v2303 = vadd.f32 %v1652, %v2302
      %v2304 = vpop.f32.mrf.mxu0
      %v2305 = vadd.f32 %v1652, %v2304
      %2306 = vmatmul.bf16.gmra.mxu0 %v2013
      %v2307 = vpop.f32.mrf.mxu0
      %v2308 = vadd.f32 %v1652, %v2307
      %v2309 = vpop.f32.mrf.mxu0
      %v2310 = vadd.f32 %v1652, %v2309
      %2311 = vmatmul.bf16.gmra.mxu0 %v2016
      %v2312 = vpop.f32.mrf.mxu0
      %v2313 = vadd.f32 %v1652, %v2312
      %v2314 = vpop.f32.mrf.mxu0
      %v2315 = vadd.f32 %v1652, %v2314
      %2316 = vmatmul.bf16.gmra.mxu0 %v2019
      %v2317 = vpop.f32.mrf.mxu0
      %v2318 = vadd.f32 %v1652, %v2317
      %v2319 = vpop.f32.mrf.mxu0
      %v2320 = vadd.f32 %v1652, %v2319
      %2321 = vmatmul.bf16.gmra.mxu0 %v2022
      %v2322 = vpop.f32.mrf.mxu0
      %v2323 = vadd.f32 %v1652, %v2322
      %v2324 = vpop.f32.mrf.mxu0
      %v2325 = vadd.f32 %v1652, %v2324
      %2326 = vmatmul.bf16.gmra.mxu0 %v2025
      %v2327 = vpop.f32.mrf.mxu0
      %v2328 = vadd.f32 %v1652, %v2327
      %v2329 = vpop.f32.mrf.mxu0
      %v2330 = vadd.f32 %v1652, %v2329
      %2331 = vmatmul.bf16.gmra.mxu0 %v2028
      %v2332 = vpop.f32.mrf.mxu0
      %v2333 = vadd.f32 %v1652, %v2332
      %v2334 = vpop.f32.mrf.mxu0
      %v2335 = vadd.f32 %v1652, %v2334
      %2336 = vmatmul.bf16.gmra.mxu0 %v2031
      %v2337 = vpop.f32.mrf.mxu0
      %v2338 = vadd.f32 %v1652, %v2337
      %v2339 = vpop.f32.mrf.mxu0
      %v2340 = vadd.f32 %v1652, %v2339
      %2341 = vmatmul.bf16.gmra.mxu0 %v2034
      %v2342 = vpop.f32.mrf.mxu0
      %v2343 = vadd.f32 %v1652, %v2342
      %v2344 = vpop.f32.mrf.mxu0
      %v2345 = vadd.f32 %v1652, %v2344
      %2346 = vmatmul.bf16.gmra.mxu0 %v2037
      %v2347 = vpop.f32.mrf.mxu0
      %v2348 = vadd.f32 %v1652, %v2347
      %v2349 = vpop.f32.mrf.mxu0
      %v2350 = vadd.f32 %v1652, %v2349
      %2351 = vmatmul.bf16.gmra.mxu0 %v2040
      %v2352 = vpop.f32.mrf.mxu0
      %v2353 = vadd.f32 %v1652, %v2352
      %v2354 = vpop.f32.mrf.mxu0
      %v2355 = vadd.f32 %v1652, %v2354
      %2356 = vmatmul.bf16.gmra.mxu0 %v2043
      %v2357 = vpop.f32.mrf.mxu0
      %v2358 = vadd.f32 %v1652, %v2357
      %v2359 = vpop.f32.mrf.mxu0
      %v2360 = vadd.f32 %v1652, %v2359
      %2361 = vmatmul.bf16.gmra.mxu0 %v2046
      %v2362 = vpop.f32.mrf.mxu0
      %v2363 = vadd.f32 %v1652, %v2362
      %v2364 = vpop.f32.mrf.mxu0
      %v2365 = vadd.f32 %v1652, %v2364
      %2366 = vmatmul.bf16.gmra.mxu0 %v2049
      %v2367 = vpop.f32.mrf.mxu0
      %v2368 = vadd.f32 %v1652, %v2367
      %v2369 = vpop.f32.mrf.mxu0
      %v2370 = vadd.f32 %v1652, %v2369
      %2371 = vmatmul.bf16.gmra.mxu0 %v2052
      %v2372 = vpop.f32.mrf.mxu0
      %v2373 = vadd.f32 %v1652, %v2372
      %v2374 = vpop.f32.mrf.mxu0
      %v2375 = vadd.f32 %v1652, %v2374
      %2376 = vmatmul.bf16.gmra.mxu0 %v2055
      %v2377 = vpop.f32.mrf.mxu0
      %v2378 = vadd.f32 %v1652, %v2377
      %v2379 = vpop.f32.mrf.mxu0
      %v2380 = vadd.f32 %v1652, %v2379
      %2381 = vmatmul.bf16.gmra.mxu0 %v2058
      %v2382 = vpop.f32.mrf.mxu0
      %v2383 = vadd.f32 %v1652, %v2382
      %v2384 = vpop.f32.mrf.mxu0
      %v2385 = vadd.f32 %v1652, %v2384
      %2386 = vmatmul.bf16.gmra.mxu0 %v2061
      %v2387 = vpop.f32.mrf.mxu0
      %v2388 = vadd.f32 %v1652, %v2387
      %v2389 = vpop.f32.mrf.mxu0
      %v2390 = vadd.f32 %v1652, %v2389
      %2391 = vdwg.mxu0
      %v2392 = vmax.f32 %v2073, 0.0
      %v2393 = vmax.f32 %v2075, 0.0
      %v2394 = vmax.f32 %v2078, 0.0
      %v2395 = vmax.f32 %v2080, 0.0
      %v2396 = vmax.f32 %v2083, 0.0
      %v2397 = vmax.f32 %v2085, 0.0
      %v2398 = vmax.f32 %v2088, 0.0
      %v2399 = vmax.f32 %v2090, 0.0
      %v2400 = vmax.f32 %v2093, 0.0
      %v2401 = vmax.f32 %v2095, 0.0
      %v2402 = vmax.f32 %v2098, 0.0
      %v2403 = vmax.f32 %v2100, 0.0
      %v2404 = vmax.f32 %v2103, 0.0
      %v2405 = vmax.f32 %v2105, 0.0
      %v2406 = vmax.f32 %v2108, 0.0
      %v2407 = vmax.f32 %v2110, 0.0
      %v2408 = vmax.f32 %v2113, 0.0
      %v2409 = vmax.f32 %v2115, 0.0
      %v2410 = vmax.f32 %v2118, 0.0
      %v2411 = vmax.f32 %v2120, 0.0
      %v2412 = vmax.f32 %v2123, 0.0
      %v2413 = vmax.f32 %v2125, 0.0
      %v2414 = vmax.f32 %v2128, 0.0
      %v2415 = vmax.f32 %v2130, 0.0
      %v2416 = vmax.f32 %v2133, 0.0
      %v2417 = vmax.f32 %v2135, 0.0
      %v2418 = vmax.f32 %v2138, 0.0
      %v2419 = vmax.f32 %v2140, 0.0
      %v2420 = vmax.f32 %v2143, 0.0
      %v2421 = vmax.f32 %v2145, 0.0
      %v2422 = vmax.f32 %v2148, 0.0
      %v2423 = vmax.f32 %v2150, 0.0
      %v2424 = vmax.f32 %v2153, 0.0
      %v2425 = vmax.f32 %v2155, 0.0
      %v2426 = vmax.f32 %v2158, 0.0
      %v2427 = vmax.f32 %v2160, 0.0
      %v2428 = vmax.f32 %v2163, 0.0
      %v2429 = vmax.f32 %v2165, 0.0
      %v2430 = vmax.f32 %v2168, 0.0
      %v2431 = vmax.f32 %v2170, 0.0
      %v2432 = vmax.f32 %v2173, 0.0
      %v2433 = vmax.f32 %v2175, 0.0
      %v2434 = vmax.f32 %v2178, 0.0
      %v2435 = vmax.f32 %v2180, 0.0
      %v2436 = vmax.f32 %v2183, 0.0
      %v2437 = vmax.f32 %v2185, 0.0
      %v2438 = vmax.f32 %v2188, 0.0
      %v2439 = vmax.f32 %v2190, 0.0
      %v2440 = vmax.f32 %v2193, 0.0
      %v2441 = vmax.f32 %v2195, 0.0
      %v2442 = vmax.f32 %v2198, 0.0
      %v2443 = vmax.f32 %v2200, 0.0
      %v2444 = vmax.f32 %v2203, 0.0
      %v2445 = vmax.f32 %v2205, 0.0
      %v2446 = vmax.f32 %v2208, 0.0
      %v2447 = vmax.f32 %v2210, 0.0
      %v2448 = vmax.f32 %v2213, 0.0
      %v2449 = vmax.f32 %v2215, 0.0
      %v2450 = vmax.f32 %v2218, 0.0
      %v2451 = vmax.f32 %v2220, 0.0
      %v2452 = vmax.f32 %v2223, 0.0
      %v2453 = vmax.f32 %v2225, 0.0
      %v2454 = vmax.f32 %v2228, 0.0
      %v2455 = vmax.f32 %v2230, 0.0
      %v2456 = vmax.f32 %v2233, 0.0
      %v2457 = vmax.f32 %v2235, 0.0
      %v2458 = vmax.f32 %v2238, 0.0
      %v2459 = vmax.f32 %v2240, 0.0
      %v2460 = vmax.f32 %v2243, 0.0
      %v2461 = vmax.f32 %v2245, 0.0
      %v2462 = vmax.f32 %v2248, 0.0
      %v2463 = vmax.f32 %v2250, 0.0
      %v2464 = vmax.f32 %v2253, 0.0
      %v2465 = vmax.f32 %v2255, 0.0
      %v2466 = vmax.f32 %v2258, 0.0
      %v2467 = vmax.f32 %v2260, 0.0
      %v2468 = vmax.f32 %v2263, 0.0
      %v2469 = vmax.f32 %v2265, 0.0
      %v2470 = vmax.f32 %v2268, 0.0
      %v2471 = vmax.f32 %v2270, 0.0
      %v2472 = vmax.f32 %v2273, 0.0
      %v2473 = vmax.f32 %v2275, 0.0
      %v2474 = vmax.f32 %v2278, 0.0
      %v2475 = vmax.f32 %v2280, 0.0
      %v2476 = vmax.f32 %v2283, 0.0
      %v2477 = vmax.f32 %v2285, 0.0
      %v2478 = vmax.f32 %v2288, 0.0
      %v2479 = vmax.f32 %v2290, 0.0
      %v2480 = vmax.f32 %v2293, 0.0
      %v2481 = vmax.f32 %v2295, 0.0
      %v2482 = vmax.f32 %v2298, 0.0
      %v2483 = vmax.f32 %v2300, 0.0
      %v2484 = vmax.f32 %v2303, 0.0
      %v2485 = vmax.f32 %v2305, 0.0
      %v2486 = vmax.f32 %v2308, 0.0
      %v2487 = vmax.f32 %v2310, 0.0
      %v2488 = vmax.f32 %v2313, 0.0
      %v2489 = vmax.f32 %v2315, 0.0
      %v2490 = vmax.f32 %v2318, 0.0
      %v2491 = vmax.f32 %v2320, 0.0
      %v2492 = vmax.f32 %v2323, 0.0
      %v2493 = vmax.f32 %v2325, 0.0
      %v2494 = vmax.f32 %v2328, 0.0
      %v2495 = vmax.f32 %v2330, 0.0
      %v2496 = vmax.f32 %v2333, 0.0
      %v2497 = vmax.f32 %v2335, 0.0
      %v2498 = vmax.f32 %v2338, 0.0
      %v2499 = vmax.f32 %v2340, 0.0
      %v2500 = vmax.f32 %v2343, 0.0
      %v2501 = vmax.f32 %v2345, 0.0
      %v2502 = vmax.f32 %v2348, 0.0
      %v2503 = vmax.f32 %v2350, 0.0
      %v2504 = vmax.f32 %v2353, 0.0
      %v2505 = vmax.f32 %v2355, 0.0
      %v2506 = vmax.f32 %v2358, 0.0
      %v2507 = vmax.f32 %v2360, 0.0
      %v2508 = vmax.f32 %v2363, 0.0
      %v2509 = vmax.f32 %v2365, 0.0
      %v2510 = vmax.f32 %v2368, 0.0
      %v2511 = vmax.f32 %v2370, 0.0
      %v2512 = vmax.f32 %v2373, 0.0
      %v2513 = vmax.f32 %v2375, 0.0
      %v2514 = vmax.f32 %v2378, 0.0
      %v2515 = vmax.f32 %v2380, 0.0
      %v2516 = vmax.f32 %v2383, 0.0
      %v2517 = vmax.f32 %v2385, 0.0
      %v2518 = vmax.f32 %v2388, 0.0
      %v2519 = vmax.f32 %v2390, 0.0
      %v2520 = vld [vmem:[%s6] sm:$0xf]
      %v2521 = vld [vmem:[%s6 + $0x4] sm:$0xf]
      %v2522 = vld [vmem:[%s6 + $0x8] sm:$0xf]
      %v2523 = vld [vmem:[%s6 + $0xc] sm:$0xf]
      %v2524 = vld [vmem:[%s6 + $0x10] sm:$0xf]
      %v2525 = vld [vmem:[%s6 + $0x14] sm:$0xf]
      %v2526 = vld [vmem:[%s6 + $0x18] sm:$0xf]
      %v2527 = vld [vmem:[%s6 + $0x1c] sm:$0xf]
      %v2528 = vpack.c.bf16 %v2393, %v2392
      %v2529 = vpack.c.bf16 %v2395, %v2394
      %v2530 = vpack.c.bf16 %v2397, %v2396
      %v2531 = vpack.c.bf16 %v2399, %v2398
      %v2532 = vpack.c.bf16 %v2401, %v2400
      %v2533 = vpack.c.bf16 %v2403, %v2402
      %v2534 = vpack.c.bf16 %v2405, %v2404
      %v2535 = vpack.c.bf16 %v2407, %v2406
      %v2536 = vpack.c.bf16 %v2409, %v2408
      %v2537 = vpack.c.bf16 %v2411, %v2410
      %v2538 = vpack.c.bf16 %v2413, %v2412
      %v2539 = vpack.c.bf16 %v2415, %v2414
      %v2540 = vpack.c.bf16 %v2417, %v2416
      %v2541 = vpack.c.bf16 %v2419, %v2418
      %v2542 = vpack.c.bf16 %v2421, %v2420
      %v2543 = vpack.c.bf16 %v2423, %v2422
      %v2544 = vpack.c.bf16 %v2425, %v2424
      %v2545 = vpack.c.bf16 %v2427, %v2426
      %v2546 = vpack.c.bf16 %v2429, %v2428
      %v2547 = vpack.c.bf16 %v2431, %v2430
      %v2548 = vpack.c.bf16 %v2433, %v2432
      %v2549 = vpack.c.bf16 %v2435, %v2434
      %v2550 = vpack.c.bf16 %v2437, %v2436
      %v2551 = vpack.c.bf16 %v2439, %v2438
      %v2552 = vpack.c.bf16 %v2441, %v2440
      %v2553 = vpack.c.bf16 %v2443, %v2442
      %v2554 = vpack.c.bf16 %v2445, %v2444
      %v2555 = vpack.c.bf16 %v2447, %v2446
      %v2556 = vpack.c.bf16 %v2449, %v2448
      %v2557 = vpack.c.bf16 %v2451, %v2450
      %v2558 = vpack.c.bf16 %v2453, %v2452
      %v2559 = vpack.c.bf16 %v2455, %v2454
      %v2560 = vpack.c.bf16 %v2457, %v2456
      %v2561 = vpack.c.bf16 %v2459, %v2458
      %v2562 = vpack.c.bf16 %v2461, %v2460
      %v2563 = vpack.c.bf16 %v2463, %v2462
      %v2564 = vpack.c.bf16 %v2465, %v2464
      %v2565 = vpack.c.bf16 %v2467, %v2466
      %v2566 = vpack.c.bf16 %v2469, %v2468
      %v2567 = vpack.c.bf16 %v2471, %v2470
      %v2568 = vpack.c.bf16 %v2473, %v2472
      %v2569 = vpack.c.bf16 %v2475, %v2474
      %v2570 = vpack.c.bf16 %v2477, %v2476
      %v2571 = vpack.c.bf16 %v2479, %v2478
      %v2572 = vpack.c.bf16 %v2481, %v2480
      %v2573 = vpack.c.bf16 %v2483, %v2482
      %v2574 = vpack.c.bf16 %v2485, %v2484
      %v2575 = vpack.c.bf16 %v2487, %v2486
      %v2576 = vpack.c.bf16 %v2489, %v2488
      %v2577 = vpack.c.bf16 %v2491, %v2490
      %v2578 = vpack.c.bf16 %v2493, %v2492
      %v2579 = vpack.c.bf16 %v2495, %v2494
      %v2580 = vpack.c.bf16 %v2497, %v2496
      %v2581 = vpack.c.bf16 %v2499, %v2498
      %v2582 = vpack.c.bf16 %v2501, %v2500
      %v2583 = vpack.c.bf16 %v2503, %v2502
      %v2584 = vpack.c.bf16 %v2505, %v2504
      %v2585 = vpack.c.bf16 %v2507, %v2506
      %v2586 = vpack.c.bf16 %v2509, %v2508
      %v2587 = vpack.c.bf16 %v2511, %v2510
      %v2588 = vpack.c.bf16 %v2513, %v2512
      %v2589 = vpack.c.bf16 %v2515, %v2514
      %v2590 = vpack.c.bf16 %v2517, %v2516
      %v2591 = vpack.c.bf16 %v2519, %v2518
      %v2592 = vld [vmem:[%s7] sm:$0xf]
      %v2593 = vld [vmem:[%s7 + $0x4] sm:$0xf]
      %v2594 = vld [vmem:[%s7 + $0x8] sm:$0xf]
      %v2595 = vld [vmem:[%s7 + $0xc] sm:$0xf]
      %v2596 = vld [vmem:[%s7 + $0x10] sm:$0xf]
      %v2597 = vld [vmem:[%s7 + $0x14] sm:$0xf]
      %v2598 = vld [vmem:[%s7 + $0x18] sm:$0xf]
      %v2599 = vld [vmem:[%s7 + $0x1c] sm:$0xf]
      %v2608 = vunpack.c.l.b16 %v2592
      %v2609 = vunpack.c.l.b16 %v2593
      %v2610 = vunpack.c.l.b16 %v2594
      %v2611 = vunpack.c.l.b16 %v2595
      %v2612 = vunpack.c.l.b16 %v2596
      %v2613 = vunpack.c.l.b16 %v2597
      %v2614 = vunpack.c.l.b16 %v2598
      %v2615 = vunpack.c.l.b16 %v2599
      %v2616 = vpack.c.b16 %v2609, %v2608
      %v2617 = vpack.c.b16 %v2611, %v2610
      %v2618 = vpack.c.b16 %v2613, %v2612
      %v2619 = vpack.c.b16 %v2615, %v2614
      %v2625 = vsel %vm1870, %v2528, 0
      %v2628 = vsel %vm1870, %v2529, 0
      %v2631 = vsel %vm1870, %v2530, 0
      %v2634 = vsel %vm1870, %v2531, 0
      %v2637 = vsel %vm1870, %v2532, 0
      %v2640 = vsel %vm1870, %v2533, 0
      %v2643 = vsel %vm1870, %v2534, 0
      %v2646 = vsel %vm1870, %v2535, 0
      %v2649 = vsel %vm1870, %v2536, 0
      %v2652 = vsel %vm1870, %v2537, 0
      %v2655 = vsel %vm1870, %v2538, 0
      %v2658 = vsel %vm1870, %v2539, 0
      %v2661 = vsel %vm1870, %v2540, 0
      %v2664 = vsel %vm1870, %v2541, 0
      %v2667 = vsel %vm1870, %v2542, 0
      %v2670 = vsel %vm1870, %v2543, 0
      %v2673 = vsel %vm1870, %v2544, 0
      %v2676 = vsel %vm1870, %v2545, 0
      %v2679 = vsel %vm1870, %v2546, 0
      %v2682 = vsel %vm1870, %v2547, 0
      %v2685 = vsel %vm1870, %v2548, 0
      %v2688 = vsel %vm1870, %v2549, 0
      %v2691 = vsel %vm1870, %v2550, 0
      %v2694 = vsel %vm1870, %v2551, 0
      %v2697 = vsel %vm1870, %v2552, 0
      %v2700 = vsel %vm1870, %v2553, 0
      %v2703 = vsel %vm1870, %v2554, 0
      %v2706 = vsel %vm1870, %v2555, 0
      %v2709 = vsel %vm1870, %v2556, 0
      %v2712 = vsel %vm1870, %v2557, 0
      %v2715 = vsel %vm1870, %v2558, 0
      %v2718 = vsel %vm1870, %v2559, 0
      %v2721 = vsel %vm1870, %v2560, 0
      %v2724 = vsel %vm1870, %v2561, 0
      %v2727 = vsel %vm1870, %v2562, 0
      %v2730 = vsel %vm1870, %v2563, 0
      %v2733 = vsel %vm1870, %v2564, 0
      %v2736 = vsel %vm1870, %v2565, 0
      %v2739 = vsel %vm1870, %v2566, 0
      %v2742 = vsel %vm1870, %v2567, 0
      %v2745 = vsel %vm1870, %v2568, 0
      %v2748 = vsel %vm1870, %v2569, 0
      %v2751 = vsel %vm1870, %v2570, 0
      %v2754 = vsel %vm1870, %v2571, 0
      %v2757 = vsel %vm1870, %v2572, 0
      %v2760 = vsel %vm1870, %v2573, 0
      %v2763 = vsel %vm1870, %v2574, 0
      %v2766 = vsel %vm1870, %v2575, 0
      %v2769 = vsel %vm1870, %v2576, 0
      %v2772 = vsel %vm1870, %v2577, 0
      %v2775 = vsel %vm1870, %v2578, 0
      %v2778 = vsel %vm1870, %v2579, 0
      %v2781 = vsel %vm1870, %v2580, 0
      %v2784 = vsel %vm1870, %v2581, 0
      %v2787 = vsel %vm1870, %v2582, 0
      %v2790 = vsel %vm1870, %v2583, 0
      %v2793 = vsel %vm1870, %v2584, 0
      %v2796 = vsel %vm1870, %v2585, 0
      %v2799 = vsel %vm1870, %v2586, 0
      %v2802 = vsel %vm1870, %v2587, 0
      %v2805 = vsel %vm1870, %v2588, 0
      %v2808 = vsel %vm1870, %v2589, 0
      %v2811 = vsel %vm1870, %v2590, 0
      %v2814 = vsel %vm1870, %v2591, 0
      %2816 = vmatpush.bf16.msra.mxu0 0
      %2817 = vmatpush.bf16.msra.mxu0 0
      %2818 = vmatpush.bf16.msra.mxu0 0
      %2819 = vmatpush.bf16.msra.mxu0 0
      %2820 = vmatpush.bf16.msra.mxu0 %v2619
      %2821 = vmatpush.bf16.msra.mxu0 %v2618
      %2822 = vmatpush.bf16.msra.mxu0 %v2617
      %2823 = vmatpush.bf16.msra.mxu0 %v2616
      %2824 = vmatmul.bf16.gmra.mxu0 %v2625
      %v2825 = vpop.f32.mrf.mxu0
      %v2826 = vadd.f32 0.0, %v2825
      %v2827 = vpop.f32.mrf.mxu0
      %v2828 = vadd.f32 0.0, %v2827
      %2829 = vmatmul.bf16.gmra.mxu0 %v2628
      %v2830 = vpop.f32.mrf.mxu0
      %v2831 = vadd.f32 0.0, %v2830
      %v2832 = vpop.f32.mrf.mxu0
      %v2833 = vadd.f32 0.0, %v2832
      %2834 = vmatmul.bf16.gmra.mxu0 %v2631
      %v2835 = vpop.f32.mrf.mxu0
      %v2836 = vadd.f32 0.0, %v2835
      %v2837 = vpop.f32.mrf.mxu0
      %v2838 = vadd.f32 0.0, %v2837
      %2839 = vmatmul.bf16.gmra.mxu0 %v2634
      %v2840 = vpop.f32.mrf.mxu0
      %v2841 = vadd.f32 0.0, %v2840
      %v2842 = vpop.f32.mrf.mxu0
      %v2843 = vadd.f32 0.0, %v2842
      %2844 = vmatmul.bf16.gmra.mxu0 %v2637
      %v2845 = vpop.f32.mrf.mxu0
      %v2846 = vadd.f32 0.0, %v2845
      %v2847 = vpop.f32.mrf.mxu0
      %v2848 = vadd.f32 0.0, %v2847
      %2849 = vmatmul.bf16.gmra.mxu0 %v2640
      %v2850 = vpop.f32.mrf.mxu0
      %v2851 = vadd.f32 0.0, %v2850
      %v2852 = vpop.f32.mrf.mxu0
      %v2853 = vadd.f32 0.0, %v2852
      %2854 = vmatmul.bf16.gmra.mxu0 %v2643
      %v2855 = vpop.f32.mrf.mxu0
      %v2856 = vadd.f32 0.0, %v2855
      %v2857 = vpop.f32.mrf.mxu0
      %v2858 = vadd.f32 0.0, %v2857
      %2859 = vmatmul.bf16.gmra.mxu0 %v2646
      %v2860 = vpop.f32.mrf.mxu0
      %v2861 = vadd.f32 0.0, %v2860
      %v2862 = vpop.f32.mrf.mxu0
      %v2863 = vadd.f32 0.0, %v2862
      %2864 = vmatmul.bf16.gmra.mxu0 %v2649
      %v2865 = vpop.f32.mrf.mxu0
      %v2866 = vadd.f32 0.0, %v2865
      %v2867 = vpop.f32.mrf.mxu0
      %v2868 = vadd.f32 0.0, %v2867
      %2869 = vmatmul.bf16.gmra.mxu0 %v2652
      %v2870 = vpop.f32.mrf.mxu0
      %v2871 = vadd.f32 0.0, %v2870
      %v2872 = vpop.f32.mrf.mxu0
      %v2873 = vadd.f32 0.0, %v2872
      %2874 = vmatmul.bf16.gmra.mxu0 %v2655
      %v2875 = vpop.f32.mrf.mxu0
      %v2876 = vadd.f32 0.0, %v2875
      %v2877 = vpop.f32.mrf.mxu0
      %v2878 = vadd.f32 0.0, %v2877
      %2879 = vmatmul.bf16.gmra.mxu0 %v2658
      %v2880 = vpop.f32.mrf.mxu0
      %v2881 = vadd.f32 0.0, %v2880
      %v2882 = vpop.f32.mrf.mxu0
      %v2883 = vadd.f32 0.0, %v2882
      %2884 = vmatmul.bf16.gmra.mxu0 %v2661
      %v2885 = vpop.f32.mrf.mxu0
      %v2886 = vadd.f32 0.0, %v2885
      %v2887 = vpop.f32.mrf.mxu0
      %v2888 = vadd.f32 0.0, %v2887
      %2889 = vmatmul.bf16.gmra.mxu0 %v2664
      %v2890 = vpop.f32.mrf.mxu0
      %v2891 = vadd.f32 0.0, %v2890
      %v2892 = vpop.f32.mrf.mxu0
      %v2893 = vadd.f32 0.0, %v2892
      %2894 = vmatmul.bf16.gmra.mxu0 %v2667
      %v2895 = vpop.f32.mrf.mxu0
      %v2896 = vadd.f32 0.0, %v2895
      %v2897 = vpop.f32.mrf.mxu0
      %v2898 = vadd.f32 0.0, %v2897
      %2899 = vmatmul.bf16.gmra.mxu0 %v2670
      %v2900 = vpop.f32.mrf.mxu0
      %v2901 = vadd.f32 0.0, %v2900
      %v2902 = vpop.f32.mrf.mxu0
      %v2903 = vadd.f32 0.0, %v2902
      %2904 = vmatmul.bf16.gmra.mxu0 %v2673
      %v2905 = vpop.f32.mrf.mxu0
      %v2906 = vadd.f32 0.0, %v2905
      %v2907 = vpop.f32.mrf.mxu0
      %v2908 = vadd.f32 0.0, %v2907
      %2909 = vmatmul.bf16.gmra.mxu0 %v2676
      %v2910 = vpop.f32.mrf.mxu0
      %v2911 = vadd.f32 0.0, %v2910
      %v2912 = vpop.f32.mrf.mxu0
      %v2913 = vadd.f32 0.0, %v2912
      %2914 = vmatmul.bf16.gmra.mxu0 %v2679
      %v2915 = vpop.f32.mrf.mxu0
      %v2916 = vadd.f32 0.0, %v2915
      %v2917 = vpop.f32.mrf.mxu0
      %v2918 = vadd.f32 0.0, %v2917
      %2919 = vmatmul.bf16.gmra.mxu0 %v2682
      %v2920 = vpop.f32.mrf.mxu0
      %v2921 = vadd.f32 0.0, %v2920
      %v2922 = vpop.f32.mrf.mxu0
      %v2923 = vadd.f32 0.0, %v2922
      %2924 = vmatmul.bf16.gmra.mxu0 %v2685
      %v2925 = vpop.f32.mrf.mxu0
      %v2926 = vadd.f32 0.0, %v2925
      %v2927 = vpop.f32.mrf.mxu0
      %v2928 = vadd.f32 0.0, %v2927
      %2929 = vmatmul.bf16.gmra.mxu0 %v2688
      %v2930 = vpop.f32.mrf.mxu0
      %v2931 = vadd.f32 0.0, %v2930
      %v2932 = vpop.f32.mrf.mxu0
      %v2933 = vadd.f32 0.0, %v2932
      %2934 = vmatmul.bf16.gmra.mxu0 %v2691
      %v2935 = vpop.f32.mrf.mxu0
      %v2936 = vadd.f32 0.0, %v2935
      %v2937 = vpop.f32.mrf.mxu0
      %v2938 = vadd.f32 0.0, %v2937
      %2939 = vmatmul.bf16.gmra.mxu0 %v2694
      %v2940 = vpop.f32.mrf.mxu0
      %v2941 = vadd.f32 0.0, %v2940
      %v2942 = vpop.f32.mrf.mxu0
      %v2943 = vadd.f32 0.0, %v2942
      %2944 = vmatmul.bf16.gmra.mxu0 %v2697
      %v2945 = vpop.f32.mrf.mxu0
      %v2946 = vadd.f32 0.0, %v2945
      %v2947 = vpop.f32.mrf.mxu0
      %v2948 = vadd.f32 0.0, %v2947
      %2949 = vmatmul.bf16.gmra.mxu0 %v2700
      %v2950 = vpop.f32.mrf.mxu0
      %v2951 = vadd.f32 0.0, %v2950
      %v2952 = vpop.f32.mrf.mxu0
      %v2953 = vadd.f32 0.0, %v2952
      %2954 = vmatmul.bf16.gmra.mxu0 %v2703
      %v2955 = vpop.f32.mrf.mxu0
      %v2956 = vadd.f32 0.0, %v2955
      %v2957 = vpop.f32.mrf.mxu0
      %v2958 = vadd.f32 0.0, %v2957
      %2959 = vmatmul.bf16.gmra.mxu0 %v2706
      %v2960 = vpop.f32.mrf.mxu0
      %v2961 = vadd.f32 0.0, %v2960
      %v2962 = vpop.f32.mrf.mxu0
      %v2963 = vadd.f32 0.0, %v2962
      %2964 = vmatmul.bf16.gmra.mxu0 %v2709
      %v2965 = vpop.f32.mrf.mxu0
      %v2966 = vadd.f32 0.0, %v2965
      %v2967 = vpop.f32.mrf.mxu0
      %v2968 = vadd.f32 0.0, %v2967
      %2969 = vmatmul.bf16.gmra.mxu0 %v2712
      %v2970 = vpop.f32.mrf.mxu0
      %v2971 = vadd.f32 0.0, %v2970
      %v2972 = vpop.f32.mrf.mxu0
      %v2973 = vadd.f32 0.0, %v2972
      %2974 = vmatmul.bf16.gmra.mxu0 %v2715
      %v2975 = vpop.f32.mrf.mxu0
      %v2976 = vadd.f32 0.0, %v2975
      %v2977 = vpop.f32.mrf.mxu0
      %v2978 = vadd.f32 0.0, %v2977
      %2979 = vmatmul.bf16.gmra.mxu0 %v2718
      %v2980 = vpop.f32.mrf.mxu0
      %v2981 = vadd.f32 0.0, %v2980
      %v2982 = vpop.f32.mrf.mxu0
      %v2983 = vadd.f32 0.0, %v2982
      %2984 = vmatmul.bf16.gmra.mxu0 %v2721
      %v2985 = vpop.f32.mrf.mxu0
      %v2986 = vadd.f32 0.0, %v2985
      %v2987 = vpop.f32.mrf.mxu0
      %v2988 = vadd.f32 0.0, %v2987
      %2989 = vmatmul.bf16.gmra.mxu0 %v2724
      %v2990 = vpop.f32.mrf.mxu0
      %v2991 = vadd.f32 0.0, %v2990
      %v2992 = vpop.f32.mrf.mxu0
      %v2993 = vadd.f32 0.0, %v2992
      %2994 = vmatmul.bf16.gmra.mxu0 %v2727
      %v2995 = vpop.f32.mrf.mxu0
      %v2996 = vadd.f32 0.0, %v2995
      %v2997 = vpop.f32.mrf.mxu0
      %v2998 = vadd.f32 0.0, %v2997
      %2999 = vmatmul.bf16.gmra.mxu0 %v2730
      %v3000 = vpop.f32.mrf.mxu0
      %v3001 = vadd.f32 0.0, %v3000
      %v3002 = vpop.f32.mrf.mxu0
      %v3003 = vadd.f32 0.0, %v3002
      %3004 = vmatmul.bf16.gmra.mxu0 %v2733
      %v3005 = vpop.f32.mrf.mxu0
      %v3006 = vadd.f32 0.0, %v3005
      %v3007 = vpop.f32.mrf.mxu0
      %v3008 = vadd.f32 0.0, %v3007
      %3009 = vmatmul.bf16.gmra.mxu0 %v2736
      %v3010 = vpop.f32.mrf.mxu0
      %v3011 = vadd.f32 0.0, %v3010
      %v3012 = vpop.f32.mrf.mxu0
      %v3013 = vadd.f32 0.0, %v3012
      %3014 = vmatmul.bf16.gmra.mxu0 %v2739
      %v3015 = vpop.f32.mrf.mxu0
      %v3016 = vadd.f32 0.0, %v3015
      %v3017 = vpop.f32.mrf.mxu0
      %v3018 = vadd.f32 0.0, %v3017
      %3019 = vmatmul.bf16.gmra.mxu0 %v2742
      %v3020 = vpop.f32.mrf.mxu0
      %v3021 = vadd.f32 0.0, %v3020
      %v3022 = vpop.f32.mrf.mxu0
      %v3023 = vadd.f32 0.0, %v3022
      %3024 = vmatmul.bf16.gmra.mxu0 %v2745
      %v3025 = vpop.f32.mrf.mxu0
      %v3026 = vadd.f32 0.0, %v3025
      %v3027 = vpop.f32.mrf.mxu0
      %v3028 = vadd.f32 0.0, %v3027
      %3029 = vmatmul.bf16.gmra.mxu0 %v2748
      %v3030 = vpop.f32.mrf.mxu0
      %v3031 = vadd.f32 0.0, %v3030
      %v3032 = vpop.f32.mrf.mxu0
      %v3033 = vadd.f32 0.0, %v3032
      %3034 = vmatmul.bf16.gmra.mxu0 %v2751
      %v3035 = vpop.f32.mrf.mxu0
      %v3036 = vadd.f32 0.0, %v3035
      %v3037 = vpop.f32.mrf.mxu0
      %v3038 = vadd.f32 0.0, %v3037
      %3039 = vmatmul.bf16.gmra.mxu0 %v2754
      %v3040 = vpop.f32.mrf.mxu0
      %v3041 = vadd.f32 0.0, %v3040
      %v3042 = vpop.f32.mrf.mxu0
      %v3043 = vadd.f32 0.0, %v3042
      %3044 = vmatmul.bf16.gmra.mxu0 %v2757
      %v3045 = vpop.f32.mrf.mxu0
      %v3046 = vadd.f32 0.0, %v3045
      %v3047 = vpop.f32.mrf.mxu0
      %v3048 = vadd.f32 0.0, %v3047
      %3049 = vmatmul.bf16.gmra.mxu0 %v2760
      %v3050 = vpop.f32.mrf.mxu0
      %v3051 = vadd.f32 0.0, %v3050
      %v3052 = vpop.f32.mrf.mxu0
      %v3053 = vadd.f32 0.0, %v3052
      %3054 = vmatmul.bf16.gmra.mxu0 %v2763
      %v3055 = vpop.f32.mrf.mxu0
      %v3056 = vadd.f32 0.0, %v3055
      %v3057 = vpop.f32.mrf.mxu0
      %v3058 = vadd.f32 0.0, %v3057
      %3059 = vmatmul.bf16.gmra.mxu0 %v2766
      %v3060 = vpop.f32.mrf.mxu0
      %v3061 = vadd.f32 0.0, %v3060
      %v3062 = vpop.f32.mrf.mxu0
      %v3063 = vadd.f32 0.0, %v3062
      %3064 = vmatmul.bf16.gmra.mxu0 %v2769
      %v3065 = vpop.f32.mrf.mxu0
      %v3066 = vadd.f32 0.0, %v3065
      %v3067 = vpop.f32.mrf.mxu0
      %v3068 = vadd.f32 0.0, %v3067
      %3069 = vmatmul.bf16.gmra.mxu0 %v2772
      %v3070 = vpop.f32.mrf.mxu0
      %v3071 = vadd.f32 0.0, %v3070
      %v3072 = vpop.f32.mrf.mxu0
      %v3073 = vadd.f32 0.0, %v3072
      %3074 = vmatmul.bf16.gmra.mxu0 %v2775
      %v3075 = vpop.f32.mrf.mxu0
      %v3076 = vadd.f32 0.0, %v3075
      %v3077 = vpop.f32.mrf.mxu0
      %v3078 = vadd.f32 0.0, %v3077
      %3079 = vmatmul.bf16.gmra.mxu0 %v2778
      %v3080 = vpop.f32.mrf.mxu0
      %v3081 = vadd.f32 0.0, %v3080
      %v3082 = vpop.f32.mrf.mxu0
      %v3083 = vadd.f32 0.0, %v3082
      %3084 = vmatmul.bf16.gmra.mxu0 %v2781
      %v3085 = vpop.f32.mrf.mxu0
      %v3086 = vadd.f32 0.0, %v3085
      %v3087 = vpop.f32.mrf.mxu0
      %v3088 = vadd.f32 0.0, %v3087
      %3089 = vmatmul.bf16.gmra.mxu0 %v2784
      %v3090 = vpop.f32.mrf.mxu0
      %v3091 = vadd.f32 0.0, %v3090
      %v3092 = vpop.f32.mrf.mxu0
      %v3093 = vadd.f32 0.0, %v3092
      %3094 = vmatmul.bf16.gmra.mxu0 %v2787
      %v3095 = vpop.f32.mrf.mxu0
      %v3096 = vadd.f32 0.0, %v3095
      %v3097 = vpop.f32.mrf.mxu0
      %v3098 = vadd.f32 0.0, %v3097
      %3099 = vmatmul.bf16.gmra.mxu0 %v2790
      %v3100 = vpop.f32.mrf.mxu0
      %v3101 = vadd.f32 0.0, %v3100
      %v3102 = vpop.f32.mrf.mxu0
      %v3103 = vadd.f32 0.0, %v3102
      %3104 = vmatmul.bf16.gmra.mxu0 %v2793
      %v3105 = vpop.f32.mrf.mxu0
      %v3106 = vadd.f32 0.0, %v3105
      %v3107 = vpop.f32.mrf.mxu0
      %v3108 = vadd.f32 0.0, %v3107
      %3109 = vmatmul.bf16.gmra.mxu0 %v2796
      %v3110 = vpop.f32.mrf.mxu0
      %v3111 = vadd.f32 0.0, %v3110
      %v3112 = vpop.f32.mrf.mxu0
      %v3113 = vadd.f32 0.0, %v3112
      %3114 = vmatmul.bf16.gmra.mxu0 %v2799
      %v3115 = vpop.f32.mrf.mxu0
      %v3116 = vadd.f32 0.0, %v3115
      %v3117 = vpop.f32.mrf.mxu0
      %v3118 = vadd.f32 0.0, %v3117
      %3119 = vmatmul.bf16.gmra.mxu0 %v2802
      %v3120 = vpop.f32.mrf.mxu0
      %v3121 = vadd.f32 0.0, %v3120
      %v3122 = vpop.f32.mrf.mxu0
      %v3123 = vadd.f32 0.0, %v3122
      %3124 = vmatmul.bf16.gmra.mxu0 %v2805
      %v3125 = vpop.f32.mrf.mxu0
      %v3126 = vadd.f32 0.0, %v3125
      %v3127 = vpop.f32.mrf.mxu0
      %v3128 = vadd.f32 0.0, %v3127
      %3129 = vmatmul.bf16.gmra.mxu0 %v2808
      %v3130 = vpop.f32.mrf.mxu0
      %v3131 = vadd.f32 0.0, %v3130
      %v3132 = vpop.f32.mrf.mxu0
      %v3133 = vadd.f32 0.0, %v3132
      %3134 = vmatmul.bf16.gmra.mxu0 %v2811
      %v3135 = vpop.f32.mrf.mxu0
      %v3136 = vadd.f32 0.0, %v3135
      %v3137 = vpop.f32.mrf.mxu0
      %v3138 = vadd.f32 0.0, %v3137
      %3139 = vmatmul.bf16.gmra.mxu0 %v2814
      %v3140 = vpop.f32.mrf.mxu0
      %v3141 = vadd.f32 0.0, %v3140
      %v3142 = vpop.f32.mrf.mxu0
      %v3143 = vadd.f32 0.0, %v3142
      %3144 = vdwg.mxu0
      %v3153 = vunpack.c.l.b16 %v2520
      %v3154 = vunpack.c.l.b16 %v2521
      %v3155 = vunpack.c.l.b16 %v2522
      %v3156 = vunpack.c.l.b16 %v2523
      %v3157 = vunpack.c.l.b16 %v2524
      %v3158 = vunpack.c.l.b16 %v2525
      %v3159 = vunpack.c.l.b16 %v2526
      %v3160 = vunpack.c.l.b16 %v2527
      %v3161 = vpack.c.b16 %v3154, %v3153
      %v3162 = vpack.c.b16 %v3156, %v3155
      %v3163 = vpack.c.b16 %v3158, %v3157
      %v3164 = vpack.c.b16 %v3160, %v3159
      %v3170 = vsel %vm1870, %v1578, 0
      %v3173 = vsel %vm1870, %v1579, 0
      %v3176 = vsel %vm1870, %v1580, 0
      %v3179 = vsel %vm1870, %v1581, 0
      %v3182 = vsel %vm1870, %v1582, 0
      %v3185 = vsel %vm1870, %v1583, 0
      %v3188 = vsel %vm1870, %v1584, 0
      %v3191 = vsel %vm1870, %v1585, 0
      %v3194 = vsel %vm1870, %v1586, 0
      %v3197 = vsel %vm1870, %v1587, 0
      %v3200 = vsel %vm1870, %v1588, 0
      %v3203 = vsel %vm1870, %v1589, 0
      %v3206 = vsel %vm1870, %v1590, 0
      %v3209 = vsel %vm1870, %v1591, 0
      %v3212 = vsel %vm1870, %v1592, 0
      %v3215 = vsel %vm1870, %v1593, 0
      %v3218 = vsel %vm1870, %v1594, 0
      %v3221 = vsel %vm1870, %v1595, 0
      %v3224 = vsel %vm1870, %v1596, 0
      %v3227 = vsel %vm1870, %v1597, 0
      %v3230 = vsel %vm1870, %v1598, 0
      %v3233 = vsel %vm1870, %v1599, 0
      %v3236 = vsel %vm1870, %v1600, 0
      %v3239 = vsel %vm1870, %v1601, 0
      %v3242 = vsel %vm1870, %v1602, 0
      %v3245 = vsel %vm1870, %v1603, 0
      %v3248 = vsel %vm1870, %v1604, 0
      %v3251 = vsel %vm1870, %v1605, 0
      %v3254 = vsel %vm1870, %v1606, 0
      %v3257 = vsel %vm1870, %v1607, 0
      %v3260 = vsel %vm1870, %v1608, 0
      %v3263 = vsel %vm1870, %v1609, 0
      %v3266 = vsel %vm1870, %v1610, 0
      %v3269 = vsel %vm1870, %v1611, 0
      %v3272 = vsel %vm1870, %v1612, 0
      %v3275 = vsel %vm1870, %v1613, 0
      %v3278 = vsel %vm1870, %v1614, 0
      %v3281 = vsel %vm1870, %v1615, 0
      %v3284 = vsel %vm1870, %v1616, 0
      %v3287 = vsel %vm1870, %v1617, 0
      %v3290 = vsel %vm1870, %v1618, 0
      %v3293 = vsel %vm1870, %v1619, 0
      %v3296 = vsel %vm1870, %v1620, 0
      %v3299 = vsel %vm1870, %v1621, 0
      %v3302 = vsel %vm1870, %v1622, 0
      %v3305 = vsel %vm1870, %v1623, 0
      %v3308 = vsel %vm1870, %v1624, 0
      %v3311 = vsel %vm1870, %v1625, 0
      %v3314 = vsel %vm1870, %v1626, 0
      %v3317 = vsel %vm1870, %v1627, 0
      %v3320 = vsel %vm1870, %v1628, 0
      %v3323 = vsel %vm1870, %v1629, 0
      %v3326 = vsel %vm1870, %v1630, 0
      %v3329 = vsel %vm1870, %v1631, 0
      %v3332 = vsel %vm1870, %v1632, 0
      %v3335 = vsel %vm1870, %v1633, 0
      %v3338 = vsel %vm1870, %v1634, 0
      %v3341 = vsel %vm1870, %v1635, 0
      %v3344 = vsel %vm1870, %v1636, 0
      %v3347 = vsel %vm1870, %v1637, 0
      %v3350 = vsel %vm1870, %v1638, 0
      %v3353 = vsel %vm1870, %v1639, 0
      %v3356 = vsel %vm1870, %v1640, 0
      %v3359 = vsel %vm1870, %v1641, 0
      %3361 = vmatpush.bf16.msra.mxu0 0
      %3362 = vmatpush.bf16.msra.mxu0 0
      %3363 = vmatpush.bf16.msra.mxu0 0
      %3364 = vmatpush.bf16.msra.mxu0 0
      %3365 = vmatpush.bf16.msra.mxu0 %v3164
      %3366 = vmatpush.bf16.msra.mxu0 %v3163
      %3367 = vmatpush.bf16.msra.mxu0 %v3162
      %3368 = vmatpush.bf16.msra.mxu0 %v3161
      %3369 = vmatmul.bf16.gmra.mxu0 %v3170
      %v3370 = vpop.f32.mrf.mxu0
      %v3371 = vadd.f32 %v2826, %v3370
      %v3372 = vpop.f32.mrf.mxu0
      %v3373 = vadd.f32 %v2828, %v3372
      %3374 = vmatmul.bf16.gmra.mxu0 %v3173
      %v3375 = vpop.f32.mrf.mxu0
      %v3376 = vadd.f32 %v2831, %v3375
      %v3377 = vpop.f32.mrf.mxu0
      %v3378 = vadd.f32 %v2833, %v3377
      %3379 = vmatmul.bf16.gmra.mxu0 %v3176
      %v3380 = vpop.f32.mrf.mxu0
      %v3381 = vadd.f32 %v2836, %v3380
      %v3382 = vpop.f32.mrf.mxu0
      %v3383 = vadd.f32 %v2838, %v3382
      %3384 = vmatmul.bf16.gmra.mxu0 %v3179
      %v3385 = vpop.f32.mrf.mxu0
      %v3386 = vadd.f32 %v2841, %v3385
      %v3387 = vpop.f32.mrf.mxu0
      %v3388 = vadd.f32 %v2843, %v3387
      %3389 = vmatmul.bf16.gmra.mxu0 %v3182
      %v3390 = vpop.f32.mrf.mxu0
      %v3391 = vadd.f32 %v2846, %v3390
      %v3392 = vpop.f32.mrf.mxu0
      %v3393 = vadd.f32 %v2848, %v3392
      %3394 = vmatmul.bf16.gmra.mxu0 %v3185
      %v3395 = vpop.f32.mrf.mxu0
      %v3396 = vadd.f32 %v2851, %v3395
      %v3397 = vpop.f32.mrf.mxu0
      %v3398 = vadd.f32 %v2853, %v3397
      %3399 = vmatmul.bf16.gmra.mxu0 %v3188
      %v3400 = vpop.f32.mrf.mxu0
      %v3401 = vadd.f32 %v2856, %v3400
      %v3402 = vpop.f32.mrf.mxu0
      %v3403 = vadd.f32 %v2858, %v3402
      %3404 = vmatmul.bf16.gmra.mxu0 %v3191
      %v3405 = vpop.f32.mrf.mxu0
      %v3406 = vadd.f32 %v2861, %v3405
      %v3407 = vpop.f32.mrf.mxu0
      %v3408 = vadd.f32 %v2863, %v3407
      %3409 = vmatmul.bf16.gmra.mxu0 %v3194
      %v3410 = vpop.f32.mrf.mxu0
      %v3411 = vadd.f32 %v2866, %v3410
      %v3412 = vpop.f32.mrf.mxu0
      %v3413 = vadd.f32 %v2868, %v3412
      %3414 = vmatmul.bf16.gmra.mxu0 %v3197
      %v3415 = vpop.f32.mrf.mxu0
      %v3416 = vadd.f32 %v2871, %v3415
      %v3417 = vpop.f32.mrf.mxu0
      %v3418 = vadd.f32 %v2873, %v3417
      %3419 = vmatmul.bf16.gmra.mxu0 %v3200
      %v3420 = vpop.f32.mrf.mxu0
      %v3421 = vadd.f32 %v2876, %v3420
      %v3422 = vpop.f32.mrf.mxu0
      %v3423 = vadd.f32 %v2878, %v3422
      %3424 = vmatmul.bf16.gmra.mxu0 %v3203
      %v3425 = vpop.f32.mrf.mxu0
      %v3426 = vadd.f32 %v2881, %v3425
      %v3427 = vpop.f32.mrf.mxu0
      %v3428 = vadd.f32 %v2883, %v3427
      %3429 = vmatmul.bf16.gmra.mxu0 %v3206
      %v3430 = vpop.f32.mrf.mxu0
      %v3431 = vadd.f32 %v2886, %v3430
      %v3432 = vpop.f32.mrf.mxu0
      %v3433 = vadd.f32 %v2888, %v3432
      %3434 = vmatmul.bf16.gmra.mxu0 %v3209
      %v3435 = vpop.f32.mrf.mxu0
      %v3436 = vadd.f32 %v2891, %v3435
      %v3437 = vpop.f32.mrf.mxu0
      %v3438 = vadd.f32 %v2893, %v3437
      %3439 = vmatmul.bf16.gmra.mxu0 %v3212
      %v3440 = vpop.f32.mrf.mxu0
      %v3441 = vadd.f32 %v2896, %v3440
      %v3442 = vpop.f32.mrf.mxu0
      %v3443 = vadd.f32 %v2898, %v3442
      %3444 = vmatmul.bf16.gmra.mxu0 %v3215
      %v3445 = vpop.f32.mrf.mxu0
      %v3446 = vadd.f32 %v2901, %v3445
      %v3447 = vpop.f32.mrf.mxu0
      %v3448 = vadd.f32 %v2903, %v3447
      %3449 = vmatmul.bf16.gmra.mxu0 %v3218
      %v3450 = vpop.f32.mrf.mxu0
      %v3451 = vadd.f32 %v2906, %v3450
      %v3452 = vpop.f32.mrf.mxu0
      %v3453 = vadd.f32 %v2908, %v3452
      %3454 = vmatmul.bf16.gmra.mxu0 %v3221
      %v3455 = vpop.f32.mrf.mxu0
      %v3456 = vadd.f32 %v2911, %v3455
      %v3457 = vpop.f32.mrf.mxu0
      %v3458 = vadd.f32 %v2913, %v3457
      %3459 = vmatmul.bf16.gmra.mxu0 %v3224
      %v3460 = vpop.f32.mrf.mxu0
      %v3461 = vadd.f32 %v2916, %v3460
      %v3462 = vpop.f32.mrf.mxu0
      %v3463 = vadd.f32 %v2918, %v3462
      %3464 = vmatmul.bf16.gmra.mxu0 %v3227
      %v3465 = vpop.f32.mrf.mxu0
      %v3466 = vadd.f32 %v2921, %v3465
      %v3467 = vpop.f32.mrf.mxu0
      %v3468 = vadd.f32 %v2923, %v3467
      %3469 = vmatmul.bf16.gmra.mxu0 %v3230
      %v3470 = vpop.f32.mrf.mxu0
      %v3471 = vadd.f32 %v2926, %v3470
      %v3472 = vpop.f32.mrf.mxu0
      %v3473 = vadd.f32 %v2928, %v3472
      %3474 = vmatmul.bf16.gmra.mxu0 %v3233
      %v3475 = vpop.f32.mrf.mxu0
      %v3476 = vadd.f32 %v2931, %v3475
      %v3477 = vpop.f32.mrf.mxu0
      %v3478 = vadd.f32 %v2933, %v3477
      %3479 = vmatmul.bf16.gmra.mxu0 %v3236
      %v3480 = vpop.f32.mrf.mxu0
      %v3481 = vadd.f32 %v2936, %v3480
      %v3482 = vpop.f32.mrf.mxu0
      %v3483 = vadd.f32 %v2938, %v3482
      %3484 = vmatmul.bf16.gmra.mxu0 %v3239
      %v3485 = vpop.f32.mrf.mxu0
      %v3486 = vadd.f32 %v2941, %v3485
      %v3487 = vpop.f32.mrf.mxu0
      %v3488 = vadd.f32 %v2943, %v3487
      %3489 = vmatmul.bf16.gmra.mxu0 %v3242
      %v3490 = vpop.f32.mrf.mxu0
      %v3491 = vadd.f32 %v2946, %v3490
      %v3492 = vpop.f32.mrf.mxu0
      %v3493 = vadd.f32 %v2948, %v3492
      %3494 = vmatmul.bf16.gmra.mxu0 %v3245
      %v3495 = vpop.f32.mrf.mxu0
      %v3496 = vadd.f32 %v2951, %v3495
      %v3497 = vpop.f32.mrf.mxu0
      %v3498 = vadd.f32 %v2953, %v3497
      %3499 = vmatmul.bf16.gmra.mxu0 %v3248
      %v3500 = vpop.f32.mrf.mxu0
      %v3501 = vadd.f32 %v2956, %v3500
      %v3502 = vpop.f32.mrf.mxu0
      %v3503 = vadd.f32 %v2958, %v3502
      %3504 = vmatmul.bf16.gmra.mxu0 %v3251
      %v3505 = vpop.f32.mrf.mxu0
      %v3506 = vadd.f32 %v2961, %v3505
      %v3507 = vpop.f32.mrf.mxu0
      %v3508 = vadd.f32 %v2963, %v3507
      %3509 = vmatmul.bf16.gmra.mxu0 %v3254
      %v3510 = vpop.f32.mrf.mxu0
      %v3511 = vadd.f32 %v2966, %v3510
      %v3512 = vpop.f32.mrf.mxu0
      %v3513 = vadd.f32 %v2968, %v3512
      %3514 = vmatmul.bf16.gmra.mxu0 %v3257
      %v3515 = vpop.f32.mrf.mxu0
      %v3516 = vadd.f32 %v2971, %v3515
      %v3517 = vpop.f32.mrf.mxu0
      %v3518 = vadd.f32 %v2973, %v3517
      %3519 = vmatmul.bf16.gmra.mxu0 %v3260
      %v3520 = vpop.f32.mrf.mxu0
      %v3521 = vadd.f32 %v2976, %v3520
      %v3522 = vpop.f32.mrf.mxu0
      %v3523 = vadd.f32 %v2978, %v3522
      %3524 = vmatmul.bf16.gmra.mxu0 %v3263
      %v3525 = vpop.f32.mrf.mxu0
      %v3526 = vadd.f32 %v2981, %v3525
      %v3527 = vpop.f32.mrf.mxu0
      %v3528 = vadd.f32 %v2983, %v3527
      %3529 = vmatmul.bf16.gmra.mxu0 %v3266
      %v3530 = vpop.f32.mrf.mxu0
      %v3531 = vadd.f32 %v2986, %v3530
      %v3532 = vpop.f32.mrf.mxu0
      %v3533 = vadd.f32 %v2988, %v3532
      %3534 = vmatmul.bf16.gmra.mxu0 %v3269
      %v3535 = vpop.f32.mrf.mxu0
      %v3536 = vadd.f32 %v2991, %v3535
      %v3537 = vpop.f32.mrf.mxu0
      %v3538 = vadd.f32 %v2993, %v3537
      %3539 = vmatmul.bf16.gmra.mxu0 %v3272
      %v3540 = vpop.f32.mrf.mxu0
      %v3541 = vadd.f32 %v2996, %v3540
      %v3542 = vpop.f32.mrf.mxu0
      %v3543 = vadd.f32 %v2998, %v3542
      %3544 = vmatmul.bf16.gmra.mxu0 %v3275
      %v3545 = vpop.f32.mrf.mxu0
      %v3546 = vadd.f32 %v3001, %v3545
      %v3547 = vpop.f32.mrf.mxu0
      %v3548 = vadd.f32 %v3003, %v3547
      %3549 = vmatmul.bf16.gmra.mxu0 %v3278
      %v3550 = vpop.f32.mrf.mxu0
      %v3551 = vadd.f32 %v3006, %v3550
      %v3552 = vpop.f32.mrf.mxu0
      %v3553 = vadd.f32 %v3008, %v3552
      %3554 = vmatmul.bf16.gmra.mxu0 %v3281
      %v3555 = vpop.f32.mrf.mxu0
      %v3556 = vadd.f32 %v3011, %v3555
      %v3557 = vpop.f32.mrf.mxu0
      %v3558 = vadd.f32 %v3013, %v3557
      %3559 = vmatmul.bf16.gmra.mxu0 %v3284
      %v3560 = vpop.f32.mrf.mxu0
      %v3561 = vadd.f32 %v3016, %v3560
      %v3562 = vpop.f32.mrf.mxu0
      %v3563 = vadd.f32 %v3018, %v3562
      %3564 = vmatmul.bf16.gmra.mxu0 %v3287
      %v3565 = vpop.f32.mrf.mxu0
      %v3566 = vadd.f32 %v3021, %v3565
      %v3567 = vpop.f32.mrf.mxu0
      %v3568 = vadd.f32 %v3023, %v3567
      %3569 = vmatmul.bf16.gmra.mxu0 %v3290
      %v3570 = vpop.f32.mrf.mxu0
      %v3571 = vadd.f32 %v3026, %v3570
      %v3572 = vpop.f32.mrf.mxu0
      %v3573 = vadd.f32 %v3028, %v3572
      %3574 = vmatmul.bf16.gmra.mxu0 %v3293
      %v3575 = vpop.f32.mrf.mxu0
      %v3576 = vadd.f32 %v3031, %v3575
      %v3577 = vpop.f32.mrf.mxu0
      %v3578 = vadd.f32 %v3033, %v3577
      %3579 = vmatmul.bf16.gmra.mxu0 %v3296
      %v3580 = vpop.f32.mrf.mxu0
      %v3581 = vadd.f32 %v3036, %v3580
      %v3582 = vpop.f32.mrf.mxu0
      %v3583 = vadd.f32 %v3038, %v3582
      %3584 = vmatmul.bf16.gmra.mxu0 %v3299
      %v3585 = vpop.f32.mrf.mxu0
      %v3586 = vadd.f32 %v3041, %v3585
      %v3587 = vpop.f32.mrf.mxu0
      %v3588 = vadd.f32 %v3043, %v3587
      %3589 = vmatmul.bf16.gmra.mxu0 %v3302
      %v3590 = vpop.f32.mrf.mxu0
      %v3591 = vadd.f32 %v3046, %v3590
      %v3592 = vpop.f32.mrf.mxu0
      %v3593 = vadd.f32 %v3048, %v3592
      %3594 = vmatmul.bf16.gmra.mxu0 %v3305
      %v3595 = vpop.f32.mrf.mxu0
      %v3596 = vadd.f32 %v3051, %v3595
      %v3597 = vpop.f32.mrf.mxu0
      %v3598 = vadd.f32 %v3053, %v3597
      %3599 = vmatmul.bf16.gmra.mxu0 %v3308
      %v3600 = vpop.f32.mrf.mxu0
      %v3601 = vadd.f32 %v3056, %v3600
      %v3602 = vpop.f32.mrf.mxu0
      %v3603 = vadd.f32 %v3058, %v3602
      %3604 = vmatmul.bf16.gmra.mxu0 %v3311
      %v3605 = vpop.f32.mrf.mxu0
      %v3606 = vadd.f32 %v3061, %v3605
      %v3607 = vpop.f32.mrf.mxu0
      %v3608 = vadd.f32 %v3063, %v3607
      %3609 = vmatmul.bf16.gmra.mxu0 %v3314
      %v3610 = vpop.f32.mrf.mxu0
      %v3611 = vadd.f32 %v3066, %v3610
      %v3612 = vpop.f32.mrf.mxu0
      %v3613 = vadd.f32 %v3068, %v3612
      %3614 = vmatmul.bf16.gmra.mxu0 %v3317
      %v3615 = vpop.f32.mrf.mxu0
      %v3616 = vadd.f32 %v3071, %v3615
      %v3617 = vpop.f32.mrf.mxu0
      %v3618 = vadd.f32 %v3073, %v3617
      %3619 = vmatmul.bf16.gmra.mxu0 %v3320
      %v3620 = vpop.f32.mrf.mxu0
      %v3621 = vadd.f32 %v3076, %v3620
      %v3622 = vpop.f32.mrf.mxu0
      %v3623 = vadd.f32 %v3078, %v3622
      %3624 = vmatmul.bf16.gmra.mxu0 %v3323
      %v3625 = vpop.f32.mrf.mxu0
      %v3626 = vadd.f32 %v3081, %v3625
      %v3627 = vpop.f32.mrf.mxu0
      %v3628 = vadd.f32 %v3083, %v3627
      %3629 = vmatmul.bf16.gmra.mxu0 %v3326
      %v3630 = vpop.f32.mrf.mxu0
      %v3631 = vadd.f32 %v3086, %v3630
      %v3632 = vpop.f32.mrf.mxu0
      %v3633 = vadd.f32 %v3088, %v3632
      %3634 = vmatmul.bf16.gmra.mxu0 %v3329
      %v3635 = vpop.f32.mrf.mxu0
      %v3636 = vadd.f32 %v3091, %v3635
      %v3637 = vpop.f32.mrf.mxu0
      %v3638 = vadd.f32 %v3093, %v3637
      %3639 = vmatmul.bf16.gmra.mxu0 %v3332
      %v3640 = vpop.f32.mrf.mxu0
      %v3641 = vadd.f32 %v3096, %v3640
      %v3642 = vpop.f32.mrf.mxu0
      %v3643 = vadd.f32 %v3098, %v3642
      %3644 = vmatmul.bf16.gmra.mxu0 %v3335
      %v3645 = vpop.f32.mrf.mxu0
      %v3646 = vadd.f32 %v3101, %v3645
      %v3647 = vpop.f32.mrf.mxu0
      %v3648 = vadd.f32 %v3103, %v3647
      %3649 = vmatmul.bf16.gmra.mxu0 %v3338
      %v3650 = vpop.f32.mrf.mxu0
      %v3651 = vadd.f32 %v3106, %v3650
      %v3652 = vpop.f32.mrf.mxu0
      %v3653 = vadd.f32 %v3108, %v3652
      %3654 = vmatmul.bf16.gmra.mxu0 %v3341
      %v3655 = vpop.f32.mrf.mxu0
      %v3656 = vadd.f32 %v3111, %v3655
      %v3657 = vpop.f32.mrf.mxu0
      %v3658 = vadd.f32 %v3113, %v3657
      %3659 = vmatmul.bf16.gmra.mxu0 %v3344
      %v3660 = vpop.f32.mrf.mxu0
      %v3661 = vadd.f32 %v3116, %v3660
      %v3662 = vpop.f32.mrf.mxu0
      %v3663 = vadd.f32 %v3118, %v3662
      %3664 = vmatmul.bf16.gmra.mxu0 %v3347
      %v3665 = vpop.f32.mrf.mxu0
      %v3666 = vadd.f32 %v3121, %v3665
      %v3667 = vpop.f32.mrf.mxu0
      %v3668 = vadd.f32 %v3123, %v3667
      %3669 = vmatmul.bf16.gmra.mxu0 %v3350
      %v3670 = vpop.f32.mrf.mxu0
      %v3671 = vadd.f32 %v3126, %v3670
      %v3672 = vpop.f32.mrf.mxu0
      %v3673 = vadd.f32 %v3128, %v3672
      %3674 = vmatmul.bf16.gmra.mxu0 %v3353
      %v3675 = vpop.f32.mrf.mxu0
      %v3676 = vadd.f32 %v3131, %v3675
      %v3677 = vpop.f32.mrf.mxu0
      %v3678 = vadd.f32 %v3133, %v3677
      %3679 = vmatmul.bf16.gmra.mxu0 %v3356
      %v3680 = vpop.f32.mrf.mxu0
      %v3681 = vadd.f32 %v3136, %v3680
      %v3682 = vpop.f32.mrf.mxu0
      %v3683 = vadd.f32 %v3138, %v3682
      %3684 = vmatmul.bf16.gmra.mxu0 %v3359
      %v3685 = vpop.f32.mrf.mxu0
      %v3686 = vadd.f32 %v3141, %v3685
      %v3687 = vpop.f32.mrf.mxu0
      %v3688 = vadd.f32 %v3143, %v3687
      %3689 = vdwg.mxu0
      %v3690 = vld [vmem:[%s8] sm:$0x1]
      %v3692 = vperm.slane %v3690, 0
      %v3694 = vadd.f32 %v3371, %v3692
      %v3695 = vadd.f32 %v3373, %v3692
      %v3696 = vadd.f32 %v3376, %v3692
      %v3697 = vadd.f32 %v3378, %v3692
      %v3698 = vadd.f32 %v3381, %v3692
      %v3699 = vadd.f32 %v3383, %v3692
      %v3700 = vadd.f32 %v3386, %v3692
      %v3701 = vadd.f32 %v3388, %v3692
      %v3702 = vadd.f32 %v3391, %v3692
      %v3703 = vadd.f32 %v3393, %v3692
      %v3704 = vadd.f32 %v3396, %v3692
      %v3705 = vadd.f32 %v3398, %v3692
      %v3706 = vadd.f32 %v3401, %v3692
      %v3707 = vadd.f32 %v3403, %v3692
      %v3708 = vadd.f32 %v3406, %v3692
      %v3709 = vadd.f32 %v3408, %v3692
      %v3710 = vadd.f32 %v3411, %v3692
      %v3711 = vadd.f32 %v3413, %v3692
      %v3712 = vadd.f32 %v3416, %v3692
      %v3713 = vadd.f32 %v3418, %v3692
      %v3714 = vadd.f32 %v3421, %v3692
      %v3715 = vadd.f32 %v3423, %v3692
      %v3716 = vadd.f32 %v3426, %v3692
      %v3717 = vadd.f32 %v3428, %v3692
      %v3718 = vadd.f32 %v3431, %v3692
      %v3719 = vadd.f32 %v3433, %v3692
      %v3720 = vadd.f32 %v3436, %v3692
      %v3721 = vadd.f32 %v3438, %v3692
      %v3722 = vadd.f32 %v3441, %v3692
      %v3723 = vadd.f32 %v3443, %v3692
      %v3724 = vadd.f32 %v3446, %v3692
      %v3725 = vadd.f32 %v3448, %v3692
      %v3726 = vadd.f32 %v3451, %v3692
      %v3727 = vadd.f32 %v3453, %v3692
      %v3728 = vadd.f32 %v3456, %v3692
      %v3729 = vadd.f32 %v3458, %v3692
      %v3730 = vadd.f32 %v3461, %v3692
      %v3731 = vadd.f32 %v3463, %v3692
      %v3732 = vadd.f32 %v3466, %v3692
      %v3733 = vadd.f32 %v3468, %v3692
      %v3734 = vadd.f32 %v3471, %v3692
      %v3735 = vadd.f32 %v3473, %v3692
      %v3736 = vadd.f32 %v3476, %v3692
      %v3737 = vadd.f32 %v3478, %v3692
      %v3738 = vadd.f32 %v3481, %v3692
      %v3739 = vadd.f32 %v3483, %v3692
      %v3740 = vadd.f32 %v3486, %v3692
      %v3741 = vadd.f32 %v3488, %v3692
      %v3742 = vadd.f32 %v3491, %v3692
      %v3743 = vadd.f32 %v3493, %v3692
      %v3744 = vadd.f32 %v3496, %v3692
      %v3745 = vadd.f32 %v3498, %v3692
      %v3746 = vadd.f32 %v3501, %v3692
      %v3747 = vadd.f32 %v3503, %v3692
      %v3748 = vadd.f32 %v3506, %v3692
      %v3749 = vadd.f32 %v3508, %v3692
      %v3750 = vadd.f32 %v3511, %v3692
      %v3751 = vadd.f32 %v3513, %v3692
      %v3752 = vadd.f32 %v3516, %v3692
      %v3753 = vadd.f32 %v3518, %v3692
      %v3754 = vadd.f32 %v3521, %v3692
      %v3755 = vadd.f32 %v3523, %v3692
      %v3756 = vadd.f32 %v3526, %v3692
      %v3757 = vadd.f32 %v3528, %v3692
      %v3758 = vadd.f32 %v3531, %v3692
      %v3759 = vadd.f32 %v3533, %v3692
      %v3760 = vadd.f32 %v3536, %v3692
      %v3761 = vadd.f32 %v3538, %v3692
      %v3762 = vadd.f32 %v3541, %v3692
      %v3763 = vadd.f32 %v3543, %v3692
      %v3764 = vadd.f32 %v3546, %v3692
      %v3765 = vadd.f32 %v3548, %v3692
      %v3766 = vadd.f32 %v3551, %v3692
      %v3767 = vadd.f32 %v3553, %v3692
      %v3768 = vadd.f32 %v3556, %v3692
      %v3769 = vadd.f32 %v3558, %v3692
      %v3770 = vadd.f32 %v3561, %v3692
      %v3771 = vadd.f32 %v3563, %v3692
      %v3772 = vadd.f32 %v3566, %v3692
      %v3773 = vadd.f32 %v3568, %v3692
      %v3774 = vadd.f32 %v3571, %v3692
      %v3775 = vadd.f32 %v3573, %v3692
      %v3776 = vadd.f32 %v3576, %v3692
      %v3777 = vadd.f32 %v3578, %v3692
      %v3778 = vadd.f32 %v3581, %v3692
      %v3779 = vadd.f32 %v3583, %v3692
      %v3780 = vadd.f32 %v3586, %v3692
      %v3781 = vadd.f32 %v3588, %v3692
      %v3782 = vadd.f32 %v3591, %v3692
      %v3783 = vadd.f32 %v3593, %v3692
      %v3784 = vadd.f32 %v3596, %v3692
      %v3785 = vadd.f32 %v3598, %v3692
      %v3786 = vadd.f32 %v3601, %v3692
      %v3787 = vadd.f32 %v3603, %v3692
      %v3788 = vadd.f32 %v3606, %v3692
      %v3789 = vadd.f32 %v3608, %v3692
      %v3790 = vadd.f32 %v3611, %v3692
      %v3791 = vadd.f32 %v3613, %v3692
      %v3792 = vadd.f32 %v3616, %v3692
      %v3793 = vadd.f32 %v3618, %v3692
      %v3794 = vadd.f32 %v3621, %v3692
      %v3795 = vadd.f32 %v3623, %v3692
      %v3796 = vadd.f32 %v3626, %v3692
      %v3797 = vadd.f32 %v3628, %v3692
      %v3798 = vadd.f32 %v3631, %v3692
      %v3799 = vadd.f32 %v3633, %v3692
      %v3800 = vadd.f32 %v3636, %v3692
      %v3801 = vadd.f32 %v3638, %v3692
      %v3802 = vadd.f32 %v3641, %v3692
      %v3803 = vadd.f32 %v3643, %v3692
      %v3804 = vadd.f32 %v3646, %v3692
      %v3805 = vadd.f32 %v3648, %v3692
      %v3806 = vadd.f32 %v3651, %v3692
      %v3807 = vadd.f32 %v3653, %v3692
      %v3808 = vadd.f32 %v3656, %v3692
      %v3809 = vadd.f32 %v3658, %v3692
      %v3810 = vadd.f32 %v3661, %v3692
      %v3811 = vadd.f32 %v3663, %v3692
      %v3812 = vadd.f32 %v3666, %v3692
      %v3813 = vadd.f32 %v3668, %v3692
      %v3814 = vadd.f32 %v3671, %v3692
      %v3815 = vadd.f32 %v3673, %v3692
      %v3816 = vadd.f32 %v3676, %v3692
      %v3817 = vadd.f32 %v3678, %v3692
      %v3818 = vadd.f32 %v3681, %v3692
      %v3819 = vadd.f32 %v3683, %v3692
      %v3820 = vadd.f32 %v3686, %v3692
      %v3821 = vadd.f32 %v3688, %v3692
      %vm3822 = vcmask 15360
      %v3823 = vsel %vm3822, %v3694, -inf
      %3824 = vmax.xlane.f32.xlu0 %v3823
      %v3825 = vpop.xlane.xlu0 %3824
      %v3826 = vsel %vm3822, %v3695, -inf
      %3827 = vmax.xlane.f32.xlu0 %v3826
      %v3828 = vpop.xlane.xlu0 %3827
      %v3829 = vsel %vm3822, %v3696, -inf
      %3830 = vmax.xlane.f32.xlu0 %v3829
      %v3831 = vpop.xlane.xlu0 %3830
      %v3832 = vsel %vm3822, %v3697, -inf
      %3833 = vmax.xlane.f32.xlu0 %v3832
      %v3834 = vpop.xlane.xlu0 %3833
      %v3835 = vsel %vm3822, %v3698, -inf
      %3836 = vmax.xlane.f32.xlu0 %v3835
      %v3837 = vpop.xlane.xlu0 %3836
      %v3838 = vsel %vm3822, %v3699, -inf
      %3839 = vmax.xlane.f32.xlu0 %v3838
      %v3840 = vpop.xlane.xlu0 %3839
      %v3841 = vsel %vm3822, %v3700, -inf
      %3842 = vmax.xlane.f32.xlu0 %v3841
      %v3843 = vpop.xlane.xlu0 %3842
      %v3844 = vsel %vm3822, %v3701, -inf
      %3845 = vmax.xlane.f32.xlu0 %v3844
      %v3846 = vpop.xlane.xlu0 %3845
      %v3847 = vsel %vm3822, %v3702, -inf
      %3848 = vmax.xlane.f32.xlu0 %v3847
      %v3849 = vpop.xlane.xlu0 %3848
      %v3850 = vsel %vm3822, %v3703, -inf
      %3851 = vmax.xlane.f32.xlu0 %v3850
      %v3852 = vpop.xlane.xlu0 %3851
      %v3853 = vsel %vm3822, %v3704, -inf
      %3854 = vmax.xlane.f32.xlu0 %v3853
      %v3855 = vpop.xlane.xlu0 %3854
      %v3856 = vsel %vm3822, %v3705, -inf
      %3857 = vmax.xlane.f32.xlu0 %v3856
      %v3858 = vpop.xlane.xlu0 %3857
      %v3859 = vsel %vm3822, %v3706, -inf
      %3860 = vmax.xlane.f32.xlu0 %v3859
      %v3861 = vpop.xlane.xlu0 %3860
      %v3862 = vsel %vm3822, %v3707, -inf
      %3863 = vmax.xlane.f32.xlu0 %v3862
      %v3864 = vpop.xlane.xlu0 %3863
      %v3865 = vsel %vm3822, %v3708, -inf
      %3866 = vmax.xlane.f32.xlu0 %v3865
      %v3867 = vpop.xlane.xlu0 %3866
      %v3868 = vsel %vm3822, %v3709, -inf
      %3869 = vmax.xlane.f32.xlu0 %v3868
      %v3870 = vpop.xlane.xlu0 %3869
      %v3871 = vsel %vm3822, %v3710, -inf
      %3872 = vmax.xlane.f32.xlu0 %v3871
      %v3873 = vpop.xlane.xlu0 %3872
      %v3874 = vsel %vm3822, %v3711, -inf
      %3875 = vmax.xlane.f32.xlu0 %v3874
      %v3876 = vpop.xlane.xlu0 %3875
      %v3877 = vsel %vm3822, %v3712, -inf
      %3878 = vmax.xlane.f32.xlu0 %v3877
      %v3879 = vpop.xlane.xlu0 %3878
      %v3880 = vsel %vm3822, %v3713, -inf
      %3881 = vmax.xlane.f32.xlu0 %v3880
      %v3882 = vpop.xlane.xlu0 %3881
      %v3883 = vsel %vm3822, %v3714, -inf
      %3884 = vmax.xlane.f32.xlu0 %v3883
      %v3885 = vpop.xlane.xlu0 %3884
      %v3886 = vsel %vm3822, %v3715, -inf
      %3887 = vmax.xlane.f32.xlu0 %v3886
      %v3888 = vpop.xlane.xlu0 %3887
      %v3889 = vsel %vm3822, %v3716, -inf
      %3890 = vmax.xlane.f32.xlu0 %v3889
      %v3891 = vpop.xlane.xlu0 %3890
      %v3892 = vsel %vm3822, %v3717, -inf
      %3893 = vmax.xlane.f32.xlu0 %v3892
      %v3894 = vpop.xlane.xlu0 %3893
      %v3895 = vsel %vm3822, %v3718, -inf
      %3896 = vmax.xlane.f32.xlu0 %v3895
      %v3897 = vpop.xlane.xlu0 %3896
      %v3898 = vsel %vm3822, %v3719, -inf
      %3899 = vmax.xlane.f32.xlu0 %v3898
      %v3900 = vpop.xlane.xlu0 %3899
      %v3901 = vsel %vm3822, %v3720, -inf
      %3902 = vmax.xlane.f32.xlu0 %v3901
      %v3903 = vpop.xlane.xlu0 %3902
      %v3904 = vsel %vm3822, %v3721, -inf
      %3905 = vmax.xlane.f32.xlu0 %v3904
      %v3906 = vpop.xlane.xlu0 %3905
      %v3907 = vsel %vm3822, %v3722, -inf
      %3908 = vmax.xlane.f32.xlu0 %v3907
      %v3909 = vpop.xlane.xlu0 %3908
      %v3910 = vsel %vm3822, %v3723, -inf
      %3911 = vmax.xlane.f32.xlu0 %v3910
      %v3912 = vpop.xlane.xlu0 %3911
      %v3913 = vsel %vm3822, %v3724, -inf
      %3914 = vmax.xlane.f32.xlu0 %v3913
      %v3915 = vpop.xlane.xlu0 %3914
      %v3916 = vsel %vm3822, %v3725, -inf
      %3917 = vmax.xlane.f32.xlu0 %v3916
      %v3918 = vpop.xlane.xlu0 %3917
      %v3919 = vsel %vm3822, %v3726, -inf
      %3920 = vmax.xlane.f32.xlu0 %v3919
      %v3921 = vpop.xlane.xlu0 %3920
      %v3922 = vsel %vm3822, %v3727, -inf
      %3923 = vmax.xlane.f32.xlu0 %v3922
      %v3924 = vpop.xlane.xlu0 %3923
      %v3925 = vsel %vm3822, %v3728, -inf
      %3926 = vmax.xlane.f32.xlu0 %v3925
      %v3927 = vpop.xlane.xlu0 %3926
      %v3928 = vsel %vm3822, %v3729, -inf
      %3929 = vmax.xlane.f32.xlu0 %v3928
      %v3930 = vpop.xlane.xlu0 %3929
      %v3931 = vsel %vm3822, %v3730, -inf
      %3932 = vmax.xlane.f32.xlu0 %v3931
      %v3933 = vpop.xlane.xlu0 %3932
      %v3934 = vsel %vm3822, %v3731, -inf
      %3935 = vmax.xlane.f32.xlu0 %v3934
      %v3936 = vpop.xlane.xlu0 %3935
      %v3937 = vsel %vm3822, %v3732, -inf
      %3938 = vmax.xlane.f32.xlu0 %v3937
      %v3939 = vpop.xlane.xlu0 %3938
      %v3940 = vsel %vm3822, %v3733, -inf
      %3941 = vmax.xlane.f32.xlu0 %v3940
      %v3942 = vpop.xlane.xlu0 %3941
      %v3943 = vsel %vm3822, %v3734, -inf
      %3944 = vmax.xlane.f32.xlu0 %v3943
      %v3945 = vpop.xlane.xlu0 %3944
      %v3946 = vsel %vm3822, %v3735, -inf
      %3947 = vmax.xlane.f32.xlu0 %v3946
      %v3948 = vpop.xlane.xlu0 %3947
      %v3949 = vsel %vm3822, %v3736, -inf
      %3950 = vmax.xlane.f32.xlu0 %v3949
      %v3951 = vpop.xlane.xlu0 %3950
      %v3952 = vsel %vm3822, %v3737, -inf
      %3953 = vmax.xlane.f32.xlu0 %v3952
      %v3954 = vpop.xlane.xlu0 %3953
      %v3955 = vsel %vm3822, %v3738, -inf
      %3956 = vmax.xlane.f32.xlu0 %v3955
      %v3957 = vpop.xlane.xlu0 %3956
      %v3958 = vsel %vm3822, %v3739, -inf
      %3959 = vmax.xlane.f32.xlu0 %v3958
      %v3960 = vpop.xlane.xlu0 %3959
      %v3961 = vsel %vm3822, %v3740, -inf
      %3962 = vmax.xlane.f32.xlu0 %v3961
      %v3963 = vpop.xlane.xlu0 %3962
      %v3964 = vsel %vm3822, %v3741, -inf
      %3965 = vmax.xlane.f32.xlu0 %v3964
      %v3966 = vpop.xlane.xlu0 %3965
      %v3967 = vsel %vm3822, %v3742, -inf
      %3968 = vmax.xlane.f32.xlu0 %v3967
      %v3969 = vpop.xlane.xlu0 %3968
      %v3970 = vsel %vm3822, %v3743, -inf
      %3971 = vmax.xlane.f32.xlu0 %v3970
      %v3972 = vpop.xlane.xlu0 %3971
      %v3973 = vsel %vm3822, %v3744, -inf
      %3974 = vmax.xlane.f32.xlu0 %v3973
      %v3975 = vpop.xlane.xlu0 %3974
      %v3976 = vsel %vm3822, %v3745, -inf
      %3977 = vmax.xlane.f32.xlu0 %v3976
      %v3978 = vpop.xlane.xlu0 %3977
      %v3979 = vsel %vm3822, %v3746, -inf
      %3980 = vmax.xlane.f32.xlu0 %v3979
      %v3981 = vpop.xlane.xlu0 %3980
      %v3982 = vsel %vm3822, %v3747, -inf
      %3983 = vmax.xlane.f32.xlu0 %v3982
      %v3984 = vpop.xlane.xlu0 %3983
      %v3985 = vsel %vm3822, %v3748, -inf
      %3986 = vmax.xlane.f32.xlu0 %v3985
      %v3987 = vpop.xlane.xlu0 %3986
      %v3988 = vsel %vm3822, %v3749, -inf
      %3989 = vmax.xlane.f32.xlu0 %v3988
      %v3990 = vpop.xlane.xlu0 %3989
      %v3991 = vsel %vm3822, %v3750, -inf
      %3992 = vmax.xlane.f32.xlu0 %v3991
      %v3993 = vpop.xlane.xlu0 %3992
      %v3994 = vsel %vm3822, %v3751, -inf
      %3995 = vmax.xlane.f32.xlu0 %v3994
      %v3996 = vpop.xlane.xlu0 %3995
      %v3997 = vsel %vm3822, %v3752, -inf
      %3998 = vmax.xlane.f32.xlu0 %v3997
      %v3999 = vpop.xlane.xlu0 %3998
      %v4000 = vsel %vm3822, %v3753, -inf
      %4001 = vmax.xlane.f32.xlu0 %v4000
      %v4002 = vpop.xlane.xlu0 %4001
      %v4003 = vsel %vm3822, %v3754, -inf
      %4004 = vmax.xlane.f32.xlu0 %v4003
      %v4005 = vpop.xlane.xlu0 %4004
      %v4006 = vsel %vm3822, %v3755, -inf
      %4007 = vmax.xlane.f32.xlu0 %v4006
      %v4008 = vpop.xlane.xlu0 %4007
      %v4009 = vsel %vm3822, %v3756, -inf
      %4010 = vmax.xlane.f32.xlu0 %v4009
      %v4011 = vpop.xlane.xlu0 %4010
      %v4012 = vsel %vm3822, %v3757, -inf
      %4013 = vmax.xlane.f32.xlu0 %v4012
      %v4014 = vpop.xlane.xlu0 %4013
      %v4015 = vsel %vm3822, %v3758, -inf
      %4016 = vmax.xlane.f32.xlu0 %v4015
      %v4017 = vpop.xlane.xlu0 %4016
      %v4018 = vsel %vm3822, %v3759, -inf
      %4019 = vmax.xlane.f32.xlu0 %v4018
      %v4020 = vpop.xlane.xlu0 %4019
      %v4021 = vsel %vm3822, %v3760, -inf
      %4022 = vmax.xlane.f32.xlu0 %v4021
      %v4023 = vpop.xlane.xlu0 %4022
      %v4024 = vsel %vm3822, %v3761, -inf
      %4025 = vmax.xlane.f32.xlu0 %v4024
      %v4026 = vpop.xlane.xlu0 %4025
      %v4027 = vsel %vm3822, %v3762, -inf
      %4028 = vmax.xlane.f32.xlu0 %v4027
      %v4029 = vpop.xlane.xlu0 %4028
      %v4030 = vsel %vm3822, %v3763, -inf
      %4031 = vmax.xlane.f32.xlu0 %v4030
      %v4032 = vpop.xlane.xlu0 %4031
      %v4033 = vsel %vm3822, %v3764, -inf
      %4034 = vmax.xlane.f32.xlu0 %v4033
      %v4035 = vpop.xlane.xlu0 %4034
      %v4036 = vsel %vm3822, %v3765, -inf
      %4037 = vmax.xlane.f32.xlu0 %v4036
      %v4038 = vpop.xlane.xlu0 %4037
      %v4039 = vsel %vm3822, %v3766, -inf
      %4040 = vmax.xlane.f32.xlu0 %v4039
      %v4041 = vpop.xlane.xlu0 %4040
      %v4042 = vsel %vm3822, %v3767, -inf
      %4043 = vmax.xlane.f32.xlu0 %v4042
      %v4044 = vpop.xlane.xlu0 %4043
      %v4045 = vsel %vm3822, %v3768, -inf
      %4046 = vmax.xlane.f32.xlu0 %v4045
      %v4047 = vpop.xlane.xlu0 %4046
      %v4048 = vsel %vm3822, %v3769, -inf
      %4049 = vmax.xlane.f32.xlu0 %v4048
      %v4050 = vpop.xlane.xlu0 %4049
      %v4051 = vsel %vm3822, %v3770, -inf
      %4052 = vmax.xlane.f32.xlu0 %v4051
      %v4053 = vpop.xlane.xlu0 %4052
      %v4054 = vsel %vm3822, %v3771, -inf
      %4055 = vmax.xlane.f32.xlu0 %v4054
      %v4056 = vpop.xlane.xlu0 %4055
      %v4057 = vsel %vm3822, %v3772, -inf
      %4058 = vmax.xlane.f32.xlu0 %v4057
      %v4059 = vpop.xlane.xlu0 %4058
      %v4060 = vsel %vm3822, %v3773, -inf
      %4061 = vmax.xlane.f32.xlu0 %v4060
      %v4062 = vpop.xlane.xlu0 %4061
      %v4063 = vsel %vm3822, %v3774, -inf
      %4064 = vmax.xlane.f32.xlu0 %v4063
      %v4065 = vpop.xlane.xlu0 %4064
      %v4066 = vsel %vm3822, %v3775, -inf
      %4067 = vmax.xlane.f32.xlu0 %v4066
      %v4068 = vpop.xlane.xlu0 %4067
      %v4069 = vsel %vm3822, %v3776, -inf
      %4070 = vmax.xlane.f32.xlu0 %v4069
      %v4071 = vpop.xlane.xlu0 %4070
      %v4072 = vsel %vm3822, %v3777, -inf
      %4073 = vmax.xlane.f32.xlu0 %v4072
      %v4074 = vpop.xlane.xlu0 %4073
      %v4075 = vsel %vm3822, %v3778, -inf
      %4076 = vmax.xlane.f32.xlu0 %v4075
      %v4077 = vpop.xlane.xlu0 %4076
      %v4078 = vsel %vm3822, %v3779, -inf
      %4079 = vmax.xlane.f32.xlu0 %v4078
      %v4080 = vpop.xlane.xlu0 %4079
      %v4081 = vsel %vm3822, %v3780, -inf
      %4082 = vmax.xlane.f32.xlu0 %v4081
      %v4083 = vpop.xlane.xlu0 %4082
      %v4084 = vsel %vm3822, %v3781, -inf
      %4085 = vmax.xlane.f32.xlu0 %v4084
      %v4086 = vpop.xlane.xlu0 %4085
      %v4087 = vsel %vm3822, %v3782, -inf
      %4088 = vmax.xlane.f32.xlu0 %v4087
      %v4089 = vpop.xlane.xlu0 %4088
      %v4090 = vsel %vm3822, %v3783, -inf
      %4091 = vmax.xlane.f32.xlu0 %v4090
      %v4092 = vpop.xlane.xlu0 %4091
      %v4093 = vsel %vm3822, %v3784, -inf
      %4094 = vmax.xlane.f32.xlu0 %v4093
      %v4095 = vpop.xlane.xlu0 %4094
      %v4096 = vsel %vm3822, %v3785, -inf
      %4097 = vmax.xlane.f32.xlu0 %v4096
      %v4098 = vpop.xlane.xlu0 %4097
      %v4099 = vsel %vm3822, %v3786, -inf
      %4100 = vmax.xlane.f32.xlu0 %v4099
      %v4101 = vpop.xlane.xlu0 %4100
      %v4102 = vsel %vm3822, %v3787, -inf
      %4103 = vmax.xlane.f32.xlu0 %v4102
      %v4104 = vpop.xlane.xlu0 %4103
      %v4105 = vsel %vm3822, %v3788, -inf
      %4106 = vmax.xlane.f32.xlu0 %v4105
      %v4107 = vpop.xlane.xlu0 %4106
      %v4108 = vsel %vm3822, %v3789, -inf
      %4109 = vmax.xlane.f32.xlu0 %v4108
      %v4110 = vpop.xlane.xlu0 %4109
      %v4111 = vsel %vm3822, %v3790, -inf
      %4112 = vmax.xlane.f32.xlu0 %v4111
      %v4113 = vpop.xlane.xlu0 %4112
      %v4114 = vsel %vm3822, %v3791, -inf
      %4115 = vmax.xlane.f32.xlu0 %v4114
      %v4116 = vpop.xlane.xlu0 %4115
      %v4117 = vsel %vm3822, %v3792, -inf
      %4118 = vmax.xlane.f32.xlu0 %v4117
      %v4119 = vpop.xlane.xlu0 %4118
      %v4120 = vsel %vm3822, %v3793, -inf
      %4121 = vmax.xlane.f32.xlu0 %v4120
      %v4122 = vpop.xlane.xlu0 %4121
      %v4123 = vsel %vm3822, %v3794, -inf
      %4124 = vmax.xlane.f32.xlu0 %v4123
      %v4125 = vpop.xlane.xlu0 %4124
      %v4126 = vsel %vm3822, %v3795, -inf
      %4127 = vmax.xlane.f32.xlu0 %v4126
      %v4128 = vpop.xlane.xlu0 %4127
      %v4129 = vsel %vm3822, %v3796, -inf
      %4130 = vmax.xlane.f32.xlu0 %v4129
      %v4131 = vpop.xlane.xlu0 %4130
      %v4132 = vsel %vm3822, %v3797, -inf
      %4133 = vmax.xlane.f32.xlu0 %v4132
      %v4134 = vpop.xlane.xlu0 %4133
      %v4135 = vsel %vm3822, %v3798, -inf
      %4136 = vmax.xlane.f32.xlu0 %v4135
      %v4137 = vpop.xlane.xlu0 %4136
      %v4138 = vsel %vm3822, %v3799, -inf
      %4139 = vmax.xlane.f32.xlu0 %v4138
      %v4140 = vpop.xlane.xlu0 %4139
      %v4141 = vsel %vm3822, %v3800, -inf
      %4142 = vmax.xlane.f32.xlu0 %v4141
      %v4143 = vpop.xlane.xlu0 %4142
      %v4144 = vsel %vm3822, %v3801, -inf
      %4145 = vmax.xlane.f32.xlu0 %v4144
      %v4146 = vpop.xlane.xlu0 %4145
      %v4147 = vsel %vm3822, %v3802, -inf
      %4148 = vmax.xlane.f32.xlu0 %v4147
      %v4149 = vpop.xlane.xlu0 %4148
      %v4150 = vsel %vm3822, %v3803, -inf
      %4151 = vmax.xlane.f32.xlu0 %v4150
      %v4152 = vpop.xlane.xlu0 %4151
      %v4153 = vsel %vm3822, %v3804, -inf
      %4154 = vmax.xlane.f32.xlu0 %v4153
      %v4155 = vpop.xlane.xlu0 %4154
      %v4156 = vsel %vm3822, %v3805, -inf
      %4157 = vmax.xlane.f32.xlu0 %v4156
      %v4158 = vpop.xlane.xlu0 %4157
      %v4159 = vsel %vm3822, %v3806, -inf
      %4160 = vmax.xlane.f32.xlu0 %v4159
      %v4161 = vpop.xlane.xlu0 %4160
      %v4162 = vsel %vm3822, %v3807, -inf
      %4163 = vmax.xlane.f32.xlu0 %v4162
      %v4164 = vpop.xlane.xlu0 %4163
      %v4165 = vsel %vm3822, %v3808, -inf
      %4166 = vmax.xlane.f32.xlu0 %v4165
      %v4167 = vpop.xlane.xlu0 %4166
      %v4168 = vsel %vm3822, %v3809, -inf
      %4169 = vmax.xlane.f32.xlu0 %v4168
      %v4170 = vpop.xlane.xlu0 %4169
      %v4171 = vsel %vm3822, %v3810, -inf
      %4172 = vmax.xlane.f32.xlu0 %v4171
      %v4173 = vpop.xlane.xlu0 %4172
      %v4174 = vsel %vm3822, %v3811, -inf
      %4175 = vmax.xlane.f32.xlu0 %v4174
      %v4176 = vpop.xlane.xlu0 %4175
      %v4177 = vsel %vm3822, %v3812, -inf
      %4178 = vmax.xlane.f32.xlu0 %v4177
      %v4179 = vpop.xlane.xlu0 %4178
      %v4180 = vsel %vm3822, %v3813, -inf
      %4181 = vmax.xlane.f32.xlu0 %v4180
      %v4182 = vpop.xlane.xlu0 %4181
      %v4183 = vsel %vm3822, %v3814, -inf
      %4184 = vmax.xlane.f32.xlu0 %v4183
      %v4185 = vpop.xlane.xlu0 %4184
      %v4186 = vsel %vm3822, %v3815, -inf
      %4187 = vmax.xlane.f32.xlu0 %v4186
      %v4188 = vpop.xlane.xlu0 %4187
      %v4189 = vsel %vm3822, %v3816, -inf
      %4190 = vmax.xlane.f32.xlu0 %v4189
      %v4191 = vpop.xlane.xlu0 %4190
      %v4192 = vsel %vm3822, %v3817, -inf
      %4193 = vmax.xlane.f32.xlu0 %v4192
      %v4194 = vpop.xlane.xlu0 %4193
      %v4195 = vsel %vm3822, %v3818, -inf
      %4196 = vmax.xlane.f32.xlu0 %v4195
      %v4197 = vpop.xlane.xlu0 %4196
      %v4198 = vsel %vm3822, %v3819, -inf
      %4199 = vmax.xlane.f32.xlu0 %v4198
      %v4200 = vpop.xlane.xlu0 %4199
      %v4201 = vsel %vm3822, %v3820, -inf
      %4202 = vmax.xlane.f32.xlu0 %v4201
      %v4203 = vpop.xlane.xlu0 %4202
      %v4204 = vsel %vm3822, %v3821, -inf
      %4205 = vmax.xlane.f32.xlu0 %v4204
      %v4206 = vpop.xlane.xlu0 %4205
      %v4207 = vsub.f32 %v3694, %v3825
      %v4208 = vsub.f32 %v3695, %v3828
      %v4209 = vsub.f32 %v3696, %v3831
      %v4210 = vsub.f32 %v3697, %v3834
      %v4211 = vsub.f32 %v3698, %v3837
      %v4212 = vsub.f32 %v3699, %v3840
      %v4213 = vsub.f32 %v3700, %v3843
      %v4214 = vsub.f32 %v3701, %v3846
      %v4215 = vsub.f32 %v3702, %v3849
      %v4216 = vsub.f32 %v3703, %v3852
      %v4217 = vsub.f32 %v3704, %v3855
      %v4218 = vsub.f32 %v3705, %v3858
      %v4219 = vsub.f32 %v3706, %v3861
      %v4220 = vsub.f32 %v3707, %v3864
      %v4221 = vsub.f32 %v3708, %v3867
      %v4222 = vsub.f32 %v3709, %v3870
      %v4223 = vsub.f32 %v3710, %v3873
      %v4224 = vsub.f32 %v3711, %v3876
      %v4225 = vsub.f32 %v3712, %v3879
      %v4226 = vsub.f32 %v3713, %v3882
      %v4227 = vsub.f32 %v3714, %v3885
      %v4228 = vsub.f32 %v3715, %v3888
      %v4229 = vsub.f32 %v3716, %v3891
      %v4230 = vsub.f32 %v3717, %v3894
      %v4231 = vsub.f32 %v3718, %v3897
      %v4232 = vsub.f32 %v3719, %v3900
      %v4233 = vsub.f32 %v3720, %v3903
      %v4234 = vsub.f32 %v3721, %v3906
      %v4235 = vsub.f32 %v3722, %v3909
      %v4236 = vsub.f32 %v3723, %v3912
      %v4237 = vsub.f32 %v3724, %v3915
      %v4238 = vsub.f32 %v3725, %v3918
      %v4239 = vsub.f32 %v3726, %v3921
      %v4240 = vsub.f32 %v3727, %v3924
      %v4241 = vsub.f32 %v3728, %v3927
      %v4242 = vsub.f32 %v3729, %v3930
      %v4243 = vsub.f32 %v3730, %v3933
      %v4244 = vsub.f32 %v3731, %v3936
      %v4245 = vsub.f32 %v3732, %v3939
      %v4246 = vsub.f32 %v3733, %v3942
      %v4247 = vsub.f32 %v3734, %v3945
      %v4248 = vsub.f32 %v3735, %v3948
      %v4249 = vsub.f32 %v3736, %v3951
      %v4250 = vsub.f32 %v3737, %v3954
      %v4251 = vsub.f32 %v3738, %v3957
      %v4252 = vsub.f32 %v3739, %v3960
      %v4253 = vsub.f32 %v3740, %v3963
      %v4254 = vsub.f32 %v3741, %v3966
      %v4255 = vsub.f32 %v3742, %v3969
      %v4256 = vsub.f32 %v3743, %v3972
      %v4257 = vsub.f32 %v3744, %v3975
      %v4258 = vsub.f32 %v3745, %v3978
      %v4259 = vsub.f32 %v3746, %v3981
      %v4260 = vsub.f32 %v3747, %v3984
      %v4261 = vsub.f32 %v3748, %v3987
      %v4262 = vsub.f32 %v3749, %v3990
      %v4263 = vsub.f32 %v3750, %v3993
      %v4264 = vsub.f32 %v3751, %v3996
      %v4265 = vsub.f32 %v3752, %v3999
      %v4266 = vsub.f32 %v3753, %v4002
      %v4267 = vsub.f32 %v3754, %v4005
      %v4268 = vsub.f32 %v3755, %v4008
      %v4269 = vsub.f32 %v3756, %v4011
      %v4270 = vsub.f32 %v3757, %v4014
      %v4271 = vsub.f32 %v3758, %v4017
      %v4272 = vsub.f32 %v3759, %v4020
      %v4273 = vsub.f32 %v3760, %v4023
      %v4274 = vsub.f32 %v3761, %v4026
      %v4275 = vsub.f32 %v3762, %v4029
      %v4276 = vsub.f32 %v3763, %v4032
      %v4277 = vsub.f32 %v3764, %v4035
      %v4278 = vsub.f32 %v3765, %v4038
      %v4279 = vsub.f32 %v3766, %v4041
      %v4280 = vsub.f32 %v3767, %v4044
      %v4281 = vsub.f32 %v3768, %v4047
      %v4282 = vsub.f32 %v3769, %v4050
      %v4283 = vsub.f32 %v3770, %v4053
      %v4284 = vsub.f32 %v3771, %v4056
      %v4285 = vsub.f32 %v3772, %v4059
      %v4286 = vsub.f32 %v3773, %v4062
      %v4287 = vsub.f32 %v3774, %v4065
      %v4288 = vsub.f32 %v3775, %v4068
      %v4289 = vsub.f32 %v3776, %v4071
      %v4290 = vsub.f32 %v3777, %v4074
      %v4291 = vsub.f32 %v3778, %v4077
      %v4292 = vsub.f32 %v3779, %v4080
      %v4293 = vsub.f32 %v3780, %v4083
      %v4294 = vsub.f32 %v3781, %v4086
      %v4295 = vsub.f32 %v3782, %v4089
      %v4296 = vsub.f32 %v3783, %v4092
      %v4297 = vsub.f32 %v3784, %v4095
      %v4298 = vsub.f32 %v3785, %v4098
      %v4299 = vsub.f32 %v3786, %v4101
      %v4300 = vsub.f32 %v3787, %v4104
      %v4301 = vsub.f32 %v3788, %v4107
      %v4302 = vsub.f32 %v3789, %v4110
      %v4303 = vsub.f32 %v3790, %v4113
      %v4304 = vsub.f32 %v3791, %v4116
      %v4305 = vsub.f32 %v3792, %v4119
      %v4306 = vsub.f32 %v3793, %v4122
      %v4307 = vsub.f32 %v3794, %v4125
      %v4308 = vsub.f32 %v3795, %v4128
      %v4309 = vsub.f32 %v3796, %v4131
      %v4310 = vsub.f32 %v3797, %v4134
      %v4311 = vsub.f32 %v3798, %v4137
      %v4312 = vsub.f32 %v3799, %v4140
      %v4313 = vsub.f32 %v3800, %v4143
      %v4314 = vsub.f32 %v3801, %v4146
      %v4315 = vsub.f32 %v3802, %v4149
      %v4316 = vsub.f32 %v3803, %v4152
      %v4317 = vsub.f32 %v3804, %v4155
      %v4318 = vsub.f32 %v3805, %v4158
      %v4319 = vsub.f32 %v3806, %v4161
      %v4320 = vsub.f32 %v3807, %v4164
      %v4321 = vsub.f32 %v3808, %v4167
      %v4322 = vsub.f32 %v3809, %v4170
      %v4323 = vsub.f32 %v3810, %v4173
      %v4324 = vsub.f32 %v3811, %v4176
      %v4325 = vsub.f32 %v3812, %v4179
      %v4326 = vsub.f32 %v3813, %v4182
      %v4327 = vsub.f32 %v3814, %v4185
      %v4328 = vsub.f32 %v3815, %v4188
      %v4329 = vsub.f32 %v3816, %v4191
      %v4330 = vsub.f32 %v3817, %v4194
      %v4331 = vsub.f32 %v3818, %v4197
      %v4332 = vsub.f32 %v3819, %v4200
      %v4333 = vsub.f32 %v3820, %v4203
      %v4334 = vsub.f32 %v3821, %v4206
      %v4335 = vmul.f32 %v4207, 1.442695
      %v4336 = vpow.pop %v4335
      %v4337 = vmul.f32 %v4208, 1.442695
      %v4338 = vpow.pop %v4337
      %v4339 = vmul.f32 %v4209, 1.442695
      %v4340 = vpow.pop %v4339
      %v4341 = vmul.f32 %v4210, 1.442695
      %v4342 = vpow.pop %v4341
      %v4343 = vmul.f32 %v4211, 1.442695
      %v4344 = vpow.pop %v4343
      %v4345 = vmul.f32 %v4212, 1.442695
      %v4346 = vpow.pop %v4345
      %v4347 = vmul.f32 %v4213, 1.442695
      %v4348 = vpow.pop %v4347
      %v4349 = vmul.f32 %v4214, 1.442695
      %v4350 = vpow.pop %v4349
      %v4351 = vmul.f32 %v4215, 1.442695
      %v4352 = vpow.pop %v4351
      %v4353 = vmul.f32 %v4216, 1.442695
      %v4354 = vpow.pop %v4353
      %v4355 = vmul.f32 %v4217, 1.442695
      %v4356 = vpow.pop %v4355
      %v4357 = vmul.f32 %v4218, 1.442695
      %v4358 = vpow.pop %v4357
      %v4359 = vmul.f32 %v4219, 1.442695
      %v4360 = vpow.pop %v4359
      %v4361 = vmul.f32 %v4220, 1.442695
      %v4362 = vpow.pop %v4361
      %v4363 = vmul.f32 %v4221, 1.442695
      %v4364 = vpow.pop %v4363
      %v4365 = vmul.f32 %v4222, 1.442695
      %v4366 = vpow.pop %v4365
      %v4367 = vmul.f32 %v4223, 1.442695
      %v4368 = vpow.pop %v4367
      %v4369 = vmul.f32 %v4224, 1.442695
      %v4370 = vpow.pop %v4369
      %v4371 = vmul.f32 %v4225, 1.442695
      %v4372 = vpow.pop %v4371
      %v4373 = vmul.f32 %v4226, 1.442695
      %v4374 = vpow.pop %v4373
      %v4375 = vmul.f32 %v4227, 1.442695
      %v4376 = vpow.pop %v4375
      %v4377 = vmul.f32 %v4228, 1.442695
      %v4378 = vpow.pop %v4377
      %v4379 = vmul.f32 %v4229, 1.442695
      %v4380 = vpow.pop %v4379
      %v4381 = vmul.f32 %v4230, 1.442695
      %v4382 = vpow.pop %v4381
      %v4383 = vmul.f32 %v4231, 1.442695
      %v4384 = vpow.pop %v4383
      %v4385 = vmul.f32 %v4232, 1.442695
      %v4386 = vpow.pop %v4385
      %v4387 = vmul.f32 %v4233, 1.442695
      %v4388 = vpow.pop %v4387
      %v4389 = vmul.f32 %v4234, 1.442695
      %v4390 = vpow.pop %v4389
      %v4391 = vmul.f32 %v4235, 1.442695
      %v4392 = vpow.pop %v4391
      %v4393 = vmul.f32 %v4236, 1.442695
      %v4394 = vpow.pop %v4393
      %v4395 = vmul.f32 %v4237, 1.442695
      %v4396 = vpow.pop %v4395
      %v4397 = vmul.f32 %v4238, 1.442695
      %v4398 = vpow.pop %v4397
      %v4399 = vmul.f32 %v4239, 1.442695
      %v4400 = vpow.pop %v4399
      %v4401 = vmul.f32 %v4240, 1.442695
      %v4402 = vpow.pop %v4401
      %v4403 = vmul.f32 %v4241, 1.442695
      %v4404 = vpow.pop %v4403
      %v4405 = vmul.f32 %v4242, 1.442695
      %v4406 = vpow.pop %v4405
      %v4407 = vmul.f32 %v4243, 1.442695
      %v4408 = vpow.pop %v4407
      %v4409 = vmul.f32 %v4244, 1.442695
      %v4410 = vpow.pop %v4409
      %v4411 = vmul.f32 %v4245, 1.442695
      %v4412 = vpow.pop %v4411
      %v4413 = vmul.f32 %v4246, 1.442695
      %v4414 = vpow.pop %v4413
      %v4415 = vmul.f32 %v4247, 1.442695
      %v4416 = vpow.pop %v4415
      %v4417 = vmul.f32 %v4248, 1.442695
      %v4418 = vpow.pop %v4417
      %v4419 = vmul.f32 %v4249, 1.442695
      %v4420 = vpow.pop %v4419
      %v4421 = vmul.f32 %v4250, 1.442695
      %v4422 = vpow.pop %v4421
      %v4423 = vmul.f32 %v4251, 1.442695
      %v4424 = vpow.pop %v4423
      %v4425 = vmul.f32 %v4252, 1.442695
      %v4426 = vpow.pop %v4425
      %v4427 = vmul.f32 %v4253, 1.442695
      %v4428 = vpow.pop %v4427
      %v4429 = vmul.f32 %v4254, 1.442695
      %v4430 = vpow.pop %v4429
      %v4431 = vmul.f32 %v4255, 1.442695
      %v4432 = vpow.pop %v4431
      %v4433 = vmul.f32 %v4256, 1.442695
      %v4434 = vpow.pop %v4433
      %v4435 = vmul.f32 %v4257, 1.442695
      %v4436 = vpow.pop %v4435
      %v4437 = vmul.f32 %v4258, 1.442695
      %v4438 = vpow.pop %v4437
      %v4439 = vmul.f32 %v4259, 1.442695
      %v4440 = vpow.pop %v4439
      %v4441 = vmul.f32 %v4260, 1.442695
      %v4442 = vpow.pop %v4441
      %v4443 = vmul.f32 %v4261, 1.442695
      %v4444 = vpow.pop %v4443
      %v4445 = vmul.f32 %v4262, 1.442695
      %v4446 = vpow.pop %v4445
      %v4447 = vmul.f32 %v4263, 1.442695
      %v4448 = vpow.pop %v4447
      %v4449 = vmul.f32 %v4264, 1.442695
      %v4450 = vpow.pop %v4449
      %v4451 = vmul.f32 %v4265, 1.442695
      %v4452 = vpow.pop %v4451
      %v4453 = vmul.f32 %v4266, 1.442695
      %v4454 = vpow.pop %v4453
      %v4455 = vmul.f32 %v4267, 1.442695
      %v4456 = vpow.pop %v4455
      %v4457 = vmul.f32 %v4268, 1.442695
      %v4458 = vpow.pop %v4457
      %v4459 = vmul.f32 %v4269, 1.442695
      %v4460 = vpow.pop %v4459
      %v4461 = vmul.f32 %v4270, 1.442695
      %v4462 = vpow.pop %v4461
      %v4463 = vmul.f32 %v4271, 1.442695
      %v4464 = vpow.pop %v4463
      %v4465 = vmul.f32 %v4272, 1.442695
      %v4466 = vpow.pop %v4465
      %v4467 = vmul.f32 %v4273, 1.442695
      %v4468 = vpow.pop %v4467
      %v4469 = vmul.f32 %v4274, 1.442695
      %v4470 = vpow.pop %v4469
      %v4471 = vmul.f32 %v4275, 1.442695
      %v4472 = vpow.pop %v4471
      %v4473 = vmul.f32 %v4276, 1.442695
      %v4474 = vpow.pop %v4473
      %v4475 = vmul.f32 %v4277, 1.442695
      %v4476 = vpow.pop %v4475
      %v4477 = vmul.f32 %v4278, 1.442695
      %v4478 = vpow.pop %v4477
      %v4479 = vmul.f32 %v4279, 1.442695
      %v4480 = vpow.pop %v4479
      %v4481 = vmul.f32 %v4280, 1.442695
      %v4482 = vpow.pop %v4481
      %v4483 = vmul.f32 %v4281, 1.442695
      %v4484 = vpow.pop %v4483
      %v4485 = vmul.f32 %v4282, 1.442695
      %v4486 = vpow.pop %v4485
      %v4487 = vmul.f32 %v4283, 1.442695
      %v4488 = vpow.pop %v4487
      %v4489 = vmul.f32 %v4284, 1.442695
      %v4490 = vpow.pop %v4489
      %v4491 = vmul.f32 %v4285, 1.442695
      %v4492 = vpow.pop %v4491
      %v4493 = vmul.f32 %v4286, 1.442695
      %v4494 = vpow.pop %v4493
      %v4495 = vmul.f32 %v4287, 1.442695
      %v4496 = vpow.pop %v4495
      %v4497 = vmul.f32 %v4288, 1.442695
      %v4498 = vpow.pop %v4497
      %v4499 = vmul.f32 %v4289, 1.442695
      %v4500 = vpow.pop %v4499
      %v4501 = vmul.f32 %v4290, 1.442695
      %v4502 = vpow.pop %v4501
      %v4503 = vmul.f32 %v4291, 1.442695
      %v4504 = vpow.pop %v4503
      %v4505 = vmul.f32 %v4292, 1.442695
      %v4506 = vpow.pop %v4505
      %v4507 = vmul.f32 %v4293, 1.442695
      %v4508 = vpow.pop %v4507
      %v4509 = vmul.f32 %v4294, 1.442695
      %v4510 = vpow.pop %v4509
      %v4511 = vmul.f32 %v4295, 1.442695
      %v4512 = vpow.pop %v4511
      %v4513 = vmul.f32 %v4296, 1.442695
      %v4514 = vpow.pop %v4513
      %v4515 = vmul.f32 %v4297, 1.442695
      %v4516 = vpow.pop %v4515
      %v4517 = vmul.f32 %v4298, 1.442695
      %v4518 = vpow.pop %v4517
      %v4519 = vmul.f32 %v4299, 1.442695
      %v4520 = vpow.pop %v4519
      %v4521 = vmul.f32 %v4300, 1.442695
      %v4522 = vpow.pop %v4521
      %v4523 = vmul.f32 %v4301, 1.442695
      %v4524 = vpow.pop %v4523
      %v4525 = vmul.f32 %v4302, 1.442695
      %v4526 = vpow.pop %v4525
      %v4527 = vmul.f32 %v4303, 1.442695
      %v4528 = vpow.pop %v4527
      %v4529 = vmul.f32 %v4304, 1.442695
      %v4530 = vpow.pop %v4529
      %v4531 = vmul.f32 %v4305, 1.442695
      %v4532 = vpow.pop %v4531
      %v4533 = vmul.f32 %v4306, 1.442695
      %v4534 = vpow.pop %v4533
      %v4535 = vmul.f32 %v4307, 1.442695
      %v4536 = vpow.pop %v4535
      %v4537 = vmul.f32 %v4308, 1.442695
      %v4538 = vpow.pop %v4537
      %v4539 = vmul.f32 %v4309, 1.442695
      %v4540 = vpow.pop %v4539
      %v4541 = vmul.f32 %v4310, 1.442695
      %v4542 = vpow.pop %v4541
      %v4543 = vmul.f32 %v4311, 1.442695
      %v4544 = vpow.pop %v4543
      %v4545 = vmul.f32 %v4312, 1.442695
      %v4546 = vpow.pop %v4545
      %v4547 = vmul.f32 %v4313, 1.442695
      %v4548 = vpow.pop %v4547
      %v4549 = vmul.f32 %v4314, 1.442695
      %v4550 = vpow.pop %v4549
      %v4551 = vmul.f32 %v4315, 1.442695
      %v4552 = vpow.pop %v4551
      %v4553 = vmul.f32 %v4316, 1.442695
      %v4554 = vpow.pop %v4553
      %v4555 = vmul.f32 %v4317, 1.442695
      %v4556 = vpow.pop %v4555
      %v4557 = vmul.f32 %v4318, 1.442695
      %v4558 = vpow.pop %v4557
      %v4559 = vmul.f32 %v4319, 1.442695
      %v4560 = vpow.pop %v4559
      %v4561 = vmul.f32 %v4320, 1.442695
      %v4562 = vpow.pop %v4561
      %v4563 = vmul.f32 %v4321, 1.442695
      %v4564 = vpow.pop %v4563
      %v4565 = vmul.f32 %v4322, 1.442695
      %v4566 = vpow.pop %v4565
      %v4567 = vmul.f32 %v4323, 1.442695
      %v4568 = vpow.pop %v4567
      %v4569 = vmul.f32 %v4324, 1.442695
      %v4570 = vpow.pop %v4569
      %v4571 = vmul.f32 %v4325, 1.442695
      %v4572 = vpow.pop %v4571
      %v4573 = vmul.f32 %v4326, 1.442695
      %v4574 = vpow.pop %v4573
      %v4575 = vmul.f32 %v4327, 1.442695
      %v4576 = vpow.pop %v4575
      %v4577 = vmul.f32 %v4328, 1.442695
      %v4578 = vpow.pop %v4577
      %v4579 = vmul.f32 %v4329, 1.442695
      %v4580 = vpow.pop %v4579
      %v4581 = vmul.f32 %v4330, 1.442695
      %v4582 = vpow.pop %v4581
      %v4583 = vmul.f32 %v4331, 1.442695
      %v4584 = vpow.pop %v4583
      %v4585 = vmul.f32 %v4332, 1.442695
      %v4586 = vpow.pop %v4585
      %v4587 = vmul.f32 %v4333, 1.442695
      %v4588 = vpow.pop %v4587
      %v4589 = vmul.f32 %v4334, 1.442695
      %v4590 = vpow.pop %v4589
      %v4591 = vsel %vm3822, %v4336, 0.0
      %4592 = vadd.xlane.f32.xlu0 %v4591
      %v4593 = vpop.xlane.xlu0 %4592
      %v4594 = vsel %vm3822, %v4338, 0.0
      %4595 = vadd.xlane.f32.xlu0 %v4594
      %v4596 = vpop.xlane.xlu0 %4595
      %v4597 = vsel %vm3822, %v4340, 0.0
      %4598 = vadd.xlane.f32.xlu0 %v4597
      %v4599 = vpop.xlane.xlu0 %4598
      %v4600 = vsel %vm3822, %v4342, 0.0
      %4601 = vadd.xlane.f32.xlu0 %v4600
      %v4602 = vpop.xlane.xlu0 %4601
      %v4603 = vsel %vm3822, %v4344, 0.0
      %4604 = vadd.xlane.f32.xlu0 %v4603
      %v4605 = vpop.xlane.xlu0 %4604
      %v4606 = vsel %vm3822, %v4346, 0.0
      %4607 = vadd.xlane.f32.xlu0 %v4606
      %v4608 = vpop.xlane.xlu0 %4607
      %v4609 = vsel %vm3822, %v4348, 0.0
      %4610 = vadd.xlane.f32.xlu0 %v4609
      %v4611 = vpop.xlane.xlu0 %4610
      %v4612 = vsel %vm3822, %v4350, 0.0
      %4613 = vadd.xlane.f32.xlu0 %v4612
      %v4614 = vpop.xlane.xlu0 %4613
      %v4615 = vsel %vm3822, %v4352, 0.0
      %4616 = vadd.xlane.f32.xlu0 %v4615
      %v4617 = vpop.xlane.xlu0 %4616
      %v4618 = vsel %vm3822, %v4354, 0.0
      %4619 = vadd.xlane.f32.xlu0 %v4618
      %v4620 = vpop.xlane.xlu0 %4619
      %v4621 = vsel %vm3822, %v4356, 0.0
      %4622 = vadd.xlane.f32.xlu0 %v4621
      %v4623 = vpop.xlane.xlu0 %4622
      %v4624 = vsel %vm3822, %v4358, 0.0
      %4625 = vadd.xlane.f32.xlu0 %v4624
      %v4626 = vpop.xlane.xlu0 %4625
      %v4627 = vsel %vm3822, %v4360, 0.0
      %4628 = vadd.xlane.f32.xlu0 %v4627
      %v4629 = vpop.xlane.xlu0 %4628
      %v4630 = vsel %vm3822, %v4362, 0.0
      %4631 = vadd.xlane.f32.xlu0 %v4630
      %v4632 = vpop.xlane.xlu0 %4631
      %v4633 = vsel %vm3822, %v4364, 0.0
      %4634 = vadd.xlane.f32.xlu0 %v4633
      %v4635 = vpop.xlane.xlu0 %4634
      %v4636 = vsel %vm3822, %v4366, 0.0
      %4637 = vadd.xlane.f32.xlu0 %v4636
      %v4638 = vpop.xlane.xlu0 %4637
      %v4639 = vsel %vm3822, %v4368, 0.0
      %4640 = vadd.xlane.f32.xlu0 %v4639
      %v4641 = vpop.xlane.xlu0 %4640
      %v4642 = vsel %vm3822, %v4370, 0.0
      %4643 = vadd.xlane.f32.xlu0 %v4642
      %v4644 = vpop.xlane.xlu0 %4643
      %v4645 = vsel %vm3822, %v4372, 0.0
      %4646 = vadd.xlane.f32.xlu0 %v4645
      %v4647 = vpop.xlane.xlu0 %4646
      %v4648 = vsel %vm3822, %v4374, 0.0
      %4649 = vadd.xlane.f32.xlu0 %v4648
      %v4650 = vpop.xlane.xlu0 %4649
      %v4651 = vsel %vm3822, %v4376, 0.0
      %4652 = vadd.xlane.f32.xlu0 %v4651
      %v4653 = vpop.xlane.xlu0 %4652
      %v4654 = vsel %vm3822, %v4378, 0.0
      %4655 = vadd.xlane.f32.xlu0 %v4654
      %v4656 = vpop.xlane.xlu0 %4655
      %v4657 = vsel %vm3822, %v4380, 0.0
      %4658 = vadd.xlane.f32.xlu0 %v4657
      %v4659 = vpop.xlane.xlu0 %4658
      %v4660 = vsel %vm3822, %v4382, 0.0
      %4661 = vadd.xlane.f32.xlu0 %v4660
      %v4662 = vpop.xlane.xlu0 %4661
      %v4663 = vsel %vm3822, %v4384, 0.0
      %4664 = vadd.xlane.f32.xlu0 %v4663
      %v4665 = vpop.xlane.xlu0 %4664
      %v4666 = vsel %vm3822, %v4386, 0.0
      %4667 = vadd.xlane.f32.xlu0 %v4666
      %v4668 = vpop.xlane.xlu0 %4667
      %v4669 = vsel %vm3822, %v4388, 0.0
      %4670 = vadd.xlane.f32.xlu0 %v4669
      %v4671 = vpop.xlane.xlu0 %4670
      %v4672 = vsel %vm3822, %v4390, 0.0
      %4673 = vadd.xlane.f32.xlu0 %v4672
      %v4674 = vpop.xlane.xlu0 %4673
      %v4675 = vsel %vm3822, %v4392, 0.0
      %4676 = vadd.xlane.f32.xlu0 %v4675
      %v4677 = vpop.xlane.xlu0 %4676
      %v4678 = vsel %vm3822, %v4394, 0.0
      %4679 = vadd.xlane.f32.xlu0 %v4678
      %v4680 = vpop.xlane.xlu0 %4679
      %v4681 = vsel %vm3822, %v4396, 0.0
      %4682 = vadd.xlane.f32.xlu0 %v4681
      %v4683 = vpop.xlane.xlu0 %4682
      %v4684 = vsel %vm3822, %v4398, 0.0
      %4685 = vadd.xlane.f32.xlu0 %v4684
      %v4686 = vpop.xlane.xlu0 %4685
      %v4687 = vsel %vm3822, %v4400, 0.0
      %4688 = vadd.xlane.f32.xlu0 %v4687
      %v4689 = vpop.xlane.xlu0 %4688
      %v4690 = vsel %vm3822, %v4402, 0.0
      %4691 = vadd.xlane.f32.xlu0 %v4690
      %v4692 = vpop.xlane.xlu0 %4691
      %v4693 = vsel %vm3822, %v4404, 0.0
      %4694 = vadd.xlane.f32.xlu0 %v4693
      %v4695 = vpop.xlane.xlu0 %4694
      %v4696 = vsel %vm3822, %v4406, 0.0
      %4697 = vadd.xlane.f32.xlu0 %v4696
      %v4698 = vpop.xlane.xlu0 %4697
      %v4699 = vsel %vm3822, %v4408, 0.0
      %4700 = vadd.xlane.f32.xlu0 %v4699
      %v4701 = vpop.xlane.xlu0 %4700
      %v4702 = vsel %vm3822, %v4410, 0.0
      %4703 = vadd.xlane.f32.xlu0 %v4702
      %v4704 = vpop.xlane.xlu0 %4703
      %v4705 = vsel %vm3822, %v4412, 0.0
      %4706 = vadd.xlane.f32.xlu0 %v4705
      %v4707 = vpop.xlane.xlu0 %4706
      %v4708 = vsel %vm3822, %v4414, 0.0
      %4709 = vadd.xlane.f32.xlu0 %v4708
      %v4710 = vpop.xlane.xlu0 %4709
      %v4711 = vsel %vm3822, %v4416, 0.0
      %4712 = vadd.xlane.f32.xlu0 %v4711
      %v4713 = vpop.xlane.xlu0 %4712
      %v4714 = vsel %vm3822, %v4418, 0.0
      %4715 = vadd.xlane.f32.xlu0 %v4714
      %v4716 = vpop.xlane.xlu0 %4715
      %v4717 = vsel %vm3822, %v4420, 0.0
      %4718 = vadd.xlane.f32.xlu0 %v4717
      %v4719 = vpop.xlane.xlu0 %4718
      %v4720 = vsel %vm3822, %v4422, 0.0
      %4721 = vadd.xlane.f32.xlu0 %v4720
      %v4722 = vpop.xlane.xlu0 %4721
      %v4723 = vsel %vm3822, %v4424, 0.0
      %4724 = vadd.xlane.f32.xlu0 %v4723
      %v4725 = vpop.xlane.xlu0 %4724
      %v4726 = vsel %vm3822, %v4426, 0.0
      %4727 = vadd.xlane.f32.xlu0 %v4726
      %v4728 = vpop.xlane.xlu0 %4727
      %v4729 = vsel %vm3822, %v4428, 0.0
      %4730 = vadd.xlane.f32.xlu0 %v4729
      %v4731 = vpop.xlane.xlu0 %4730
      %v4732 = vsel %vm3822, %v4430, 0.0
      %4733 = vadd.xlane.f32.xlu0 %v4732
      %v4734 = vpop.xlane.xlu0 %4733
      %v4735 = vsel %vm3822, %v4432, 0.0
      %4736 = vadd.xlane.f32.xlu0 %v4735
      %v4737 = vpop.xlane.xlu0 %4736
      %v4738 = vsel %vm3822, %v4434, 0.0
      %4739 = vadd.xlane.f32.xlu0 %v4738
      %v4740 = vpop.xlane.xlu0 %4739
      %v4741 = vsel %vm3822, %v4436, 0.0
      %4742 = vadd.xlane.f32.xlu0 %v4741
      %v4743 = vpop.xlane.xlu0 %4742
      %v4744 = vsel %vm3822, %v4438, 0.0
      %4745 = vadd.xlane.f32.xlu0 %v4744
      %v4746 = vpop.xlane.xlu0 %4745
      %v4747 = vsel %vm3822, %v4440, 0.0
      %4748 = vadd.xlane.f32.xlu0 %v4747
      %v4749 = vpop.xlane.xlu0 %4748
      %v4750 = vsel %vm3822, %v4442, 0.0
      %4751 = vadd.xlane.f32.xlu0 %v4750
      %v4752 = vpop.xlane.xlu0 %4751
      %v4753 = vsel %vm3822, %v4444, 0.0
      %4754 = vadd.xlane.f32.xlu0 %v4753
      %v4755 = vpop.xlane.xlu0 %4754
      %v4756 = vsel %vm3822, %v4446, 0.0
      %4757 = vadd.xlane.f32.xlu0 %v4756
      %v4758 = vpop.xlane.xlu0 %4757
      %v4759 = vsel %vm3822, %v4448, 0.0
      %4760 = vadd.xlane.f32.xlu0 %v4759
      %v4761 = vpop.xlane.xlu0 %4760
      %v4762 = vsel %vm3822, %v4450, 0.0
      %4763 = vadd.xlane.f32.xlu0 %v4762
      %v4764 = vpop.xlane.xlu0 %4763
      %v4765 = vsel %vm3822, %v4452, 0.0
      %4766 = vadd.xlane.f32.xlu0 %v4765
      %v4767 = vpop.xlane.xlu0 %4766
      %v4768 = vsel %vm3822, %v4454, 0.0
      %4769 = vadd.xlane.f32.xlu0 %v4768
      %v4770 = vpop.xlane.xlu0 %4769
      %v4771 = vsel %vm3822, %v4456, 0.0
      %4772 = vadd.xlane.f32.xlu0 %v4771
      %v4773 = vpop.xlane.xlu0 %4772
      %v4774 = vsel %vm3822, %v4458, 0.0
      %4775 = vadd.xlane.f32.xlu0 %v4774
      %v4776 = vpop.xlane.xlu0 %4775
      %v4777 = vsel %vm3822, %v4460, 0.0
      %4778 = vadd.xlane.f32.xlu0 %v4777
      %v4779 = vpop.xlane.xlu0 %4778
      %v4780 = vsel %vm3822, %v4462, 0.0
      %4781 = vadd.xlane.f32.xlu0 %v4780
      %v4782 = vpop.xlane.xlu0 %4781
      %v4783 = vsel %vm3822, %v4464, 0.0
      %4784 = vadd.xlane.f32.xlu0 %v4783
      %v4785 = vpop.xlane.xlu0 %4784
      %v4786 = vsel %vm3822, %v4466, 0.0
      %4787 = vadd.xlane.f32.xlu0 %v4786
      %v4788 = vpop.xlane.xlu0 %4787
      %v4789 = vsel %vm3822, %v4468, 0.0
      %4790 = vadd.xlane.f32.xlu0 %v4789
      %v4791 = vpop.xlane.xlu0 %4790
      %v4792 = vsel %vm3822, %v4470, 0.0
      %4793 = vadd.xlane.f32.xlu0 %v4792
      %v4794 = vpop.xlane.xlu0 %4793
      %v4795 = vsel %vm3822, %v4472, 0.0
      %4796 = vadd.xlane.f32.xlu0 %v4795
      %v4797 = vpop.xlane.xlu0 %4796
      %v4798 = vsel %vm3822, %v4474, 0.0
      %4799 = vadd.xlane.f32.xlu0 %v4798
      %v4800 = vpop.xlane.xlu0 %4799
      %v4801 = vsel %vm3822, %v4476, 0.0
      %4802 = vadd.xlane.f32.xlu0 %v4801
      %v4803 = vpop.xlane.xlu0 %4802
      %v4804 = vsel %vm3822, %v4478, 0.0
      %4805 = vadd.xlane.f32.xlu0 %v4804
      %v4806 = vpop.xlane.xlu0 %4805
      %v4807 = vsel %vm3822, %v4480, 0.0
      %4808 = vadd.xlane.f32.xlu0 %v4807
      %v4809 = vpop.xlane.xlu0 %4808
      %v4810 = vsel %vm3822, %v4482, 0.0
      %4811 = vadd.xlane.f32.xlu0 %v4810
      %v4812 = vpop.xlane.xlu0 %4811
      %v4813 = vsel %vm3822, %v4484, 0.0
      %4814 = vadd.xlane.f32.xlu0 %v4813
      %v4815 = vpop.xlane.xlu0 %4814
      %v4816 = vsel %vm3822, %v4486, 0.0
      %4817 = vadd.xlane.f32.xlu0 %v4816
      %v4818 = vpop.xlane.xlu0 %4817
      %v4819 = vsel %vm3822, %v4488, 0.0
      %4820 = vadd.xlane.f32.xlu0 %v4819
      %v4821 = vpop.xlane.xlu0 %4820
      %v4822 = vsel %vm3822, %v4490, 0.0
      %4823 = vadd.xlane.f32.xlu0 %v4822
      %v4824 = vpop.xlane.xlu0 %4823
      %v4825 = vsel %vm3822, %v4492, 0.0
      %4826 = vadd.xlane.f32.xlu0 %v4825
      %v4827 = vpop.xlane.xlu0 %4826
      %v4828 = vsel %vm3822, %v4494, 0.0
      %4829 = vadd.xlane.f32.xlu0 %v4828
      %v4830 = vpop.xlane.xlu0 %4829
      %v4831 = vsel %vm3822, %v4496, 0.0
      %4832 = vadd.xlane.f32.xlu0 %v4831
      %v4833 = vpop.xlane.xlu0 %4832
      %v4834 = vsel %vm3822, %v4498, 0.0
      %4835 = vadd.xlane.f32.xlu0 %v4834
      %v4836 = vpop.xlane.xlu0 %4835
      %v4837 = vsel %vm3822, %v4500, 0.0
      %4838 = vadd.xlane.f32.xlu0 %v4837
      %v4839 = vpop.xlane.xlu0 %4838
      %v4840 = vsel %vm3822, %v4502, 0.0
      %4841 = vadd.xlane.f32.xlu0 %v4840
      %v4842 = vpop.xlane.xlu0 %4841
      %v4843 = vsel %vm3822, %v4504, 0.0
      %4844 = vadd.xlane.f32.xlu0 %v4843
      %v4845 = vpop.xlane.xlu0 %4844
      %v4846 = vsel %vm3822, %v4506, 0.0
      %4847 = vadd.xlane.f32.xlu0 %v4846
      %v4848 = vpop.xlane.xlu0 %4847
      %v4849 = vsel %vm3822, %v4508, 0.0
      %4850 = vadd.xlane.f32.xlu0 %v4849
      %v4851 = vpop.xlane.xlu0 %4850
      %v4852 = vsel %vm3822, %v4510, 0.0
      %4853 = vadd.xlane.f32.xlu0 %v4852
      %v4854 = vpop.xlane.xlu0 %4853
      %v4855 = vsel %vm3822, %v4512, 0.0
      %4856 = vadd.xlane.f32.xlu0 %v4855
      %v4857 = vpop.xlane.xlu0 %4856
      %v4858 = vsel %vm3822, %v4514, 0.0
      %4859 = vadd.xlane.f32.xlu0 %v4858
      %v4860 = vpop.xlane.xlu0 %4859
      %v4861 = vsel %vm3822, %v4516, 0.0
      %4862 = vadd.xlane.f32.xlu0 %v4861
      %v4863 = vpop.xlane.xlu0 %4862
      %v4864 = vsel %vm3822, %v4518, 0.0
      %4865 = vadd.xlane.f32.xlu0 %v4864
      %v4866 = vpop.xlane.xlu0 %4865
      %v4867 = vsel %vm3822, %v4520, 0.0
      %4868 = vadd.xlane.f32.xlu0 %v4867
      %v4869 = vpop.xlane.xlu0 %4868
      %v4870 = vsel %vm3822, %v4522, 0.0
      %4871 = vadd.xlane.f32.xlu0 %v4870
      %v4872 = vpop.xlane.xlu0 %4871
      %v4873 = vsel %vm3822, %v4524, 0.0
      %4874 = vadd.xlane.f32.xlu0 %v4873
      %v4875 = vpop.xlane.xlu0 %4874
      %v4876 = vsel %vm3822, %v4526, 0.0
      %4877 = vadd.xlane.f32.xlu0 %v4876
      %v4878 = vpop.xlane.xlu0 %4877
      %v4879 = vsel %vm3822, %v4528, 0.0
      %4880 = vadd.xlane.f32.xlu0 %v4879
      %v4881 = vpop.xlane.xlu0 %4880
      %v4882 = vsel %vm3822, %v4530, 0.0
      %4883 = vadd.xlane.f32.xlu0 %v4882
      %v4884 = vpop.xlane.xlu0 %4883
      %v4885 = vsel %vm3822, %v4532, 0.0
      %4886 = vadd.xlane.f32.xlu0 %v4885
      %v4887 = vpop.xlane.xlu0 %4886
      %v4888 = vsel %vm3822, %v4534, 0.0
      %4889 = vadd.xlane.f32.xlu0 %v4888
      %v4890 = vpop.xlane.xlu0 %4889
      %v4891 = vsel %vm3822, %v4536, 0.0
      %4892 = vadd.xlane.f32.xlu0 %v4891
      %v4893 = vpop.xlane.xlu0 %4892
      %v4894 = vsel %vm3822, %v4538, 0.0
      %4895 = vadd.xlane.f32.xlu0 %v4894
      %v4896 = vpop.xlane.xlu0 %4895
      %v4897 = vsel %vm3822, %v4540, 0.0
      %4898 = vadd.xlane.f32.xlu0 %v4897
      %v4899 = vpop.xlane.xlu0 %4898
      %v4900 = vsel %vm3822, %v4542, 0.0
      %4901 = vadd.xlane.f32.xlu0 %v4900
      %v4902 = vpop.xlane.xlu0 %4901
      %v4903 = vsel %vm3822, %v4544, 0.0
      %4904 = vadd.xlane.f32.xlu0 %v4903
      %v4905 = vpop.xlane.xlu0 %4904
      %v4906 = vsel %vm3822, %v4546, 0.0
      %4907 = vadd.xlane.f32.xlu0 %v4906
      %v4908 = vpop.xlane.xlu0 %4907
      %v4909 = vsel %vm3822, %v4548, 0.0
      %4910 = vadd.xlane.f32.xlu0 %v4909
      %v4911 = vpop.xlane.xlu0 %4910
      %v4912 = vsel %vm3822, %v4550, 0.0
      %4913 = vadd.xlane.f32.xlu0 %v4912
      %v4914 = vpop.xlane.xlu0 %4913
      %v4915 = vsel %vm3822, %v4552, 0.0
      %4916 = vadd.xlane.f32.xlu0 %v4915
      %v4917 = vpop.xlane.xlu0 %4916
      %v4918 = vsel %vm3822, %v4554, 0.0
      %4919 = vadd.xlane.f32.xlu0 %v4918
      %v4920 = vpop.xlane.xlu0 %4919
      %v4921 = vsel %vm3822, %v4556, 0.0
      %4922 = vadd.xlane.f32.xlu0 %v4921
      %v4923 = vpop.xlane.xlu0 %4922
      %v4924 = vsel %vm3822, %v4558, 0.0
      %4925 = vadd.xlane.f32.xlu0 %v4924
      %v4926 = vpop.xlane.xlu0 %4925
      %v4927 = vsel %vm3822, %v4560, 0.0
      %4928 = vadd.xlane.f32.xlu0 %v4927
      %v4929 = vpop.xlane.xlu0 %4928
      %v4930 = vsel %vm3822, %v4562, 0.0
      %4931 = vadd.xlane.f32.xlu0 %v4930
      %v4932 = vpop.xlane.xlu0 %4931
      %v4933 = vsel %vm3822, %v4564, 0.0
      %4934 = vadd.xlane.f32.xlu0 %v4933
      %v4935 = vpop.xlane.xlu0 %4934
      %v4936 = vsel %vm3822, %v4566, 0.0
      %4937 = vadd.xlane.f32.xlu0 %v4936
      %v4938 = vpop.xlane.xlu0 %4937
      %v4939 = vsel %vm3822, %v4568, 0.0
      %4940 = vadd.xlane.f32.xlu0 %v4939
      %v4941 = vpop.xlane.xlu0 %4940
      %v4942 = vsel %vm3822, %v4570, 0.0
      %4943 = vadd.xlane.f32.xlu0 %v4942
      %v4944 = vpop.xlane.xlu0 %4943
      %v4945 = vsel %vm3822, %v4572, 0.0
      %4946 = vadd.xlane.f32.xlu0 %v4945
      %v4947 = vpop.xlane.xlu0 %4946
      %v4948 = vsel %vm3822, %v4574, 0.0
      %4949 = vadd.xlane.f32.xlu0 %v4948
      %v4950 = vpop.xlane.xlu0 %4949
      %v4951 = vsel %vm3822, %v4576, 0.0
      %4952 = vadd.xlane.f32.xlu0 %v4951
      %v4953 = vpop.xlane.xlu0 %4952
      %v4954 = vsel %vm3822, %v4578, 0.0
      %4955 = vadd.xlane.f32.xlu0 %v4954
      %v4956 = vpop.xlane.xlu0 %4955
      %v4957 = vsel %vm3822, %v4580, 0.0
      %4958 = vadd.xlane.f32.xlu0 %v4957
      %v4959 = vpop.xlane.xlu0 %4958
      %v4960 = vsel %vm3822, %v4582, 0.0
      %4961 = vadd.xlane.f32.xlu0 %v4960
      %v4962 = vpop.xlane.xlu0 %4961
      %v4963 = vsel %vm3822, %v4584, 0.0
      %4964 = vadd.xlane.f32.xlu0 %v4963
      %v4965 = vpop.xlane.xlu0 %4964
      %v4966 = vsel %vm3822, %v4586, 0.0
      %4967 = vadd.xlane.f32.xlu0 %v4966
      %v4968 = vpop.xlane.xlu0 %4967
      %v4969 = vsel %vm3822, %v4588, 0.0
      %4970 = vadd.xlane.f32.xlu0 %v4969
      %v4971 = vpop.xlane.xlu0 %4970
      %v4972 = vsel %vm3822, %v4590, 0.0
      %4973 = vadd.xlane.f32.xlu0 %v4972
      %v4974 = vpop.xlane.xlu0 %4973
      %v4975 = vrcp.pop %v4593
      %v4976 = vrcp.pop %v4596
      %v4977 = vrcp.pop %v4599
      %v4978 = vrcp.pop %v4602
      %v4979 = vrcp.pop %v4605
      %v4980 = vrcp.pop %v4608
      %v4981 = vrcp.pop %v4611
      %v4982 = vrcp.pop %v4614
      %v4983 = vrcp.pop %v4617
      %v4984 = vrcp.pop %v4620
      %v4985 = vrcp.pop %v4623
      %v4986 = vrcp.pop %v4626
      %v4987 = vrcp.pop %v4629
      %v4988 = vrcp.pop %v4632
      %v4989 = vrcp.pop %v4635
      %v4990 = vrcp.pop %v4638
      %v4991 = vrcp.pop %v4641
      %v4992 = vrcp.pop %v4644
      %v4993 = vrcp.pop %v4647
      %v4994 = vrcp.pop %v4650
      %v4995 = vrcp.pop %v4653
      %v4996 = vrcp.pop %v4656
      %v4997 = vrcp.pop %v4659
      %v4998 = vrcp.pop %v4662
      %v4999 = vrcp.pop %v4665
      %v5000 = vrcp.pop %v4668
      %v5001 = vrcp.pop %v4671
      %v5002 = vrcp.pop %v4674
      %v5003 = vrcp.pop %v4677
      %v5004 = vrcp.pop %v4680
      %v5005 = vrcp.pop %v4683
      %v5006 = vrcp.pop %v4686
      %v5007 = vrcp.pop %v4689
      %v5008 = vrcp.pop %v4692
      %v5009 = vrcp.pop %v4695
      %v5010 = vrcp.pop %v4698
      %v5011 = vrcp.pop %v4701
      %v5012 = vrcp.pop %v4704
      %v5013 = vrcp.pop %v4707
      %v5014 = vrcp.pop %v4710
      %v5015 = vrcp.pop %v4713
      %v5016 = vrcp.pop %v4716
      %v5017 = vrcp.pop %v4719
      %v5018 = vrcp.pop %v4722
      %v5019 = vrcp.pop %v4725
      %v5020 = vrcp.pop %v4728
      %v5021 = vrcp.pop %v4731
      %v5022 = vrcp.pop %v4734
      %v5023 = vrcp.pop %v4737
      %v5024 = vrcp.pop %v4740
      %v5025 = vrcp.pop %v4743
      %v5026 = vrcp.pop %v4746
      %v5027 = vrcp.pop %v4749
      %v5028 = vrcp.pop %v4752
      %v5029 = vrcp.pop %v4755
      %v5030 = vrcp.pop %v4758
      %v5031 = vrcp.pop %v4761
      %v5032 = vrcp.pop %v4764
      %v5033 = vrcp.pop %v4767
      %v5034 = vrcp.pop %v4770
      %v5035 = vrcp.pop %v4773
      %v5036 = vrcp.pop %v4776
      %v5037 = vrcp.pop %v4779
      %v5038 = vrcp.pop %v4782
      %v5039 = vrcp.pop %v4785
      %v5040 = vrcp.pop %v4788
      %v5041 = vrcp.pop %v4791
      %v5042 = vrcp.pop %v4794
      %v5043 = vrcp.pop %v4797
      %v5044 = vrcp.pop %v4800
      %v5045 = vrcp.pop %v4803
      %v5046 = vrcp.pop %v4806
      %v5047 = vrcp.pop %v4809
      %v5048 = vrcp.pop %v4812
      %v5049 = vrcp.pop %v4815
      %v5050 = vrcp.pop %v4818
      %v5051 = vrcp.pop %v4821
      %v5052 = vrcp.pop %v4824
      %v5053 = vrcp.pop %v4827
      %v5054 = vrcp.pop %v4830
      %v5055 = vrcp.pop %v4833
      %v5056 = vrcp.pop %v4836
      %v5057 = vrcp.pop %v4839
      %v5058 = vrcp.pop %v4842
      %v5059 = vrcp.pop %v4845
      %v5060 = vrcp.pop %v4848
      %v5061 = vrcp.pop %v4851
      %v5062 = vrcp.pop %v4854
      %v5063 = vrcp.pop %v4857
      %v5064 = vrcp.pop %v4860
      %v5065 = vrcp.pop %v4863
      %v5066 = vrcp.pop %v4866
      %v5067 = vrcp.pop %v4869
      %v5068 = vrcp.pop %v4872
      %v5069 = vrcp.pop %v4875
      %v5070 = vrcp.pop %v4878
      %v5071 = vrcp.pop %v4881
      %v5072 = vrcp.pop %v4884
      %v5073 = vrcp.pop %v4887
      %v5074 = vrcp.pop %v4890
      %v5075 = vrcp.pop %v4893
      %v5076 = vrcp.pop %v4896
      %v5077 = vrcp.pop %v4899
      %v5078 = vrcp.pop %v4902
      %v5079 = vrcp.pop %v4905
      %v5080 = vrcp.pop %v4908
      %v5081 = vrcp.pop %v4911
      %v5082 = vrcp.pop %v4914
      %v5083 = vrcp.pop %v4917
      %v5084 = vrcp.pop %v4920
      %v5085 = vrcp.pop %v4923
      %v5086 = vrcp.pop %v4926
      %v5087 = vrcp.pop %v4929
      %v5088 = vrcp.pop %v4932
      %v5089 = vrcp.pop %v4935
      %v5090 = vrcp.pop %v4938
      %v5091 = vrcp.pop %v4941
      %v5092 = vrcp.pop %v4944
      %v5093 = vrcp.pop %v4947
      %v5094 = vrcp.pop %v4950
      %v5095 = vrcp.pop %v4953
      %v5096 = vrcp.pop %v4956
      %v5097 = vrcp.pop %v4959
      %v5098 = vrcp.pop %v4962
      %v5099 = vrcp.pop %v4965
      %v5100 = vrcp.pop %v4968
      %v5101 = vrcp.pop %v4971
      %v5102 = vrcp.pop %v4974
      %v5103 = vmul.f32 %v4336, %v4975
      %v5104 = vmul.f32 %v4338, %v4976
      %v5105 = vmul.f32 %v4340, %v4977
      %v5106 = vmul.f32 %v4342, %v4978
      %v5107 = vmul.f32 %v4344, %v4979
      %v5108 = vmul.f32 %v4346, %v4980
      %v5109 = vmul.f32 %v4348, %v4981
      %v5110 = vmul.f32 %v4350, %v4982
      %v5111 = vmul.f32 %v4352, %v4983
      %v5112 = vmul.f32 %v4354, %v4984
      %v5113 = vmul.f32 %v4356, %v4985
      %v5114 = vmul.f32 %v4358, %v4986
      %v5115 = vmul.f32 %v4360, %v4987
      %v5116 = vmul.f32 %v4362, %v4988
      %v5117 = vmul.f32 %v4364, %v4989
      %v5118 = vmul.f32 %v4366, %v4990
      %v5119 = vmul.f32 %v4368, %v4991
      %v5120 = vmul.f32 %v4370, %v4992
      %v5121 = vmul.f32 %v4372, %v4993
      %v5122 = vmul.f32 %v4374, %v4994
      %v5123 = vmul.f32 %v4376, %v4995
      %v5124 = vmul.f32 %v4378, %v4996
      %v5125 = vmul.f32 %v4380, %v4997
      %v5126 = vmul.f32 %v4382, %v4998
      %v5127 = vmul.f32 %v4384, %v4999
      %v5128 = vmul.f32 %v4386, %v5000
      %v5129 = vmul.f32 %v4388, %v5001
      %v5130 = vmul.f32 %v4390, %v5002
      %v5131 = vmul.f32 %v4392, %v5003
      %v5132 = vmul.f32 %v4394, %v5004
      %v5133 = vmul.f32 %v4396, %v5005
      %v5134 = vmul.f32 %v4398, %v5006
      %v5135 = vmul.f32 %v4400, %v5007
      %v5136 = vmul.f32 %v4402, %v5008
      %v5137 = vmul.f32 %v4404, %v5009
      %v5138 = vmul.f32 %v4406, %v5010
      %v5139 = vmul.f32 %v4408, %v5011
      %v5140 = vmul.f32 %v4410, %v5012
      %v5141 = vmul.f32 %v4412, %v5013
      %v5142 = vmul.f32 %v4414, %v5014
      %v5143 = vmul.f32 %v4416, %v5015
      %v5144 = vmul.f32 %v4418, %v5016
      %v5145 = vmul.f32 %v4420, %v5017
      %v5146 = vmul.f32 %v4422, %v5018
      %v5147 = vmul.f32 %v4424, %v5019
      %v5148 = vmul.f32 %v4426, %v5020
      %v5149 = vmul.f32 %v4428, %v5021
      %v5150 = vmul.f32 %v4430, %v5022
      %v5151 = vmul.f32 %v4432, %v5023
      %v5152 = vmul.f32 %v4434, %v5024
      %v5153 = vmul.f32 %v4436, %v5025
      %v5154 = vmul.f32 %v4438, %v5026
      %v5155 = vmul.f32 %v4440, %v5027
      %v5156 = vmul.f32 %v4442, %v5028
      %v5157 = vmul.f32 %v4444, %v5029
      %v5158 = vmul.f32 %v4446, %v5030
      %v5159 = vmul.f32 %v4448, %v5031
      %v5160 = vmul.f32 %v4450, %v5032
      %v5161 = vmul.f32 %v4452, %v5033
      %v5162 = vmul.f32 %v4454, %v5034
      %v5163 = vmul.f32 %v4456, %v5035
      %v5164 = vmul.f32 %v4458, %v5036
      %v5165 = vmul.f32 %v4460, %v5037
      %v5166 = vmul.f32 %v4462, %v5038
      %v5167 = vmul.f32 %v4464, %v5039
      %v5168 = vmul.f32 %v4466, %v5040
      %v5169 = vmul.f32 %v4468, %v5041
      %v5170 = vmul.f32 %v4470, %v5042
      %v5171 = vmul.f32 %v4472, %v5043
      %v5172 = vmul.f32 %v4474, %v5044
      %v5173 = vmul.f32 %v4476, %v5045
      %v5174 = vmul.f32 %v4478, %v5046
      %v5175 = vmul.f32 %v4480, %v5047
      %v5176 = vmul.f32 %v4482, %v5048
      %v5177 = vmul.f32 %v4484, %v5049
      %v5178 = vmul.f32 %v4486, %v5050
      %v5179 = vmul.f32 %v4488, %v5051
      %v5180 = vmul.f32 %v4490, %v5052
      %v5181 = vmul.f32 %v4492, %v5053
      %v5182 = vmul.f32 %v4494, %v5054
      %v5183 = vmul.f32 %v4496, %v5055
      %v5184 = vmul.f32 %v4498, %v5056
      %v5185 = vmul.f32 %v4500, %v5057
      %v5186 = vmul.f32 %v4502, %v5058
      %v5187 = vmul.f32 %v4504, %v5059
      %v5188 = vmul.f32 %v4506, %v5060
      %v5189 = vmul.f32 %v4508, %v5061
      %v5190 = vmul.f32 %v4510, %v5062
      %v5191 = vmul.f32 %v4512, %v5063
      %v5192 = vmul.f32 %v4514, %v5064
      %v5193 = vmul.f32 %v4516, %v5065
      %v5194 = vmul.f32 %v4518, %v5066
      %v5195 = vmul.f32 %v4520, %v5067
      %v5196 = vmul.f32 %v4522, %v5068
      %v5197 = vmul.f32 %v4524, %v5069
      %v5198 = vmul.f32 %v4526, %v5070
      %v5199 = vmul.f32 %v4528, %v5071
      %v5200 = vmul.f32 %v4530, %v5072
      %v5201 = vmul.f32 %v4532, %v5073
      %v5202 = vmul.f32 %v4534, %v5074
      %v5203 = vmul.f32 %v4536, %v5075
      %v5204 = vmul.f32 %v4538, %v5076
      %v5205 = vmul.f32 %v4540, %v5077
      %v5206 = vmul.f32 %v4542, %v5078
      %v5207 = vmul.f32 %v4544, %v5079
      %v5208 = vmul.f32 %v4546, %v5080
      %v5209 = vmul.f32 %v4548, %v5081
      %v5210 = vmul.f32 %v4550, %v5082
      %v5211 = vmul.f32 %v4552, %v5083
      %v5212 = vmul.f32 %v4554, %v5084
      %v5213 = vmul.f32 %v4556, %v5085
      %v5214 = vmul.f32 %v4558, %v5086
      %v5215 = vmul.f32 %v4560, %v5087
      %v5216 = vmul.f32 %v4562, %v5088
      %v5217 = vmul.f32 %v4564, %v5089
      %v5218 = vmul.f32 %v4566, %v5090
      %v5219 = vmul.f32 %v4568, %v5091
      %v5220 = vmul.f32 %v4570, %v5092
      %v5221 = vmul.f32 %v4572, %v5093
      %v5222 = vmul.f32 %v4574, %v5094
      %v5223 = vmul.f32 %v4576, %v5095
      %v5224 = vmul.f32 %v4578, %v5096
      %v5225 = vmul.f32 %v4580, %v5097
      %v5226 = vmul.f32 %v4582, %v5098
      %v5227 = vmul.f32 %v4584, %v5099
      %v5228 = vmul.f32 %v4586, %v5100
      %v5229 = vmul.f32 %v4588, %v5101
      %v5230 = vmul.f32 %v4590, %v5102
      %5232 = vset.pattern.permute.xlu0 0
      %5233 = vperm.xlu0 %5232, %v5103
      %v5234 = vpop.permute.xlu0 %5233
      %5237 = vset.pattern.permute.xlu0 0
      %5238 = vperm.xlu0 %5237, %v5104
      %v5239 = vpop.permute.xlu0 %5238
      %5242 = vset.pattern.permute.xlu0 0
      %5243 = vperm.xlu0 %5242, %v5105
      %v5244 = vpop.permute.xlu0 %5243
      %5247 = vset.pattern.permute.xlu0 0
      %5248 = vperm.xlu0 %5247, %v5106
      %v5249 = vpop.permute.xlu0 %5248
      %5252 = vset.pattern.permute.xlu0 0
      %5253 = vperm.xlu0 %5252, %v5107
      %v5254 = vpop.permute.xlu0 %5253
      %5257 = vset.pattern.permute.xlu0 0
      %5258 = vperm.xlu0 %5257, %v5108
      %v5259 = vpop.permute.xlu0 %5258
      %5262 = vset.pattern.permute.xlu0 0
      %5263 = vperm.xlu0 %5262, %v5109
      %v5264 = vpop.permute.xlu0 %5263
      %5267 = vset.pattern.permute.xlu0 0
      %5268 = vperm.xlu0 %5267, %v5110
      %v5269 = vpop.permute.xlu0 %5268
      %5272 = vset.pattern.permute.xlu0 0
      %5273 = vperm.xlu0 %5272, %v5111
      %v5274 = vpop.permute.xlu0 %5273
      %5277 = vset.pattern.permute.xlu0 0
      %5278 = vperm.xlu0 %5277, %v5112
      %v5279 = vpop.permute.xlu0 %5278
      %5282 = vset.pattern.permute.xlu0 0
      %5283 = vperm.xlu0 %5282, %v5113
      %v5284 = vpop.permute.xlu0 %5283
      %5287 = vset.pattern.permute.xlu0 0
      %5288 = vperm.xlu0 %5287, %v5114
      %v5289 = vpop.permute.xlu0 %5288
      %5292 = vset.pattern.permute.xlu0 0
      %5293 = vperm.xlu0 %5292, %v5115
      %v5294 = vpop.permute.xlu0 %5293
      %5297 = vset.pattern.permute.xlu0 0
      %5298 = vperm.xlu0 %5297, %v5116
      %v5299 = vpop.permute.xlu0 %5298
      %5302 = vset.pattern.permute.xlu0 0
      %5303 = vperm.xlu0 %5302, %v5117
      %v5304 = vpop.permute.xlu0 %5303
      %5307 = vset.pattern.permute.xlu0 0
      %5308 = vperm.xlu0 %5307, %v5118
      %v5309 = vpop.permute.xlu0 %5308
      %5312 = vset.pattern.permute.xlu0 0
      %5313 = vperm.xlu0 %5312, %v5119
      %v5314 = vpop.permute.xlu0 %5313
      %5317 = vset.pattern.permute.xlu0 0
      %5318 = vperm.xlu0 %5317, %v5120
      %v5319 = vpop.permute.xlu0 %5318
      %5322 = vset.pattern.permute.xlu0 0
      %5323 = vperm.xlu0 %5322, %v5121
      %v5324 = vpop.permute.xlu0 %5323
      %5327 = vset.pattern.permute.xlu0 0
      %5328 = vperm.xlu0 %5327, %v5122
      %v5329 = vpop.permute.xlu0 %5328
      %5332 = vset.pattern.permute.xlu0 0
      %5333 = vperm.xlu0 %5332, %v5123
      %v5334 = vpop.permute.xlu0 %5333
      %5337 = vset.pattern.permute.xlu0 0
      %5338 = vperm.xlu0 %5337, %v5124
      %v5339 = vpop.permute.xlu0 %5338
      %5342 = vset.pattern.permute.xlu0 0
      %5343 = vperm.xlu0 %5342, %v5125
      %v5344 = vpop.permute.xlu0 %5343
      %5347 = vset.pattern.permute.xlu0 0
      %5348 = vperm.xlu0 %5347, %v5126
      %v5349 = vpop.permute.xlu0 %5348
      %5352 = vset.pattern.permute.xlu0 0
      %5353 = vperm.xlu0 %5352, %v5127
      %v5354 = vpop.permute.xlu0 %5353
      %5357 = vset.pattern.permute.xlu0 0
      %5358 = vperm.xlu0 %5357, %v5128
      %v5359 = vpop.permute.xlu0 %5358
      %5362 = vset.pattern.permute.xlu0 0
      %5363 = vperm.xlu0 %5362, %v5129
      %v5364 = vpop.permute.xlu0 %5363
      %5367 = vset.pattern.permute.xlu0 0
      %5368 = vperm.xlu0 %5367, %v5130
      %v5369 = vpop.permute.xlu0 %5368
      %5372 = vset.pattern.permute.xlu0 0
      %5373 = vperm.xlu0 %5372, %v5131
      %v5374 = vpop.permute.xlu0 %5373
      %5377 = vset.pattern.permute.xlu0 0
      %5378 = vperm.xlu0 %5377, %v5132
      %v5379 = vpop.permute.xlu0 %5378
      %5382 = vset.pattern.permute.xlu0 0
      %5383 = vperm.xlu0 %5382, %v5133
      %v5384 = vpop.permute.xlu0 %5383
      %5387 = vset.pattern.permute.xlu0 0
      %5388 = vperm.xlu0 %5387, %v5134
      %v5389 = vpop.permute.xlu0 %5388
      %5392 = vset.pattern.permute.xlu0 0
      %5393 = vperm.xlu0 %5392, %v5135
      %v5394 = vpop.permute.xlu0 %5393
      %5397 = vset.pattern.permute.xlu0 0
      %5398 = vperm.xlu0 %5397, %v5136
      %v5399 = vpop.permute.xlu0 %5398
      %5402 = vset.pattern.permute.xlu0 0
      %5403 = vperm.xlu0 %5402, %v5137
      %v5404 = vpop.permute.xlu0 %5403
      %5407 = vset.pattern.permute.xlu0 0
      %5408 = vperm.xlu0 %5407, %v5138
      %v5409 = vpop.permute.xlu0 %5408
      %5412 = vset.pattern.permute.xlu0 0
      %5413 = vperm.xlu0 %5412, %v5139
      %v5414 = vpop.permute.xlu0 %5413
      %5417 = vset.pattern.permute.xlu0 0
      %5418 = vperm.xlu0 %5417, %v5140
      %v5419 = vpop.permute.xlu0 %5418
      %5422 = vset.pattern.permute.xlu0 0
      %5423 = vperm.xlu0 %5422, %v5141
      %v5424 = vpop.permute.xlu0 %5423
      %5427 = vset.pattern.permute.xlu0 0
      %5428 = vperm.xlu0 %5427, %v5142
      %v5429 = vpop.permute.xlu0 %5428
      %5432 = vset.pattern.permute.xlu0 0
      %5433 = vperm.xlu0 %5432, %v5143
      %v5434 = vpop.permute.xlu0 %5433
      %5437 = vset.pattern.permute.xlu0 0
      %5438 = vperm.xlu0 %5437, %v5144
      %v5439 = vpop.permute.xlu0 %5438
      %5442 = vset.pattern.permute.xlu0 0
      %5443 = vperm.xlu0 %5442, %v5145
      %v5444 = vpop.permute.xlu0 %5443
      %5447 = vset.pattern.permute.xlu0 0
      %5448 = vperm.xlu0 %5447, %v5146
      %v5449 = vpop.permute.xlu0 %5448
      %5452 = vset.pattern.permute.xlu0 0
      %5453 = vperm.xlu0 %5452, %v5147
      %v5454 = vpop.permute.xlu0 %5453
      %5457 = vset.pattern.permute.xlu0 0
      %5458 = vperm.xlu0 %5457, %v5148
      %v5459 = vpop.permute.xlu0 %5458
      %5462 = vset.pattern.permute.xlu0 0
      %5463 = vperm.xlu0 %5462, %v5149
      %v5464 = vpop.permute.xlu0 %5463
      %5467 = vset.pattern.permute.xlu0 0
      %5468 = vperm.xlu0 %5467, %v5150
      %v5469 = vpop.permute.xlu0 %5468
      %5472 = vset.pattern.permute.xlu0 0
      %5473 = vperm.xlu0 %5472, %v5151
      %v5474 = vpop.permute.xlu0 %5473
      %5477 = vset.pattern.permute.xlu0 0
      %5478 = vperm.xlu0 %5477, %v5152
      %v5479 = vpop.permute.xlu0 %5478
      %5482 = vset.pattern.permute.xlu0 0
      %5483 = vperm.xlu0 %5482, %v5153
      %v5484 = vpop.permute.xlu0 %5483
      %5487 = vset.pattern.permute.xlu0 0
      %5488 = vperm.xlu0 %5487, %v5154
      %v5489 = vpop.permute.xlu0 %5488
      %5492 = vset.pattern.permute.xlu0 0
      %5493 = vperm.xlu0 %5492, %v5155
      %v5494 = vpop.permute.xlu0 %5493
      %5497 = vset.pattern.permute.xlu0 0
      %5498 = vperm.xlu0 %5497, %v5156
      %v5499 = vpop.permute.xlu0 %5498
      %5502 = vset.pattern.permute.xlu0 0
      %5503 = vperm.xlu0 %5502, %v5157
      %v5504 = vpop.permute.xlu0 %5503
      %5507 = vset.pattern.permute.xlu0 0
      %5508 = vperm.xlu0 %5507, %v5158
      %v5509 = vpop.permute.xlu0 %5508
      %5512 = vset.pattern.permute.xlu0 0
      %5513 = vperm.xlu0 %5512, %v5159
      %v5514 = vpop.permute.xlu0 %5513
      %5517 = vset.pattern.permute.xlu0 0
      %5518 = vperm.xlu0 %5517, %v5160
      %v5519 = vpop.permute.xlu0 %5518
      %5522 = vset.pattern.permute.xlu0 0
      %5523 = vperm.xlu0 %5522, %v5161
      %v5524 = vpop.permute.xlu0 %5523
      %5527 = vset.pattern.permute.xlu0 0
      %5528 = vperm.xlu0 %5527, %v5162
      %v5529 = vpop.permute.xlu0 %5528
      %5532 = vset.pattern.permute.xlu0 0
      %5533 = vperm.xlu0 %5532, %v5163
      %v5534 = vpop.permute.xlu0 %5533
      %5537 = vset.pattern.permute.xlu0 0
      %5538 = vperm.xlu0 %5537, %v5164
      %v5539 = vpop.permute.xlu0 %5538
      %5542 = vset.pattern.permute.xlu0 0
      %5543 = vperm.xlu0 %5542, %v5165
      %v5544 = vpop.permute.xlu0 %5543
      %5547 = vset.pattern.permute.xlu0 0
      %5548 = vperm.xlu0 %5547, %v5166
      %v5549 = vpop.permute.xlu0 %5548
      %5552 = vset.pattern.permute.xlu0 0
      %5553 = vperm.xlu0 %5552, %v5167
      %v5554 = vpop.permute.xlu0 %5553
      %5557 = vset.pattern.permute.xlu0 0
      %5558 = vperm.xlu0 %5557, %v5168
      %v5559 = vpop.permute.xlu0 %5558
      %5562 = vset.pattern.permute.xlu0 0
      %5563 = vperm.xlu0 %5562, %v5169
      %v5564 = vpop.permute.xlu0 %5563
      %5567 = vset.pattern.permute.xlu0 0
      %5568 = vperm.xlu0 %5567, %v5170
      %v5569 = vpop.permute.xlu0 %5568
      %5572 = vset.pattern.permute.xlu0 0
      %5573 = vperm.xlu0 %5572, %v5171
      %v5574 = vpop.permute.xlu0 %5573
      %5577 = vset.pattern.permute.xlu0 0
      %5578 = vperm.xlu0 %5577, %v5172
      %v5579 = vpop.permute.xlu0 %5578
      %5582 = vset.pattern.permute.xlu0 0
      %5583 = vperm.xlu0 %5582, %v5173
      %v5584 = vpop.permute.xlu0 %5583
      %5587 = vset.pattern.permute.xlu0 0
      %5588 = vperm.xlu0 %5587, %v5174
      %v5589 = vpop.permute.xlu0 %5588
      %5592 = vset.pattern.permute.xlu0 0
      %5593 = vperm.xlu0 %5592, %v5175
      %v5594 = vpop.permute.xlu0 %5593
      %5597 = vset.pattern.permute.xlu0 0
      %5598 = vperm.xlu0 %5597, %v5176
      %v5599 = vpop.permute.xlu0 %5598
      %5602 = vset.pattern.permute.xlu0 0
      %5603 = vperm.xlu0 %5602, %v5177
      %v5604 = vpop.permute.xlu0 %5603
      %5607 = vset.pattern.permute.xlu0 0
      %5608 = vperm.xlu0 %5607, %v5178
      %v5609 = vpop.permute.xlu0 %5608
      %5612 = vset.pattern.permute.xlu0 0
      %5613 = vperm.xlu0 %5612, %v5179
      %v5614 = vpop.permute.xlu0 %5613
      %5617 = vset.pattern.permute.xlu0 0
      %5618 = vperm.xlu0 %5617, %v5180
      %v5619 = vpop.permute.xlu0 %5618
      %5622 = vset.pattern.permute.xlu0 0
      %5623 = vperm.xlu0 %5622, %v5181
      %v5624 = vpop.permute.xlu0 %5623
      %5627 = vset.pattern.permute.xlu0 0
      %5628 = vperm.xlu0 %5627, %v5182
      %v5629 = vpop.permute.xlu0 %5628
      %5632 = vset.pattern.permute.xlu0 0
      %5633 = vperm.xlu0 %5632, %v5183
      %v5634 = vpop.permute.xlu0 %5633
      %5637 = vset.pattern.permute.xlu0 0
      %5638 = vperm.xlu0 %5637, %v5184
      %v5639 = vpop.permute.xlu0 %5638
      %5642 = vset.pattern.permute.xlu0 0
      %5643 = vperm.xlu0 %5642, %v5185
      %v5644 = vpop.permute.xlu0 %5643
      %5647 = vset.pattern.permute.xlu0 0
      %5648 = vperm.xlu0 %5647, %v5186
      %v5649 = vpop.permute.xlu0 %5648
      %5652 = vset.pattern.permute.xlu0 0
      %5653 = vperm.xlu0 %5652, %v5187
      %v5654 = vpop.permute.xlu0 %5653
      %5657 = vset.pattern.permute.xlu0 0
      %5658 = vperm.xlu0 %5657, %v5188
      %v5659 = vpop.permute.xlu0 %5658
      %5662 = vset.pattern.permute.xlu0 0
      %5663 = vperm.xlu0 %5662, %v5189
      %v5664 = vpop.permute.xlu0 %5663
      %5667 = vset.pattern.permute.xlu0 0
      %5668 = vperm.xlu0 %5667, %v5190
      %v5669 = vpop.permute.xlu0 %5668
      %5672 = vset.pattern.permute.xlu0 0
      %5673 = vperm.xlu0 %5672, %v5191
      %v5674 = vpop.permute.xlu0 %5673
      %5677 = vset.pattern.permute.xlu0 0
      %5678 = vperm.xlu0 %5677, %v5192
      %v5679 = vpop.permute.xlu0 %5678
      %5682 = vset.pattern.permute.xlu0 0
      %5683 = vperm.xlu0 %5682, %v5193
      %v5684 = vpop.permute.xlu0 %5683
      %5687 = vset.pattern.permute.xlu0 0
      %5688 = vperm.xlu0 %5687, %v5194
      %v5689 = vpop.permute.xlu0 %5688
      %5692 = vset.pattern.permute.xlu0 0
      %5693 = vperm.xlu0 %5692, %v5195
      %v5694 = vpop.permute.xlu0 %5693
      %5697 = vset.pattern.permute.xlu0 0
      %5698 = vperm.xlu0 %5697, %v5196
      %v5699 = vpop.permute.xlu0 %5698
      %5702 = vset.pattern.permute.xlu0 0
      %5703 = vperm.xlu0 %5702, %v5197
      %v5704 = vpop.permute.xlu0 %5703
      %5707 = vset.pattern.permute.xlu0 0
      %5708 = vperm.xlu0 %5707, %v5198
      %v5709 = vpop.permute.xlu0 %5708
      %5712 = vset.pattern.permute.xlu0 0
      %5713 = vperm.xlu0 %5712, %v5199
      %v5714 = vpop.permute.xlu0 %5713
      %5717 = vset.pattern.permute.xlu0 0
      %5718 = vperm.xlu0 %5717, %v5200
      %v5719 = vpop.permute.xlu0 %5718
      %5722 = vset.pattern.permute.xlu0 0
      %5723 = vperm.xlu0 %5722, %v5201
      %v5724 = vpop.permute.xlu0 %5723
      %5727 = vset.pattern.permute.xlu0 0
      %5728 = vperm.xlu0 %5727, %v5202
      %v5729 = vpop.permute.xlu0 %5728
      %5732 = vset.pattern.permute.xlu0 0
      %5733 = vperm.xlu0 %5732, %v5203
      %v5734 = vpop.permute.xlu0 %5733
      %5737 = vset.pattern.permute.xlu0 0
      %5738 = vperm.xlu0 %5737, %v5204
      %v5739 = vpop.permute.xlu0 %5738
      %5742 = vset.pattern.permute.xlu0 0
      %5743 = vperm.xlu0 %5742, %v5205
      %v5744 = vpop.permute.xlu0 %5743
      %5747 = vset.pattern.permute.xlu0 0
      %5748 = vperm.xlu0 %5747, %v5206
      %v5749 = vpop.permute.xlu0 %5748
      %5752 = vset.pattern.permute.xlu0 0
      %5753 = vperm.xlu0 %5752, %v5207
      %v5754 = vpop.permute.xlu0 %5753
      %5757 = vset.pattern.permute.xlu0 0
      %5758 = vperm.xlu0 %5757, %v5208
      %v5759 = vpop.permute.xlu0 %5758
      %5762 = vset.pattern.permute.xlu0 0
      %5763 = vperm.xlu0 %5762, %v5209
      %v5764 = vpop.permute.xlu0 %5763
      %5767 = vset.pattern.permute.xlu0 0
      %5768 = vperm.xlu0 %5767, %v5210
      %v5769 = vpop.permute.xlu0 %5768
      %5772 = vset.pattern.permute.xlu0 0
      %5773 = vperm.xlu0 %5772, %v5211
      %v5774 = vpop.permute.xlu0 %5773
      %5777 = vset.pattern.permute.xlu0 0
      %5778 = vperm.xlu0 %5777, %v5212
      %v5779 = vpop.permute.xlu0 %5778
      %5782 = vset.pattern.permute.xlu0 0
      %5783 = vperm.xlu0 %5782, %v5213
      %v5784 = vpop.permute.xlu0 %5783
      %5787 = vset.pattern.permute.xlu0 0
      %5788 = vperm.xlu0 %5787, %v5214
      %v5789 = vpop.permute.xlu0 %5788
      %5792 = vset.pattern.permute.xlu0 0
      %5793 = vperm.xlu0 %5792, %v5215
      %v5794 = vpop.permute.xlu0 %5793
      %5797 = vset.pattern.permute.xlu0 0
      %5798 = vperm.xlu0 %5797, %v5216
      %v5799 = vpop.permute.xlu0 %5798
      %5802 = vset.pattern.permute.xlu0 0
      %5803 = vperm.xlu0 %5802, %v5217
      %v5804 = vpop.permute.xlu0 %5803
      %5807 = vset.pattern.permute.xlu0 0
      %5808 = vperm.xlu0 %5807, %v5218
      %v5809 = vpop.permute.xlu0 %5808
      %5812 = vset.pattern.permute.xlu0 0
      %5813 = vperm.xlu0 %5812, %v5219
      %v5814 = vpop.permute.xlu0 %5813
      %5817 = vset.pattern.permute.xlu0 0
      %5818 = vperm.xlu0 %5817, %v5220
      %v5819 = vpop.permute.xlu0 %5818
      %5822 = vset.pattern.permute.xlu0 0
      %5823 = vperm.xlu0 %5822, %v5221
      %v5824 = vpop.permute.xlu0 %5823
      %5827 = vset.pattern.permute.xlu0 0
      %5828 = vperm.xlu0 %5827, %v5222
      %v5829 = vpop.permute.xlu0 %5828
      %5832 = vset.pattern.permute.xlu0 0
      %5833 = vperm.xlu0 %5832, %v5223
      %v5834 = vpop.permute.xlu0 %5833
      %5837 = vset.pattern.permute.xlu0 0
      %5838 = vperm.xlu0 %5837, %v5224
      %v5839 = vpop.permute.xlu0 %5838
      %5842 = vset.pattern.permute.xlu0 0
      %5843 = vperm.xlu0 %5842, %v5225
      %v5844 = vpop.permute.xlu0 %5843
      %5847 = vset.pattern.permute.xlu0 0
      %5848 = vperm.xlu0 %5847, %v5226
      %v5849 = vpop.permute.xlu0 %5848
      %5852 = vset.pattern.permute.xlu0 0
      %5853 = vperm.xlu0 %5852, %v5227
      %v5854 = vpop.permute.xlu0 %5853
      %5857 = vset.pattern.permute.xlu0 0
      %5858 = vperm.xlu0 %5857, %v5228
      %v5859 = vpop.permute.xlu0 %5858
      %5862 = vset.pattern.permute.xlu0 0
      %5863 = vperm.xlu0 %5862, %v5229
      %v5864 = vpop.permute.xlu0 %5863
      %5867 = vset.pattern.permute.xlu0 0
      %5868 = vperm.xlu0 %5867, %v5230
      %v5869 = vpop.permute.xlu0 %5868
      %v5871 = vmul.f32 %v5234, %v3694
      %v5872 = vmul.f32 %v5239, %v3695
      %v5873 = vmul.f32 %v5244, %v3696
      %v5874 = vmul.f32 %v5249, %v3697
      %v5875 = vmul.f32 %v5254, %v3698
      %v5876 = vmul.f32 %v5259, %v3699
      %v5877 = vmul.f32 %v5264, %v3700
      %v5878 = vmul.f32 %v5269, %v3701
      %v5879 = vmul.f32 %v5274, %v3702
      %v5880 = vmul.f32 %v5279, %v3703
      %v5881 = vmul.f32 %v5284, %v3704
      %v5882 = vmul.f32 %v5289, %v3705
      %v5883 = vmul.f32 %v5294, %v3706
      %v5884 = vmul.f32 %v5299, %v3707
      %v5885 = vmul.f32 %v5304, %v3708
      %v5886 = vmul.f32 %v5309, %v3709
      %v5887 = vmul.f32 %v5314, %v3710
      %v5888 = vmul.f32 %v5319, %v3711
      %v5889 = vmul.f32 %v5324, %v3712
      %v5890 = vmul.f32 %v5329, %v3713
      %v5891 = vmul.f32 %v5334, %v3714
      %v5892 = vmul.f32 %v5339, %v3715
      %v5893 = vmul.f32 %v5344, %v3716
      %v5894 = vmul.f32 %v5349, %v3717
      %v5895 = vmul.f32 %v5354, %v3718
      %v5896 = vmul.f32 %v5359, %v3719
      %v5897 = vmul.f32 %v5364, %v3720
      %v5898 = vmul.f32 %v5369, %v3721
      %v5899 = vmul.f32 %v5374, %v3722
      %v5900 = vmul.f32 %v5379, %v3723
      %v5901 = vmul.f32 %v5384, %v3724
      %v5902 = vmul.f32 %v5389, %v3725
      %v5903 = vmul.f32 %v5394, %v3726
      %v5904 = vmul.f32 %v5399, %v3727
      %v5905 = vmul.f32 %v5404, %v3728
      %v5906 = vmul.f32 %v5409, %v3729
      %v5907 = vmul.f32 %v5414, %v3730
      %v5908 = vmul.f32 %v5419, %v3731
      %v5909 = vmul.f32 %v5424, %v3732
      %v5910 = vmul.f32 %v5429, %v3733
      %v5911 = vmul.f32 %v5434, %v3734
      %v5912 = vmul.f32 %v5439, %v3735
      %v5913 = vmul.f32 %v5444, %v3736
      %v5914 = vmul.f32 %v5449, %v3737
      %v5915 = vmul.f32 %v5454, %v3738
      %v5916 = vmul.f32 %v5459, %v3739
      %v5917 = vmul.f32 %v5464, %v3740
      %v5918 = vmul.f32 %v5469, %v3741
      %v5919 = vmul.f32 %v5474, %v3742
      %v5920 = vmul.f32 %v5479, %v3743
      %v5921 = vmul.f32 %v5484, %v3744
      %v5922 = vmul.f32 %v5489, %v3745
      %v5923 = vmul.f32 %v5494, %v3746
      %v5924 = vmul.f32 %v5499, %v3747
      %v5925 = vmul.f32 %v5504, %v3748
      %v5926 = vmul.f32 %v5509, %v3749
      %v5927 = vmul.f32 %v5514, %v3750
      %v5928 = vmul.f32 %v5519, %v3751
      %v5929 = vmul.f32 %v5524, %v3752
      %v5930 = vmul.f32 %v5529, %v3753
      %v5931 = vmul.f32 %v5534, %v3754
      %v5932 = vmul.f32 %v5539, %v3755
      %v5933 = vmul.f32 %v5544, %v3756
      %v5934 = vmul.f32 %v5549, %v3757
      %v5935 = vmul.f32 %v5554, %v3758
      %v5936 = vmul.f32 %v5559, %v3759
      %v5937 = vmul.f32 %v5564, %v3760
      %v5938 = vmul.f32 %v5569, %v3761
      %v5939 = vmul.f32 %v5574, %v3762
      %v5940 = vmul.f32 %v5579, %v3763
      %v5941 = vmul.f32 %v5584, %v3764
      %v5942 = vmul.f32 %v5589, %v3765
      %v5943 = vmul.f32 %v5594, %v3766
      %v5944 = vmul.f32 %v5599, %v3767
      %v5945 = vmul.f32 %v5604, %v3768
      %v5946 = vmul.f32 %v5609, %v3769
      %v5947 = vmul.f32 %v5614, %v3770
      %v5948 = vmul.f32 %v5619, %v3771
      %v5949 = vmul.f32 %v5624, %v3772
      %v5950 = vmul.f32 %v5629, %v3773
      %v5951 = vmul.f32 %v5634, %v3774
      %v5952 = vmul.f32 %v5639, %v3775
      %v5953 = vmul.f32 %v5644, %v3776
      %v5954 = vmul.f32 %v5649, %v3777
      %v5955 = vmul.f32 %v5654, %v3778
      %v5956 = vmul.f32 %v5659, %v3779
      %v5957 = vmul.f32 %v5664, %v3780
      %v5958 = vmul.f32 %v5669, %v3781
      %v5959 = vmul.f32 %v5674, %v3782
      %v5960 = vmul.f32 %v5679, %v3783
      %v5961 = vmul.f32 %v5684, %v3784
      %v5962 = vmul.f32 %v5689, %v3785
      %v5963 = vmul.f32 %v5694, %v3786
      %v5964 = vmul.f32 %v5699, %v3787
      %v5965 = vmul.f32 %v5704, %v3788
      %v5966 = vmul.f32 %v5709, %v3789
      %v5967 = vmul.f32 %v5714, %v3790
      %v5968 = vmul.f32 %v5719, %v3791
      %v5969 = vmul.f32 %v5724, %v3792
      %v5970 = vmul.f32 %v5729, %v3793
      %v5971 = vmul.f32 %v5734, %v3794
      %v5972 = vmul.f32 %v5739, %v3795
      %v5973 = vmul.f32 %v5744, %v3796
      %v5974 = vmul.f32 %v5749, %v3797
      %v5975 = vmul.f32 %v5754, %v3798
      %v5976 = vmul.f32 %v5759, %v3799
      %v5977 = vmul.f32 %v5764, %v3800
      %v5978 = vmul.f32 %v5769, %v3801
      %v5979 = vmul.f32 %v5774, %v3802
      %v5980 = vmul.f32 %v5779, %v3803
      %v5981 = vmul.f32 %v5784, %v3804
      %v5982 = vmul.f32 %v5789, %v3805
      %v5983 = vmul.f32 %v5794, %v3806
      %v5984 = vmul.f32 %v5799, %v3807
      %v5985 = vmul.f32 %v5804, %v3808
      %v5986 = vmul.f32 %v5809, %v3809
      %v5987 = vmul.f32 %v5814, %v3810
      %v5988 = vmul.f32 %v5819, %v3811
      %v5989 = vmul.f32 %v5824, %v3812
      %v5990 = vmul.f32 %v5829, %v3813
      %v5991 = vmul.f32 %v5834, %v3814
      %v5992 = vmul.f32 %v5839, %v3815
      %v5993 = vmul.f32 %v5844, %v3816
      %v5994 = vmul.f32 %v5849, %v3817
      %v5995 = vmul.f32 %v5854, %v3818
      %v5996 = vmul.f32 %v5859, %v3819
      %v5997 = vmul.f32 %v5864, %v3820
      %v5998 = vmul.f32 %v5869, %v3821
      %5999 = vset.pattern.permute.xlu0 1
      %6000 = vperm.xlu0 %5999, %v5103
      %v6001 = vpop.permute.xlu0 %6000
      %6003 = vset.pattern.permute.xlu0 1
      %6004 = vperm.xlu0 %6003, %v5104
      %v6005 = vpop.permute.xlu0 %6004
      %6007 = vset.pattern.permute.xlu0 1
      %6008 = vperm.xlu0 %6007, %v5105
      %v6009 = vpop.permute.xlu0 %6008
      %6011 = vset.pattern.permute.xlu0 1
      %6012 = vperm.xlu0 %6011, %v5106
      %v6013 = vpop.permute.xlu0 %6012
      %6015 = vset.pattern.permute.xlu0 1
      %6016 = vperm.xlu0 %6015, %v5107
      %v6017 = vpop.permute.xlu0 %6016
      %6019 = vset.pattern.permute.xlu0 1
      %6020 = vperm.xlu0 %6019, %v5108
      %v6021 = vpop.permute.xlu0 %6020
      %6023 = vset.pattern.permute.xlu0 1
      %6024 = vperm.xlu0 %6023, %v5109
      %v6025 = vpop.permute.xlu0 %6024
      %6027 = vset.pattern.permute.xlu0 1
      %6028 = vperm.xlu0 %6027, %v5110
      %v6029 = vpop.permute.xlu0 %6028
      %6031 = vset.pattern.permute.xlu0 1
      %6032 = vperm.xlu0 %6031, %v5111
      %v6033 = vpop.permute.xlu0 %6032
      %6035 = vset.pattern.permute.xlu0 1
      %6036 = vperm.xlu0 %6035, %v5112
      %v6037 = vpop.permute.xlu0 %6036
      %6039 = vset.pattern.permute.xlu0 1
      %6040 = vperm.xlu0 %6039, %v5113
      %v6041 = vpop.permute.xlu0 %6040
      %6043 = vset.pattern.permute.xlu0 1
      %6044 = vperm.xlu0 %6043, %v5114
      %v6045 = vpop.permute.xlu0 %6044
      %6047 = vset.pattern.permute.xlu0 1
      %6048 = vperm.xlu0 %6047, %v5115
      %v6049 = vpop.permute.xlu0 %6048
      %6051 = vset.pattern.permute.xlu0 1
      %6052 = vperm.xlu0 %6051, %v5116
      %v6053 = vpop.permute.xlu0 %6052
      %6055 = vset.pattern.permute.xlu0 1
      %6056 = vperm.xlu0 %6055, %v5117
      %v6057 = vpop.permute.xlu0 %6056
      %6059 = vset.pattern.permute.xlu0 1
      %6060 = vperm.xlu0 %6059, %v5118
      %v6061 = vpop.permute.xlu0 %6060
      %6063 = vset.pattern.permute.xlu0 1
      %6064 = vperm.xlu0 %6063, %v5119
      %v6065 = vpop.permute.xlu0 %6064
      %6067 = vset.pattern.permute.xlu0 1
      %6068 = vperm.xlu0 %6067, %v5120
      %v6069 = vpop.permute.xlu0 %6068
      %6071 = vset.pattern.permute.xlu0 1
      %6072 = vperm.xlu0 %6071, %v5121
      %v6073 = vpop.permute.xlu0 %6072
      %6075 = vset.pattern.permute.xlu0 1
      %6076 = vperm.xlu0 %6075, %v5122
      %v6077 = vpop.permute.xlu0 %6076
      %6079 = vset.pattern.permute.xlu0 1
      %6080 = vperm.xlu0 %6079, %v5123
      %v6081 = vpop.permute.xlu0 %6080
      %6083 = vset.pattern.permute.xlu0 1
      %6084 = vperm.xlu0 %6083, %v5124
      %v6085 = vpop.permute.xlu0 %6084
      %6087 = vset.pattern.permute.xlu0 1
      %6088 = vperm.xlu0 %6087, %v5125
      %v6089 = vpop.permute.xlu0 %6088
      %6091 = vset.pattern.permute.xlu0 1
      %6092 = vperm.xlu0 %6091, %v5126
      %v6093 = vpop.permute.xlu0 %6092
      %6095 = vset.pattern.permute.xlu0 1
      %6096 = vperm.xlu0 %6095, %v5127
      %v6097 = vpop.permute.xlu0 %6096
      %6099 = vset.pattern.permute.xlu0 1
      %6100 = vperm.xlu0 %6099, %v5128
      %v6101 = vpop.permute.xlu0 %6100
      %6103 = vset.pattern.permute.xlu0 1
      %6104 = vperm.xlu0 %6103, %v5129
      %v6105 = vpop.permute.xlu0 %6104
      %6107 = vset.pattern.permute.xlu0 1
      %6108 = vperm.xlu0 %6107, %v5130
      %v6109 = vpop.permute.xlu0 %6108
      %6111 = vset.pattern.permute.xlu0 1
      %6112 = vperm.xlu0 %6111, %v5131
      %v6113 = vpop.permute.xlu0 %6112
      %6115 = vset.pattern.permute.xlu0 1
      %6116 = vperm.xlu0 %6115, %v5132
      %v6117 = vpop.permute.xlu0 %6116
      %6119 = vset.pattern.permute.xlu0 1
      %6120 = vperm.xlu0 %6119, %v5133
      %v6121 = vpop.permute.xlu0 %6120
      %6123 = vset.pattern.permute.xlu0 1
      %6124 = vperm.xlu0 %6123, %v5134
      %v6125 = vpop.permute.xlu0 %6124
      %6127 = vset.pattern.permute.xlu0 1
      %6128 = vperm.xlu0 %6127, %v5135
      %v6129 = vpop.permute.xlu0 %6128
      %6131 = vset.pattern.permute.xlu0 1
      %6132 = vperm.xlu0 %6131, %v5136
      %v6133 = vpop.permute.xlu0 %6132
      %6135 = vset.pattern.permute.xlu0 1
      %6136 = vperm.xlu0 %6135, %v5137
      %v6137 = vpop.permute.xlu0 %6136
      %6139 = vset.pattern.permute.xlu0 1
      %6140 = vperm.xlu0 %6139, %v5138
      %v6141 = vpop.permute.xlu0 %6140
      %6143 = vset.pattern.permute.xlu0 1
      %6144 = vperm.xlu0 %6143, %v5139
      %v6145 = vpop.permute.xlu0 %6144
      %6147 = vset.pattern.permute.xlu0 1
      %6148 = vperm.xlu0 %6147, %v5140
      %v6149 = vpop.permute.xlu0 %6148
      %6151 = vset.pattern.permute.xlu0 1
      %6152 = vperm.xlu0 %6151, %v5141
      %v6153 = vpop.permute.xlu0 %6152
      %6155 = vset.pattern.permute.xlu0 1
      %6156 = vperm.xlu0 %6155, %v5142
      %v6157 = vpop.permute.xlu0 %6156
      %6159 = vset.pattern.permute.xlu0 1
      %6160 = vperm.xlu0 %6159, %v5143
      %v6161 = vpop.permute.xlu0 %6160
      %6163 = vset.pattern.permute.xlu0 1
      %6164 = vperm.xlu0 %6163, %v5144
      %v6165 = vpop.permute.xlu0 %6164
      %6167 = vset.pattern.permute.xlu0 1
      %6168 = vperm.xlu0 %6167, %v5145
      %v6169 = vpop.permute.xlu0 %6168
      %6171 = vset.pattern.permute.xlu0 1
      %6172 = vperm.xlu0 %6171, %v5146
      %v6173 = vpop.permute.xlu0 %6172
      %6175 = vset.pattern.permute.xlu0 1
      %6176 = vperm.xlu0 %6175, %v5147
      %v6177 = vpop.permute.xlu0 %6176
      %6179 = vset.pattern.permute.xlu0 1
      %6180 = vperm.xlu0 %6179, %v5148
      %v6181 = vpop.permute.xlu0 %6180
      %6183 = vset.pattern.permute.xlu0 1
      %6184 = vperm.xlu0 %6183, %v5149
      %v6185 = vpop.permute.xlu0 %6184
      %6187 = vset.pattern.permute.xlu0 1
      %6188 = vperm.xlu0 %6187, %v5150
      %v6189 = vpop.permute.xlu0 %6188
      %6191 = vset.pattern.permute.xlu0 1
      %6192 = vperm.xlu0 %6191, %v5151
      %v6193 = vpop.permute.xlu0 %6192
      %6195 = vset.pattern.permute.xlu0 1
      %6196 = vperm.xlu0 %6195, %v5152
      %v6197 = vpop.permute.xlu0 %6196
      %6199 = vset.pattern.permute.xlu0 1
      %6200 = vperm.xlu0 %6199, %v5153
      %v6201 = vpop.permute.xlu0 %6200
      %6203 = vset.pattern.permute.xlu0 1
      %6204 = vperm.xlu0 %6203, %v5154
      %v6205 = vpop.permute.xlu0 %6204
      %6207 = vset.pattern.permute.xlu0 1
      %6208 = vperm.xlu0 %6207, %v5155
      %v6209 = vpop.permute.xlu0 %6208
      %6211 = vset.pattern.permute.xlu0 1
      %6212 = vperm.xlu0 %6211, %v5156
      %v6213 = vpop.permute.xlu0 %6212
      %6215 = vset.pattern.permute.xlu0 1
      %6216 = vperm.xlu0 %6215, %v5157
      %v6217 = vpop.permute.xlu0 %6216
      %6219 = vset.pattern.permute.xlu0 1
      %6220 = vperm.xlu0 %6219, %v5158
      %v6221 = vpop.permute.xlu0 %6220
      %6223 = vset.pattern.permute.xlu0 1
      %6224 = vperm.xlu0 %6223, %v5159
      %v6225 = vpop.permute.xlu0 %6224
      %6227 = vset.pattern.permute.xlu0 1
      %6228 = vperm.xlu0 %6227, %v5160
      %v6229 = vpop.permute.xlu0 %6228
      %6231 = vset.pattern.permute.xlu0 1
      %6232 = vperm.xlu0 %6231, %v5161
      %v6233 = vpop.permute.xlu0 %6232
      %6235 = vset.pattern.permute.xlu0 1
      %6236 = vperm.xlu0 %6235, %v5162
      %v6237 = vpop.permute.xlu0 %6236
      %6239 = vset.pattern.permute.xlu0 1
      %6240 = vperm.xlu0 %6239, %v5163
      %v6241 = vpop.permute.xlu0 %6240
      %6243 = vset.pattern.permute.xlu0 1
      %6244 = vperm.xlu0 %6243, %v5164
      %v6245 = vpop.permute.xlu0 %6244
      %6247 = vset.pattern.permute.xlu0 1
      %6248 = vperm.xlu0 %6247, %v5165
      %v6249 = vpop.permute.xlu0 %6248
      %6251 = vset.pattern.permute.xlu0 1
      %6252 = vperm.xlu0 %6251, %v5166
      %v6253 = vpop.permute.xlu0 %6252
      %6255 = vset.pattern.permute.xlu0 1
      %6256 = vperm.xlu0 %6255, %v5167
      %v6257 = vpop.permute.xlu0 %6256
      %6259 = vset.pattern.permute.xlu0 1
      %6260 = vperm.xlu0 %6259, %v5168
      %v6261 = vpop.permute.xlu0 %6260
      %6263 = vset.pattern.permute.xlu0 1
      %6264 = vperm.xlu0 %6263, %v5169
      %v6265 = vpop.permute.xlu0 %6264
      %6267 = vset.pattern.permute.xlu0 1
      %6268 = vperm.xlu0 %6267, %v5170
      %v6269 = vpop.permute.xlu0 %6268
      %6271 = vset.pattern.permute.xlu0 1
      %6272 = vperm.xlu0 %6271, %v5171
      %v6273 = vpop.permute.xlu0 %6272
      %6275 = vset.pattern.permute.xlu0 1
      %6276 = vperm.xlu0 %6275, %v5172
      %v6277 = vpop.permute.xlu0 %6276
      %6279 = vset.pattern.permute.xlu0 1
      %6280 = vperm.xlu0 %6279, %v5173
      %v6281 = vpop.permute.xlu0 %6280
      %6283 = vset.pattern.permute.xlu0 1
      %6284 = vperm.xlu0 %6283, %v5174
      %v6285 = vpop.permute.xlu0 %6284
      %6287 = vset.pattern.permute.xlu0 1
      %6288 = vperm.xlu0 %6287, %v5175
      %v6289 = vpop.permute.xlu0 %6288
      %6291 = vset.pattern.permute.xlu0 1
      %6292 = vperm.xlu0 %6291, %v5176
      %v6293 = vpop.permute.xlu0 %6292
      %6295 = vset.pattern.permute.xlu0 1
      %6296 = vperm.xlu0 %6295, %v5177
      %v6297 = vpop.permute.xlu0 %6296
      %6299 = vset.pattern.permute.xlu0 1
      %6300 = vperm.xlu0 %6299, %v5178
      %v6301 = vpop.permute.xlu0 %6300
      %6303 = vset.pattern.permute.xlu0 1
      %6304 = vperm.xlu0 %6303, %v5179
      %v6305 = vpop.permute.xlu0 %6304
      %6307 = vset.pattern.permute.xlu0 1
      %6308 = vperm.xlu0 %6307, %v5180
      %v6309 = vpop.permute.xlu0 %6308
      %6311 = vset.pattern.permute.xlu0 1
      %6312 = vperm.xlu0 %6311, %v5181
      %v6313 = vpop.permute.xlu0 %6312
      %6315 = vset.pattern.permute.xlu0 1
      %6316 = vperm.xlu0 %6315, %v5182
      %v6317 = vpop.permute.xlu0 %6316
      %6319 = vset.pattern.permute.xlu0 1
      %6320 = vperm.xlu0 %6319, %v5183
      %v6321 = vpop.permute.xlu0 %6320
      %6323 = vset.pattern.permute.xlu0 1
      %6324 = vperm.xlu0 %6323, %v5184
      %v6325 = vpop.permute.xlu0 %6324
      %6327 = vset.pattern.permute.xlu0 1
      %6328 = vperm.xlu0 %6327, %v5185
      %v6329 = vpop.permute.xlu0 %6328
      %6331 = vset.pattern.permute.xlu0 1
      %6332 = vperm.xlu0 %6331, %v5186
      %v6333 = vpop.permute.xlu0 %6332
      %6335 = vset.pattern.permute.xlu0 1
      %6336 = vperm.xlu0 %6335, %v5187
      %v6337 = vpop.permute.xlu0 %6336
      %6339 = vset.pattern.permute.xlu0 1
      %6340 = vperm.xlu0 %6339, %v5188
      %v6341 = vpop.permute.xlu0 %6340
      %6343 = vset.pattern.permute.xlu0 1
      %6344 = vperm.xlu0 %6343, %v5189
      %v6345 = vpop.permute.xlu0 %6344
      %6347 = vset.pattern.permute.xlu0 1
      %6348 = vperm.xlu0 %6347, %v5190
      %v6349 = vpop.permute.xlu0 %6348
      %6351 = vset.pattern.permute.xlu0 1
      %6352 = vperm.xlu0 %6351, %v5191
      %v6353 = vpop.permute.xlu0 %6352
      %6355 = vset.pattern.permute.xlu0 1
      %6356 = vperm.xlu0 %6355, %v5192
      %v6357 = vpop.permute.xlu0 %6356
      %6359 = vset.pattern.permute.xlu0 1
      %6360 = vperm.xlu0 %6359, %v5193
      %v6361 = vpop.permute.xlu0 %6360
      %6363 = vset.pattern.permute.xlu0 1
      %6364 = vperm.xlu0 %6363, %v5194
      %v6365 = vpop.permute.xlu0 %6364
      %6367 = vset.pattern.permute.xlu0 1
      %6368 = vperm.xlu0 %6367, %v5195
      %v6369 = vpop.permute.xlu0 %6368
      %6371 = vset.pattern.permute.xlu0 1
      %6372 = vperm.xlu0 %6371, %v5196
      %v6373 = vpop.permute.xlu0 %6372
      %6375 = vset.pattern.permute.xlu0 1
      %6376 = vperm.xlu0 %6375, %v5197
      %v6377 = vpop.permute.xlu0 %6376
      %6379 = vset.pattern.permute.xlu0 1
      %6380 = vperm.xlu0 %6379, %v5198
      %v6381 = vpop.permute.xlu0 %6380
      %6383 = vset.pattern.permute.xlu0 1
      %6384 = vperm.xlu0 %6383, %v5199
      %v6385 = vpop.permute.xlu0 %6384
      %6387 = vset.pattern.permute.xlu0 1
      %6388 = vperm.xlu0 %6387, %v5200
      %v6389 = vpop.permute.xlu0 %6388
      %6391 = vset.pattern.permute.xlu0 1
      %6392 = vperm.xlu0 %6391, %v5201
      %v6393 = vpop.permute.xlu0 %6392
      %6395 = vset.pattern.permute.xlu0 1
      %6396 = vperm.xlu0 %6395, %v5202
      %v6397 = vpop.permute.xlu0 %6396
      %6399 = vset.pattern.permute.xlu0 1
      %6400 = vperm.xlu0 %6399, %v5203
      %v6401 = vpop.permute.xlu0 %6400
      %6403 = vset.pattern.permute.xlu0 1
      %6404 = vperm.xlu0 %6403, %v5204
      %v6405 = vpop.permute.xlu0 %6404
      %6407 = vset.pattern.permute.xlu0 1
      %6408 = vperm.xlu0 %6407, %v5205
      %v6409 = vpop.permute.xlu0 %6408
      %6411 = vset.pattern.permute.xlu0 1
      %6412 = vperm.xlu0 %6411, %v5206
      %v6413 = vpop.permute.xlu0 %6412
      %6415 = vset.pattern.permute.xlu0 1
      %6416 = vperm.xlu0 %6415, %v5207
      %v6417 = vpop.permute.xlu0 %6416
      %6419 = vset.pattern.permute.xlu0 1
      %6420 = vperm.xlu0 %6419, %v5208
      %v6421 = vpop.permute.xlu0 %6420
      %6423 = vset.pattern.permute.xlu0 1
      %6424 = vperm.xlu0 %6423, %v5209
      %v6425 = vpop.permute.xlu0 %6424
      %6427 = vset.pattern.permute.xlu0 1
      %6428 = vperm.xlu0 %6427, %v5210
      %v6429 = vpop.permute.xlu0 %6428
      %6431 = vset.pattern.permute.xlu0 1
      %6432 = vperm.xlu0 %6431, %v5211
      %v6433 = vpop.permute.xlu0 %6432
      %6435 = vset.pattern.permute.xlu0 1
      %6436 = vperm.xlu0 %6435, %v5212
      %v6437 = vpop.permute.xlu0 %6436
      %6439 = vset.pattern.permute.xlu0 1
      %6440 = vperm.xlu0 %6439, %v5213
      %v6441 = vpop.permute.xlu0 %6440
      %6443 = vset.pattern.permute.xlu0 1
      %6444 = vperm.xlu0 %6443, %v5214
      %v6445 = vpop.permute.xlu0 %6444
      %6447 = vset.pattern.permute.xlu0 1
      %6448 = vperm.xlu0 %6447, %v5215
      %v6449 = vpop.permute.xlu0 %6448
      %6451 = vset.pattern.permute.xlu0 1
      %6452 = vperm.xlu0 %6451, %v5216
      %v6453 = vpop.permute.xlu0 %6452
      %6455 = vset.pattern.permute.xlu0 1
      %6456 = vperm.xlu0 %6455, %v5217
      %v6457 = vpop.permute.xlu0 %6456
      %6459 = vset.pattern.permute.xlu0 1
      %6460 = vperm.xlu0 %6459, %v5218
      %v6461 = vpop.permute.xlu0 %6460
      %6463 = vset.pattern.permute.xlu0 1
      %6464 = vperm.xlu0 %6463, %v5219
      %v6465 = vpop.permute.xlu0 %6464
      %6467 = vset.pattern.permute.xlu0 1
      %6468 = vperm.xlu0 %6467, %v5220
      %v6469 = vpop.permute.xlu0 %6468
      %6471 = vset.pattern.permute.xlu0 1
      %6472 = vperm.xlu0 %6471, %v5221
      %v6473 = vpop.permute.xlu0 %6472
      %6475 = vset.pattern.permute.xlu0 1
      %6476 = vperm.xlu0 %6475, %v5222
      %v6477 = vpop.permute.xlu0 %6476
      %6479 = vset.pattern.permute.xlu0 1
      %6480 = vperm.xlu0 %6479, %v5223
      %v6481 = vpop.permute.xlu0 %6480
      %6483 = vset.pattern.permute.xlu0 1
      %6484 = vperm.xlu0 %6483, %v5224
      %v6485 = vpop.permute.xlu0 %6484
      %6487 = vset.pattern.permute.xlu0 1
      %6488 = vperm.xlu0 %6487, %v5225
      %v6489 = vpop.permute.xlu0 %6488
      %6491 = vset.pattern.permute.xlu0 1
      %6492 = vperm.xlu0 %6491, %v5226
      %v6493 = vpop.permute.xlu0 %6492
      %6495 = vset.pattern.permute.xlu0 1
      %6496 = vperm.xlu0 %6495, %v5227
      %v6497 = vpop.permute.xlu0 %6496
      %6499 = vset.pattern.permute.xlu0 1
      %6500 = vperm.xlu0 %6499, %v5228
      %v6501 = vpop.permute.xlu0 %6500
      %6503 = vset.pattern.permute.xlu0 1
      %6504 = vperm.xlu0 %6503, %v5229
      %v6505 = vpop.permute.xlu0 %6504
      %6507 = vset.pattern.permute.xlu0 1
      %6508 = vperm.xlu0 %6507, %v5230
      %v6509 = vpop.permute.xlu0 %6508
      %v6511 = vmul.f32 %v6001, %v3694
      %v6512 = vmul.f32 %v6005, %v3695
      %v6513 = vmul.f32 %v6009, %v3696
      %v6514 = vmul.f32 %v6013, %v3697
      %v6515 = vmul.f32 %v6017, %v3698
      %v6516 = vmul.f32 %v6021, %v3699
      %v6517 = vmul.f32 %v6025, %v3700
      %v6518 = vmul.f32 %v6029, %v3701
      %v6519 = vmul.f32 %v6033, %v3702
      %v6520 = vmul.f32 %v6037, %v3703
      %v6521 = vmul.f32 %v6041, %v3704
      %v6522 = vmul.f32 %v6045, %v3705
      %v6523 = vmul.f32 %v6049, %v3706
      %v6524 = vmul.f32 %v6053, %v3707
      %v6525 = vmul.f32 %v6057, %v3708
      %v6526 = vmul.f32 %v6061, %v3709
      %v6527 = vmul.f32 %v6065, %v3710
      %v6528 = vmul.f32 %v6069, %v3711
      %v6529 = vmul.f32 %v6073, %v3712
      %v6530 = vmul.f32 %v6077, %v3713
      %v6531 = vmul.f32 %v6081, %v3714
      %v6532 = vmul.f32 %v6085, %v3715
      %v6533 = vmul.f32 %v6089, %v3716
      %v6534 = vmul.f32 %v6093, %v3717
      %v6535 = vmul.f32 %v6097, %v3718
      %v6536 = vmul.f32 %v6101, %v3719
      %v6537 = vmul.f32 %v6105, %v3720
      %v6538 = vmul.f32 %v6109, %v3721
      %v6539 = vmul.f32 %v6113, %v3722
      %v6540 = vmul.f32 %v6117, %v3723
      %v6541 = vmul.f32 %v6121, %v3724
      %v6542 = vmul.f32 %v6125, %v3725
      %v6543 = vmul.f32 %v6129, %v3726
      %v6544 = vmul.f32 %v6133, %v3727
      %v6545 = vmul.f32 %v6137, %v3728
      %v6546 = vmul.f32 %v6141, %v3729
      %v6547 = vmul.f32 %v6145, %v3730
      %v6548 = vmul.f32 %v6149, %v3731
      %v6549 = vmul.f32 %v6153, %v3732
      %v6550 = vmul.f32 %v6157, %v3733
      %v6551 = vmul.f32 %v6161, %v3734
      %v6552 = vmul.f32 %v6165, %v3735
      %v6553 = vmul.f32 %v6169, %v3736
      %v6554 = vmul.f32 %v6173, %v3737
      %v6555 = vmul.f32 %v6177, %v3738
      %v6556 = vmul.f32 %v6181, %v3739
      %v6557 = vmul.f32 %v6185, %v3740
      %v6558 = vmul.f32 %v6189, %v3741
      %v6559 = vmul.f32 %v6193, %v3742
      %v6560 = vmul.f32 %v6197, %v3743
      %v6561 = vmul.f32 %v6201, %v3744
      %v6562 = vmul.f32 %v6205, %v3745
      %v6563 = vmul.f32 %v6209, %v3746
      %v6564 = vmul.f32 %v6213, %v3747
      %v6565 = vmul.f32 %v6217, %v3748
      %v6566 = vmul.f32 %v6221, %v3749
      %v6567 = vmul.f32 %v6225, %v3750
      %v6568 = vmul.f32 %v6229, %v3751
      %v6569 = vmul.f32 %v6233, %v3752
      %v6570 = vmul.f32 %v6237, %v3753
      %v6571 = vmul.f32 %v6241, %v3754
      %v6572 = vmul.f32 %v6245, %v3755
      %v6573 = vmul.f32 %v6249, %v3756
      %v6574 = vmul.f32 %v6253, %v3757
      %v6575 = vmul.f32 %v6257, %v3758
      %v6576 = vmul.f32 %v6261, %v3759
      %v6577 = vmul.f32 %v6265, %v3760
      %v6578 = vmul.f32 %v6269, %v3761
      %v6579 = vmul.f32 %v6273, %v3762
      %v6580 = vmul.f32 %v6277, %v3763
      %v6581 = vmul.f32 %v6281, %v3764
      %v6582 = vmul.f32 %v6285, %v3765
      %v6583 = vmul.f32 %v6289, %v3766
      %v6584 = vmul.f32 %v6293, %v3767
      %v6585 = vmul.f32 %v6297, %v3768
      %v6586 = vmul.f32 %v6301, %v3769
      %v6587 = vmul.f32 %v6305, %v3770
      %v6588 = vmul.f32 %v6309, %v3771
      %v6589 = vmul.f32 %v6313, %v3772
      %v6590 = vmul.f32 %v6317, %v3773
      %v6591 = vmul.f32 %v6321, %v3774
      %v6592 = vmul.f32 %v6325, %v3775
      %v6593 = vmul.f32 %v6329, %v3776
      %v6594 = vmul.f32 %v6333, %v3777
      %v6595 = vmul.f32 %v6337, %v3778
      %v6596 = vmul.f32 %v6341, %v3779
      %v6597 = vmul.f32 %v6345, %v3780
      %v6598 = vmul.f32 %v6349, %v3781
      %v6599 = vmul.f32 %v6353, %v3782
      %v6600 = vmul.f32 %v6357, %v3783
      %v6601 = vmul.f32 %v6361, %v3784
      %v6602 = vmul.f32 %v6365, %v3785
      %v6603 = vmul.f32 %v6369, %v3786
      %v6604 = vmul.f32 %v6373, %v3787
      %v6605 = vmul.f32 %v6377, %v3788
      %v6606 = vmul.f32 %v6381, %v3789
      %v6607 = vmul.f32 %v6385, %v3790
      %v6608 = vmul.f32 %v6389, %v3791
      %v6609 = vmul.f32 %v6393, %v3792
      %v6610 = vmul.f32 %v6397, %v3793
      %v6611 = vmul.f32 %v6401, %v3794
      %v6612 = vmul.f32 %v6405, %v3795
      %v6613 = vmul.f32 %v6409, %v3796
      %v6614 = vmul.f32 %v6413, %v3797
      %v6615 = vmul.f32 %v6417, %v3798
      %v6616 = vmul.f32 %v6421, %v3799
      %v6617 = vmul.f32 %v6425, %v3800
      %v6618 = vmul.f32 %v6429, %v3801
      %v6619 = vmul.f32 %v6433, %v3802
      %v6620 = vmul.f32 %v6437, %v3803
      %v6621 = vmul.f32 %v6441, %v3804
      %v6622 = vmul.f32 %v6445, %v3805
      %v6623 = vmul.f32 %v6449, %v3806
      %v6624 = vmul.f32 %v6453, %v3807
      %v6625 = vmul.f32 %v6457, %v3808
      %v6626 = vmul.f32 %v6461, %v3809
      %v6627 = vmul.f32 %v6465, %v3810
      %v6628 = vmul.f32 %v6469, %v3811
      %v6629 = vmul.f32 %v6473, %v3812
      %v6630 = vmul.f32 %v6477, %v3813
      %v6631 = vmul.f32 %v6481, %v3814
      %v6632 = vmul.f32 %v6485, %v3815
      %v6633 = vmul.f32 %v6489, %v3816
      %v6634 = vmul.f32 %v6493, %v3817
      %v6635 = vmul.f32 %v6497, %v3818
      %v6636 = vmul.f32 %v6501, %v3819
      %v6637 = vmul.f32 %v6505, %v3820
      %v6638 = vmul.f32 %v6509, %v3821
      %6767 = vrot.lane.b32.xlu0 %v6511, 125
      %v6768 = vpop.permute.xlu0 %6767
      %6769 = vrot.lane.b32.xlu0 %v6512, 125
      %v6770 = vpop.permute.xlu0 %6769
      %6771 = vrot.lane.b32.xlu0 %v6513, 125
      %v6772 = vpop.permute.xlu0 %6771
      %6773 = vrot.lane.b32.xlu0 %v6514, 125
      %v6774 = vpop.permute.xlu0 %6773
      %6775 = vrot.lane.b32.xlu0 %v6515, 125
      %v6776 = vpop.permute.xlu0 %6775
      %6777 = vrot.lane.b32.xlu0 %v6516, 125
      %v6778 = vpop.permute.xlu0 %6777
      %6779 = vrot.lane.b32.xlu0 %v6517, 125
      %v6780 = vpop.permute.xlu0 %6779
      %6781 = vrot.lane.b32.xlu0 %v6518, 125
      %v6782 = vpop.permute.xlu0 %6781
      %6783 = vrot.lane.b32.xlu0 %v6519, 125
      %v6784 = vpop.permute.xlu0 %6783
      %6785 = vrot.lane.b32.xlu0 %v6520, 125
      %v6786 = vpop.permute.xlu0 %6785
      %6787 = vrot.lane.b32.xlu0 %v6521, 125
      %v6788 = vpop.permute.xlu0 %6787
      %6789 = vrot.lane.b32.xlu0 %v6522, 125
      %v6790 = vpop.permute.xlu0 %6789
      %6791 = vrot.lane.b32.xlu0 %v6523, 125
      %v6792 = vpop.permute.xlu0 %6791
      %6793 = vrot.lane.b32.xlu0 %v6524, 125
      %v6794 = vpop.permute.xlu0 %6793
      %6795 = vrot.lane.b32.xlu0 %v6525, 125
      %v6796 = vpop.permute.xlu0 %6795
      %6797 = vrot.lane.b32.xlu0 %v6526, 125
      %v6798 = vpop.permute.xlu0 %6797
      %6799 = vrot.lane.b32.xlu0 %v6527, 125
      %v6800 = vpop.permute.xlu0 %6799
      %6801 = vrot.lane.b32.xlu0 %v6528, 125
      %v6802 = vpop.permute.xlu0 %6801
      %6803 = vrot.lane.b32.xlu0 %v6529, 125
      %v6804 = vpop.permute.xlu0 %6803
      %6805 = vrot.lane.b32.xlu0 %v6530, 125
      %v6806 = vpop.permute.xlu0 %6805
      %6807 = vrot.lane.b32.xlu0 %v6531, 125
      %v6808 = vpop.permute.xlu0 %6807
      %6809 = vrot.lane.b32.xlu0 %v6532, 125
      %v6810 = vpop.permute.xlu0 %6809
      %6811 = vrot.lane.b32.xlu0 %v6533, 125
      %v6812 = vpop.permute.xlu0 %6811
      %6813 = vrot.lane.b32.xlu0 %v6534, 125
      %v6814 = vpop.permute.xlu0 %6813
      %6815 = vrot.lane.b32.xlu0 %v6535, 125
      %v6816 = vpop.permute.xlu0 %6815
      %6817 = vrot.lane.b32.xlu0 %v6536, 125
      %v6818 = vpop.permute.xlu0 %6817
      %6819 = vrot.lane.b32.xlu0 %v6537, 125
      %v6820 = vpop.permute.xlu0 %6819
      %6821 = vrot.lane.b32.xlu0 %v6538, 125
      %v6822 = vpop.permute.xlu0 %6821
      %6823 = vrot.lane.b32.xlu0 %v6539, 125
      %v6824 = vpop.permute.xlu0 %6823
      %6825 = vrot.lane.b32.xlu0 %v6540, 125
      %v6826 = vpop.permute.xlu0 %6825
      %6827 = vrot.lane.b32.xlu0 %v6541, 125
      %v6828 = vpop.permute.xlu0 %6827
      %6829 = vrot.lane.b32.xlu0 %v6542, 125
      %v6830 = vpop.permute.xlu0 %6829
      %6831 = vrot.lane.b32.xlu0 %v6543, 125
      %v6832 = vpop.permute.xlu0 %6831
      %6833 = vrot.lane.b32.xlu0 %v6544, 125
      %v6834 = vpop.permute.xlu0 %6833
      %6835 = vrot.lane.b32.xlu0 %v6545, 125
      %v6836 = vpop.permute.xlu0 %6835
      %6837 = vrot.lane.b32.xlu0 %v6546, 125
      %v6838 = vpop.permute.xlu0 %6837
      %6839 = vrot.lane.b32.xlu0 %v6547, 125
      %v6840 = vpop.permute.xlu0 %6839
      %6841 = vrot.lane.b32.xlu0 %v6548, 125
      %v6842 = vpop.permute.xlu0 %6841
      %6843 = vrot.lane.b32.xlu0 %v6549, 125
      %v6844 = vpop.permute.xlu0 %6843
      %6845 = vrot.lane.b32.xlu0 %v6550, 125
      %v6846 = vpop.permute.xlu0 %6845
      %6847 = vrot.lane.b32.xlu0 %v6551, 125
      %v6848 = vpop.permute.xlu0 %6847
      %6849 = vrot.lane.b32.xlu0 %v6552, 125
      %v6850 = vpop.permute.xlu0 %6849
      %6851 = vrot.lane.b32.xlu0 %v6553, 125
      %v6852 = vpop.permute.xlu0 %6851
      %6853 = vrot.lane.b32.xlu0 %v6554, 125
      %v6854 = vpop.permute.xlu0 %6853
      %6855 = vrot.lane.b32.xlu0 %v6555, 125
      %v6856 = vpop.permute.xlu0 %6855
      %6857 = vrot.lane.b32.xlu0 %v6556, 125
      %v6858 = vpop.permute.xlu0 %6857
      %6859 = vrot.lane.b32.xlu0 %v6557, 125
      %v6860 = vpop.permute.xlu0 %6859
      %6861 = vrot.lane.b32.xlu0 %v6558, 125
      %v6862 = vpop.permute.xlu0 %6861
      %6863 = vrot.lane.b32.xlu0 %v6559, 125
      %v6864 = vpop.permute.xlu0 %6863
      %6865 = vrot.lane.b32.xlu0 %v6560, 125
      %v6866 = vpop.permute.xlu0 %6865
      %6867 = vrot.lane.b32.xlu0 %v6561, 125
      %v6868 = vpop.permute.xlu0 %6867
      %6869 = vrot.lane.b32.xlu0 %v6562, 125
      %v6870 = vpop.permute.xlu0 %6869
      %6871 = vrot.lane.b32.xlu0 %v6563, 125
      %v6872 = vpop.permute.xlu0 %6871
      %6873 = vrot.lane.b32.xlu0 %v6564, 125
      %v6874 = vpop.permute.xlu0 %6873
      %6875 = vrot.lane.b32.xlu0 %v6565, 125
      %v6876 = vpop.permute.xlu0 %6875
      %6877 = vrot.lane.b32.xlu0 %v6566, 125
      %v6878 = vpop.permute.xlu0 %6877
      %6879 = vrot.lane.b32.xlu0 %v6567, 125
      %v6880 = vpop.permute.xlu0 %6879
      %6881 = vrot.lane.b32.xlu0 %v6568, 125
      %v6882 = vpop.permute.xlu0 %6881
      %6883 = vrot.lane.b32.xlu0 %v6569, 125
      %v6884 = vpop.permute.xlu0 %6883
      %6885 = vrot.lane.b32.xlu0 %v6570, 125
      %v6886 = vpop.permute.xlu0 %6885
      %6887 = vrot.lane.b32.xlu0 %v6571, 125
      %v6888 = vpop.permute.xlu0 %6887
      %6889 = vrot.lane.b32.xlu0 %v6572, 125
      %v6890 = vpop.permute.xlu0 %6889
      %6891 = vrot.lane.b32.xlu0 %v6573, 125
      %v6892 = vpop.permute.xlu0 %6891
      %6893 = vrot.lane.b32.xlu0 %v6574, 125
      %v6894 = vpop.permute.xlu0 %6893
      %6895 = vrot.lane.b32.xlu0 %v6575, 125
      %v6896 = vpop.permute.xlu0 %6895
      %6897 = vrot.lane.b32.xlu0 %v6576, 125
      %v6898 = vpop.permute.xlu0 %6897
      %6899 = vrot.lane.b32.xlu0 %v6577, 125
      %v6900 = vpop.permute.xlu0 %6899
      %6901 = vrot.lane.b32.xlu0 %v6578, 125
      %v6902 = vpop.permute.xlu0 %6901
      %6903 = vrot.lane.b32.xlu0 %v6579, 125
      %v6904 = vpop.permute.xlu0 %6903
      %6905 = vrot.lane.b32.xlu0 %v6580, 125
      %v6906 = vpop.permute.xlu0 %6905
      %6907 = vrot.lane.b32.xlu0 %v6581, 125
      %v6908 = vpop.permute.xlu0 %6907
      %6909 = vrot.lane.b32.xlu0 %v6582, 125
      %v6910 = vpop.permute.xlu0 %6909
      %6911 = vrot.lane.b32.xlu0 %v6583, 125
      %v6912 = vpop.permute.xlu0 %6911
      %6913 = vrot.lane.b32.xlu0 %v6584, 125
      %v6914 = vpop.permute.xlu0 %6913
      %6915 = vrot.lane.b32.xlu0 %v6585, 125
      %v6916 = vpop.permute.xlu0 %6915
      %6917 = vrot.lane.b32.xlu0 %v6586, 125
      %v6918 = vpop.permute.xlu0 %6917
      %6919 = vrot.lane.b32.xlu0 %v6587, 125
      %v6920 = vpop.permute.xlu0 %6919
      %6921 = vrot.lane.b32.xlu0 %v6588, 125
      %v6922 = vpop.permute.xlu0 %6921
      %6923 = vrot.lane.b32.xlu0 %v6589, 125
      %v6924 = vpop.permute.xlu0 %6923
      %6925 = vrot.lane.b32.xlu0 %v6590, 125
      %v6926 = vpop.permute.xlu0 %6925
      %6927 = vrot.lane.b32.xlu0 %v6591, 125
      %v6928 = vpop.permute.xlu0 %6927
      %6929 = vrot.lane.b32.xlu0 %v6592, 125
      %v6930 = vpop.permute.xlu0 %6929
      %6931 = vrot.lane.b32.xlu0 %v6593, 125
      %v6932 = vpop.permute.xlu0 %6931
      %6933 = vrot.lane.b32.xlu0 %v6594, 125
      %v6934 = vpop.permute.xlu0 %6933
      %6935 = vrot.lane.b32.xlu0 %v6595, 125
      %v6936 = vpop.permute.xlu0 %6935
      %6937 = vrot.lane.b32.xlu0 %v6596, 125
      %v6938 = vpop.permute.xlu0 %6937
      %6939 = vrot.lane.b32.xlu0 %v6597, 125
      %v6940 = vpop.permute.xlu0 %6939
      %6941 = vrot.lane.b32.xlu0 %v6598, 125
      %v6942 = vpop.permute.xlu0 %6941
      %6943 = vrot.lane.b32.xlu0 %v6599, 125
      %v6944 = vpop.permute.xlu0 %6943
      %6945 = vrot.lane.b32.xlu0 %v6600, 125
      %v6946 = vpop.permute.xlu0 %6945
      %6947 = vrot.lane.b32.xlu0 %v6601, 125
      %v6948 = vpop.permute.xlu0 %6947
      %6949 = vrot.lane.b32.xlu0 %v6602, 125
      %v6950 = vpop.permute.xlu0 %6949
      %6951 = vrot.lane.b32.xlu0 %v6603, 125
      %v6952 = vpop.permute.xlu0 %6951
      %6953 = vrot.lane.b32.xlu0 %v6604, 125
      %v6954 = vpop.permute.xlu0 %6953
      %6955 = vrot.lane.b32.xlu0 %v6605, 125
      %v6956 = vpop.permute.xlu0 %6955
      %6957 = vrot.lane.b32.xlu0 %v6606, 125
      %v6958 = vpop.permute.xlu0 %6957
      %6959 = vrot.lane.b32.xlu0 %v6607, 125
      %v6960 = vpop.permute.xlu0 %6959
      %6961 = vrot.lane.b32.xlu0 %v6608, 125
      %v6962 = vpop.permute.xlu0 %6961
      %6963 = vrot.lane.b32.xlu0 %v6609, 125
      %v6964 = vpop.permute.xlu0 %6963
      %6965 = vrot.lane.b32.xlu0 %v6610, 125
      %v6966 = vpop.permute.xlu0 %6965
      %6967 = vrot.lane.b32.xlu0 %v6611, 125
      %v6968 = vpop.permute.xlu0 %6967
      %6969 = vrot.lane.b32.xlu0 %v6612, 125
      %v6970 = vpop.permute.xlu0 %6969
      %6971 = vrot.lane.b32.xlu0 %v6613, 125
      %v6972 = vpop.permute.xlu0 %6971
      %6973 = vrot.lane.b32.xlu0 %v6614, 125
      %v6974 = vpop.permute.xlu0 %6973
      %6975 = vrot.lane.b32.xlu0 %v6615, 125
      %v6976 = vpop.permute.xlu0 %6975
      %6977 = vrot.lane.b32.xlu0 %v6616, 125
      %v6978 = vpop.permute.xlu0 %6977
      %6979 = vrot.lane.b32.xlu0 %v6617, 125
      %v6980 = vpop.permute.xlu0 %6979
      %6981 = vrot.lane.b32.xlu0 %v6618, 125
      %v6982 = vpop.permute.xlu0 %6981
      %6983 = vrot.lane.b32.xlu0 %v6619, 125
      %v6984 = vpop.permute.xlu0 %6983
      %6985 = vrot.lane.b32.xlu0 %v6620, 125
      %v6986 = vpop.permute.xlu0 %6985
      %6987 = vrot.lane.b32.xlu0 %v6621, 125
      %v6988 = vpop.permute.xlu0 %6987
      %6989 = vrot.lane.b32.xlu0 %v6622, 125
      %v6990 = vpop.permute.xlu0 %6989
      %6991 = vrot.lane.b32.xlu0 %v6623, 125
      %v6992 = vpop.permute.xlu0 %6991
      %6993 = vrot.lane.b32.xlu0 %v6624, 125
      %v6994 = vpop.permute.xlu0 %6993
      %6995 = vrot.lane.b32.xlu0 %v6625, 125
      %v6996 = vpop.permute.xlu0 %6995
      %6997 = vrot.lane.b32.xlu0 %v6626, 125
      %v6998 = vpop.permute.xlu0 %6997
      %6999 = vrot.lane.b32.xlu0 %v6627, 125
      %v7000 = vpop.permute.xlu0 %6999
      %7001 = vrot.lane.b32.xlu0 %v6628, 125
      %v7002 = vpop.permute.xlu0 %7001
      %7003 = vrot.lane.b32.xlu0 %v6629, 125
      %v7004 = vpop.permute.xlu0 %7003
      %7005 = vrot.lane.b32.xlu0 %v6630, 125
      %v7006 = vpop.permute.xlu0 %7005
      %7007 = vrot.lane.b32.xlu0 %v6631, 125
      %v7008 = vpop.permute.xlu0 %7007
      %7009 = vrot.lane.b32.xlu0 %v6632, 125
      %v7010 = vpop.permute.xlu0 %7009
      %7011 = vrot.lane.b32.xlu0 %v6633, 125
      %v7012 = vpop.permute.xlu0 %7011
      %7013 = vrot.lane.b32.xlu0 %v6634, 125
      %v7014 = vpop.permute.xlu0 %7013
      %7015 = vrot.lane.b32.xlu0 %v6635, 125
      %v7016 = vpop.permute.xlu0 %7015
      %7017 = vrot.lane.b32.xlu0 %v6636, 125
      %v7018 = vpop.permute.xlu0 %7017
      %7019 = vrot.lane.b32.xlu0 %v6637, 125
      %v7020 = vpop.permute.xlu0 %7019
      %7021 = vrot.lane.b32.xlu0 %v6638, 125
      %v7022 = vpop.permute.xlu0 %7021
      %v7151 = vadd.f32 %v5871, %v6768
      %v7152 = vadd.f32 %v5872, %v6770
      %v7153 = vadd.f32 %v5873, %v6772
      %v7154 = vadd.f32 %v5874, %v6774
      %v7155 = vadd.f32 %v5875, %v6776
      %v7156 = vadd.f32 %v5876, %v6778
      %v7157 = vadd.f32 %v5877, %v6780
      %v7158 = vadd.f32 %v5878, %v6782
      %v7159 = vadd.f32 %v5879, %v6784
      %v7160 = vadd.f32 %v5880, %v6786
      %v7161 = vadd.f32 %v5881, %v6788
      %v7162 = vadd.f32 %v5882, %v6790
      %v7163 = vadd.f32 %v5883, %v6792
      %v7164 = vadd.f32 %v5884, %v6794
      %v7165 = vadd.f32 %v5885, %v6796
      %v7166 = vadd.f32 %v5886, %v6798
      %v7167 = vadd.f32 %v5887, %v6800
      %v7168 = vadd.f32 %v5888, %v6802
      %v7169 = vadd.f32 %v5889, %v6804
      %v7170 = vadd.f32 %v5890, %v6806
      %v7171 = vadd.f32 %v5891, %v6808
      %v7172 = vadd.f32 %v5892, %v6810
      %v7173 = vadd.f32 %v5893, %v6812
      %v7174 = vadd.f32 %v5894, %v6814
      %v7175 = vadd.f32 %v5895, %v6816
      %v7176 = vadd.f32 %v5896, %v6818
      %v7177 = vadd.f32 %v5897, %v6820
      %v7178 = vadd.f32 %v5898, %v6822
      %v7179 = vadd.f32 %v5899, %v6824
      %v7180 = vadd.f32 %v5900, %v6826
      %v7181 = vadd.f32 %v5901, %v6828
      %v7182 = vadd.f32 %v5902, %v6830
      %v7183 = vadd.f32 %v5903, %v6832
      %v7184 = vadd.f32 %v5904, %v6834
      %v7185 = vadd.f32 %v5905, %v6836
      %v7186 = vadd.f32 %v5906, %v6838
      %v7187 = vadd.f32 %v5907, %v6840
      %v7188 = vadd.f32 %v5908, %v6842
      %v7189 = vadd.f32 %v5909, %v6844
      %v7190 = vadd.f32 %v5910, %v6846
      %v7191 = vadd.f32 %v5911, %v6848
      %v7192 = vadd.f32 %v5912, %v6850
      %v7193 = vadd.f32 %v5913, %v6852
      %v7194 = vadd.f32 %v5914, %v6854
      %v7195 = vadd.f32 %v5915, %v6856
      %v7196 = vadd.f32 %v5916, %v6858
      %v7197 = vadd.f32 %v5917, %v6860
      %v7198 = vadd.f32 %v5918, %v6862
      %v7199 = vadd.f32 %v5919, %v6864
      %v7200 = vadd.f32 %v5920, %v6866
      %v7201 = vadd.f32 %v5921, %v6868
      %v7202 = vadd.f32 %v5922, %v6870
      %v7203 = vadd.f32 %v5923, %v6872
      %v7204 = vadd.f32 %v5924, %v6874
      %v7205 = vadd.f32 %v5925, %v6876
      %v7206 = vadd.f32 %v5926, %v6878
      %v7207 = vadd.f32 %v5927, %v6880
      %v7208 = vadd.f32 %v5928, %v6882
      %v7209 = vadd.f32 %v5929, %v6884
      %v7210 = vadd.f32 %v5930, %v6886
      %v7211 = vadd.f32 %v5931, %v6888
      %v7212 = vadd.f32 %v5932, %v6890
      %v7213 = vadd.f32 %v5933, %v6892
      %v7214 = vadd.f32 %v5934, %v6894
      %v7215 = vadd.f32 %v5935, %v6896
      %v7216 = vadd.f32 %v5936, %v6898
      %v7217 = vadd.f32 %v5937, %v6900
      %v7218 = vadd.f32 %v5938, %v6902
      %v7219 = vadd.f32 %v5939, %v6904
      %v7220 = vadd.f32 %v5940, %v6906
      %v7221 = vadd.f32 %v5941, %v6908
      %v7222 = vadd.f32 %v5942, %v6910
      %v7223 = vadd.f32 %v5943, %v6912
      %v7224 = vadd.f32 %v5944, %v6914
      %v7225 = vadd.f32 %v5945, %v6916
      %v7226 = vadd.f32 %v5946, %v6918
      %v7227 = vadd.f32 %v5947, %v6920
      %v7228 = vadd.f32 %v5948, %v6922
      %v7229 = vadd.f32 %v5949, %v6924
      %v7230 = vadd.f32 %v5950, %v6926
      %v7231 = vadd.f32 %v5951, %v6928
      %v7232 = vadd.f32 %v5952, %v6930
      %v7233 = vadd.f32 %v5953, %v6932
      %v7234 = vadd.f32 %v5954, %v6934
      %v7235 = vadd.f32 %v5955, %v6936
      %v7236 = vadd.f32 %v5956, %v6938
      %v7237 = vadd.f32 %v5957, %v6940
      %v7238 = vadd.f32 %v5958, %v6942
      %v7239 = vadd.f32 %v5959, %v6944
      %v7240 = vadd.f32 %v5960, %v6946
      %v7241 = vadd.f32 %v5961, %v6948
      %v7242 = vadd.f32 %v5962, %v6950
      %v7243 = vadd.f32 %v5963, %v6952
      %v7244 = vadd.f32 %v5964, %v6954
      %v7245 = vadd.f32 %v5965, %v6956
      %v7246 = vadd.f32 %v5966, %v6958
      %v7247 = vadd.f32 %v5967, %v6960
      %v7248 = vadd.f32 %v5968, %v6962
      %v7249 = vadd.f32 %v5969, %v6964
      %v7250 = vadd.f32 %v5970, %v6966
      %v7251 = vadd.f32 %v5971, %v6968
      %v7252 = vadd.f32 %v5972, %v6970
      %v7253 = vadd.f32 %v5973, %v6972
      %v7254 = vadd.f32 %v5974, %v6974
      %v7255 = vadd.f32 %v5975, %v6976
      %v7256 = vadd.f32 %v5976, %v6978
      %v7257 = vadd.f32 %v5977, %v6980
      %v7258 = vadd.f32 %v5978, %v6982
      %v7259 = vadd.f32 %v5979, %v6984
      %v7260 = vadd.f32 %v5980, %v6986
      %v7261 = vadd.f32 %v5981, %v6988
      %v7262 = vadd.f32 %v5982, %v6990
      %v7263 = vadd.f32 %v5983, %v6992
      %v7264 = vadd.f32 %v5984, %v6994
      %v7265 = vadd.f32 %v5985, %v6996
      %v7266 = vadd.f32 %v5986, %v6998
      %v7267 = vadd.f32 %v5987, %v7000
      %v7268 = vadd.f32 %v5988, %v7002
      %v7269 = vadd.f32 %v5989, %v7004
      %v7270 = vadd.f32 %v5990, %v7006
      %v7271 = vadd.f32 %v5991, %v7008
      %v7272 = vadd.f32 %v5992, %v7010
      %v7273 = vadd.f32 %v5993, %v7012
      %v7274 = vadd.f32 %v5994, %v7014
      %v7275 = vadd.f32 %v5995, %v7016
      %v7276 = vadd.f32 %v5996, %v7018
      %v7277 = vadd.f32 %v5997, %v7020
      %v7278 = vadd.f32 %v5998, %v7022
      %v7279 = vld [vmem:[%s437] sm:$0xff]
      %v7280 = vld [vmem:[%s437 + $0x8] sm:$0xff]
      %v7281 = vld [vmem:[%s437 + $0x10] sm:$0xff]
      %v7282 = vld [vmem:[%s437 + $0x18] sm:$0xff]
      %v7283 = vld [vmem:[%s437 + $0x20] sm:$0xff]
      %v7284 = vld [vmem:[%s437 + $0x28] sm:$0xff]
      %v7285 = vld [vmem:[%s437 + $0x30] sm:$0xff]
      %v7286 = vld [vmem:[%s437 + $0x38] sm:$0xff]
      %v7287 = vld [vmem:[%s437 + $0x40] sm:$0xff]
      %v7288 = vld [vmem:[%s437 + $0x48] sm:$0xff]
      %v7289 = vld [vmem:[%s437 + $0x50] sm:$0xff]
      %v7290 = vld [vmem:[%s437 + $0x58] sm:$0xff]
      %v7291 = vld [vmem:[%s437 + $0x60] sm:$0xff]
      %v7292 = vld [vmem:[%s437 + $0x68] sm:$0xff]
      %v7293 = vld [vmem:[%s437 + $0x70] sm:$0xff]
      %v7294 = vld [vmem:[%s437 + $0x78] sm:$0xff]
      %v7295 = vld [vmem:[%s437 + $0x80] sm:$0xff]
      %v7296 = vld [vmem:[%s437 + $0x88] sm:$0xff]
      %v7297 = vld [vmem:[%s437 + $0x90] sm:$0xff]
      %v7298 = vld [vmem:[%s437 + $0x98] sm:$0xff]
      %v7299 = vld [vmem:[%s437 + $0xa0] sm:$0xff]
      %v7300 = vld [vmem:[%s437 + $0xa8] sm:$0xff]
      %v7301 = vld [vmem:[%s437 + $0xb0] sm:$0xff]
      %v7302 = vld [vmem:[%s437 + $0xb8] sm:$0xff]
      %v7303 = vld [vmem:[%s437 + $0xc0] sm:$0xff]
      %v7304 = vld [vmem:[%s437 + $0xc8] sm:$0xff]
      %v7305 = vld [vmem:[%s437 + $0xd0] sm:$0xff]
      %v7306 = vld [vmem:[%s437 + $0xd8] sm:$0xff]
      %v7307 = vld [vmem:[%s437 + $0xe0] sm:$0xff]
      %v7308 = vld [vmem:[%s437 + $0xe8] sm:$0xff]
      %v7309 = vld [vmem:[%s437 + $0xf0] sm:$0xff]
      %v7310 = vld [vmem:[%s437 + $0xf8] sm:$0xff]
      %v7311 = vld [vmem:[%s437 + $0x100] sm:$0xff]
      %v7312 = vld [vmem:[%s437 + $0x108] sm:$0xff]
      %v7313 = vld [vmem:[%s437 + $0x110] sm:$0xff]
      %v7314 = vld [vmem:[%s437 + $0x118] sm:$0xff]
      %v7315 = vld [vmem:[%s437 + $0x120] sm:$0xff]
      %v7316 = vld [vmem:[%s437 + $0x128] sm:$0xff]
      %v7317 = vld [vmem:[%s437 + $0x130] sm:$0xff]
      %v7318 = vld [vmem:[%s437 + $0x138] sm:$0xff]
      %v7319 = vld [vmem:[%s437 + $0x140] sm:$0xff]
      %v7320 = vld [vmem:[%s437 + $0x148] sm:$0xff]
      %v7321 = vld [vmem:[%s437 + $0x150] sm:$0xff]
      %v7322 = vld [vmem:[%s437 + $0x158] sm:$0xff]
      %v7323 = vld [vmem:[%s437 + $0x160] sm:$0xff]
      %v7324 = vld [vmem:[%s437 + $0x168] sm:$0xff]
      %v7325 = vld [vmem:[%s437 + $0x170] sm:$0xff]
      %v7326 = vld [vmem:[%s437 + $0x178] sm:$0xff]
      %v7327 = vld [vmem:[%s437 + $0x180] sm:$0xff]
      %v7328 = vld [vmem:[%s437 + $0x188] sm:$0xff]
      %v7329 = vld [vmem:[%s437 + $0x190] sm:$0xff]
      %v7330 = vld [vmem:[%s437 + $0x198] sm:$0xff]
      %v7331 = vld [vmem:[%s437 + $0x1a0] sm:$0xff]
      %v7332 = vld [vmem:[%s437 + $0x1a8] sm:$0xff]
      %v7333 = vld [vmem:[%s437 + $0x1b0] sm:$0xff]
      %v7334 = vld [vmem:[%s437 + $0x1b8] sm:$0xff]
      %v7335 = vld [vmem:[%s437 + $0x1c0] sm:$0xff]
      %v7336 = vld [vmem:[%s437 + $0x1c8] sm:$0xff]
      %v7337 = vld [vmem:[%s437 + $0x1d0] sm:$0xff]
      %v7338 = vld [vmem:[%s437 + $0x1d8] sm:$0xff]
      %v7339 = vld [vmem:[%s437 + $0x1e0] sm:$0xff]
      %v7340 = vld [vmem:[%s437 + $0x1e8] sm:$0xff]
      %v7341 = vld [vmem:[%s437 + $0x1f0] sm:$0xff]
      %v7342 = vld [vmem:[%s437 + $0x1f8] sm:$0xff]
      %v7343 = vld [vmem:[%s437 + $0x200] sm:$0xff]
      %v7344 = vld [vmem:[%s437 + $0x208] sm:$0xff]
      %v7345 = vld [vmem:[%s437 + $0x210] sm:$0xff]
      %v7346 = vld [vmem:[%s437 + $0x218] sm:$0xff]
      %v7347 = vld [vmem:[%s437 + $0x220] sm:$0xff]
      %v7348 = vld [vmem:[%s437 + $0x228] sm:$0xff]
      %v7349 = vld [vmem:[%s437 + $0x230] sm:$0xff]
      %v7350 = vld [vmem:[%s437 + $0x238] sm:$0xff]
      %v7351 = vld [vmem:[%s437 + $0x240] sm:$0xff]
      %v7352 = vld [vmem:[%s437 + $0x248] sm:$0xff]
      %v7353 = vld [vmem:[%s437 + $0x250] sm:$0xff]
      %v7354 = vld [vmem:[%s437 + $0x258] sm:$0xff]
      %v7355 = vld [vmem:[%s437 + $0x260] sm:$0xff]
      %v7356 = vld [vmem:[%s437 + $0x268] sm:$0xff]
      %v7357 = vld [vmem:[%s437 + $0x270] sm:$0xff]
      %v7358 = vld [vmem:[%s437 + $0x278] sm:$0xff]
      %v7359 = vld [vmem:[%s437 + $0x280] sm:$0xff]
      %v7360 = vld [vmem:[%s437 + $0x288] sm:$0xff]
      %v7361 = vld [vmem:[%s437 + $0x290] sm:$0xff]
      %v7362 = vld [vmem:[%s437 + $0x298] sm:$0xff]
      %v7363 = vld [vmem:[%s437 + $0x2a0] sm:$0xff]
      %v7364 = vld [vmem:[%s437 + $0x2a8] sm:$0xff]
      %v7365 = vld [vmem:[%s437 + $0x2b0] sm:$0xff]
      %v7366 = vld [vmem:[%s437 + $0x2b8] sm:$0xff]
      %v7367 = vld [vmem:[%s437 + $0x2c0] sm:$0xff]
      %v7368 = vld [vmem:[%s437 + $0x2c8] sm:$0xff]
      %v7369 = vld [vmem:[%s437 + $0x2d0] sm:$0xff]
      %v7370 = vld [vmem:[%s437 + $0x2d8] sm:$0xff]
      %v7371 = vld [vmem:[%s437 + $0x2e0] sm:$0xff]
      %v7372 = vld [vmem:[%s437 + $0x2e8] sm:$0xff]
      %v7373 = vld [vmem:[%s437 + $0x2f0] sm:$0xff]
      %v7374 = vld [vmem:[%s437 + $0x2f8] sm:$0xff]
      %v7375 = vld [vmem:[%s437 + $0x300] sm:$0xff]
      %v7376 = vld [vmem:[%s437 + $0x308] sm:$0xff]
      %v7377 = vld [vmem:[%s437 + $0x310] sm:$0xff]
      %v7378 = vld [vmem:[%s437 + $0x318] sm:$0xff]
      %v7379 = vld [vmem:[%s437 + $0x320] sm:$0xff]
      %v7380 = vld [vmem:[%s437 + $0x328] sm:$0xff]
      %v7381 = vld [vmem:[%s437 + $0x330] sm:$0xff]
      %v7382 = vld [vmem:[%s437 + $0x338] sm:$0xff]
      %v7383 = vld [vmem:[%s437 + $0x340] sm:$0xff]
      %v7384 = vld [vmem:[%s437 + $0x348] sm:$0xff]
      %v7385 = vld [vmem:[%s437 + $0x350] sm:$0xff]
      %v7386 = vld [vmem:[%s437 + $0x358] sm:$0xff]
      %v7387 = vld [vmem:[%s437 + $0x360] sm:$0xff]
      %v7388 = vld [vmem:[%s437 + $0x368] sm:$0xff]
      %v7389 = vld [vmem:[%s437 + $0x370] sm:$0xff]
      %v7390 = vld [vmem:[%s437 + $0x378] sm:$0xff]
      %v7391 = vld [vmem:[%s437 + $0x380] sm:$0xff]
      %v7392 = vld [vmem:[%s437 + $0x388] sm:$0xff]
      %v7393 = vld [vmem:[%s437 + $0x390] sm:$0xff]
      %v7394 = vld [vmem:[%s437 + $0x398] sm:$0xff]
      %v7395 = vld [vmem:[%s437 + $0x3a0] sm:$0xff]
      %v7396 = vld [vmem:[%s437 + $0x3a8] sm:$0xff]
      %v7397 = vld [vmem:[%s437 + $0x3b0] sm:$0xff]
      %v7398 = vld [vmem:[%s437 + $0x3b8] sm:$0xff]
      %v7399 = vld [vmem:[%s437 + $0x3c0] sm:$0xff]
      %v7400 = vld [vmem:[%s437 + $0x3c8] sm:$0xff]
      %v7401 = vld [vmem:[%s437 + $0x3d0] sm:$0xff]
      %v7402 = vld [vmem:[%s437 + $0x3d8] sm:$0xff]
      %v7403 = vld [vmem:[%s437 + $0x3e0] sm:$0xff]
      %v7404 = vld [vmem:[%s437 + $0x3e8] sm:$0xff]
      %v7405 = vld [vmem:[%s437 + $0x3f0] sm:$0xff]
      %v7406 = vld [vmem:[%s437 + $0x3f8] sm:$0xff]
      %7535 = vrot.lane.b32.xlu0 %v7279, 2
      %v7536 = vpop.permute.xlu0 %7535
      %7537 = vrot.lane.b32.xlu0 %v7280, 2
      %v7538 = vpop.permute.xlu0 %7537
      %7539 = vrot.lane.b32.xlu0 %v7281, 2
      %v7540 = vpop.permute.xlu0 %7539
      %7541 = vrot.lane.b32.xlu0 %v7282, 2
      %v7542 = vpop.permute.xlu0 %7541
      %7543 = vrot.lane.b32.xlu0 %v7283, 2
      %v7544 = vpop.permute.xlu0 %7543
      %7545 = vrot.lane.b32.xlu0 %v7284, 2
      %v7546 = vpop.permute.xlu0 %7545
      %7547 = vrot.lane.b32.xlu0 %v7285, 2
      %v7548 = vpop.permute.xlu0 %7547
      %7549 = vrot.lane.b32.xlu0 %v7286, 2
      %v7550 = vpop.permute.xlu0 %7549
      %7551 = vrot.lane.b32.xlu0 %v7287, 2
      %v7552 = vpop.permute.xlu0 %7551
      %7553 = vrot.lane.b32.xlu0 %v7288, 2
      %v7554 = vpop.permute.xlu0 %7553
      %7555 = vrot.lane.b32.xlu0 %v7289, 2
      %v7556 = vpop.permute.xlu0 %7555
      %7557 = vrot.lane.b32.xlu0 %v7290, 2
      %v7558 = vpop.permute.xlu0 %7557
      %7559 = vrot.lane.b32.xlu0 %v7291, 2
      %v7560 = vpop.permute.xlu0 %7559
      %7561 = vrot.lane.b32.xlu0 %v7292, 2
      %v7562 = vpop.permute.xlu0 %7561
      %7563 = vrot.lane.b32.xlu0 %v7293, 2
      %v7564 = vpop.permute.xlu0 %7563
      %7565 = vrot.lane.b32.xlu0 %v7294, 2
      %v7566 = vpop.permute.xlu0 %7565
      %7567 = vrot.lane.b32.xlu0 %v7295, 2
      %v7568 = vpop.permute.xlu0 %7567
      %7569 = vrot.lane.b32.xlu0 %v7296, 2
      %v7570 = vpop.permute.xlu0 %7569
      %7571 = vrot.lane.b32.xlu0 %v7297, 2
      %v7572 = vpop.permute.xlu0 %7571
      %7573 = vrot.lane.b32.xlu0 %v7298, 2
      %v7574 = vpop.permute.xlu0 %7573
      %7575 = vrot.lane.b32.xlu0 %v7299, 2
      %v7576 = vpop.permute.xlu0 %7575
      %7577 = vrot.lane.b32.xlu0 %v7300, 2
      %v7578 = vpop.permute.xlu0 %7577
      %7579 = vrot.lane.b32.xlu0 %v7301, 2
      %v7580 = vpop.permute.xlu0 %7579
      %7581 = vrot.lane.b32.xlu0 %v7302, 2
      %v7582 = vpop.permute.xlu0 %7581
      %7583 = vrot.lane.b32.xlu0 %v7303, 2
      %v7584 = vpop.permute.xlu0 %7583
      %7585 = vrot.lane.b32.xlu0 %v7304, 2
      %v7586 = vpop.permute.xlu0 %7585
      %7587 = vrot.lane.b32.xlu0 %v7305, 2
      %v7588 = vpop.permute.xlu0 %7587
      %7589 = vrot.lane.b32.xlu0 %v7306, 2
      %v7590 = vpop.permute.xlu0 %7589
      %7591 = vrot.lane.b32.xlu0 %v7307, 2
      %v7592 = vpop.permute.xlu0 %7591
      %7593 = vrot.lane.b32.xlu0 %v7308, 2
      %v7594 = vpop.permute.xlu0 %7593
      %7595 = vrot.lane.b32.xlu0 %v7309, 2
      %v7596 = vpop.permute.xlu0 %7595
      %7597 = vrot.lane.b32.xlu0 %v7310, 2
      %v7598 = vpop.permute.xlu0 %7597
      %7599 = vrot.lane.b32.xlu0 %v7311, 2
      %v7600 = vpop.permute.xlu0 %7599
      %7601 = vrot.lane.b32.xlu0 %v7312, 2
      %v7602 = vpop.permute.xlu0 %7601
      %7603 = vrot.lane.b32.xlu0 %v7313, 2
      %v7604 = vpop.permute.xlu0 %7603
      %7605 = vrot.lane.b32.xlu0 %v7314, 2
      %v7606 = vpop.permute.xlu0 %7605
      %7607 = vrot.lane.b32.xlu0 %v7315, 2
      %v7608 = vpop.permute.xlu0 %7607
      %7609 = vrot.lane.b32.xlu0 %v7316, 2
      %v7610 = vpop.permute.xlu0 %7609
      %7611 = vrot.lane.b32.xlu0 %v7317, 2
      %v7612 = vpop.permute.xlu0 %7611
      %7613 = vrot.lane.b32.xlu0 %v7318, 2
      %v7614 = vpop.permute.xlu0 %7613
      %7615 = vrot.lane.b32.xlu0 %v7319, 2
      %v7616 = vpop.permute.xlu0 %7615
      %7617 = vrot.lane.b32.xlu0 %v7320, 2
      %v7618 = vpop.permute.xlu0 %7617
      %7619 = vrot.lane.b32.xlu0 %v7321, 2
      %v7620 = vpop.permute.xlu0 %7619
      %7621 = vrot.lane.b32.xlu0 %v7322, 2
      %v7622 = vpop.permute.xlu0 %7621
      %7623 = vrot.lane.b32.xlu0 %v7323, 2
      %v7624 = vpop.permute.xlu0 %7623
      %7625 = vrot.lane.b32.xlu0 %v7324, 2
      %v7626 = vpop.permute.xlu0 %7625
      %7627 = vrot.lane.b32.xlu0 %v7325, 2
      %v7628 = vpop.permute.xlu0 %7627
      %7629 = vrot.lane.b32.xlu0 %v7326, 2
      %v7630 = vpop.permute.xlu0 %7629
      %7631 = vrot.lane.b32.xlu0 %v7327, 2
      %v7632 = vpop.permute.xlu0 %7631
      %7633 = vrot.lane.b32.xlu0 %v7328, 2
      %v7634 = vpop.permute.xlu0 %7633
      %7635 = vrot.lane.b32.xlu0 %v7329, 2
      %v7636 = vpop.permute.xlu0 %7635
      %7637 = vrot.lane.b32.xlu0 %v7330, 2
      %v7638 = vpop.permute.xlu0 %7637
      %7639 = vrot.lane.b32.xlu0 %v7331, 2
      %v7640 = vpop.permute.xlu0 %7639
      %7641 = vrot.lane.b32.xlu0 %v7332, 2
      %v7642 = vpop.permute.xlu0 %7641
      %7643 = vrot.lane.b32.xlu0 %v7333, 2
      %v7644 = vpop.permute.xlu0 %7643
      %7645 = vrot.lane.b32.xlu0 %v7334, 2
      %v7646 = vpop.permute.xlu0 %7645
      %7647 = vrot.lane.b32.xlu0 %v7335, 2
      %v7648 = vpop.permute.xlu0 %7647
      %7649 = vrot.lane.b32.xlu0 %v7336, 2
      %v7650 = vpop.permute.xlu0 %7649
      %7651 = vrot.lane.b32.xlu0 %v7337, 2
      %v7652 = vpop.permute.xlu0 %7651
      %7653 = vrot.lane.b32.xlu0 %v7338, 2
      %v7654 = vpop.permute.xlu0 %7653
      %7655 = vrot.lane.b32.xlu0 %v7339, 2
      %v7656 = vpop.permute.xlu0 %7655
      %7657 = vrot.lane.b32.xlu0 %v7340, 2
      %v7658 = vpop.permute.xlu0 %7657
      %7659 = vrot.lane.b32.xlu0 %v7341, 2
      %v7660 = vpop.permute.xlu0 %7659
      %7661 = vrot.lane.b32.xlu0 %v7342, 2
      %v7662 = vpop.permute.xlu0 %7661
      %7663 = vrot.lane.b32.xlu0 %v7343, 2
      %v7664 = vpop.permute.xlu0 %7663
      %7665 = vrot.lane.b32.xlu0 %v7344, 2
      %v7666 = vpop.permute.xlu0 %7665
      %7667 = vrot.lane.b32.xlu0 %v7345, 2
      %v7668 = vpop.permute.xlu0 %7667
      %7669 = vrot.lane.b32.xlu0 %v7346, 2
      %v7670 = vpop.permute.xlu0 %7669
      %7671 = vrot.lane.b32.xlu0 %v7347, 2
      %v7672 = vpop.permute.xlu0 %7671
      %7673 = vrot.lane.b32.xlu0 %v7348, 2
      %v7674 = vpop.permute.xlu0 %7673
      %7675 = vrot.lane.b32.xlu0 %v7349, 2
      %v7676 = vpop.permute.xlu0 %7675
      %7677 = vrot.lane.b32.xlu0 %v7350, 2
      %v7678 = vpop.permute.xlu0 %7677
      %7679 = vrot.lane.b32.xlu0 %v7351, 2
      %v7680 = vpop.permute.xlu0 %7679
      %7681 = vrot.lane.b32.xlu0 %v7352, 2
      %v7682 = vpop.permute.xlu0 %7681
      %7683 = vrot.lane.b32.xlu0 %v7353, 2
      %v7684 = vpop.permute.xlu0 %7683
      %7685 = vrot.lane.b32.xlu0 %v7354, 2
      %v7686 = vpop.permute.xlu0 %7685
      %7687 = vrot.lane.b32.xlu0 %v7355, 2
      %v7688 = vpop.permute.xlu0 %7687
      %7689 = vrot.lane.b32.xlu0 %v7356, 2
      %v7690 = vpop.permute.xlu0 %7689
      %7691 = vrot.lane.b32.xlu0 %v7357, 2
      %v7692 = vpop.permute.xlu0 %7691
      %7693 = vrot.lane.b32.xlu0 %v7358, 2
      %v7694 = vpop.permute.xlu0 %7693
      %7695 = vrot.lane.b32.xlu0 %v7359, 2
      %v7696 = vpop.permute.xlu0 %7695
      %7697 = vrot.lane.b32.xlu0 %v7360, 2
      %v7698 = vpop.permute.xlu0 %7697
      %7699 = vrot.lane.b32.xlu0 %v7361, 2
      %v7700 = vpop.permute.xlu0 %7699
      %7701 = vrot.lane.b32.xlu0 %v7362, 2
      %v7702 = vpop.permute.xlu0 %7701
      %7703 = vrot.lane.b32.xlu0 %v7363, 2
      %v7704 = vpop.permute.xlu0 %7703
      %7705 = vrot.lane.b32.xlu0 %v7364, 2
      %v7706 = vpop.permute.xlu0 %7705
      %7707 = vrot.lane.b32.xlu0 %v7365, 2
      %v7708 = vpop.permute.xlu0 %7707
      %7709 = vrot.lane.b32.xlu0 %v7366, 2
      %v7710 = vpop.permute.xlu0 %7709
      %7711 = vrot.lane.b32.xlu0 %v7367, 2
      %v7712 = vpop.permute.xlu0 %7711
      %7713 = vrot.lane.b32.xlu0 %v7368, 2
      %v7714 = vpop.permute.xlu0 %7713
      %7715 = vrot.lane.b32.xlu0 %v7369, 2
      %v7716 = vpop.permute.xlu0 %7715
      %7717 = vrot.lane.b32.xlu0 %v7370, 2
      %v7718 = vpop.permute.xlu0 %7717
      %7719 = vrot.lane.b32.xlu0 %v7371, 2
      %v7720 = vpop.permute.xlu0 %7719
      %7721 = vrot.lane.b32.xlu0 %v7372, 2
      %v7722 = vpop.permute.xlu0 %7721
      %7723 = vrot.lane.b32.xlu0 %v7373, 2
      %v7724 = vpop.permute.xlu0 %7723
      %7725 = vrot.lane.b32.xlu0 %v7374, 2
      %v7726 = vpop.permute.xlu0 %7725
      %7727 = vrot.lane.b32.xlu0 %v7375, 2
      %v7728 = vpop.permute.xlu0 %7727
      %7729 = vrot.lane.b32.xlu0 %v7376, 2
      %v7730 = vpop.permute.xlu0 %7729
      %7731 = vrot.lane.b32.xlu0 %v7377, 2
      %v7732 = vpop.permute.xlu0 %7731
      %7733 = vrot.lane.b32.xlu0 %v7378, 2
      %v7734 = vpop.permute.xlu0 %7733
      %7735 = vrot.lane.b32.xlu0 %v7379, 2
      %v7736 = vpop.permute.xlu0 %7735
      %7737 = vrot.lane.b32.xlu0 %v7380, 2
      %v7738 = vpop.permute.xlu0 %7737
      %7739 = vrot.lane.b32.xlu0 %v7381, 2
      %v7740 = vpop.permute.xlu0 %7739
      %7741 = vrot.lane.b32.xlu0 %v7382, 2
      %v7742 = vpop.permute.xlu0 %7741
      %7743 = vrot.lane.b32.xlu0 %v7383, 2
      %v7744 = vpop.permute.xlu0 %7743
      %7745 = vrot.lane.b32.xlu0 %v7384, 2
      %v7746 = vpop.permute.xlu0 %7745
      %7747 = vrot.lane.b32.xlu0 %v7385, 2
      %v7748 = vpop.permute.xlu0 %7747
      %7749 = vrot.lane.b32.xlu0 %v7386, 2
      %v7750 = vpop.permute.xlu0 %7749
      %7751 = vrot.lane.b32.xlu0 %v7387, 2
      %v7752 = vpop.permute.xlu0 %7751
      %7753 = vrot.lane.b32.xlu0 %v7388, 2
      %v7754 = vpop.permute.xlu0 %7753
      %7755 = vrot.lane.b32.xlu0 %v7389, 2
      %v7756 = vpop.permute.xlu0 %7755
      %7757 = vrot.lane.b32.xlu0 %v7390, 2
      %v7758 = vpop.permute.xlu0 %7757
      %7759 = vrot.lane.b32.xlu0 %v7391, 2
      %v7760 = vpop.permute.xlu0 %7759
      %7761 = vrot.lane.b32.xlu0 %v7392, 2
      %v7762 = vpop.permute.xlu0 %7761
      %7763 = vrot.lane.b32.xlu0 %v7393, 2
      %v7764 = vpop.permute.xlu0 %7763
      %7765 = vrot.lane.b32.xlu0 %v7394, 2
      %v7766 = vpop.permute.xlu0 %7765
      %7767 = vrot.lane.b32.xlu0 %v7395, 2
      %v7768 = vpop.permute.xlu0 %7767
      %7769 = vrot.lane.b32.xlu0 %v7396, 2
      %v7770 = vpop.permute.xlu0 %7769
      %7771 = vrot.lane.b32.xlu0 %v7397, 2
      %v7772 = vpop.permute.xlu0 %7771
      %7773 = vrot.lane.b32.xlu0 %v7398, 2
      %v7774 = vpop.permute.xlu0 %7773
      %7775 = vrot.lane.b32.xlu0 %v7399, 2
      %v7776 = vpop.permute.xlu0 %7775
      %7777 = vrot.lane.b32.xlu0 %v7400, 2
      %v7778 = vpop.permute.xlu0 %7777
      %7779 = vrot.lane.b32.xlu0 %v7401, 2
      %v7780 = vpop.permute.xlu0 %7779
      %7781 = vrot.lane.b32.xlu0 %v7402, 2
      %v7782 = vpop.permute.xlu0 %7781
      %7783 = vrot.lane.b32.xlu0 %v7403, 2
      %v7784 = vpop.permute.xlu0 %7783
      %7785 = vrot.lane.b32.xlu0 %v7404, 2
      %v7786 = vpop.permute.xlu0 %7785
      %7787 = vrot.lane.b32.xlu0 %v7405, 2
      %v7788 = vpop.permute.xlu0 %7787
      %7789 = vrot.lane.b32.xlu0 %v7406, 2
      %v7790 = vpop.permute.xlu0 %7789
      %v7919 = vadd.f32 %v7151, %v7536
      %v7920 = vadd.f32 %v7152, %v7538
      %v7921 = vadd.f32 %v7153, %v7540
      %v7922 = vadd.f32 %v7154, %v7542
      %v7923 = vadd.f32 %v7155, %v7544
      %v7924 = vadd.f32 %v7156, %v7546
      %v7925 = vadd.f32 %v7157, %v7548
      %v7926 = vadd.f32 %v7158, %v7550
      %v7927 = vadd.f32 %v7159, %v7552
      %v7928 = vadd.f32 %v7160, %v7554
      %v7929 = vadd.f32 %v7161, %v7556
      %v7930 = vadd.f32 %v7162, %v7558
      %v7931 = vadd.f32 %v7163, %v7560
      %v7932 = vadd.f32 %v7164, %v7562
      %v7933 = vadd.f32 %v7165, %v7564
      %v7934 = vadd.f32 %v7166, %v7566
      %v7935 = vadd.f32 %v7167, %v7568
      %v7936 = vadd.f32 %v7168, %v7570
      %v7937 = vadd.f32 %v7169, %v7572
      %v7938 = vadd.f32 %v7170, %v7574
      %v7939 = vadd.f32 %v7171, %v7576
      %v7940 = vadd.f32 %v7172, %v7578
      %v7941 = vadd.f32 %v7173, %v7580
      %v7942 = vadd.f32 %v7174, %v7582
      %v7943 = vadd.f32 %v7175, %v7584
      %v7944 = vadd.f32 %v7176, %v7586
      %v7945 = vadd.f32 %v7177, %v7588
      %v7946 = vadd.f32 %v7178, %v7590
      %v7947 = vadd.f32 %v7179, %v7592
      %v7948 = vadd.f32 %v7180, %v7594
      %v7949 = vadd.f32 %v7181, %v7596
      %v7950 = vadd.f32 %v7182, %v7598
      %v7951 = vadd.f32 %v7183, %v7600
      %v7952 = vadd.f32 %v7184, %v7602
      %v7953 = vadd.f32 %v7185, %v7604
      %v7954 = vadd.f32 %v7186, %v7606
      %v7955 = vadd.f32 %v7187, %v7608
      %v7956 = vadd.f32 %v7188, %v7610
      %v7957 = vadd.f32 %v7189, %v7612
      %v7958 = vadd.f32 %v7190, %v7614
      %v7959 = vadd.f32 %v7191, %v7616
      %v7960 = vadd.f32 %v7192, %v7618
      %v7961 = vadd.f32 %v7193, %v7620
      %v7962 = vadd.f32 %v7194, %v7622
      %v7963 = vadd.f32 %v7195, %v7624
      %v7964 = vadd.f32 %v7196, %v7626
      %v7965 = vadd.f32 %v7197, %v7628
      %v7966 = vadd.f32 %v7198, %v7630
      %v7967 = vadd.f32 %v7199, %v7632
      %v7968 = vadd.f32 %v7200, %v7634
      %v7969 = vadd.f32 %v7201, %v7636
      %v7970 = vadd.f32 %v7202, %v7638
      %v7971 = vadd.f32 %v7203, %v7640
      %v7972 = vadd.f32 %v7204, %v7642
      %v7973 = vadd.f32 %v7205, %v7644
      %v7974 = vadd.f32 %v7206, %v7646
      %v7975 = vadd.f32 %v7207, %v7648
      %v7976 = vadd.f32 %v7208, %v7650
      %v7977 = vadd.f32 %v7209, %v7652
      %v7978 = vadd.f32 %v7210, %v7654
      %v7979 = vadd.f32 %v7211, %v7656
      %v7980 = vadd.f32 %v7212, %v7658
      %v7981 = vadd.f32 %v7213, %v7660
      %v7982 = vadd.f32 %v7214, %v7662
      %v7983 = vadd.f32 %v7215, %v7664
      %v7984 = vadd.f32 %v7216, %v7666
      %v7985 = vadd.f32 %v7217, %v7668
      %v7986 = vadd.f32 %v7218, %v7670
      %v7987 = vadd.f32 %v7219, %v7672
      %v7988 = vadd.f32 %v7220, %v7674
      %v7989 = vadd.f32 %v7221, %v7676
      %v7990 = vadd.f32 %v7222, %v7678
      %v7991 = vadd.f32 %v7223, %v7680
      %v7992 = vadd.f32 %v7224, %v7682
      %v7993 = vadd.f32 %v7225, %v7684
      %v7994 = vadd.f32 %v7226, %v7686
      %v7995 = vadd.f32 %v7227, %v7688
      %v7996 = vadd.f32 %v7228, %v7690
      %v7997 = vadd.f32 %v7229, %v7692
      %v7998 = vadd.f32 %v7230, %v7694
      %v7999 = vadd.f32 %v7231, %v7696
      %v8000 = vadd.f32 %v7232, %v7698
      %v8001 = vadd.f32 %v7233, %v7700
      %v8002 = vadd.f32 %v7234, %v7702
      %v8003 = vadd.f32 %v7235, %v7704
      %v8004 = vadd.f32 %v7236, %v7706
      %v8005 = vadd.f32 %v7237, %v7708
      %v8006 = vadd.f32 %v7238, %v7710
      %v8007 = vadd.f32 %v7239, %v7712
      %v8008 = vadd.f32 %v7240, %v7714
      %v8009 = vadd.f32 %v7241, %v7716
      %v8010 = vadd.f32 %v7242, %v7718
      %v8011 = vadd.f32 %v7243, %v7720
      %v8012 = vadd.f32 %v7244, %v7722
      %v8013 = vadd.f32 %v7245, %v7724
      %v8014 = vadd.f32 %v7246, %v7726
      %v8015 = vadd.f32 %v7247, %v7728
      %v8016 = vadd.f32 %v7248, %v7730
      %v8017 = vadd.f32 %v7249, %v7732
      %v8018 = vadd.f32 %v7250, %v7734
      %v8019 = vadd.f32 %v7251, %v7736
      %v8020 = vadd.f32 %v7252, %v7738
      %v8021 = vadd.f32 %v7253, %v7740
      %v8022 = vadd.f32 %v7254, %v7742
      %v8023 = vadd.f32 %v7255, %v7744
      %v8024 = vadd.f32 %v7256, %v7746
      %v8025 = vadd.f32 %v7257, %v7748
      %v8026 = vadd.f32 %v7258, %v7750
      %v8027 = vadd.f32 %v7259, %v7752
      %v8028 = vadd.f32 %v7260, %v7754
      %v8029 = vadd.f32 %v7261, %v7756
      %v8030 = vadd.f32 %v7262, %v7758
      %v8031 = vadd.f32 %v7263, %v7760
      %v8032 = vadd.f32 %v7264, %v7762
      %v8033 = vadd.f32 %v7265, %v7764
      %v8034 = vadd.f32 %v7266, %v7766
      %v8035 = vadd.f32 %v7267, %v7768
      %v8036 = vadd.f32 %v7268, %v7770
      %v8037 = vadd.f32 %v7269, %v7772
      %v8038 = vadd.f32 %v7270, %v7774
      %v8039 = vadd.f32 %v7271, %v7776
      %v8040 = vadd.f32 %v7272, %v7778
      %v8041 = vadd.f32 %v7273, %v7780
      %v8042 = vadd.f32 %v7274, %v7782
      %v8043 = vadd.f32 %v7275, %v7784
      %v8044 = vadd.f32 %v7276, %v7786
      %v8045 = vadd.f32 %v7277, %v7788
      %v8046 = vadd.f32 %v7278, %v7790
      %8175 = vrot.lane.b32.xlu0 %v7919, 126
      %v8176 = vpop.permute.xlu0 %8175
      %8177 = vrot.lane.b32.xlu0 %v7920, 126
      %v8178 = vpop.permute.xlu0 %8177
      %8179 = vrot.lane.b32.xlu0 %v7921, 126
      %v8180 = vpop.permute.xlu0 %8179
      %8181 = vrot.lane.b32.xlu0 %v7922, 126
      %v8182 = vpop.permute.xlu0 %8181
      %8183 = vrot.lane.b32.xlu0 %v7923, 126
      %v8184 = vpop.permute.xlu0 %8183
      %8185 = vrot.lane.b32.xlu0 %v7924, 126
      %v8186 = vpop.permute.xlu0 %8185
      %8187 = vrot.lane.b32.xlu0 %v7925, 126
      %v8188 = vpop.permute.xlu0 %8187
      %8189 = vrot.lane.b32.xlu0 %v7926, 126
      %v8190 = vpop.permute.xlu0 %8189
      %8191 = vrot.lane.b32.xlu0 %v7927, 126
      %v8192 = vpop.permute.xlu0 %8191
      %8193 = vrot.lane.b32.xlu0 %v7928, 126
      %v8194 = vpop.permute.xlu0 %8193
      %8195 = vrot.lane.b32.xlu0 %v7929, 126
      %v8196 = vpop.permute.xlu0 %8195
      %8197 = vrot.lane.b32.xlu0 %v7930, 126
      %v8198 = vpop.permute.xlu0 %8197
      %8199 = vrot.lane.b32.xlu0 %v7931, 126
      %v8200 = vpop.permute.xlu0 %8199
      %8201 = vrot.lane.b32.xlu0 %v7932, 126
      %v8202 = vpop.permute.xlu0 %8201
      %8203 = vrot.lane.b32.xlu0 %v7933, 126
      %v8204 = vpop.permute.xlu0 %8203
      %8205 = vrot.lane.b32.xlu0 %v7934, 126
      %v8206 = vpop.permute.xlu0 %8205
      %8207 = vrot.lane.b32.xlu0 %v7935, 126
      %v8208 = vpop.permute.xlu0 %8207
      %8209 = vrot.lane.b32.xlu0 %v7936, 126
      %v8210 = vpop.permute.xlu0 %8209
      %8211 = vrot.lane.b32.xlu0 %v7937, 126
      %v8212 = vpop.permute.xlu0 %8211
      %8213 = vrot.lane.b32.xlu0 %v7938, 126
      %v8214 = vpop.permute.xlu0 %8213
      %8215 = vrot.lane.b32.xlu0 %v7939, 126
      %v8216 = vpop.permute.xlu0 %8215
      %8217 = vrot.lane.b32.xlu0 %v7940, 126
      %v8218 = vpop.permute.xlu0 %8217
      %8219 = vrot.lane.b32.xlu0 %v7941, 126
      %v8220 = vpop.permute.xlu0 %8219
      %8221 = vrot.lane.b32.xlu0 %v7942, 126
      %v8222 = vpop.permute.xlu0 %8221
      %8223 = vrot.lane.b32.xlu0 %v7943, 126
      %v8224 = vpop.permute.xlu0 %8223
      %8225 = vrot.lane.b32.xlu0 %v7944, 126
      %v8226 = vpop.permute.xlu0 %8225
      %8227 = vrot.lane.b32.xlu0 %v7945, 126
      %v8228 = vpop.permute.xlu0 %8227
      %8229 = vrot.lane.b32.xlu0 %v7946, 126
      %v8230 = vpop.permute.xlu0 %8229
      %8231 = vrot.lane.b32.xlu0 %v7947, 126
      %v8232 = vpop.permute.xlu0 %8231
      %8233 = vrot.lane.b32.xlu0 %v7948, 126
      %v8234 = vpop.permute.xlu0 %8233
      %8235 = vrot.lane.b32.xlu0 %v7949, 126
      %v8236 = vpop.permute.xlu0 %8235
      %8237 = vrot.lane.b32.xlu0 %v7950, 126
      %v8238 = vpop.permute.xlu0 %8237
      %8239 = vrot.lane.b32.xlu0 %v7951, 126
      %v8240 = vpop.permute.xlu0 %8239
      %8241 = vrot.lane.b32.xlu0 %v7952, 126
      %v8242 = vpop.permute.xlu0 %8241
      %8243 = vrot.lane.b32.xlu0 %v7953, 126
      %v8244 = vpop.permute.xlu0 %8243
      %8245 = vrot.lane.b32.xlu0 %v7954, 126
      %v8246 = vpop.permute.xlu0 %8245
      %8247 = vrot.lane.b32.xlu0 %v7955, 126
      %v8248 = vpop.permute.xlu0 %8247
      %8249 = vrot.lane.b32.xlu0 %v7956, 126
      %v8250 = vpop.permute.xlu0 %8249
      %8251 = vrot.lane.b32.xlu0 %v7957, 126
      %v8252 = vpop.permute.xlu0 %8251
      %8253 = vrot.lane.b32.xlu0 %v7958, 126
      %v8254 = vpop.permute.xlu0 %8253
      %8255 = vrot.lane.b32.xlu0 %v7959, 126
      %v8256 = vpop.permute.xlu0 %8255
      %8257 = vrot.lane.b32.xlu0 %v7960, 126
      %v8258 = vpop.permute.xlu0 %8257
      %8259 = vrot.lane.b32.xlu0 %v7961, 126
      %v8260 = vpop.permute.xlu0 %8259
      %8261 = vrot.lane.b32.xlu0 %v7962, 126
      %v8262 = vpop.permute.xlu0 %8261
      %8263 = vrot.lane.b32.xlu0 %v7963, 126
      %v8264 = vpop.permute.xlu0 %8263
      %8265 = vrot.lane.b32.xlu0 %v7964, 126
      %v8266 = vpop.permute.xlu0 %8265
      %8267 = vrot.lane.b32.xlu0 %v7965, 126
      %v8268 = vpop.permute.xlu0 %8267
      %8269 = vrot.lane.b32.xlu0 %v7966, 126
      %v8270 = vpop.permute.xlu0 %8269
      %8271 = vrot.lane.b32.xlu0 %v7967, 126
      %v8272 = vpop.permute.xlu0 %8271
      %8273 = vrot.lane.b32.xlu0 %v7968, 126
      %v8274 = vpop.permute.xlu0 %8273
      %8275 = vrot.lane.b32.xlu0 %v7969, 126
      %v8276 = vpop.permute.xlu0 %8275
      %8277 = vrot.lane.b32.xlu0 %v7970, 126
      %v8278 = vpop.permute.xlu0 %8277
      %8279 = vrot.lane.b32.xlu0 %v7971, 126
      %v8280 = vpop.permute.xlu0 %8279
      %8281 = vrot.lane.b32.xlu0 %v7972, 126
      %v8282 = vpop.permute.xlu0 %8281
      %8283 = vrot.lane.b32.xlu0 %v7973, 126
      %v8284 = vpop.permute.xlu0 %8283
      %8285 = vrot.lane.b32.xlu0 %v7974, 126
      %v8286 = vpop.permute.xlu0 %8285
      %8287 = vrot.lane.b32.xlu0 %v7975, 126
      %v8288 = vpop.permute.xlu0 %8287
      %8289 = vrot.lane.b32.xlu0 %v7976, 126
      %v8290 = vpop.permute.xlu0 %8289
      %8291 = vrot.lane.b32.xlu0 %v7977, 126
      %v8292 = vpop.permute.xlu0 %8291
      %8293 = vrot.lane.b32.xlu0 %v7978, 126
      %v8294 = vpop.permute.xlu0 %8293
      %8295 = vrot.lane.b32.xlu0 %v7979, 126
      %v8296 = vpop.permute.xlu0 %8295
      %8297 = vrot.lane.b32.xlu0 %v7980, 126
      %v8298 = vpop.permute.xlu0 %8297
      %8299 = vrot.lane.b32.xlu0 %v7981, 126
      %v8300 = vpop.permute.xlu0 %8299
      %8301 = vrot.lane.b32.xlu0 %v7982, 126
      %v8302 = vpop.permute.xlu0 %8301
      %8303 = vrot.lane.b32.xlu0 %v7983, 126
      %v8304 = vpop.permute.xlu0 %8303
      %8305 = vrot.lane.b32.xlu0 %v7984, 126
      %v8306 = vpop.permute.xlu0 %8305
      %8307 = vrot.lane.b32.xlu0 %v7985, 126
      %v8308 = vpop.permute.xlu0 %8307
      %8309 = vrot.lane.b32.xlu0 %v7986, 126
      %v8310 = vpop.permute.xlu0 %8309
      %8311 = vrot.lane.b32.xlu0 %v7987, 126
      %v8312 = vpop.permute.xlu0 %8311
      %8313 = vrot.lane.b32.xlu0 %v7988, 126
      %v8314 = vpop.permute.xlu0 %8313
      %8315 = vrot.lane.b32.xlu0 %v7989, 126
      %v8316 = vpop.permute.xlu0 %8315
      %8317 = vrot.lane.b32.xlu0 %v7990, 126
      %v8318 = vpop.permute.xlu0 %8317
      %8319 = vrot.lane.b32.xlu0 %v7991, 126
      %v8320 = vpop.permute.xlu0 %8319
      %8321 = vrot.lane.b32.xlu0 %v7992, 126
      %v8322 = vpop.permute.xlu0 %8321
      %8323 = vrot.lane.b32.xlu0 %v7993, 126
      %v8324 = vpop.permute.xlu0 %8323
      %8325 = vrot.lane.b32.xlu0 %v7994, 126
      %v8326 = vpop.permute.xlu0 %8325
      %8327 = vrot.lane.b32.xlu0 %v7995, 126
      %v8328 = vpop.permute.xlu0 %8327
      %8329 = vrot.lane.b32.xlu0 %v7996, 126
      %v8330 = vpop.permute.xlu0 %8329
      %8331 = vrot.lane.b32.xlu0 %v7997, 126
      %v8332 = vpop.permute.xlu0 %8331
      %8333 = vrot.lane.b32.xlu0 %v7998, 126
      %v8334 = vpop.permute.xlu0 %8333
      %8335 = vrot.lane.b32.xlu0 %v7999, 126
      %v8336 = vpop.permute.xlu0 %8335
      %8337 = vrot.lane.b32.xlu0 %v8000, 126
      %v8338 = vpop.permute.xlu0 %8337
      %8339 = vrot.lane.b32.xlu0 %v8001, 126
      %v8340 = vpop.permute.xlu0 %8339
      %8341 = vrot.lane.b32.xlu0 %v8002, 126
      %v8342 = vpop.permute.xlu0 %8341
      %8343 = vrot.lane.b32.xlu0 %v8003, 126
      %v8344 = vpop.permute.xlu0 %8343
      %8345 = vrot.lane.b32.xlu0 %v8004, 126
      %v8346 = vpop.permute.xlu0 %8345
      %8347 = vrot.lane.b32.xlu0 %v8005, 126
      %v8348 = vpop.permute.xlu0 %8347
      %8349 = vrot.lane.b32.xlu0 %v8006, 126
      %v8350 = vpop.permute.xlu0 %8349
      %8351 = vrot.lane.b32.xlu0 %v8007, 126
      %v8352 = vpop.permute.xlu0 %8351
      %8353 = vrot.lane.b32.xlu0 %v8008, 126
      %v8354 = vpop.permute.xlu0 %8353
      %8355 = vrot.lane.b32.xlu0 %v8009, 126
      %v8356 = vpop.permute.xlu0 %8355
      %8357 = vrot.lane.b32.xlu0 %v8010, 126
      %v8358 = vpop.permute.xlu0 %8357
      %8359 = vrot.lane.b32.xlu0 %v8011, 126
      %v8360 = vpop.permute.xlu0 %8359
      %8361 = vrot.lane.b32.xlu0 %v8012, 126
      %v8362 = vpop.permute.xlu0 %8361
      %8363 = vrot.lane.b32.xlu0 %v8013, 126
      %v8364 = vpop.permute.xlu0 %8363
      %8365 = vrot.lane.b32.xlu0 %v8014, 126
      %v8366 = vpop.permute.xlu0 %8365
      %8367 = vrot.lane.b32.xlu0 %v8015, 126
      %v8368 = vpop.permute.xlu0 %8367
      %8369 = vrot.lane.b32.xlu0 %v8016, 126
      %v8370 = vpop.permute.xlu0 %8369
      %8371 = vrot.lane.b32.xlu0 %v8017, 126
      %v8372 = vpop.permute.xlu0 %8371
      %8373 = vrot.lane.b32.xlu0 %v8018, 126
      %v8374 = vpop.permute.xlu0 %8373
      %8375 = vrot.lane.b32.xlu0 %v8019, 126
      %v8376 = vpop.permute.xlu0 %8375
      %8377 = vrot.lane.b32.xlu0 %v8020, 126
      %v8378 = vpop.permute.xlu0 %8377
      %8379 = vrot.lane.b32.xlu0 %v8021, 126
      %v8380 = vpop.permute.xlu0 %8379
      %8381 = vrot.lane.b32.xlu0 %v8022, 126
      %v8382 = vpop.permute.xlu0 %8381
      %8383 = vrot.lane.b32.xlu0 %v8023, 126
      %v8384 = vpop.permute.xlu0 %8383
      %8385 = vrot.lane.b32.xlu0 %v8024, 126
      %v8386 = vpop.permute.xlu0 %8385
      %8387 = vrot.lane.b32.xlu0 %v8025, 126
      %v8388 = vpop.permute.xlu0 %8387
      %8389 = vrot.lane.b32.xlu0 %v8026, 126
      %v8390 = vpop.permute.xlu0 %8389
      %8391 = vrot.lane.b32.xlu0 %v8027, 126
      %v8392 = vpop.permute.xlu0 %8391
      %8393 = vrot.lane.b32.xlu0 %v8028, 126
      %v8394 = vpop.permute.xlu0 %8393
      %8395 = vrot.lane.b32.xlu0 %v8029, 126
      %v8396 = vpop.permute.xlu0 %8395
      %8397 = vrot.lane.b32.xlu0 %v8030, 126
      %v8398 = vpop.permute.xlu0 %8397
      %8399 = vrot.lane.b32.xlu0 %v8031, 126
      %v8400 = vpop.permute.xlu0 %8399
      %8401 = vrot.lane.b32.xlu0 %v8032, 126
      %v8402 = vpop.permute.xlu0 %8401
      %8403 = vrot.lane.b32.xlu0 %v8033, 126
      %v8404 = vpop.permute.xlu0 %8403
      %8405 = vrot.lane.b32.xlu0 %v8034, 126
      %v8406 = vpop.permute.xlu0 %8405
      %8407 = vrot.lane.b32.xlu0 %v8035, 126
      %v8408 = vpop.permute.xlu0 %8407
      %8409 = vrot.lane.b32.xlu0 %v8036, 126
      %v8410 = vpop.permute.xlu0 %8409
      %8411 = vrot.lane.b32.xlu0 %v8037, 126
      %v8412 = vpop.permute.xlu0 %8411
      %8413 = vrot.lane.b32.xlu0 %v8038, 126
      %v8414 = vpop.permute.xlu0 %8413
      %8415 = vrot.lane.b32.xlu0 %v8039, 126
      %v8416 = vpop.permute.xlu0 %8415
      %8417 = vrot.lane.b32.xlu0 %v8040, 126
      %v8418 = vpop.permute.xlu0 %8417
      %8419 = vrot.lane.b32.xlu0 %v8041, 126
      %v8420 = vpop.permute.xlu0 %8419
      %8421 = vrot.lane.b32.xlu0 %v8042, 126
      %v8422 = vpop.permute.xlu0 %8421
      %8423 = vrot.lane.b32.xlu0 %v8043, 126
      %v8424 = vpop.permute.xlu0 %8423
      %8425 = vrot.lane.b32.xlu0 %v8044, 126
      %v8426 = vpop.permute.xlu0 %8425
      %8427 = vrot.lane.b32.xlu0 %v8045, 126
      %v8428 = vpop.permute.xlu0 %8427
      %8429 = vrot.lane.b32.xlu0 %v8046, 126
      %v8430 = vpop.permute.xlu0 %8429
      %vm8559 = vcmask 23552
      %8560 = vst.msk [vmem:[%s447] sm:$0xff] %vm8559, %v8176
      %8561 = vst.msk [vmem:[%s447 + $0x8] sm:$0xff] %vm8559, %v8178
      %8562 = vst.msk [vmem:[%s447 + $0x10] sm:$0xff] %vm8559, %v8180
      %8563 = vst.msk [vmem:[%s447 + $0x18] sm:$0xff] %vm8559, %v8182
      %8564 = vst.msk [vmem:[%s447 + $0x20] sm:$0xff] %vm8559, %v8184
      %8565 = vst.msk [vmem:[%s447 + $0x28] sm:$0xff] %vm8559, %v8186
      %8566 = vst.msk [vmem:[%s447 + $0x30] sm:$0xff] %vm8559, %v8188
      %8567 = vst.msk [vmem:[%s447 + $0x38] sm:$0xff] %vm8559, %v8190
      %8568 = vst.msk [vmem:[%s447 + $0x40] sm:$0xff] %vm8559, %v8192
      %8569 = vst.msk [vmem:[%s447 + $0x48] sm:$0xff] %vm8559, %v8194
      %8570 = vst.msk [vmem:[%s447 + $0x50] sm:$0xff] %vm8559, %v8196
      %8571 = vst.msk [vmem:[%s447 + $0x58] sm:$0xff] %vm8559, %v8198
      %8572 = vst.msk [vmem:[%s447 + $0x60] sm:$0xff] %vm8559, %v8200
      %8573 = vst.msk [vmem:[%s447 + $0x68] sm:$0xff] %vm8559, %v8202
      %8574 = vst.msk [vmem:[%s447 + $0x70] sm:$0xff] %vm8559, %v8204
      %8575 = vst.msk [vmem:[%s447 + $0x78] sm:$0xff] %vm8559, %v8206
      %8576 = vst.msk [vmem:[%s447 + $0x80] sm:$0xff] %vm8559, %v8208
      %8577 = vst.msk [vmem:[%s447 + $0x88] sm:$0xff] %vm8559, %v8210
      %8578 = vst.msk [vmem:[%s447 + $0x90] sm:$0xff] %vm8559, %v8212
      %8579 = vst.msk [vmem:[%s447 + $0x98] sm:$0xff] %vm8559, %v8214
      %8580 = vst.msk [vmem:[%s447 + $0xa0] sm:$0xff] %vm8559, %v8216
      %8581 = vst.msk [vmem:[%s447 + $0xa8] sm:$0xff] %vm8559, %v8218
      %8582 = vst.msk [vmem:[%s447 + $0xb0] sm:$0xff] %vm8559, %v8220
      %8583 = vst.msk [vmem:[%s447 + $0xb8] sm:$0xff] %vm8559, %v8222
      %8584 = vst.msk [vmem:[%s447 + $0xc0] sm:$0xff] %vm8559, %v8224
      %8585 = vst.msk [vmem:[%s447 + $0xc8] sm:$0xff] %vm8559, %v8226
      %8586 = vst.msk [vmem:[%s447 + $0xd0] sm:$0xff] %vm8559, %v8228
      %8587 = vst.msk [vmem:[%s447 + $0xd8] sm:$0xff] %vm8559, %v8230
      %8588 = vst.msk [vmem:[%s447 + $0xe0] sm:$0xff] %vm8559, %v8232
      %8589 = vst.msk [vmem:[%s447 + $0xe8] sm:$0xff] %vm8559, %v8234
      %8590 = vst.msk [vmem:[%s447 + $0xf0] sm:$0xff] %vm8559, %v8236
      %8591 = vst.msk [vmem:[%s447 + $0xf8] sm:$0xff] %vm8559, %v8238
      %8592 = vst.msk [vmem:[%s447 + $0x100] sm:$0xff] %vm8559, %v8240
      %8593 = vst.msk [vmem:[%s447 + $0x108] sm:$0xff] %vm8559, %v8242
      %8594 = vst.msk [vmem:[%s447 + $0x110] sm:$0xff] %vm8559, %v8244
      %8595 = vst.msk [vmem:[%s447 + $0x118] sm:$0xff] %vm8559, %v8246
      %8596 = vst.msk [vmem:[%s447 + $0x120] sm:$0xff] %vm8559, %v8248
      %8597 = vst.msk [vmem:[%s447 + $0x128] sm:$0xff] %vm8559, %v8250
      %8598 = vst.msk [vmem:[%s447 + $0x130] sm:$0xff] %vm8559, %v8252
      %8599 = vst.msk [vmem:[%s447 + $0x138] sm:$0xff] %vm8559, %v8254
      %8600 = vst.msk [vmem:[%s447 + $0x140] sm:$0xff] %vm8559, %v8256
      %8601 = vst.msk [vmem:[%s447 + $0x148] sm:$0xff] %vm8559, %v8258
      %8602 = vst.msk [vmem:[%s447 + $0x150] sm:$0xff] %vm8559, %v8260
      %8603 = vst.msk [vmem:[%s447 + $0x158] sm:$0xff] %vm8559, %v8262
      %8604 = vst.msk [vmem:[%s447 + $0x160] sm:$0xff] %vm8559, %v8264
      %8605 = vst.msk [vmem:[%s447 + $0x168] sm:$0xff] %vm8559, %v8266
      %8606 = vst.msk [vmem:[%s447 + $0x170] sm:$0xff] %vm8559, %v8268
      %8607 = vst.msk [vmem:[%s447 + $0x178] sm:$0xff] %vm8559, %v8270
      %8608 = vst.msk [vmem:[%s447 + $0x180] sm:$0xff] %vm8559, %v8272
      %8609 = vst.msk [vmem:[%s447 + $0x188] sm:$0xff] %vm8559, %v8274
      %8610 = vst.msk [vmem:[%s447 + $0x190] sm:$0xff] %vm8559, %v8276
      %8611 = vst.msk [vmem:[%s447 + $0x198] sm:$0xff] %vm8559, %v8278
      %8612 = vst.msk [vmem:[%s447 + $0x1a0] sm:$0xff] %vm8559, %v8280
      %8613 = vst.msk [vmem:[%s447 + $0x1a8] sm:$0xff] %vm8559, %v8282
      %8614 = vst.msk [vmem:[%s447 + $0x1b0] sm:$0xff] %vm8559, %v8284
      %8615 = vst.msk [vmem:[%s447 + $0x1b8] sm:$0xff] %vm8559, %v8286
      %8616 = vst.msk [vmem:[%s447 + $0x1c0] sm:$0xff] %vm8559, %v8288
      %8617 = vst.msk [vmem:[%s447 + $0x1c8] sm:$0xff] %vm8559, %v8290
      %8618 = vst.msk [vmem:[%s447 + $0x1d0] sm:$0xff] %vm8559, %v8292
      %8619 = vst.msk [vmem:[%s447 + $0x1d8] sm:$0xff] %vm8559, %v8294
      %8620 = vst.msk [vmem:[%s447 + $0x1e0] sm:$0xff] %vm8559, %v8296
      %8621 = vst.msk [vmem:[%s447 + $0x1e8] sm:$0xff] %vm8559, %v8298
      %8622 = vst.msk [vmem:[%s447 + $0x1f0] sm:$0xff] %vm8559, %v8300
      %8623 = vst.msk [vmem:[%s447 + $0x1f8] sm:$0xff] %vm8559, %v8302
      %8624 = vst.msk [vmem:[%s447 + $0x200] sm:$0xff] %vm8559, %v8304
      %8625 = vst.msk [vmem:[%s447 + $0x208] sm:$0xff] %vm8559, %v8306
      %8626 = vst.msk [vmem:[%s447 + $0x210] sm:$0xff] %vm8559, %v8308
      %8627 = vst.msk [vmem:[%s447 + $0x218] sm:$0xff] %vm8559, %v8310
      %8628 = vst.msk [vmem:[%s447 + $0x220] sm:$0xff] %vm8559, %v8312
      %8629 = vst.msk [vmem:[%s447 + $0x228] sm:$0xff] %vm8559, %v8314
      %8630 = vst.msk [vmem:[%s447 + $0x230] sm:$0xff] %vm8559, %v8316
      %8631 = vst.msk [vmem:[%s447 + $0x238] sm:$0xff] %vm8559, %v8318
      %8632 = vst.msk [vmem:[%s447 + $0x240] sm:$0xff] %vm8559, %v8320
      %8633 = vst.msk [vmem:[%s447 + $0x248] sm:$0xff] %vm8559, %v8322
      %8634 = vst.msk [vmem:[%s447 + $0x250] sm:$0xff] %vm8559, %v8324
      %8635 = vst.msk [vmem:[%s447 + $0x258] sm:$0xff] %vm8559, %v8326
      %8636 = vst.msk [vmem:[%s447 + $0x260] sm:$0xff] %vm8559, %v8328
      %8637 = vst.msk [vmem:[%s447 + $0x268] sm:$0xff] %vm8559, %v8330
      %8638 = vst.msk [vmem:[%s447 + $0x270] sm:$0xff] %vm8559, %v8332
      %8639 = vst.msk [vmem:[%s447 + $0x278] sm:$0xff] %vm8559, %v8334
      %8640 = vst.msk [vmem:[%s447 + $0x280] sm:$0xff] %vm8559, %v8336
      %8641 = vst.msk [vmem:[%s447 + $0x288] sm:$0xff] %vm8559, %v8338
      %8642 = vst.msk [vmem:[%s447 + $0x290] sm:$0xff] %vm8559, %v8340
      %8643 = vst.msk [vmem:[%s447 + $0x298] sm:$0xff] %vm8559, %v8342
      %8644 = vst.msk [vmem:[%s447 + $0x2a0] sm:$0xff] %vm8559, %v8344
      %8645 = vst.msk [vmem:[%s447 + $0x2a8] sm:$0xff] %vm8559, %v8346
      %8646 = vst.msk [vmem:[%s447 + $0x2b0] sm:$0xff] %vm8559, %v8348
      %8647 = vst.msk [vmem:[%s447 + $0x2b8] sm:$0xff] %vm8559, %v8350
      %8648 = vst.msk [vmem:[%s447 + $0x2c0] sm:$0xff] %vm8559, %v8352
      %8649 = vst.msk [vmem:[%s447 + $0x2c8] sm:$0xff] %vm8559, %v8354
      %8650 = vst.msk [vmem:[%s447 + $0x2d0] sm:$0xff] %vm8559, %v8356
      %8651 = vst.msk [vmem:[%s447 + $0x2d8] sm:$0xff] %vm8559, %v8358
      %8652 = vst.msk [vmem:[%s447 + $0x2e0] sm:$0xff] %vm8559, %v8360
      %8653 = vst.msk [vmem:[%s447 + $0x2e8] sm:$0xff] %vm8559, %v8362
      %8654 = vst.msk [vmem:[%s447 + $0x2f0] sm:$0xff] %vm8559, %v8364
      %8655 = vst.msk [vmem:[%s447 + $0x2f8] sm:$0xff] %vm8559, %v8366
      %8656 = vst.msk [vmem:[%s447 + $0x300] sm:$0xff] %vm8559, %v8368
      %8657 = vst.msk [vmem:[%s447 + $0x308] sm:$0xff] %vm8559, %v8370
      %8658 = vst.msk [vmem:[%s447 + $0x310] sm:$0xff] %vm8559, %v8372
      %8659 = vst.msk [vmem:[%s447 + $0x318] sm:$0xff] %vm8559, %v8374
      %8660 = vst.msk [vmem:[%s447 + $0x320] sm:$0xff] %vm8559, %v8376
      %8661 = vst.msk [vmem:[%s447 + $0x328] sm:$0xff] %vm8559, %v8378
      %8662 = vst.msk [vmem:[%s447 + $0x330] sm:$0xff] %vm8559, %v8380
      %8663 = vst.msk [vmem:[%s447 + $0x338] sm:$0xff] %vm8559, %v8382
      %8664 = vst.msk [vmem:[%s447 + $0x340] sm:$0xff] %vm8559, %v8384
      %8665 = vst.msk [vmem:[%s447 + $0x348] sm:$0xff] %vm8559, %v8386
      %8666 = vst.msk [vmem:[%s447 + $0x350] sm:$0xff] %vm8559, %v8388
      %8667 = vst.msk [vmem:[%s447 + $0x358] sm:$0xff] %vm8559, %v8390
      %8668 = vst.msk [vmem:[%s447 + $0x360] sm:$0xff] %vm8559, %v8392
      %8669 = vst.msk [vmem:[%s447 + $0x368] sm:$0xff] %vm8559, %v8394
      %8670 = vst.msk [vmem:[%s447 + $0x370] sm:$0xff] %vm8559, %v8396
      %8671 = vst.msk [vmem:[%s447 + $0x378] sm:$0xff] %vm8559, %v8398
      %8672 = vst.msk [vmem:[%s447 + $0x380] sm:$0xff] %vm8559, %v8400
      %8673 = vst.msk [vmem:[%s447 + $0x388] sm:$0xff] %vm8559, %v8402
      %8674 = vst.msk [vmem:[%s447 + $0x390] sm:$0xff] %vm8559, %v8404
      %8675 = vst.msk [vmem:[%s447 + $0x398] sm:$0xff] %vm8559, %v8406
      %8676 = vst.msk [vmem:[%s447 + $0x3a0] sm:$0xff] %vm8559, %v8408
      %8677 = vst.msk [vmem:[%s447 + $0x3a8] sm:$0xff] %vm8559, %v8410
      %8678 = vst.msk [vmem:[%s447 + $0x3b0] sm:$0xff] %vm8559, %v8412
      %8679 = vst.msk [vmem:[%s447 + $0x3b8] sm:$0xff] %vm8559, %v8414
      %8680 = vst.msk [vmem:[%s447 + $0x3c0] sm:$0xff] %vm8559, %v8416
      %8681 = vst.msk [vmem:[%s447 + $0x3c8] sm:$0xff] %vm8559, %v8418
      %8682 = vst.msk [vmem:[%s447 + $0x3d0] sm:$0xff] %vm8559, %v8420
      %8683 = vst.msk [vmem:[%s447 + $0x3d8] sm:$0xff] %vm8559, %v8422
      %8684 = vst.msk [vmem:[%s447 + $0x3e0] sm:$0xff] %vm8559, %v8424
      %8685 = vst.msk [vmem:[%s447 + $0x3e8] sm:$0xff] %vm8559, %v8426
      %8686 = vst.msk [vmem:[%s447 + $0x3f0] sm:$0xff] %vm8559, %v8428
      %8687 = vst.msk [vmem:[%s447 + $0x3f8] sm:$0xff] %vm8559, %v8430
      %8688 = vst.msk [vmem:[%s457] sm:$0xff] %vm3822, %v5103
      %8689 = vst.msk [vmem:[%s457 + $0x8] sm:$0xff] %vm3822, %v5104
      %8690 = vst.msk [vmem:[%s457 + $0x10] sm:$0xff] %vm3822, %v5105
      %8691 = vst.msk [vmem:[%s457 + $0x18] sm:$0xff] %vm3822, %v5106
      %8692 = vst.msk [vmem:[%s457 + $0x20] sm:$0xff] %vm3822, %v5107
      %8693 = vst.msk [vmem:[%s457 + $0x28] sm:$0xff] %vm3822, %v5108
      %8694 = vst.msk [vmem:[%s457 + $0x30] sm:$0xff] %vm3822, %v5109
      %8695 = vst.msk [vmem:[%s457 + $0x38] sm:$0xff] %vm3822, %v5110
      %8696 = vst.msk [vmem:[%s457 + $0x40] sm:$0xff] %vm3822, %v5111
      %8697 = vst.msk [vmem:[%s457 + $0x48] sm:$0xff] %vm3822, %v5112
      %8698 = vst.msk [vmem:[%s457 + $0x50] sm:$0xff] %vm3822, %v5113
      %8699 = vst.msk [vmem:[%s457 + $0x58] sm:$0xff] %vm3822, %v5114
      %8700 = vst.msk [vmem:[%s457 + $0x60] sm:$0xff] %vm3822, %v5115
      %8701 = vst.msk [vmem:[%s457 + $0x68] sm:$0xff] %vm3822, %v5116
      %8702 = vst.msk [vmem:[%s457 + $0x70] sm:$0xff] %vm3822, %v5117
      %8703 = vst.msk [vmem:[%s457 + $0x78] sm:$0xff] %vm3822, %v5118
      %8704 = vst.msk [vmem:[%s457 + $0x80] sm:$0xff] %vm3822, %v5119
      %8705 = vst.msk [vmem:[%s457 + $0x88] sm:$0xff] %vm3822, %v5120
      %8706 = vst.msk [vmem:[%s457 + $0x90] sm:$0xff] %vm3822, %v5121
      %8707 = vst.msk [vmem:[%s457 + $0x98] sm:$0xff] %vm3822, %v5122
      %8708 = vst.msk [vmem:[%s457 + $0xa0] sm:$0xff] %vm3822, %v5123
      %8709 = vst.msk [vmem:[%s457 + $0xa8] sm:$0xff] %vm3822, %v5124
      %8710 = vst.msk [vmem:[%s457 + $0xb0] sm:$0xff] %vm3822, %v5125
      %8711 = vst.msk [vmem:[%s457 + $0xb8] sm:$0xff] %vm3822, %v5126
      %8712 = vst.msk [vmem:[%s457 + $0xc0] sm:$0xff] %vm3822, %v5127
      %8713 = vst.msk [vmem:[%s457 + $0xc8] sm:$0xff] %vm3822, %v5128
      %8714 = vst.msk [vmem:[%s457 + $0xd0] sm:$0xff] %vm3822, %v5129
      %8715 = vst.msk [vmem:[%s457 + $0xd8] sm:$0xff] %vm3822, %v5130
      %8716 = vst.msk [vmem:[%s457 + $0xe0] sm:$0xff] %vm3822, %v5131
      %8717 = vst.msk [vmem:[%s457 + $0xe8] sm:$0xff] %vm3822, %v5132
      %8718 = vst.msk [vmem:[%s457 + $0xf0] sm:$0xff] %vm3822, %v5133
      %8719 = vst.msk [vmem:[%s457 + $0xf8] sm:$0xff] %vm3822, %v5134
      %8720 = vst.msk [vmem:[%s457 + $0x100] sm:$0xff] %vm3822, %v5135
      %8721 = vst.msk [vmem:[%s457 + $0x108] sm:$0xff] %vm3822, %v5136
      %8722 = vst.msk [vmem:[%s457 + $0x110] sm:$0xff] %vm3822, %v5137
      %8723 = vst.msk [vmem:[%s457 + $0x118] sm:$0xff] %vm3822, %v5138
      %8724 = vst.msk [vmem:[%s457 + $0x120] sm:$0xff] %vm3822, %v5139
      %8725 = vst.msk [vmem:[%s457 + $0x128] sm:$0xff] %vm3822, %v5140
      %8726 = vst.msk [vmem:[%s457 + $0x130] sm:$0xff] %vm3822, %v5141
      %8727 = vst.msk [vmem:[%s457 + $0x138] sm:$0xff] %vm3822, %v5142
      %8728 = vst.msk [vmem:[%s457 + $0x140] sm:$0xff] %vm3822, %v5143
      %8729 = vst.msk [vmem:[%s457 + $0x148] sm:$0xff] %vm3822, %v5144
      %8730 = vst.msk [vmem:[%s457 + $0x150] sm:$0xff] %vm3822, %v5145
      %8731 = vst.msk [vmem:[%s457 + $0x158] sm:$0xff] %vm3822, %v5146
      %8732 = vst.msk [vmem:[%s457 + $0x160] sm:$0xff] %vm3822, %v5147
      %8733 = vst.msk [vmem:[%s457 + $0x168] sm:$0xff] %vm3822, %v5148
      %8734 = vst.msk [vmem:[%s457 + $0x170] sm:$0xff] %vm3822, %v5149
      %8735 = vst.msk [vmem:[%s457 + $0x178] sm:$0xff] %vm3822, %v5150
      %8736 = vst.msk [vmem:[%s457 + $0x180] sm:$0xff] %vm3822, %v5151
      %8737 = vst.msk [vmem:[%s457 + $0x188] sm:$0xff] %vm3822, %v5152
      %8738 = vst.msk [vmem:[%s457 + $0x190] sm:$0xff] %vm3822, %v5153
      %8739 = vst.msk [vmem:[%s457 + $0x198] sm:$0xff] %vm3822, %v5154
      %8740 = vst.msk [vmem:[%s457 + $0x1a0] sm:$0xff] %vm3822, %v5155
      %8741 = vst.msk [vmem:[%s457 + $0x1a8] sm:$0xff] %vm3822, %v5156
      %8742 = vst.msk [vmem:[%s457 + $0x1b0] sm:$0xff] %vm3822, %v5157
      %8743 = vst.msk [vmem:[%s457 + $0x1b8] sm:$0xff] %vm3822, %v5158
      %8744 = vst.msk [vmem:[%s457 + $0x1c0] sm:$0xff] %vm3822, %v5159
      %8745 = vst.msk [vmem:[%s457 + $0x1c8] sm:$0xff] %vm3822, %v5160
      %8746 = vst.msk [vmem:[%s457 + $0x1d0] sm:$0xff] %vm3822, %v5161
      %8747 = vst.msk [vmem:[%s457 + $0x1d8] sm:$0xff] %vm3822, %v5162
      %8748 = vst.msk [vmem:[%s457 + $0x1e0] sm:$0xff] %vm3822, %v5163
      %8749 = vst.msk [vmem:[%s457 + $0x1e8] sm:$0xff] %vm3822, %v5164
      %8750 = vst.msk [vmem:[%s457 + $0x1f0] sm:$0xff] %vm3822, %v5165
      %8751 = vst.msk [vmem:[%s457 + $0x1f8] sm:$0xff] %vm3822, %v5166
      %8752 = vst.msk [vmem:[%s457 + $0x200] sm:$0xff] %vm3822, %v5167
      %8753 = vst.msk [vmem:[%s457 + $0x208] sm:$0xff] %vm3822, %v5168
      %8754 = vst.msk [vmem:[%s457 + $0x210] sm:$0xff] %vm3822, %v5169
      %8755 = vst.msk [vmem:[%s457 + $0x218] sm:$0xff] %vm3822, %v5170
      %8756 = vst.msk [vmem:[%s457 + $0x220] sm:$0xff] %vm3822, %v5171
      %8757 = vst.msk [vmem:[%s457 + $0x228] sm:$0xff] %vm3822, %v5172
      %8758 = vst.msk [vmem:[%s457 + $0x230] sm:$0xff] %vm3822, %v5173
      %8759 = vst.msk [vmem:[%s457 + $0x238] sm:$0xff] %vm3822, %v5174
      %8760 = vst.msk [vmem:[%s457 + $0x240] sm:$0xff] %vm3822, %v5175
      %8761 = vst.msk [vmem:[%s457 + $0x248] sm:$0xff] %vm3822, %v5176
      %8762 = vst.msk [vmem:[%s457 + $0x250] sm:$0xff] %vm3822, %v5177
      %8763 = vst.msk [vmem:[%s457 + $0x258] sm:$0xff] %vm3822, %v5178
      %8764 = vst.msk [vmem:[%s457 + $0x260] sm:$0xff] %vm3822, %v5179
      %8765 = vst.msk [vmem:[%s457 + $0x268] sm:$0xff] %vm3822, %v5180
      %8766 = vst.msk [vmem:[%s457 + $0x270] sm:$0xff] %vm3822, %v5181
      %8767 = vst.msk [vmem:[%s457 + $0x278] sm:$0xff] %vm3822, %v5182
      %8768 = vst.msk [vmem:[%s457 + $0x280] sm:$0xff] %vm3822, %v5183
      %8769 = vst.msk [vmem:[%s457 + $0x288] sm:$0xff] %vm3822, %v5184
      %8770 = vst.msk [vmem:[%s457 + $0x290] sm:$0xff] %vm3822, %v5185
      %8771 = vst.msk [vmem:[%s457 + $0x298] sm:$0xff] %vm3822, %v5186
      %8772 = vst.msk [vmem:[%s457 + $0x2a0] sm:$0xff] %vm3822, %v5187
      %8773 = vst.msk [vmem:[%s457 + $0x2a8] sm:$0xff] %vm3822, %v5188
      %8774 = vst.msk [vmem:[%s457 + $0x2b0] sm:$0xff] %vm3822, %v5189
      %8775 = vst.msk [vmem:[%s457 + $0x2b8] sm:$0xff] %vm3822, %v5190
      %8776 = vst.msk [vmem:[%s457 + $0x2c0] sm:$0xff] %vm3822, %v5191
      %8777 = vst.msk [vmem:[%s457 + $0x2c8] sm:$0xff] %vm3822, %v5192
      %8778 = vst.msk [vmem:[%s457 + $0x2d0] sm:$0xff] %vm3822, %v5193
      %8779 = vst.msk [vmem:[%s457 + $0x2d8] sm:$0xff] %vm3822, %v5194
      %8780 = vst.msk [vmem:[%s457 + $0x2e0] sm:$0xff] %vm3822, %v5195
      %8781 = vst.msk [vmem:[%s457 + $0x2e8] sm:$0xff] %vm3822, %v5196
      %8782 = vst.msk [vmem:[%s457 + $0x2f0] sm:$0xff] %vm3822, %v5197
      %8783 = vst.msk [vmem:[%s457 + $0x2f8] sm:$0xff] %vm3822, %v5198
      %8784 = vst.msk [vmem:[%s457 + $0x300] sm:$0xff] %vm3822, %v5199
      %8785 = vst.msk [vmem:[%s457 + $0x308] sm:$0xff] %vm3822, %v5200
      %8786 = vst.msk [vmem:[%s457 + $0x310] sm:$0xff] %vm3822, %v5201
      %8787 = vst.msk [vmem:[%s457 + $0x318] sm:$0xff] %vm3822, %v5202
      %8788 = vst.msk [vmem:[%s457 + $0x320] sm:$0xff] %vm3822, %v5203
      %8789 = vst.msk [vmem:[%s457 + $0x328] sm:$0xff] %vm3822, %v5204
      %8790 = vst.msk [vmem:[%s457 + $0x330] sm:$0xff] %vm3822, %v5205
      %8791 = vst.msk [vmem:[%s457 + $0x338] sm:$0xff] %vm3822, %v5206
      %8792 = vst.msk [vmem:[%s457 + $0x340] sm:$0xff] %vm3822, %v5207
      %8793 = vst.msk [vmem:[%s457 + $0x348] sm:$0xff] %vm3822, %v5208
      %8794 = vst.msk [vmem:[%s457 + $0x350] sm:$0xff] %vm3822, %v5209
      %8795 = vst.msk [vmem:[%s457 + $0x358] sm:$0xff] %vm3822, %v5210
      %8796 = vst.msk [vmem:[%s457 + $0x360] sm:$0xff] %vm3822, %v5211
      %8797 = vst.msk [vmem:[%s457 + $0x368] sm:$0xff] %vm3822, %v5212
      %8798 = vst.msk [vmem:[%s457 + $0x370] sm:$0xff] %vm3822, %v5213
      %8799 = vst.msk [vmem:[%s457 + $0x378] sm:$0xff] %vm3822, %v5214
      %8800 = vst.msk [vmem:[%s457 + $0x380] sm:$0xff] %vm3822, %v5215
      %8801 = vst.msk [vmem:[%s457 + $0x388] sm:$0xff] %vm3822, %v5216
      %8802 = vst.msk [vmem:[%s457 + $0x390] sm:$0xff] %vm3822, %v5217
      %8803 = vst.msk [vmem:[%s457 + $0x398] sm:$0xff] %vm3822, %v5218
      %8804 = vst.msk [vmem:[%s457 + $0x3a0] sm:$0xff] %vm3822, %v5219
      %8805 = vst.msk [vmem:[%s457 + $0x3a8] sm:$0xff] %vm3822, %v5220
      %8806 = vst.msk [vmem:[%s457 + $0x3b0] sm:$0xff] %vm3822, %v5221
      %8807 = vst.msk [vmem:[%s457 + $0x3b8] sm:$0xff] %vm3822, %v5222
      %8808 = vst.msk [vmem:[%s457 + $0x3c0] sm:$0xff] %vm3822, %v5223
      %8809 = vst.msk [vmem:[%s457 + $0x3c8] sm:$0xff] %vm3822, %v5224
      %8810 = vst.msk [vmem:[%s457 + $0x3d0] sm:$0xff] %vm3822, %v5225
      %8811 = vst.msk [vmem:[%s457 + $0x3d8] sm:$0xff] %vm3822, %v5226
      %8812 = vst.msk [vmem:[%s457 + $0x3e0] sm:$0xff] %vm3822, %v5227
      %8813 = vst.msk [vmem:[%s457 + $0x3e8] sm:$0xff] %vm3822, %v5228
      %8814 = vst.msk [vmem:[%s457 + $0x3f0] sm:$0xff] %vm3822, %v5229
      %8815 = vst.msk [vmem:[%s457 + $0x3f8] sm:$0xff] %vm3822, %v5230
      %s8816 = smul.u32 128, %s27
      %p8817 = scmp.lt.s32.totalorder %s26, 1
      %s8818 = scalar_select %p8817, %s26, 1
      %p8819 = scmp.lt.s32.totalorder %s8816, 127
      %s8820 = scalar_select %p8819, %s8816, 127
      %s8821 = smul.addr %s8818, 128
      %s8822 = sadd.s32 %s8820, %s8821
      %s8823 = smul.addr %s8822, 8
      %s8824 = scalar_lea.vmem %s9, %s8823
      %s8825 = smul.u32 128, %s27
      %p8826 = scmp.lt.s32.totalorder %s26, 1
      %s8827 = scalar_select %p8826, %s26, 1
      %p8828 = scmp.lt.s32.totalorder %s8825, 127
      %s8829 = scalar_select %p8828, %s8825, 127
      %s8830 = smul.addr %s8827, 128
      %s8831 = sadd.s32 %s8829, %s8830
      %s8832 = smul.addr %s8831, 8
      %s8833 = scalar_lea.vmem %s10, %s8832
      // Predicated region
      $region57: #{pcsr_forward_train.3} parent=55 // pred_check
        %p8834 = pneg %p257
      $region58: #{pcsr_forward_train.3} parent=55 // pred_check_branch
        %8836 = sbr.rel (%p8834) target = $region60
      $region59: #{pcsr_forward_train.3} parent=55 // pred_region
        %s8837 = smul.u32 128, %s27
      $region60: #{pcsr_forward_train.3} parent=55 // pred_fallthru
        _
      // Predicated region
      $region61: #{pcsr_forward_train.3} parent=55 // pred_check
        %p8838 = pneg %p285
      $region62: #{pcsr_forward_train.3} parent=55 // pred_check_branch
        %8840 = sbr.rel (%p8838) target = $region64
      $region63: #{pcsr_forward_train.3} parent=55 // pred_region
        %s8841 = smul.u32 128, %s27
      $region64: #{pcsr_forward_train.3} parent=55 // pred_fallthru
        _
    $region56: #{pcsr_forward_train.3} parent=5 // pred_fallthru
      _
    %p8842 = scmp.le.s32.totalorder 2, %s17
    // Predicated region
    $region65: #{pcsr_forward_train.3} parent=5 // pred_check
      %p8843 = pneg %p8842
    $region66: #{pcsr_forward_train.3} parent=5 // pred_check_branch
      %8845 = sbr.rel (%p8843) target = $region68
    $region67: #{pcsr_forward_train.3} parent=5 // pred_region
      %s8846 = ssub.s32 %s17, 2
      // Predicated region
      $region69: #{pcsr_forward_train.3} parent=67 // pred_check
        %p8847 = pneg %p263
      $region70: #{pcsr_forward_train.3} parent=67 // pred_check_branch
        %8849 = sbr.rel (%p8847) target = $region72
      $region71: #{pcsr_forward_train.3} parent=67 // pred_region
        %s8850 = smul.u32 128, %s29
        %p8851 = scmp.lt.s32.totalorder %s28, 1
        %s8852 = scalar_select %p8851, %s28, 1
        %p8853 = scmp.lt.s32.totalorder %s8850, 127
        %s8854 = scalar_select %p8853, %s8850, 127
        %s8855 = smul.addr %s8852, 128
        %s8856 = sadd.s32 %s8854, %s8855
        %s8857 = smul.addr %s8856, 8
        %s8858 = scalar_lea.vmem %s9, %s8857
      $region72: #{pcsr_forward_train.3} parent=67 // pred_fallthru
        _
      // Predicated region
      $region73: #{pcsr_forward_train.3} parent=67 // pred_check
        %p8859 = pneg %p291
      $region74: #{pcsr_forward_train.3} parent=67 // pred_check_branch
        %8861 = sbr.rel (%p8859) target = $region76
      $region75: #{pcsr_forward_train.3} parent=67 // pred_region
        %s8862 = smul.u32 128, %s29
        %p8863 = scmp.lt.s32.totalorder %s28, 1
        %s8864 = scalar_select %p8863, %s28, 1
        %p8865 = scmp.lt.s32.totalorder %s8862, 127
        %s8866 = scalar_select %p8865, %s8862, 127
        %s8867 = smul.addr %s8864, 128
        %s8868 = sadd.s32 %s8866, %s8867
        %s8869 = smul.addr %s8868, 8
        %s8870 = scalar_lea.vmem %s10, %s8869
      $region76: #{pcsr_forward_train.3} parent=67 // pred_fallthru
        _
    $region68: #{pcsr_forward_train.3} parent=5 // pred_fallthru
      _
  $region6: #{pcsr_forward_train.3} parent=0 // loop_footer
    %s21 = sadd.s32 1, %s17
  $region7: #{pcsr_forward_train.3} parent=0 // loop_footer_branch
    %16 = sbr.rel target = $region3
  $region8: #{pcsr_forward_train.3} parent=0 // loop_exit
    _

</llo_original>
